<compile_context>
chip_gen: v6e
topology: v6e:2x2x1
jax: 0.10.0
libtpu: 0.0.40
codegen_flags: <defaults>
</compile_context>

<pallas_src>
import functools
import math

import jax
import jax.numpy as jnp
from jax import lax
from jax.experimental import pallas as pl
from jax.experimental.pallas import tpu as pltpu


def _round_up(v, m):
    return (v + m - 1) // m * m


def _quick_gelu(v):
    # x * sigmoid(1.702 x); exp and the approximate reciprocal both use the EUP.
    return v * pl.reciprocal(1.0 + jnp.exp(-1.702 * v), approx=True)


# ---------------------------------------------------------------------------
# Fully fused kernel: one grid step = one batch element.
# ---------------------------------------------------------------------------
def _convpass_fused_kernel(x_ref, wd_ref, bd_ref, wc_ref, wu_ref, bu_ref,
                           o_ref, pad_ref, *, dim, P, W, halo):
    # ---- adapter_down + QuickGELU (one 768-deep MXU dot for all N rows) ----
    xd = jnp.dot(x_ref[0].astype(jnp.bfloat16), wd_ref[...],
                 preferred_element_type=jnp.float32) + bd_ref[...]
    xd = _quick_gelu(xd)                                      # (N, dim) f32

    # ---- stack the two 14x14 maps channel-wise into a zero-halo scratch ----
    pad_ref[...] = jnp.zeros_like(pad_ref)
    pad_ref[pl.ds(halo, P), pl.ds(0, dim)] = xd[1:1 + P, :].astype(jnp.bfloat16)
    pad_ref[pl.ds(halo, P), pl.ds(dim, dim)] = (
        xd[1 + P:1 + 2 * P, :].astype(jnp.bfloat16))

    # ---- 3x3 CDC conv (theta already folded into the centre-tap weight) ----
    # Tap (kh, kw): output row i reads scratch row halo + i + off with
    # off = (kh-1)*W + (kw-1).  Rows that fall outside the 14x14 map
    # vertically land in the zero halo; horizontal wrap-around is removed
    # with a per-row width mask on the output position.
    wcol = lax.broadcasted_iota(jnp.int32, (P, 1), 0) % W     # w index of row i
    acc = jnp.zeros((P, dim), jnp.float32)
    for kh in range(3):
        for kw in range(3):
            off = (kh - 1) * W + (kw - 1)
            tap = pad_ref[pl.ds(halo + off, P), :]            # (P, 2*dim) bf16
            if kw == 0:
                tap = jnp.where(wcol >= 1, tap, jnp.zeros_like(tap))
            elif kw == 2:
                tap = jnp.where(wcol <= W - 2, tap, jnp.zeros_like(tap))
            acc = acc + jnp.dot(tap, wc_ref[kh * 3 + kw],
                                preferred_element_type=jnp.float32)

    # ---- cls token: 1x1 map with pad=1 -> only the (folded) centre tap -----
    cls = xd[0:1, :].astype(jnp.bfloat16)                     # (1, dim)
    w4 = wc_ref[4]                                            # (2*dim, dim)
    cls_conv = (jnp.dot(cls, w4[:dim, :], preferred_element_type=jnp.float32)
                + jnp.dot(cls, w4[dim:, :], preferred_element_type=jnp.float32))

    # ---- QuickGELU -> adapter_up; duplicate the patch rows in-kernel -------
    # (nn.Dropout(0.1) is an eval-mode identity.)
    up_pat = jnp.dot(_quick_gelu(acc).astype(jnp.bfloat16), wu_ref[...],
                     preferred_element_type=jnp.float32) + bu_ref[...]
    up_cls = jnp.dot(_quick_gelu(cls_conv).astype(jnp.bfloat16), wu_ref[...],
                     preferred_element_type=jnp.float32) + bu_ref[...]
    pat = up_pat.astype(o_ref.dtype)
    o_ref[0, pl.ds(0, 1), :] = up_cls.astype(o_ref.dtype)
    o_ref[0, pl.ds(1, P), :] = pat
    o_ref[0, pl.ds(1 + P, P), :] = pat


# ---------------------------------------------------------------------------
# Forward pass of Convpass_Concat2ModalConv_Only2modal (eval mode)
# ---------------------------------------------------------------------------
def convpass_2modal_forward(x, params, *, theta=0.0):
    B, N, C = x.shape
    dim = params["adapter_down_w"].shape[1]
    P, W = 14 * 14, 14
    assert N == 1 + 2 * P, "N must be 1 + 2*14*14 for the 2-modal adapter"
    cin = 2 * dim
    halo = 16                                # >= max |tap offset| (15)
    rows_pad = _round_up(2 * halo + P, 8)    # zero-halo scratch rows

    # Conv weight in HWIO -> (9, cin, dim); fold the CDC (central-difference)
    # term exactly into the centre tap: w[1,1] -= theta * sum_{kh,kw} w[kh,kw].
    wc = params["adapter_conv_w"].reshape(9, cin, dim)
    if math.fabs(theta) >= 1e-8:
        wc = wc.at[4].add(-theta * jnp.sum(params["adapter_conv_w"], axis=(0, 1)))
    wc = wc.astype(jnp.bfloat16)

    wd = params["adapter_down_w"].astype(jnp.bfloat16)
    bd = params["adapter_down_b"].reshape(1, dim).astype(jnp.float32)
    wu = params["adapter_up_w"].astype(jnp.bfloat16)
    bu = params["adapter_up_b"].reshape(1, C).astype(jnp.float32)

    flops = B * (2 * N * C * dim            # adapter_down
                 + 2 * P * 9 * cin * dim    # 3x3 conv
                 + 2 * cin * dim            # cls conv (centre tap)
                 + 2 * (P + 1) * dim * C)   # adapter_up
    cost = pl.CostEstimate(
        flops=flops,
        transcendentals=B * dim * (N + P + 1),
        bytes_accessed=(8 * B * N * C                       # x in (f32) + out (f32)
                        + 2 * (C * dim + 9 * cin * dim + dim * C)
                        + 4 * (dim + C)),
    )

    return pl.pallas_call(
        functools.partial(_convpass_fused_kernel, dim=dim, P=P, W=W, halo=halo),
        out_shape=jax.ShapeDtypeStruct((B, N, C), jnp.float32),
        grid_spec=pltpu.PrefetchScalarGridSpec(
            num_scalar_prefetch=0,
            grid=(B,),
            in_specs=[
                pl.BlockSpec((1, N, C), lambda b: (b, 0, 0)),      # x
                pl.BlockSpec((C, dim), lambda b: (0, 0)),          # w_down (bf16)
                pl.BlockSpec((1, dim), lambda b: (0, 0)),          # b_down
                pl.BlockSpec((9, cin, dim), lambda b: (0, 0, 0)),  # w_conv (CDC folded)
                pl.BlockSpec((dim, C), lambda b: (0, 0)),          # w_up (bf16)
                pl.BlockSpec((1, C), lambda b: (0, 0)),            # b_up
            ],
            out_specs=pl.BlockSpec((1, N, C), lambda b: (b, 0, 0)),
            scratch_shapes=[pltpu.VMEM((rows_pad, cin), jnp.bfloat16)],
        ),
        compiler_params=pltpu.CompilerParams(
            dimension_semantics=("parallel",)),
        cost_estimate=cost,
    )(x, wd, bd, wc, wu, bu)


# ---------------------------------------------------------------------------
# Pure-JAX f32 reference (for a correctness check)
# ---------------------------------------------------------------------------
def _conv2d_cd_ref(x_nhwc, w_hwio, theta):
    out = lax.conv_general_dilated(
        x_nhwc, w_hwio, window_strides=(1, 1), padding=((1, 1), (1, 1)),
        dimension_numbers=("NHWC", "HWIO", "NHWC"))
    if math.fabs(theta) >= 1e-8:
        w_sum = jnp.sum(w_hwio, axis=(0, 1), keepdims=True)
        out_diff = lax.conv_general_dilated(
            x_nhwc, w_sum, window_strides=(1, 1), padding=((0, 0), (0, 0)),
            dimension_numbers=("NHWC", "HWIO", "NHWC"))
        out = out - theta * out_diff
    return out


def convpass_2modal_ref(x, params, theta):
    B, N, C = x.shape
    dim = params["adapter_down_w"].shape[1]
    P = 14 * 14
    act = lambda v: v * jax.nn.sigmoid(1.702 * v)
    xd = act(x @ params["adapter_down_w"] + params["adapter_down_b"])
    p1 = xd[:, 1:1 + P].reshape(B, 14, 14, dim)
    p2 = xd[:, 1 + P:1 + 2 * P].reshape(B, 14, 14, dim)
    patch = _conv2d_cd_ref(jnp.concatenate([p1, p2], axis=-1),
                           params["adapter_conv_w"], theta).reshape(B, P, dim)
    cls = xd[:, :1].reshape(B, 1, 1, dim)
    cls = jnp.concatenate([cls, cls], axis=-1)
    cls = _conv2d_cd_ref(cls, params["adapter_conv_w"], theta).reshape(B, 1, dim)
    xd2 = act(jnp.concatenate([cls, patch, patch], axis=1))
    return xd2 @ params["adapter_up_w"] + params["adapter_up_b"]


# ---------------------------------------------------------------------------
# Deterministic synthetic parameters.
# NOTE: PyTorch zero-inits adapter_up weight/bias and adapter_down bias; small
# random values are used here so the whole path is numerically exercised.
# ---------------------------------------------------------------------------
def init_params(key, C=768, adapterdim=64):
    ks = jax.random.split(key, 5)
    s = 0.02
    f32 = jnp.float32
    return {
        "adapter_down_w": s * jax.random.normal(ks[0], (C, adapterdim), f32),
        "adapter_down_b": s * jax.random.normal(ks[1], (adapterdim,), f32),
        "adapter_up_w": s * jax.random.normal(ks[2], (adapterdim, C), f32),
        "adapter_up_b": s * jax.random.normal(ks[3], (C,), f32),
        # Conv2d_cd weight in HWIO layout: (3, 3, 2*adapterdim, adapterdim)
        "adapter_conv_w": s * jax.random.normal(
            ks[4], (3, 3, 2 * adapterdim, adapterdim), f32),
    }


if __name__ == "__main__":
    # Shapes dictated by the module: N = 1 + 2*14*14 = 393, C = 768, d = 64.
    B, dim = 2, 64
    N, C = 1 + 2 * 14 * 14, 768
    theta = 0.7                      # exercise the central-difference branch

    key = jax.random.PRNGKey(0)
    kx, kp = jax.random.split(key)
    x = jax.random.normal(kx, (B, N, C), jnp.float32)
    params = init_params(kp, C=C, adapterdim=dim)

    fwd = jax.jit(functools.partial(convpass_2modal_forward, theta=theta))
    out = fwd(x, params)
    jax.block_until_ready(out)
    assert out.shape == (B, N, C)
    assert bool(jnp.all(jnp.isfinite(out)))

    # Loose tolerance: kernel uses bf16 MXU operands with f32 accumulation.
    ref = convpass_2modal_ref(x, params, theta)
    rel = float(jnp.linalg.norm((out - ref).astype(jnp.float32)) /
                (jnp.linalg.norm(ref.astype(jnp.float32)) + 1e-12))
    assert rel < 5e-2, f"relative error vs reference too large: {rel}"
    print("KERNEL_OK")
</pallas_src>

<mosaic_0001>
module attributes {stable_mosaic.version = 11 : i64} {
  func.func @_convpass_fused_kernel(%arg0: i32, %arg1: memref<1x393x768xf32, #tpu.memory_space<vmem>>, %arg2: memref<768x64xbf16, #tpu.memory_space<vmem>>, %arg3: memref<1x64xf32, #tpu.memory_space<vmem>>, %arg4: memref<9x128x64xbf16, #tpu.memory_space<vmem>>, %arg5: memref<64x768xbf16, #tpu.memory_space<vmem>>, %arg6: memref<1x768xf32, #tpu.memory_space<vmem>>, %arg7: memref<1x393x768xf32, #tpu.memory_space<vmem>>, %arg8: memref<232x128xbf16, #tpu.memory_space<vmem>>) attributes {dimension_semantics = [#tpu.dimension_semantics<parallel>], iteration_bounds = array<i64: 2>, scalar_prefetch = 0 : i64, scratch_operands = 1 : i64, tpu.core_type = #tpu.core_type<tc>, window_params = [{transform_indices = @transform_0, window_bounds = array<i64: 1, 393, 768>}, {pipeline_mode = #tpu.pipeline_mode<synchronous>, transform_indices = @transform_1, window_bounds = array<i64: 768, 64>}, {pipeline_mode = #tpu.pipeline_mode<synchronous>, transform_indices = @transform_2, window_bounds = array<i64: 1, 64>}, {pipeline_mode = #tpu.pipeline_mode<synchronous>, transform_indices = @transform_3, window_bounds = array<i64: 9, 128, 64>}, {pipeline_mode = #tpu.pipeline_mode<synchronous>, transform_indices = @transform_4, window_bounds = array<i64: 64, 768>}, {pipeline_mode = #tpu.pipeline_mode<synchronous>, transform_indices = @transform_5, window_bounds = array<i64: 1, 768>}, {transform_indices = @transform_6, window_bounds = array<i64: 1, 393, 768>}]} {
    %c0 = arith.constant 0 : index
    %c0_0 = arith.constant 0 : index
    %c0_1 = arith.constant 0 : index
    %0 = vector.load %arg1[%c0, %c0_0, %c0_1] : memref<1x393x768xf32, #tpu.memory_space<vmem>>, vector<1x393x768xf32>
    %1 = vector.shape_cast %0 : vector<1x393x768xf32> to vector<393x768xf32>
    %2 = arith.truncf %1 : vector<393x768xf32> to vector<393x768xbf16>
    %c0_2 = arith.constant 0 : index
    %c0_3 = arith.constant 0 : index
    %3 = vector.load %arg2[%c0_2, %c0_3] : memref<768x64xbf16, #tpu.memory_space<vmem>>, vector<768x64xbf16>
    %cst = arith.constant dense<0.000000e+00> : vector<393x64xf32>
    %4 = tpu.matmul %2, %3, %cst {dimension_numbers = #tpu.dot_dimension_numbers<[1], [0], [0], [1], [0, 0, 1, 1], [], []>} : vector<393x768xbf16>, vector<768x64xbf16>, vector<393x64xf32> -> vector<393x64xf32>
    %c0_4 = arith.constant 0 : index
    %c0_5 = arith.constant 0 : index
    %5 = vector.load %arg3[%c0_4, %c0_5] : memref<1x64xf32, #tpu.memory_space<vmem>>, vector<1x64xf32>
    %6 = vector.broadcast %5 : vector<1x64xf32> to vector<393x64xf32>
    %7 = arith.addf %4, %6 : vector<393x64xf32>
    %cst_6 = arith.constant -1.702000e+00 : f32
    %8 = vector.broadcast %cst_6 : f32 to vector<393x64xf32>
    %9 = arith.mulf %8, %7 : vector<393x64xf32>
    %10 = math.exp %9 : vector<393x64xf32>
    %cst_7 = arith.constant 1.000000e+00 : f32
    %11 = vector.broadcast %cst_7 : f32 to vector<393x64xf32>
    %12 = arith.addf %11, %10 : vector<393x64xf32>
    %13 = tpu.reciprocal %12 {approx = true} : vector<393x64xf32> -> vector<393x64xf32>
    %14 = arith.mulf %7, %13 : vector<393x64xf32>
    %cst_8 = arith.constant 0.000000e+00 : bf16
    %15 = vector.broadcast %cst_8 : bf16 to vector<232x128xbf16>
    %c0_9 = arith.constant 0 : index
    %c0_10 = arith.constant 0 : index
    %16 = vector.load %arg8[%c0_9, %c0_10] : memref<232x128xbf16, #tpu.memory_space<vmem>>, vector<232x128xbf16>
    tpu.vector_store %arg8[%c0_9, %c0_10], %15 {strides = array<i32>} : memref<232x128xbf16, #tpu.memory_space<vmem>>, vector<232x128xbf16>,
    %17 = vector.extract_strided_slice %14 {offsets = [1, 0], sizes = [196, 64], strides = [1, 1]} : vector<393x64xf32> to vector<196x64xf32>
    %18 = arith.truncf %17 : vector<196x64xf32> to vector<196x64xbf16>
    %c16 = arith.constant 16 : index
    %c0_11 = arith.constant 0 : index
    %19 = vector.load %arg8[%c16, %c0_11] : memref<232x128xbf16, #tpu.memory_space<vmem>>, vector<196x64xbf16>
    tpu.vector_store %arg8[%c16, %c0_11], %18 {strides = array<i32>} : memref<232x128xbf16, #tpu.memory_space<vmem>>, vector<196x64xbf16>,
    %20 = vector.extract_strided_slice %14 {offsets = [197, 0], sizes = [196, 64], strides = [1, 1]} : vector<393x64xf32> to vector<196x64xf32>
    %21 = arith.truncf %20 : vector<196x64xf32> to vector<196x64xbf16>
    %c16_12 = arith.constant 16 : index
    %c64 = arith.constant 64 : index
    %22 = vector.load %arg8[%c16_12, %c64] : memref<232x128xbf16, #tpu.memory_space<vmem>>, vector<196x64xbf16>
    tpu.vector_store %arg8[%c16_12, %c64], %21 {strides = array<i32>} : memref<232x128xbf16, #tpu.memory_space<vmem>>, vector<196x64xbf16>,
    %23 = tpu.iota {dimensions = array<i32: 0>} : vector<196x1xi32>
    %c14_i32 = arith.constant 14 : i32
    %c0_i32 = arith.constant 0 : i32
    %24 = arith.cmpi eq, %c14_i32, %c0_i32 : i32
    %c1_i32 = arith.constant 1 : i32
    %25 = arith.select %24, %c1_i32, %c14_i32 : i32
    %26 = vector.broadcast %25 : i32 to vector<196x1xi32>
    %27 = arith.remsi %23, %26 : vector<196x1xi32>
    %c0_i32_13 = arith.constant 0 : i32
    %28 = vector.broadcast %c0_i32_13 : i32 to vector<196x1xi32>
    %29 = arith.cmpi ne, %27, %28 : vector<196x1xi32>
    %c0_i32_14 = arith.constant 0 : i32
    %30 = vector.broadcast %c0_i32_14 : i32 to vector<196x1xi32>
    %31 = arith.cmpi slt, %27, %30 : vector<196x1xi32>
    %c0_i32_15 = arith.constant 0 : i32
    %32 = arith.cmpi slt, %25, %c0_i32_15 : i32
    %33 = vector.broadcast %32 : i1 to vector<196x1xi1>
    %34 = vector.broadcast %33 : vector<196x1xi1> to vector<196x1xi1>
    %35 = arith.xori %31, %34 : vector<196x1xi1>
    %36 = arith.andi %35, %29 : vector<196x1xi1>
    %37 = vector.broadcast %25 : i32 to vector<196x1xi32>
    %38 = arith.addi %27, %37 : vector<196x1xi32>
    %39 = arith.select %36, %38, %27 : vector<196x1xi1>, vector<196x1xi32>
    %cst_16 = arith.constant 0.000000e+00 : f32
    %40 = vector.broadcast %cst_16 : f32 to vector<196x64xf32>
    %c1 = arith.constant 1 : index
    %c0_17 = arith.constant 0 : index
    %41 = vector.load %arg8[%c1, %c0_17] : memref<232x128xbf16, #tpu.memory_space<vmem>>, vector<196x128xbf16>
    %c1_i32_18 = arith.constant 1 : i32
    %42 = vector.broadcast %c1_i32_18 : i32 to vector<196x1xi32>
    %43 = arith.cmpi sge, %39, %42 : vector<196x1xi32>
    %cst_19 = arith.constant 0.000000e+00 : bf16
    %44 = vector.broadcast %cst_19 : bf16 to vector<196x128xbf16>
    %45 = vector.shape_cast %43 : vector<196x1xi1> to vector<196x1xi1>
    %46 = vector.broadcast %45 : vector<196x1xi1> to vector<196x128xi1>
    %47 = arith.select %46, %41, %44 : vector<196x128xi1>, vector<196x128xbf16>
    %c0_20 = arith.constant 0 : index
    %c0_21 = arith.constant 0 : index
    %c0_22 = arith.constant 0 : index
    %48 = vector.load %arg4[%c0_20, %c0_21, %c0_22] : memref<9x128x64xbf16, #tpu.memory_space<vmem>>, vector<1x128x64xbf16>
    %49 = vector.shape_cast %48 : vector<1x128x64xbf16> to vector<128x64xbf16>
    %cst_23 = arith.constant dense<0.000000e+00> : vector<196x64xf32>
    %50 = tpu.matmul %47, %49, %cst_23 {dimension_numbers = #tpu.dot_dimension_numbers<[1], [0], [0], [1], [0, 0, 1, 1], [], []>} : vector<196x128xbf16>, vector<128x64xbf16>, vector<196x64xf32> -> vector<196x64xf32>
    %51 = arith.addf %40, %50 : vector<196x64xf32>
    %c2 = arith.constant 2 : index
    %c0_24 = arith.constant 0 : index
    %52 = vector.load %arg8[%c2, %c0_24] : memref<232x128xbf16, #tpu.memory_space<vmem>>, vector<196x128xbf16>
    %c1_25 = arith.constant 1 : index
    %c0_26 = arith.constant 0 : index
    %c0_27 = arith.constant 0 : index
    %53 = vector.load %arg4[%c1_25, %c0_26, %c0_27] : memref<9x128x64xbf16, #tpu.memory_space<vmem>>, vector<1x128x64xbf16>
    %54 = vector.shape_cast %53 : vector<1x128x64xbf16> to vector<128x64xbf16>
    %cst_28 = arith.constant dense<0.000000e+00> : vector<196x64xf32>
    %55 = tpu.matmul %52, %54, %cst_28 {dimension_numbers = #tpu.dot_dimension_numbers<[1], [0], [0], [1], [0, 0, 1, 1], [], []>} : vector<196x128xbf16>, vector<128x64xbf16>, vector<196x64xf32> -> vector<196x64xf32>
    %56 = arith.addf %51, %55 : vector<196x64xf32>
    %c3 = arith.constant 3 : index
    %c0_29 = arith.constant 0 : index
    %57 = vector.load %arg8[%c3, %c0_29] : memref<232x128xbf16, #tpu.memory_space<vmem>>, vector<196x128xbf16>
    %c12_i32 = arith.constant 12 : i32
    %58 = vector.broadcast %c12_i32 : i32 to vector<196x1xi32>
    %59 = arith.cmpi sle, %39, %58 : vector<196x1xi32>
    %cst_30 = arith.constant 0.000000e+00 : bf16
    %60 = vector.broadcast %cst_30 : bf16 to vector<196x128xbf16>
    %61 = vector.shape_cast %59 : vector<196x1xi1> to vector<196x1xi1>
    %62 = vector.broadcast %61 : vector<196x1xi1> to vector<196x128xi1>
    %63 = arith.select %62, %57, %60 : vector<196x128xi1>, vector<196x128xbf16>
    %c2_31 = arith.constant 2 : index
    %c0_32 = arith.constant 0 : index
    %c0_33 = arith.constant 0 : index
    %64 = vector.load %arg4[%c2_31, %c0_32, %c0_33] : memref<9x128x64xbf16, #tpu.memory_space<vmem>>, vector<1x128x64xbf16>
    %65 = vector.shape_cast %64 : vector<1x128x64xbf16> to vector<128x64xbf16>
    %cst_34 = arith.constant dense<0.000000e+00> : vector<196x64xf32>
    %66 = tpu.matmul %63, %65, %cst_34 {dimension_numbers = #tpu.dot_dimension_numbers<[1], [0], [0], [1], [0, 0, 1, 1], [], []>} : vector<196x128xbf16>, vector<128x64xbf16>, vector<196x64xf32> -> vector<196x64xf32>
    %67 = arith.addf %56, %66 : vector<196x64xf32>
    %c15 = arith.constant 15 : index
    %c0_35 = arith.constant 0 : index
    %68 = vector.load %arg8[%c15, %c0_35] : memref<232x128xbf16, #tpu.memory_space<vmem>>, vector<196x128xbf16>
    %c1_i32_36 = arith.constant 1 : i32
    %69 = vector.broadcast %c1_i32_36 : i32 to vector<196x1xi32>
    %70 = arith.cmpi sge, %39, %69 : vector<196x1xi32>
    %cst_37 = arith.constant 0.000000e+00 : bf16
    %71 = vector.broadcast %cst_37 : bf16 to vector<196x128xbf16>
    %72 = vector.shape_cast %70 : vector<196x1xi1> to vector<196x1xi1>
    %73 = vector.broadcast %72 : vector<196x1xi1> to vector<196x128xi1>
    %74 = arith.select %73, %68, %71 : vector<196x128xi1>, vector<196x128xbf16>
    %c3_38 = arith.constant 3 : index
    %c0_39 = arith.constant 0 : index
    %c0_40 = arith.constant 0 : index
    %75 = vector.load %arg4[%c3_38, %c0_39, %c0_40] : memref<9x128x64xbf16, #tpu.memory_space<vmem>>, vector<1x128x64xbf16>
    %76 = vector.shape_cast %75 : vector<1x128x64xbf16> to vector<128x64xbf16>
    %cst_41 = arith.constant dense<0.000000e+00> : vector<196x64xf32>
    %77 = tpu.matmul %74, %76, %cst_41 {dimension_numbers = #tpu.dot_dimension_numbers<[1], [0], [0], [1], [0, 0, 1, 1], [], []>} : vector<196x128xbf16>, vector<128x64xbf16>, vector<196x64xf32> -> vector<196x64xf32>
    %78 = arith.addf %67, %77 : vector<196x64xf32>
    %c16_42 = arith.constant 16 : index
    %c0_43 = arith.constant 0 : index
    %79 = vector.load %arg8[%c16_42, %c0_43] : memref<232x128xbf16, #tpu.memory_space<vmem>>, vector<196x128xbf16>
    %c4 = arith.constant 4 : index
    %c0_44 = arith.constant 0 : index
    %c0_45 = arith.constant 0 : index
    %80 = vector.load %arg4[%c4, %c0_44, %c0_45] : memref<9x128x64xbf16, #tpu.memory_space<vmem>>, vector<1x128x64xbf16>
    %81 = vector.shape_cast %80 : vector<1x128x64xbf16> to vector<128x64xbf16>
    %cst_46 = arith.constant dense<0.000000e+00> : vector<196x64xf32>
    %82 = tpu.matmul %79, %81, %cst_46 {dimension_numbers = #tpu.dot_dimension_numbers<[1], [0], [0], [1], [0, 0, 1, 1], [], []>} : vector<196x128xbf16>, vector<128x64xbf16>, vector<196x64xf32> -> vector<196x64xf32>
    %83 = arith.addf %78, %82 : vector<196x64xf32>
    %c17 = arith.constant 17 : index
    %c0_47 = arith.constant 0 : index
    %84 = vector.load %arg8[%c17, %c0_47] : memref<232x128xbf16, #tpu.memory_space<vmem>>, vector<196x128xbf16>
    %c12_i32_48 = arith.constant 12 : i32
    %85 = vector.broadcast %c12_i32_48 : i32 to vector<196x1xi32>
    %86 = arith.cmpi sle, %39, %85 : vector<196x1xi32>
    %cst_49 = arith.constant 0.000000e+00 : bf16
    %87 = vector.broadcast %cst_49 : bf16 to vector<196x128xbf16>
    %88 = vector.shape_cast %86 : vector<196x1xi1> to vector<196x1xi1>
    %89 = vector.broadcast %88 : vector<196x1xi1> to vector<196x128xi1>
    %90 = arith.select %89, %84, %87 : vector<196x128xi1>, vector<196x128xbf16>
    %c5 = arith.constant 5 : index
    %c0_50 = arith.constant 0 : index
    %c0_51 = arith.constant 0 : index
    %91 = vector.load %arg4[%c5, %c0_50, %c0_51] : memref<9x128x64xbf16, #tpu.memory_space<vmem>>, vector<1x128x64xbf16>
    %92 = vector.shape_cast %91 : vector<1x128x64xbf16> to vector<128x64xbf16>
    %cst_52 = arith.constant dense<0.000000e+00> : vector<196x64xf32>
    %93 = tpu.matmul %90, %92, %cst_52 {dimension_numbers = #tpu.dot_dimension_numbers<[1], [0], [0], [1], [0, 0, 1, 1], [], []>} : vector<196x128xbf16>, vector<128x64xbf16>, vector<196x64xf32> -> vector<196x64xf32>
    %94 = arith.addf %83, %93 : vector<196x64xf32>
    %c29 = arith.constant 29 : index
    %c0_53 = arith.constant 0 : index
    %95 = vector.load %arg8[%c29, %c0_53] : memref<232x128xbf16, #tpu.memory_space<vmem>>, vector<196x128xbf16>
    %c1_i32_54 = arith.constant 1 : i32
    %96 = vector.broadcast %c1_i32_54 : i32 to vector<196x1xi32>
    %97 = arith.cmpi sge, %39, %96 : vector<196x1xi32>
    %cst_55 = arith.constant 0.000000e+00 : bf16
    %98 = vector.broadcast %cst_55 : bf16 to vector<196x128xbf16>
    %99 = vector.shape_cast %97 : vector<196x1xi1> to vector<196x1xi1>
    %100 = vector.broadcast %99 : vector<196x1xi1> to vector<196x128xi1>
    %101 = arith.select %100, %95, %98 : vector<196x128xi1>, vector<196x128xbf16>
    %c6 = arith.constant 6 : index
    %c0_56 = arith.constant 0 : index
    %c0_57 = arith.constant 0 : index
    %102 = vector.load %arg4[%c6, %c0_56, %c0_57] : memref<9x128x64xbf16, #tpu.memory_space<vmem>>, vector<1x128x64xbf16>
    %103 = vector.shape_cast %102 : vector<1x128x64xbf16> to vector<128x64xbf16>
    %cst_58 = arith.constant dense<0.000000e+00> : vector<196x64xf32>
    %104 = tpu.matmul %101, %103, %cst_58 {dimension_numbers = #tpu.dot_dimension_numbers<[1], [0], [0], [1], [0, 0, 1, 1], [], []>} : vector<196x128xbf16>, vector<128x64xbf16>, vector<196x64xf32> -> vector<196x64xf32>
    %105 = arith.addf %94, %104 : vector<196x64xf32>
    %c30 = arith.constant 30 : index
    %c0_59 = arith.constant 0 : index
    %106 = vector.load %arg8[%c30, %c0_59] : memref<232x128xbf16, #tpu.memory_space<vmem>>, vector<196x128xbf16>
    %c7 = arith.constant 7 : index
    %c0_60 = arith.constant 0 : index
    %c0_61 = arith.constant 0 : index
    %107 = vector.load %arg4[%c7, %c0_60, %c0_61] : memref<9x128x64xbf16, #tpu.memory_space<vmem>>, vector<1x128x64xbf16>
    %108 = vector.shape_cast %107 : vector<1x128x64xbf16> to vector<128x64xbf16>
    %cst_62 = arith.constant dense<0.000000e+00> : vector<196x64xf32>
    %109 = tpu.matmul %106, %108, %cst_62 {dimension_numbers = #tpu.dot_dimension_numbers<[1], [0], [0], [1], [0, 0, 1, 1], [], []>} : vector<196x128xbf16>, vector<128x64xbf16>, vector<196x64xf32> -> vector<196x64xf32>
    %110 = arith.addf %105, %109 : vector<196x64xf32>
    %c31 = arith.constant 31 : index
    %c0_63 = arith.constant 0 : index
    %111 = vector.load %arg8[%c31, %c0_63] : memref<232x128xbf16, #tpu.memory_space<vmem>>, vector<196x128xbf16>
    %c12_i32_64 = arith.constant 12 : i32
    %112 = vector.broadcast %c12_i32_64 : i32 to vector<196x1xi32>
    %113 = arith.cmpi sle, %39, %112 : vector<196x1xi32>
    %cst_65 = arith.constant 0.000000e+00 : bf16
    %114 = vector.broadcast %cst_65 : bf16 to vector<196x128xbf16>
    %115 = vector.shape_cast %113 : vector<196x1xi1> to vector<196x1xi1>
    %116 = vector.broadcast %115 : vector<196x1xi1> to vector<196x128xi1>
    %117 = arith.select %116, %111, %114 : vector<196x128xi1>, vector<196x128xbf16>
    %c8 = arith.constant 8 : index
    %c0_66 = arith.constant 0 : index
    %c0_67 = arith.constant 0 : index
    %118 = vector.load %arg4[%c8, %c0_66, %c0_67] : memref<9x128x64xbf16, #tpu.memory_space<vmem>>, vector<1x128x64xbf16>
    %119 = vector.shape_cast %118 : vector<1x128x64xbf16> to vector<128x64xbf16>
    %cst_68 = arith.constant dense<0.000000e+00> : vector<196x64xf32>
    %120 = tpu.matmul %117, %119, %cst_68 {dimension_numbers = #tpu.dot_dimension_numbers<[1], [0], [0], [1], [0, 0, 1, 1], [], []>} : vector<196x128xbf16>, vector<128x64xbf16>, vector<196x64xf32> -> vector<196x64xf32>
    %121 = arith.addf %110, %120 : vector<196x64xf32>
    %122 = vector.extract_strided_slice %14 {offsets = [0, 0], sizes = [1, 64], strides = [1, 1]} : vector<393x64xf32> to vector<1x64xf32>
    %123 = arith.truncf %122 : vector<1x64xf32> to vector<1x64xbf16>
    %c4_69 = arith.constant 4 : index
    %c0_70 = arith.constant 0 : index
    %c0_71 = arith.constant 0 : index
    %124 = vector.load %arg4[%c4_69, %c0_70, %c0_71] : memref<9x128x64xbf16, #tpu.memory_space<vmem>>, vector<1x128x64xbf16>
    %125 = vector.shape_cast %124 : vector<1x128x64xbf16> to vector<128x64xbf16>
    %126 = vector.extract_strided_slice %125 {offsets = [0, 0], sizes = [64, 64], strides = [1, 1]} : vector<128x64xbf16> to vector<64x64xbf16>
    %cst_72 = arith.constant dense<0.000000e+00> : vector<1x64xf32>
    %127 = tpu.matmul %123, %126, %cst_72 {dimension_numbers = #tpu.dot_dimension_numbers<[1], [0], [0], [1], [0, 0, 1, 1], [], []>} : vector<1x64xbf16>, vector<64x64xbf16>, vector<1x64xf32> -> vector<1x64xf32>
    %128 = vector.extract_strided_slice %125 {offsets = [64, 0], sizes = [64, 64], strides = [1, 1]} : vector<128x64xbf16> to vector<64x64xbf16>
    %cst_73 = arith.constant dense<0.000000e+00> : vector<1x64xf32>
    %129 = tpu.matmul %123, %128, %cst_73 {dimension_numbers = #tpu.dot_dimension_numbers<[1], [0], [0], [1], [0, 0, 1, 1], [], []>} : vector<1x64xbf16>, vector<64x64xbf16>, vector<1x64xf32> -> vector<1x64xf32>
    %130 = arith.addf %127, %129 : vector<1x64xf32>
    %cst_74 = arith.constant -1.702000e+00 : f32
    %131 = vector.broadcast %cst_74 : f32 to vector<196x64xf32>
    %132 = arith.mulf %131, %121 : vector<196x64xf32>
    %133 = math.exp %132 : vector<196x64xf32>
    %cst_75 = arith.constant 1.000000e+00 : f32
    %134 = vector.broadcast %cst_75 : f32 to vector<196x64xf32>
    %135 = arith.addf %134, %133 : vector<196x64xf32>
    %136 = tpu.reciprocal %135 {approx = true} : vector<196x64xf32> -> vector<196x64xf32>
    %137 = arith.mulf %121, %136 : vector<196x64xf32>
    %138 = arith.truncf %137 : vector<196x64xf32> to vector<196x64xbf16>
    %c0_76 = arith.constant 0 : index
    %c0_77 = arith.constant 0 : index
    %139 = vector.load %arg5[%c0_76, %c0_77] : memref<64x768xbf16, #tpu.memory_space<vmem>>, vector<64x768xbf16>
    %cst_78 = arith.constant dense<0.000000e+00> : vector<196x768xf32>
    %140 = tpu.matmul %138, %139, %cst_78 {dimension_numbers = #tpu.dot_dimension_numbers<[1], [0], [0], [1], [0, 0, 1, 1], [], []>} : vector<196x64xbf16>, vector<64x768xbf16>, vector<196x768xf32> -> vector<196x768xf32>
    %c0_79 = arith.constant 0 : index
    %c0_80 = arith.constant 0 : index
    %141 = vector.load %arg6[%c0_79, %c0_80] : memref<1x768xf32, #tpu.memory_space<vmem>>, vector<1x768xf32>
    %142 = vector.broadcast %141 : vector<1x768xf32> to vector<196x768xf32>
    %143 = arith.addf %140, %142 : vector<196x768xf32>
    %cst_81 = arith.constant -1.702000e+00 : f32
    %144 = vector.broadcast %cst_81 : f32 to vector<1x64xf32>
    %145 = arith.mulf %144, %130 : vector<1x64xf32>
    %146 = math.exp %145 : vector<1x64xf32>
    %cst_82 = arith.constant 1.000000e+00 : f32
    %147 = vector.broadcast %cst_82 : f32 to vector<1x64xf32>
    %148 = arith.addf %147, %146 : vector<1x64xf32>
    %149 = tpu.reciprocal %148 {approx = true} : vector<1x64xf32> -> vector<1x64xf32>
    %150 = arith.mulf %130, %149 : vector<1x64xf32>
    %151 = arith.truncf %150 : vector<1x64xf32> to vector<1x64xbf16>
    %c0_83 = arith.constant 0 : index
    %c0_84 = arith.constant 0 : index
    %152 = vector.load %arg5[%c0_83, %c0_84] : memref<64x768xbf16, #tpu.memory_space<vmem>>, vector<64x768xbf16>
    %cst_85 = arith.constant dense<0.000000e+00> : vector<1x768xf32>
    %153 = tpu.matmul %151, %152, %cst_85 {dimension_numbers = #tpu.dot_dimension_numbers<[1], [0], [0], [1], [0, 0, 1, 1], [], []>} : vector<1x64xbf16>, vector<64x768xbf16>, vector<1x768xf32> -> vector<1x768xf32>
    %c0_86 = arith.constant 0 : index
    %c0_87 = arith.constant 0 : index
    %154 = vector.load %arg6[%c0_86, %c0_87] : memref<1x768xf32, #tpu.memory_space<vmem>>, vector<1x768xf32>
    %155 = arith.addf %153, %154 : vector<1x768xf32>
    %c0_88 = arith.constant 0 : index
    %c0_89 = arith.constant 0 : index
    %c0_90 = arith.constant 0 : index
    %156 = vector.load %arg7[%c0_88, %c0_89, %c0_90] : memref<1x393x768xf32, #tpu.memory_space<vmem>>, vector<1x1x768xf32>
    %157 = vector.shape_cast %156 : vector<1x1x768xf32> to vector<1x768xf32>
    %158 = vector.shape_cast %155 : vector<1x768xf32> to vector<1x1x768xf32>
    tpu.vector_store %arg7[%c0_88, %c0_89, %c0_90], %158 {strides = array<i32>} : memref<1x393x768xf32, #tpu.memory_space<vmem>>, vector<1x1x768xf32>,
    %c0_91 = arith.constant 0 : index
    %c1_92 = arith.constant 1 : index
    %c0_93 = arith.constant 0 : index
    %159 = vector.load %arg7[%c0_91, %c1_92, %c0_93] : memref<1x393x768xf32, #tpu.memory_space<vmem>>, vector<1x196x768xf32>
    %160 = vector.shape_cast %159 : vector<1x196x768xf32> to vector<196x768xf32>
    %161 = vector.shape_cast %143 : vector<196x768xf32> to vector<1x196x768xf32>
    tpu.vector_store %arg7[%c0_91, %c1_92, %c0_93], %161 {strides = array<i32>} : memref<1x393x768xf32, #tpu.memory_space<vmem>>, vector<1x196x768xf32>,
    %c0_94 = arith.constant 0 : index
    %c197 = arith.constant 197 : index
    %c0_95 = arith.constant 0 : index
    %162 = vector.load %arg7[%c0_94, %c197, %c0_95] : memref<1x393x768xf32, #tpu.memory_space<vmem>>, vector<1x196x768xf32>
    %163 = vector.shape_cast %162 : vector<1x196x768xf32> to vector<196x768xf32>
    %164 = vector.shape_cast %143 : vector<196x768xf32> to vector<1x196x768xf32>
    tpu.vector_store %arg7[%c0_94, %c197, %c0_95], %164 {strides = array<i32>} : memref<1x393x768xf32, #tpu.memory_space<vmem>>, vector<1x196x768xf32>,
    return
  }
  func.func @transform_0(%arg0: i32) -> (i32, i32, i32) {
    %c0_i32 = arith.constant 0 : i32
    %c0_i32_0 = arith.constant 0 : i32
    %c0_i32_1 = arith.constant 0 : i32
    return %arg0, %c0_i32, %c0_i32_0 : i32, i32, i32
  }
  func.func @transform_1(%arg0: i32) -> (i32, i32) {
    %c0_i32 = arith.constant 0 : i32
    %c0_i32_0 = arith.constant 0 : i32
    %c0_i32_1 = arith.constant 0 : i32
    return %c0_i32, %c0_i32_0 : i32, i32
  }
  func.func @transform_2(%arg0: i32) -> (i32, i32) {
    %c0_i32 = arith.constant 0 : i32
    %c0_i32_0 = arith.constant 0 : i32
    %c0_i32_1 = arith.constant 0 : i32
    return %c0_i32, %c0_i32_0 : i32, i32
  }
  func.func @transform_3(%arg0: i32) -> (i32, i32, i32) {
    %c0_i32 = arith.constant 0 : i32
    %c0_i32_0 = arith.constant 0 : i32
    %c0_i32_1 = arith.constant 0 : i32
    %c0_i32_2 = arith.constant 0 : i32
    return %c0_i32, %c0_i32_0, %c0_i32_1 : i32, i32, i32
  }
  func.func @transform_4(%arg0: i32) -> (i32, i32) {
    %c0_i32 = arith.constant 0 : i32
    %c0_i32_0 = arith.constant 0 : i32
    %c0_i32_1 = arith.constant 0 : i32
    return %c0_i32, %c0_i32_0 : i32, i32
  }
  func.func @transform_5(%arg0: i32) -> (i32, i32) {
    %c0_i32 = arith.constant 0 : i32
    %c0_i32_0 = arith.constant 0 : i32
    %c0_i32_1 = arith.constant 0 : i32
    return %c0_i32, %c0_i32_0 : i32, i32
  }
  func.func @transform_6(%arg0: i32) -> (i32, i32, i32) {
    %c0_i32 = arith.constant 0 : i32
    %c0_i32_0 = arith.constant 0 : i32
    %c0_i32_1 = arith.constant 0 : i32
    return %arg0, %c0_i32, %c0_i32_0 : i32, i32, i32
  }
}

</mosaic_0001>

<llo_original>
// kernel: convpass_2modal_forward.1
$region0: #{convpass_2modal_forward.1}
  #allocation0 [shape = 'u32[]', space=smem, size = 0x4, offset = 0x4, fixed_abs, tag = 'smem constant byte address 0x4 - core index']
  #allocation1 [shape = 'u32[144,128]{1,0:T(1,128)}', space=vmem, size = 0x12000, scoped, tag = 'internal scratch']
  #allocation2 [shape = 'bf16[232,128]{1,0:T(8,128)(2,1)}', space=vmem, size = 0xe800, scoped, tag = 'scratch operand']
  %s0 = inlined_call_operand.vmem [shape: f32[2,393,768], index: 0, kind: input, shape index: {}]
  %s1 = inlined_call_operand.vmem [shape: bf16[768,64], index: 1, kind: input, shape index: {}]
  %s2 = inlined_call_operand.vmem [shape: f32[1,64], index: 2, kind: input, shape index: {}]
  %s3 = inlined_call_operand.vmem [shape: bf16[9,128,64], index: 3, kind: input, shape index: {}]
  %s4 = inlined_call_operand.vmem [shape: bf16[64,768], index: 4, kind: input, shape index: {}]
  %s5 = inlined_call_operand.vmem [shape: f32[1,768], index: 5, kind: input, shape index: {}]
  %s6 = inlined_call_operand.vmem [shape: f32[2,393,768], index: 6, kind: output, shape index: {}]
  %s7 = sld [smem:[#allocation0]]
  $region57: #{convpass_2modal_forward.1} parent=0
    _
  %s9 = ssub.s32 1, %s7
  %s10 = scalar_select 0, %s9, %s7
  loop: start=0, step=1, limit=4
  $region2: #{convpass_2modal_forward.1} parent=0 // loop_pre_header
    _
  $region3: #{convpass_2modal_forward.1} parent=0 // loop_header
    %s12 = sphi 0, %s16
    %p13 = scmp.ge.s32.totalorder %s12, 4
    %s22 = sphi 0, %s24
    %s25 = sphi 0, %s22
    %s26 = sphi 0, %s25
    %s42 = sphi 0, %s26
    %s46 = sphi 0, %s46
    %s48 = sphi 0, %s46
    %s49 = sphi 0, %s48
    %s63 = sphi 0, %s49
    %s67 = sphi 0, %s67
    %s69 = sphi 0, %s67
    %s70 = sphi 0, %s69
    %s84 = sphi 0, %s70
    %s88 = sphi 0, %s88
    %s90 = sphi 0, %s88
    %s91 = sphi 0, %s90
    %s105 = sphi 0, %s91
    %s109 = sphi 0, %s109
    %s111 = sphi 0, %s109
    %s112 = sphi 0, %s111
    %s126 = sphi 0, %s112
    %s130 = sphi 0, %s130
    %s132 = sphi 0, %s130
    %s133 = sphi 0, %s132
    %s147 = sphi 0, %s133
    %s153 = sphi 0, %s155
    %s156 = sphi 0, %s153
    %s157 = sphi 0, %s156
    %s173 = sphi 0, %s157
  $region4: #{convpass_2modal_forward.1} parent=0 // loop_header_branch
    %15 = sbr.rel (%p13) target = $region8
  $region5: #{convpass_2modal_forward.1} parent=0 // loop_body
    %s17 = ssub.s32 %s12, 1
    %s18 = ssub.s32 %s12, 2
    %s19 = sadd.s32 %s12, 1
    %s20 = ssub.s32 %s12, %s19
    %p21 = scmp.eq.s32.totalorder %s20, 0
    %s23 = sadd.s32 %s22, 1
    %s24 = scalar_select %p21, %s22, %s23
    %p27 = pneg %p21
    %p28 = scmp.eq.s32.totalorder %s12, 1
    %p29 = por %p27, %p28
    %p30 = scmp.ne.s32.totalorder %s22, %s25
    %p31 = scmp.eq.s32.totalorder %s12, 0
    %p32 = por %p30, %p31
    %p33 = scmp.ne.s32.totalorder %s22, %s25
    %p34 = scmp.eq.s32.totalorder %s17, 1
    %p35 = por %p33, %p34
    %p36 = scmp.ne.s32.totalorder %s25, %s26
    %p37 = scmp.eq.s32.totalorder %s17, 0
    %p38 = por %p36, %p37
    %p39 = scmp.ne.s32.totalorder %s25, %s26
    %p40 = scmp.eq.s32.totalorder %s18, 1
    %p41 = por %p39, %p40
    %p43 = scmp.ne.s32.totalorder %s26, %s42
    %p44 = scmp.eq.s32.totalorder %s18, 0
    %p45 = por %p43, %p44
    %s47 = sadd.s32 %s46, 1
    %p50 = scmp.eq.s32.totalorder %s12, 1
    %p51 = scmp.ne.s32.totalorder %s46, %s48
    %p52 = scmp.eq.s32.totalorder %s12, 0
    %p53 = por %p51, %p52
    %p54 = scmp.ne.s32.totalorder %s46, %s48
    %p55 = scmp.eq.s32.totalorder %s17, 1
    %p56 = por %p54, %p55
    %p57 = scmp.ne.s32.totalorder %s48, %s49
    %p58 = scmp.eq.s32.totalorder %s17, 0
    %p59 = por %p57, %p58
    %p60 = scmp.ne.s32.totalorder %s48, %s49
    %p61 = scmp.eq.s32.totalorder %s18, 1
    %p62 = por %p60, %p61
    %p64 = scmp.ne.s32.totalorder %s49, %s63
    %p65 = scmp.eq.s32.totalorder %s18, 0
    %p66 = por %p64, %p65
    %s68 = sadd.s32 %s67, 1
    %p71 = scmp.eq.s32.totalorder %s12, 1
    %p72 = scmp.ne.s32.totalorder %s67, %s69
    %p73 = scmp.eq.s32.totalorder %s12, 0
    %p74 = por %p72, %p73
    %p75 = scmp.ne.s32.totalorder %s67, %s69
    %p76 = scmp.eq.s32.totalorder %s17, 1
    %p77 = por %p75, %p76
    %p78 = scmp.ne.s32.totalorder %s69, %s70
    %p79 = scmp.eq.s32.totalorder %s17, 0
    %p80 = por %p78, %p79
    %p81 = scmp.ne.s32.totalorder %s69, %s70
    %p82 = scmp.eq.s32.totalorder %s18, 1
    %p83 = por %p81, %p82
    %p85 = scmp.ne.s32.totalorder %s70, %s84
    %p86 = scmp.eq.s32.totalorder %s18, 0
    %p87 = por %p85, %p86
    %s89 = sadd.s32 %s88, 1
    %p92 = scmp.eq.s32.totalorder %s12, 1
    %p93 = scmp.ne.s32.totalorder %s88, %s90
    %p94 = scmp.eq.s32.totalorder %s12, 0
    %p95 = por %p93, %p94
    %p96 = scmp.ne.s32.totalorder %s88, %s90
    %p97 = scmp.eq.s32.totalorder %s17, 1
    %p98 = por %p96, %p97
    %p99 = scmp.ne.s32.totalorder %s90, %s91
    %p100 = scmp.eq.s32.totalorder %s17, 0
    %p101 = por %p99, %p100
    %p102 = scmp.ne.s32.totalorder %s90, %s91
    %p103 = scmp.eq.s32.totalorder %s18, 1
    %p104 = por %p102, %p103
    %p106 = scmp.ne.s32.totalorder %s91, %s105
    %p107 = scmp.eq.s32.totalorder %s18, 0
    %p108 = por %p106, %p107
    %s110 = sadd.s32 %s109, 1
    %p113 = scmp.eq.s32.totalorder %s12, 1
    %p114 = scmp.ne.s32.totalorder %s109, %s111
    %p115 = scmp.eq.s32.totalorder %s12, 0
    %p116 = por %p114, %p115
    %p117 = scmp.ne.s32.totalorder %s109, %s111
    %p118 = scmp.eq.s32.totalorder %s17, 1
    %p119 = por %p117, %p118
    %p120 = scmp.ne.s32.totalorder %s111, %s112
    %p121 = scmp.eq.s32.totalorder %s17, 0
    %p122 = por %p120, %p121
    %p123 = scmp.ne.s32.totalorder %s111, %s112
    %p124 = scmp.eq.s32.totalorder %s18, 1
    %p125 = por %p123, %p124
    %p127 = scmp.ne.s32.totalorder %s112, %s126
    %p128 = scmp.eq.s32.totalorder %s18, 0
    %p129 = por %p127, %p128
    %s131 = sadd.s32 %s130, 1
    %p134 = scmp.eq.s32.totalorder %s12, 1
    %p135 = scmp.ne.s32.totalorder %s130, %s132
    %p136 = scmp.eq.s32.totalorder %s12, 0
    %p137 = por %p135, %p136
    %p138 = scmp.ne.s32.totalorder %s130, %s132
    %p139 = scmp.eq.s32.totalorder %s17, 1
    %p140 = por %p138, %p139
    %p141 = scmp.ne.s32.totalorder %s132, %s133
    %p142 = scmp.eq.s32.totalorder %s17, 0
    %p143 = por %p141, %p142
    %p144 = scmp.ne.s32.totalorder %s132, %s133
    %p145 = scmp.eq.s32.totalorder %s18, 1
    %p146 = por %p144, %p145
    %p148 = scmp.ne.s32.totalorder %s133, %s147
    %p149 = scmp.eq.s32.totalorder %s18, 0
    %p150 = por %p148, %p149
    %s151 = ssub.s32 %s12, %s19
    %p152 = scmp.eq.s32.totalorder %s151, 0
    %s154 = sadd.s32 %s153, 1
    %s155 = scalar_select %p152, %s153, %s154
    %p158 = pneg %p152
    %p159 = scmp.eq.s32.totalorder %s12, 1
    %p160 = por %p158, %p159
    %p161 = scmp.ne.s32.totalorder %s153, %s156
    %p162 = scmp.eq.s32.totalorder %s12, 0
    %p163 = por %p161, %p162
    %p164 = scmp.ne.s32.totalorder %s153, %s156
    %p165 = scmp.eq.s32.totalorder %s17, 1
    %p166 = por %p164, %p165
    %p167 = scmp.ne.s32.totalorder %s156, %s157
    %p168 = scmp.eq.s32.totalorder %s17, 0
    %p169 = por %p167, %p168
    %p170 = scmp.ne.s32.totalorder %s156, %s157
    %p171 = scmp.eq.s32.totalorder %s18, 1
    %p172 = por %p170, %p171
    %p174 = scmp.ne.s32.totalorder %s157, %s173
    %p175 = scmp.eq.s32.totalorder %s18, 0
    %p176 = por %p174, %p175
    %p177 = scmp.le.s32.totalorder 1, %s12
    %p178 = scmp.lt.s32.totalorder %s12, 3
    %p179 = pnand %p177, %p178
    %p180 = pneg %p179
    // Predicated region
    $region9: #{convpass_2modal_forward.1} parent=5 // pred_check
      _
    $region10: #{convpass_2modal_forward.1} parent=5 // pred_check_branch
      %182 = sbr.rel (%p179) target = $region12
    $region11: #{convpass_2modal_forward.1} parent=5 // pred_region
      %s183 = ssub.s32 %s12, 1
      // Predicated region
      $region13: #{convpass_2modal_forward.1} parent=11 // pred_check
        %p184 = pneg %p59
      $region14: #{convpass_2modal_forward.1} parent=11 // pred_check_branch
        %186 = sbr.rel (%p184) target = $region16
      $region15: #{convpass_2modal_forward.1} parent=11 // pred_region
        _
      $region16: #{convpass_2modal_forward.1} parent=11 // pred_fallthru
        _
      // Predicated region
      $region17: #{convpass_2modal_forward.1} parent=11 // pred_check
        %p187 = pneg %p80
      $region18: #{convpass_2modal_forward.1} parent=11 // pred_check_branch
        %189 = sbr.rel (%p187) target = $region20
      $region19: #{convpass_2modal_forward.1} parent=11 // pred_region
        _
      $region20: #{convpass_2modal_forward.1} parent=11 // pred_fallthru
        _
      // Predicated region
      $region21: #{convpass_2modal_forward.1} parent=11 // pred_check
        %p190 = pneg %p101
      $region22: #{convpass_2modal_forward.1} parent=11 // pred_check_branch
        %192 = sbr.rel (%p190) target = $region24
      $region23: #{convpass_2modal_forward.1} parent=11 // pred_region
        _
      $region24: #{convpass_2modal_forward.1} parent=11 // pred_fallthru
        _
      // Predicated region
      $region25: #{convpass_2modal_forward.1} parent=11 // pred_check
        %p193 = pneg %p122
      $region26: #{convpass_2modal_forward.1} parent=11 // pred_check_branch
        %195 = sbr.rel (%p193) target = $region28
      $region27: #{convpass_2modal_forward.1} parent=11 // pred_region
        _
      $region28: #{convpass_2modal_forward.1} parent=11 // pred_fallthru
        _
      // Predicated region
      $region29: #{convpass_2modal_forward.1} parent=11 // pred_check
        %p196 = pneg %p143
      $region30: #{convpass_2modal_forward.1} parent=11 // pred_check_branch
        %198 = sbr.rel (%p196) target = $region32
      $region31: #{convpass_2modal_forward.1} parent=11 // pred_region
        _
      $region32: #{convpass_2modal_forward.1} parent=11 // pred_fallthru
        _
    $region12: #{convpass_2modal_forward.1} parent=5 // pred_fallthru
      _
    %p199 = scmp.lt.s32.totalorder %s12, 2
    // Predicated region
    $region33: #{convpass_2modal_forward.1} parent=5 // pred_check
      %p200 = pneg %p199
    $region34: #{convpass_2modal_forward.1} parent=5 // pred_check_branch
      %202 = sbr.rel (%p200) target = $region36
    $region35: #{convpass_2modal_forward.1} parent=5 // pred_region
      // Predicated region
      $region37: #{convpass_2modal_forward.1} parent=35 // pred_check
        %p203 = pneg %p32
      $region38: #{convpass_2modal_forward.1} parent=35 // pred_check_branch
        %205 = sbr.rel (%p203) target = $region40
      $region39: #{convpass_2modal_forward.1} parent=35 // pred_region
        %p206 = scmp.lt.s32.totalorder %s12, 1
        %s207 = scalar_select %p206, %s12, 1
        %s208 = smul.addr %s207, 300
        %s209 = smul.addr %s208, 8
        %s210 = scalar_lea.vmem %s0, %s209
      $region40: #{convpass_2modal_forward.1} parent=35 // pred_fallthru
        _
    $region36: #{convpass_2modal_forward.1} parent=5 // pred_fallthru
      _
    %p211 = scmp.le.s32.totalorder 1, %s12
    %p212 = scmp.lt.s32.totalorder %s12, 3
    %p213 = pnand %p211, %p212
    %p214 = pneg %p213
    // Predicated region
    $region41: #{convpass_2modal_forward.1} parent=5 // pred_check
      _
    $region42: #{convpass_2modal_forward.1} parent=5 // pred_check_branch
      %216 = sbr.rel (%p213) target = $region44
    $region43: #{convpass_2modal_forward.1} parent=5 // pred_region
      %s217 = ssub.s32 %s12, 1
      %p218 = scmp.lt.s32.totalorder %s17, 1
      %s219 = scalar_select %p218, %s17, 1
      %s220 = smul.addr %s219, 300
      %s221 = smul.addr %s220, 8
      %s222 = scalar_lea.vmem %s0, %s221
      %p223 = pneg %p38
      %p224 = pneg %p35
      %p225 = pneg %p59
      %p226 = pneg %p56
      %p227 = pneg %p80
      %p228 = pneg %p77
      %p229 = pneg %p101
      %p230 = pneg %p98
      %p231 = pneg %p122
      %p232 = pneg %p119
      %p233 = pneg %p143
      %p234 = pneg %p140
      %p235 = pneg %p169
      %p236 = pneg %p166
      %p237 = scmp.lt.s32.totalorder %s17, 1
      %s238 = scalar_select %p237, %s17, 1
      %s239 = smul.addr %s238, 300
      %s240 = smul.addr %s239, 8
      %s241 = scalar_lea.vmem %s6, %s240
      %p242 = scmp.lt.s32.totalorder %s17, 1
      %s243 = scalar_select %p242, %s17, 1
      %s244 = smul.addr %s243, 300
      %s245 = smul.addr %s244, 8
      %s246 = scalar_lea.vmem %s0, %s245
      %p247 = scmp.lt.s32.totalorder %s17, 1
      %s248 = scalar_select %p247, %s17, 1
      %s249 = smul.addr %s248, 300
      %s250 = smul.addr %s249, 8
      %s251 = scalar_lea.vmem %s6, %s250
      %v255 = vld [vmem:[%s246] sm:$0xff]
      %v256 = vld [vmem:[%s246 + $0x8] sm:$0xff]
      %v257 = vld [vmem:[%s246 + $0x10] sm:$0xff]
      %v258 = vld [vmem:[%s246 + $0x18] sm:$0xff]
      %v259 = vld [vmem:[%s246 + $0x20] sm:$0xff]
      %v260 = vld [vmem:[%s246 + $0x28] sm:$0xff]
      %v261 = vld [vmem:[%s246 + $0x30] sm:$0xff]
      %v262 = vld [vmem:[%s246 + $0x38] sm:$0xff]
      %v263 = vld [vmem:[%s246 + $0x40] sm:$0xff]
      %v264 = vld [vmem:[%s246 + $0x48] sm:$0xff]
      %v265 = vld [vmem:[%s246 + $0x50] sm:$0xff]
      %v266 = vld [vmem:[%s246 + $0x58] sm:$0xff]
      %v267 = vld [vmem:[%s246 + $0x60] sm:$0xff]
      %v268 = vld [vmem:[%s246 + $0x68] sm:$0xff]
      %v269 = vld [vmem:[%s246 + $0x70] sm:$0xff]
      %v270 = vld [vmem:[%s246 + $0x78] sm:$0xff]
      %v271 = vld [vmem:[%s246 + $0x80] sm:$0xff]
      %v272 = vld [vmem:[%s246 + $0x88] sm:$0xff]
      %v273 = vld [vmem:[%s246 + $0x90] sm:$0xff]
      %v274 = vld [vmem:[%s246 + $0x98] sm:$0xff]
      %v275 = vld [vmem:[%s246 + $0xa0] sm:$0xff]
      %v276 = vld [vmem:[%s246 + $0xa8] sm:$0xff]
      %v277 = vld [vmem:[%s246 + $0xb0] sm:$0xff]
      %v278 = vld [vmem:[%s246 + $0xb8] sm:$0xff]
      %v279 = vld [vmem:[%s246 + $0xc0] sm:$0xff]
      %v280 = vld [vmem:[%s246 + $0xc8] sm:$0xff]
      %v281 = vld [vmem:[%s246 + $0xd0] sm:$0xff]
      %v282 = vld [vmem:[%s246 + $0xd8] sm:$0xff]
      %v283 = vld [vmem:[%s246 + $0xe0] sm:$0xff]
      %v284 = vld [vmem:[%s246 + $0xe8] sm:$0xff]
      %v285 = vld [vmem:[%s246 + $0xf0] sm:$0xff]
      %v286 = vld [vmem:[%s246 + $0xf8] sm:$0xff]
      %v287 = vld [vmem:[%s246 + $0x100] sm:$0xff]
      %v288 = vld [vmem:[%s246 + $0x108] sm:$0xff]
      %v289 = vld [vmem:[%s246 + $0x110] sm:$0xff]
      %v290 = vld [vmem:[%s246 + $0x118] sm:$0xff]
      %v291 = vld [vmem:[%s246 + $0x120] sm:$0xff]
      %v292 = vld [vmem:[%s246 + $0x128] sm:$0xff]
      %v293 = vld [vmem:[%s246 + $0x130] sm:$0xff]
      %v294 = vld [vmem:[%s246 + $0x138] sm:$0xff]
      %v295 = vld [vmem:[%s246 + $0x140] sm:$0xff]
      %v296 = vld [vmem:[%s246 + $0x148] sm:$0xff]
      %v297 = vld [vmem:[%s246 + $0x150] sm:$0xff]
      %v298 = vld [vmem:[%s246 + $0x158] sm:$0xff]
      %v299 = vld [vmem:[%s246 + $0x160] sm:$0xff]
      %v300 = vld [vmem:[%s246 + $0x168] sm:$0xff]
      %v301 = vld [vmem:[%s246 + $0x170] sm:$0xff]
      %v302 = vld [vmem:[%s246 + $0x178] sm:$0xff]
      %v303 = vld [vmem:[%s246 + $0x180] sm:$0xff]
      %v304 = vld [vmem:[%s246 + $0x188] sm:$0xff]
      %v305 = vld [vmem:[%s246 + $0x190] sm:$0xff]
      %v306 = vld [vmem:[%s246 + $0x198] sm:$0xff]
      %v307 = vld [vmem:[%s246 + $0x1a0] sm:$0xff]
      %v308 = vld [vmem:[%s246 + $0x1a8] sm:$0xff]
      %v309 = vld [vmem:[%s246 + $0x1b0] sm:$0xff]
      %v310 = vld [vmem:[%s246 + $0x1b8] sm:$0xff]
      %v311 = vld [vmem:[%s246 + $0x1c0] sm:$0xff]
      %v312 = vld [vmem:[%s246 + $0x1c8] sm:$0xff]
      %v313 = vld [vmem:[%s246 + $0x1d0] sm:$0xff]
      %v314 = vld [vmem:[%s246 + $0x1d8] sm:$0xff]
      %v315 = vld [vmem:[%s246 + $0x1e0] sm:$0xff]
      %v316 = vld [vmem:[%s246 + $0x1e8] sm:$0xff]
      %v317 = vld [vmem:[%s246 + $0x1f0] sm:$0xff]
      %v318 = vld [vmem:[%s246 + $0x1f8] sm:$0xff]
      %v319 = vld [vmem:[%s246 + $0x200] sm:$0xff]
      %v320 = vld [vmem:[%s246 + $0x208] sm:$0xff]
      %v321 = vld [vmem:[%s246 + $0x210] sm:$0xff]
      %v322 = vld [vmem:[%s246 + $0x218] sm:$0xff]
      %v323 = vld [vmem:[%s246 + $0x220] sm:$0xff]
      %v324 = vld [vmem:[%s246 + $0x228] sm:$0xff]
      %v325 = vld [vmem:[%s246 + $0x230] sm:$0xff]
      %v326 = vld [vmem:[%s246 + $0x238] sm:$0xff]
      %v327 = vld [vmem:[%s246 + $0x240] sm:$0xff]
      %v328 = vld [vmem:[%s246 + $0x248] sm:$0xff]
      %v329 = vld [vmem:[%s246 + $0x250] sm:$0xff]
      %v330 = vld [vmem:[%s246 + $0x258] sm:$0xff]
      %v331 = vld [vmem:[%s246 + $0x260] sm:$0xff]
      %v332 = vld [vmem:[%s246 + $0x268] sm:$0xff]
      %v333 = vld [vmem:[%s246 + $0x270] sm:$0xff]
      %v334 = vld [vmem:[%s246 + $0x278] sm:$0xff]
      %v335 = vld [vmem:[%s246 + $0x280] sm:$0xff]
      %v336 = vld [vmem:[%s246 + $0x288] sm:$0xff]
      %v337 = vld [vmem:[%s246 + $0x290] sm:$0xff]
      %v338 = vld [vmem:[%s246 + $0x298] sm:$0xff]
      %v339 = vld [vmem:[%s246 + $0x2a0] sm:$0xff]
      %v340 = vld [vmem:[%s246 + $0x2a8] sm:$0xff]
      %v341 = vld [vmem:[%s246 + $0x2b0] sm:$0xff]
      %v342 = vld [vmem:[%s246 + $0x2b8] sm:$0xff]
      %v343 = vld [vmem:[%s246 + $0x2c0] sm:$0xff]
      %v344 = vld [vmem:[%s246 + $0x2c8] sm:$0xff]
      %v345 = vld [vmem:[%s246 + $0x2d0] sm:$0xff]
      %v346 = vld [vmem:[%s246 + $0x2d8] sm:$0xff]
      %v347 = vld [vmem:[%s246 + $0x2e0] sm:$0xff]
      %v348 = vld [vmem:[%s246 + $0x2e8] sm:$0xff]
      %v349 = vld [vmem:[%s246 + $0x2f0] sm:$0xff]
      %v350 = vld [vmem:[%s246 + $0x2f8] sm:$0xff]
      %v351 = vld [vmem:[%s246 + $0x300] sm:$0xff]
      %v352 = vld [vmem:[%s246 + $0x308] sm:$0xff]
      %v353 = vld [vmem:[%s246 + $0x310] sm:$0xff]
      %v354 = vld [vmem:[%s246 + $0x318] sm:$0xff]
      %v355 = vld [vmem:[%s246 + $0x320] sm:$0xff]
      %v356 = vld [vmem:[%s246 + $0x328] sm:$0xff]
      %v357 = vld [vmem:[%s246 + $0x330] sm:$0xff]
      %v358 = vld [vmem:[%s246 + $0x338] sm:$0xff]
      %v359 = vld [vmem:[%s246 + $0x340] sm:$0xff]
      %v360 = vld [vmem:[%s246 + $0x348] sm:$0xff]
      %v361 = vld [vmem:[%s246 + $0x350] sm:$0xff]
      %v362 = vld [vmem:[%s246 + $0x358] sm:$0xff]
      %v363 = vld [vmem:[%s246 + $0x360] sm:$0xff]
      %v364 = vld [vmem:[%s246 + $0x368] sm:$0xff]
      %v365 = vld [vmem:[%s246 + $0x370] sm:$0xff]
      %v366 = vld [vmem:[%s246 + $0x378] sm:$0xff]
      %v367 = vld [vmem:[%s246 + $0x380] sm:$0xff]
      %v368 = vld [vmem:[%s246 + $0x388] sm:$0xff]
      %v369 = vld [vmem:[%s246 + $0x390] sm:$0xff]
      %v370 = vld [vmem:[%s246 + $0x398] sm:$0xff]
      %v371 = vld [vmem:[%s246 + $0x3a0] sm:$0xff]
      %v372 = vld [vmem:[%s246 + $0x3a8] sm:$0xff]
      %v373 = vld [vmem:[%s246 + $0x3b0] sm:$0xff]
      %v374 = vld [vmem:[%s246 + $0x3b8] sm:$0xff]
      %v375 = vld [vmem:[%s246 + $0x3c0] sm:$0xff]
      %v376 = vld [vmem:[%s246 + $0x3c8] sm:$0xff]
      %v377 = vld [vmem:[%s246 + $0x3d0] sm:$0xff]
      %v378 = vld [vmem:[%s246 + $0x3d8] sm:$0xff]
      %v379 = vld [vmem:[%s246 + $0x3e0] sm:$0xff]
      %v380 = vld [vmem:[%s246 + $0x3e8] sm:$0xff]
      %v381 = vld [vmem:[%s246 + $0x3f0] sm:$0xff]
      %v382 = vld [vmem:[%s246 + $0x3f8] sm:$0xff]
      %v383 = vld [vmem:[%s246 + $0x400] sm:$0xff]
      %v384 = vld [vmem:[%s246 + $0x408] sm:$0xff]
      %v385 = vld [vmem:[%s246 + $0x410] sm:$0xff]
      %v386 = vld [vmem:[%s246 + $0x418] sm:$0xff]
      %v387 = vld [vmem:[%s246 + $0x420] sm:$0xff]
      %v388 = vld [vmem:[%s246 + $0x428] sm:$0xff]
      %v389 = vld [vmem:[%s246 + $0x430] sm:$0xff]
      %v390 = vld [vmem:[%s246 + $0x438] sm:$0xff]
      %v391 = vld [vmem:[%s246 + $0x440] sm:$0xff]
      %v392 = vld [vmem:[%s246 + $0x448] sm:$0xff]
      %v393 = vld [vmem:[%s246 + $0x450] sm:$0xff]
      %v394 = vld [vmem:[%s246 + $0x458] sm:$0xff]
      %v395 = vld [vmem:[%s246 + $0x460] sm:$0xff]
      %v396 = vld [vmem:[%s246 + $0x468] sm:$0xff]
      %v397 = vld [vmem:[%s246 + $0x470] sm:$0xff]
      %v398 = vld [vmem:[%s246 + $0x478] sm:$0xff]
      %v399 = vld [vmem:[%s246 + $0x480] sm:$0xff]
      %v400 = vld [vmem:[%s246 + $0x488] sm:$0xff]
      %v401 = vld [vmem:[%s246 + $0x490] sm:$0xff]
      %v402 = vld [vmem:[%s246 + $0x498] sm:$0xff]
      %v403 = vld [vmem:[%s246 + $0x4a0] sm:$0xff]
      %v404 = vld [vmem:[%s246 + $0x4a8] sm:$0xff]
      %v405 = vld [vmem:[%s246 + $0x4b0] sm:$0xff]
      %v406 = vld [vmem:[%s246 + $0x4b8] sm:$0xff]
      %v407 = vld [vmem:[%s246 + $0x4c0] sm:$0xff]
      %v408 = vld [vmem:[%s246 + $0x4c8] sm:$0xff]
      %v409 = vld [vmem:[%s246 + $0x4d0] sm:$0xff]
      %v410 = vld [vmem:[%s246 + $0x4d8] sm:$0xff]
      %v411 = vld [vmem:[%s246 + $0x4e0] sm:$0xff]
      %v412 = vld [vmem:[%s246 + $0x4e8] sm:$0xff]
      %v413 = vld [vmem:[%s246 + $0x4f0] sm:$0xff]
      %v414 = vld [vmem:[%s246 + $0x4f8] sm:$0xff]
      %v415 = vld [vmem:[%s246 + $0x500] sm:$0xff]
      %v416 = vld [vmem:[%s246 + $0x508] sm:$0xff]
      %v417 = vld [vmem:[%s246 + $0x510] sm:$0xff]
      %v418 = vld [vmem:[%s246 + $0x518] sm:$0xff]
      %v419 = vld [vmem:[%s246 + $0x520] sm:$0xff]
      %v420 = vld [vmem:[%s246 + $0x528] sm:$0xff]
      %v421 = vld [vmem:[%s246 + $0x530] sm:$0xff]
      %v422 = vld [vmem:[%s246 + $0x538] sm:$0xff]
      %v423 = vld [vmem:[%s246 + $0x540] sm:$0xff]
      %v424 = vld [vmem:[%s246 + $0x548] sm:$0xff]
      %v425 = vld [vmem:[%s246 + $0x550] sm:$0xff]
      %v426 = vld [vmem:[%s246 + $0x558] sm:$0xff]
      %v427 = vld [vmem:[%s246 + $0x560] sm:$0xff]
      %v428 = vld [vmem:[%s246 + $0x568] sm:$0xff]
      %v429 = vld [vmem:[%s246 + $0x570] sm:$0xff]
      %v430 = vld [vmem:[%s246 + $0x578] sm:$0xff]
      %v431 = vld [vmem:[%s246 + $0x580] sm:$0xff]
      %v432 = vld [vmem:[%s246 + $0x588] sm:$0xff]
      %v433 = vld [vmem:[%s246 + $0x590] sm:$0xff]
      %v434 = vld [vmem:[%s246 + $0x598] sm:$0xff]
      %v435 = vld [vmem:[%s246 + $0x5a0] sm:$0xff]
      %v436 = vld [vmem:[%s246 + $0x5a8] sm:$0xff]
      %v437 = vld [vmem:[%s246 + $0x5b0] sm:$0xff]
      %v438 = vld [vmem:[%s246 + $0x5b8] sm:$0xff]
      %v439 = vld [vmem:[%s246 + $0x5c0] sm:$0xff]
      %v440 = vld [vmem:[%s246 + $0x5c8] sm:$0xff]
      %v441 = vld [vmem:[%s246 + $0x5d0] sm:$0xff]
      %v442 = vld [vmem:[%s246 + $0x5d8] sm:$0xff]
      %v443 = vld [vmem:[%s246 + $0x5e0] sm:$0xff]
      %v444 = vld [vmem:[%s246 + $0x5e8] sm:$0xff]
      %v445 = vld [vmem:[%s246 + $0x5f0] sm:$0xff]
      %v446 = vld [vmem:[%s246 + $0x5f8] sm:$0xff]
      %v447 = vld [vmem:[%s246 + $0x600] sm:$0xff]
      %v448 = vld [vmem:[%s246 + $0x608] sm:$0xff]
      %v449 = vld [vmem:[%s246 + $0x610] sm:$0xff]
      %v450 = vld [vmem:[%s246 + $0x618] sm:$0xff]
      %v451 = vld [vmem:[%s246 + $0x620] sm:$0xff]
      %v452 = vld [vmem:[%s246 + $0x628] sm:$0xff]
      %v453 = vld [vmem:[%s246 + $0x630] sm:$0xff]
      %v454 = vld [vmem:[%s246 + $0x638] sm:$0xff]
      %v455 = vld [vmem:[%s246 + $0x640] sm:$0xff]
      %v456 = vld [vmem:[%s246 + $0x648] sm:$0xff]
      %v457 = vld [vmem:[%s246 + $0x650] sm:$0xff]
      %v458 = vld [vmem:[%s246 + $0x658] sm:$0xff]
      %v459 = vld [vmem:[%s246 + $0x660] sm:$0xff]
      %v460 = vld [vmem:[%s246 + $0x668] sm:$0xff]
      %v461 = vld [vmem:[%s246 + $0x670] sm:$0xff]
      %v462 = vld [vmem:[%s246 + $0x678] sm:$0xff]
      %v463 = vld [vmem:[%s246 + $0x680] sm:$0xff]
      %v464 = vld [vmem:[%s246 + $0x688] sm:$0xff]
      %v465 = vld [vmem:[%s246 + $0x690] sm:$0xff]
      %v466 = vld [vmem:[%s246 + $0x698] sm:$0xff]
      %v467 = vld [vmem:[%s246 + $0x6a0] sm:$0xff]
      %v468 = vld [vmem:[%s246 + $0x6a8] sm:$0xff]
      %v469 = vld [vmem:[%s246 + $0x6b0] sm:$0xff]
      %v470 = vld [vmem:[%s246 + $0x6b8] sm:$0xff]
      %v471 = vld [vmem:[%s246 + $0x6c0] sm:$0xff]
      %v472 = vld [vmem:[%s246 + $0x6c8] sm:$0xff]
      %v473 = vld [vmem:[%s246 + $0x6d0] sm:$0xff]
      %v474 = vld [vmem:[%s246 + $0x6d8] sm:$0xff]
      %v475 = vld [vmem:[%s246 + $0x6e0] sm:$0xff]
      %v476 = vld [vmem:[%s246 + $0x6e8] sm:$0xff]
      %v477 = vld [vmem:[%s246 + $0x6f0] sm:$0xff]
      %v478 = vld [vmem:[%s246 + $0x6f8] sm:$0xff]
      %v479 = vld [vmem:[%s246 + $0x700] sm:$0xff]
      %v480 = vld [vmem:[%s246 + $0x708] sm:$0xff]
      %v481 = vld [vmem:[%s246 + $0x710] sm:$0xff]
      %v482 = vld [vmem:[%s246 + $0x718] sm:$0xff]
      %v483 = vld [vmem:[%s246 + $0x720] sm:$0xff]
      %v484 = vld [vmem:[%s246 + $0x728] sm:$0xff]
      %v485 = vld [vmem:[%s246 + $0x730] sm:$0xff]
      %v486 = vld [vmem:[%s246 + $0x738] sm:$0xff]
      %v487 = vld [vmem:[%s246 + $0x740] sm:$0xff]
      %v488 = vld [vmem:[%s246 + $0x748] sm:$0xff]
      %v489 = vld [vmem:[%s246 + $0x750] sm:$0xff]
      %v490 = vld [vmem:[%s246 + $0x758] sm:$0xff]
      %v491 = vld [vmem:[%s246 + $0x760] sm:$0xff]
      %v492 = vld [vmem:[%s246 + $0x768] sm:$0xff]
      %v493 = vld [vmem:[%s246 + $0x770] sm:$0xff]
      %v494 = vld [vmem:[%s246 + $0x778] sm:$0xff]
      %v495 = vld [vmem:[%s246 + $0x780] sm:$0xff]
      %v496 = vld [vmem:[%s246 + $0x788] sm:$0xff]
      %v497 = vld [vmem:[%s246 + $0x790] sm:$0xff]
      %v498 = vld [vmem:[%s246 + $0x798] sm:$0xff]
      %v499 = vld [vmem:[%s246 + $0x7a0] sm:$0xff]
      %v500 = vld [vmem:[%s246 + $0x7a8] sm:$0xff]
      %v501 = vld [vmem:[%s246 + $0x7b0] sm:$0xff]
      %v502 = vld [vmem:[%s246 + $0x7b8] sm:$0xff]
      %v503 = vld [vmem:[%s246 + $0x7c0] sm:$0xff]
      %v504 = vld [vmem:[%s246 + $0x7c8] sm:$0xff]
      %v505 = vld [vmem:[%s246 + $0x7d0] sm:$0xff]
      %v506 = vld [vmem:[%s246 + $0x7d8] sm:$0xff]
      %v507 = vld [vmem:[%s246 + $0x7e0] sm:$0xff]
      %v508 = vld [vmem:[%s246 + $0x7e8] sm:$0xff]
      %v509 = vld [vmem:[%s246 + $0x7f0] sm:$0xff]
      %v510 = vld [vmem:[%s246 + $0x7f8] sm:$0xff]
      %v511 = vld [vmem:[%s246 + $0x800] sm:$0xff]
      %v512 = vld [vmem:[%s246 + $0x808] sm:$0xff]
      %v513 = vld [vmem:[%s246 + $0x810] sm:$0xff]
      %v514 = vld [vmem:[%s246 + $0x818] sm:$0xff]
      %v515 = vld [vmem:[%s246 + $0x820] sm:$0xff]
      %v516 = vld [vmem:[%s246 + $0x828] sm:$0xff]
      %v517 = vld [vmem:[%s246 + $0x830] sm:$0xff]
      %v518 = vld [vmem:[%s246 + $0x838] sm:$0xff]
      %v519 = vld [vmem:[%s246 + $0x840] sm:$0xff]
      %v520 = vld [vmem:[%s246 + $0x848] sm:$0xff]
      %v521 = vld [vmem:[%s246 + $0x850] sm:$0xff]
      %v522 = vld [vmem:[%s246 + $0x858] sm:$0xff]
      %v523 = vld [vmem:[%s246 + $0x860] sm:$0xff]
      %v524 = vld [vmem:[%s246 + $0x868] sm:$0xff]
      %v525 = vld [vmem:[%s246 + $0x870] sm:$0xff]
      %v526 = vld [vmem:[%s246 + $0x878] sm:$0xff]
      %v527 = vld [vmem:[%s246 + $0x880] sm:$0xff]
      %v528 = vld [vmem:[%s246 + $0x888] sm:$0xff]
      %v529 = vld [vmem:[%s246 + $0x890] sm:$0xff]
      %v530 = vld [vmem:[%s246 + $0x898] sm:$0xff]
      %v531 = vld [vmem:[%s246 + $0x8a0] sm:$0xff]
      %v532 = vld [vmem:[%s246 + $0x8a8] sm:$0xff]
      %v533 = vld [vmem:[%s246 + $0x8b0] sm:$0xff]
      %v534 = vld [vmem:[%s246 + $0x8b8] sm:$0xff]
      %v535 = vld [vmem:[%s246 + $0x8c0] sm:$0xff]
      %v536 = vld [vmem:[%s246 + $0x8c8] sm:$0xff]
      %v537 = vld [vmem:[%s246 + $0x8d0] sm:$0xff]
      %v538 = vld [vmem:[%s246 + $0x8d8] sm:$0xff]
      %v539 = vld [vmem:[%s246 + $0x8e0] sm:$0xff]
      %v540 = vld [vmem:[%s246 + $0x8e8] sm:$0xff]
      %v541 = vld [vmem:[%s246 + $0x8f0] sm:$0xff]
      %v542 = vld [vmem:[%s246 + $0x8f8] sm:$0xff]
      %v543 = vld [vmem:[%s246 + $0x900] sm:$0xff]
      %v544 = vld [vmem:[%s246 + $0x908] sm:$0xff]
      %v545 = vld [vmem:[%s246 + $0x910] sm:$0xff]
      %v546 = vld [vmem:[%s246 + $0x918] sm:$0xff]
      %v547 = vld [vmem:[%s246 + $0x920] sm:$0xff]
      %v548 = vld [vmem:[%s246 + $0x928] sm:$0xff]
      %v549 = vld [vmem:[%s246 + $0x930] sm:$0x1]
      %v550 = vld [vmem:[%s246 + $0x938] sm:$0x1]
      %v551 = vld [vmem:[%s246 + $0x940] sm:$0x1]
      %v552 = vld [vmem:[%s246 + $0x948] sm:$0x1]
      %v553 = vld [vmem:[%s246 + $0x950] sm:$0x1]
      %v554 = vld [vmem:[%s246 + $0x958] sm:$0x1]
      %v555 = vpack.c.bf16 %v261, %v255
      %v556 = vpack.c.bf16 %v262, %v256
      %v557 = vpack.c.bf16 %v263, %v257
      %v558 = vpack.c.bf16 %v264, %v258
      %v559 = vpack.c.bf16 %v265, %v259
      %v560 = vpack.c.bf16 %v266, %v260
      %v561 = vpack.c.bf16 %v273, %v267
      %v562 = vpack.c.bf16 %v274, %v268
      %v563 = vpack.c.bf16 %v275, %v269
      %v564 = vpack.c.bf16 %v276, %v270
      %v565 = vpack.c.bf16 %v277, %v271
      %v566 = vpack.c.bf16 %v278, %v272
      %v567 = vpack.c.bf16 %v285, %v279
      %v568 = vpack.c.bf16 %v286, %v280
      %v569 = vpack.c.bf16 %v287, %v281
      %v570 = vpack.c.bf16 %v288, %v282
      %v571 = vpack.c.bf16 %v289, %v283
      %v572 = vpack.c.bf16 %v290, %v284
      %v573 = vpack.c.bf16 %v297, %v291
      %v574 = vpack.c.bf16 %v298, %v292
      %v575 = vpack.c.bf16 %v299, %v293
      %v576 = vpack.c.bf16 %v300, %v294
      %v577 = vpack.c.bf16 %v301, %v295
      %v578 = vpack.c.bf16 %v302, %v296
      %v579 = vpack.c.bf16 %v309, %v303
      %v580 = vpack.c.bf16 %v310, %v304
      %v581 = vpack.c.bf16 %v311, %v305
      %v582 = vpack.c.bf16 %v312, %v306
      %v583 = vpack.c.bf16 %v313, %v307
      %v584 = vpack.c.bf16 %v314, %v308
      %v585 = vpack.c.bf16 %v321, %v315
      %v586 = vpack.c.bf16 %v322, %v316
      %v587 = vpack.c.bf16 %v323, %v317
      %v588 = vpack.c.bf16 %v324, %v318
      %v589 = vpack.c.bf16 %v325, %v319
      %v590 = vpack.c.bf16 %v326, %v320
      %v591 = vpack.c.bf16 %v333, %v327
      %v592 = vpack.c.bf16 %v334, %v328
      %v593 = vpack.c.bf16 %v335, %v329
      %v594 = vpack.c.bf16 %v336, %v330
      %v595 = vpack.c.bf16 %v337, %v331
      %v596 = vpack.c.bf16 %v338, %v332
      %v597 = vpack.c.bf16 %v345, %v339
      %v598 = vpack.c.bf16 %v346, %v340
      %v599 = vpack.c.bf16 %v347, %v341
      %v600 = vpack.c.bf16 %v348, %v342
      %v601 = vpack.c.bf16 %v349, %v343
      %v602 = vpack.c.bf16 %v350, %v344
      %v603 = vpack.c.bf16 %v357, %v351
      %v604 = vpack.c.bf16 %v358, %v352
      %v605 = vpack.c.bf16 %v359, %v353
      %v606 = vpack.c.bf16 %v360, %v354
      %v607 = vpack.c.bf16 %v361, %v355
      %v608 = vpack.c.bf16 %v362, %v356
      %v609 = vpack.c.bf16 %v369, %v363
      %v610 = vpack.c.bf16 %v370, %v364
      %v611 = vpack.c.bf16 %v371, %v365
      %v612 = vpack.c.bf16 %v372, %v366
      %v613 = vpack.c.bf16 %v373, %v367
      %v614 = vpack.c.bf16 %v374, %v368
      %v615 = vpack.c.bf16 %v381, %v375
      %v616 = vpack.c.bf16 %v382, %v376
      %v617 = vpack.c.bf16 %v383, %v377
      %v618 = vpack.c.bf16 %v384, %v378
      %v619 = vpack.c.bf16 %v385, %v379
      %v620 = vpack.c.bf16 %v386, %v380
      %v621 = vpack.c.bf16 %v393, %v387
      %v622 = vpack.c.bf16 %v394, %v388
      %v623 = vpack.c.bf16 %v395, %v389
      %v624 = vpack.c.bf16 %v396, %v390
      %v625 = vpack.c.bf16 %v397, %v391
      %v626 = vpack.c.bf16 %v398, %v392
      %v627 = vpack.c.bf16 %v405, %v399
      %v628 = vpack.c.bf16 %v406, %v400
      %v629 = vpack.c.bf16 %v407, %v401
      %v630 = vpack.c.bf16 %v408, %v402
      %v631 = vpack.c.bf16 %v409, %v403
      %v632 = vpack.c.bf16 %v410, %v404
      %v633 = vpack.c.bf16 %v417, %v411
      %v634 = vpack.c.bf16 %v418, %v412
      %v635 = vpack.c.bf16 %v419, %v413
      %v636 = vpack.c.bf16 %v420, %v414
      %v637 = vpack.c.bf16 %v421, %v415
      %v638 = vpack.c.bf16 %v422, %v416
      %v639 = vpack.c.bf16 %v429, %v423
      %v640 = vpack.c.bf16 %v430, %v424
      %v641 = vpack.c.bf16 %v431, %v425
      %v642 = vpack.c.bf16 %v432, %v426
      %v643 = vpack.c.bf16 %v433, %v427
      %v644 = vpack.c.bf16 %v434, %v428
      %v645 = vpack.c.bf16 %v441, %v435
      %v646 = vpack.c.bf16 %v442, %v436
      %v647 = vpack.c.bf16 %v443, %v437
      %v648 = vpack.c.bf16 %v444, %v438
      %v649 = vpack.c.bf16 %v445, %v439
      %v650 = vpack.c.bf16 %v446, %v440
      %v651 = vpack.c.bf16 %v453, %v447
      %v652 = vpack.c.bf16 %v454, %v448
      %v653 = vpack.c.bf16 %v455, %v449
      %v654 = vpack.c.bf16 %v456, %v450
      %v655 = vpack.c.bf16 %v457, %v451
      %v656 = vpack.c.bf16 %v458, %v452
      %v657 = vpack.c.bf16 %v465, %v459
      %v658 = vpack.c.bf16 %v466, %v460
      %v659 = vpack.c.bf16 %v467, %v461
      %v660 = vpack.c.bf16 %v468, %v462
      %v661 = vpack.c.bf16 %v469, %v463
      %v662 = vpack.c.bf16 %v470, %v464
      %v663 = vpack.c.bf16 %v477, %v471
      %v664 = vpack.c.bf16 %v478, %v472
      %v665 = vpack.c.bf16 %v479, %v473
      %v666 = vpack.c.bf16 %v480, %v474
      %v667 = vpack.c.bf16 %v481, %v475
      %v668 = vpack.c.bf16 %v482, %v476
      %v669 = vpack.c.bf16 %v489, %v483
      %v670 = vpack.c.bf16 %v490, %v484
      %v671 = vpack.c.bf16 %v491, %v485
      %v672 = vpack.c.bf16 %v492, %v486
      %v673 = vpack.c.bf16 %v493, %v487
      %v674 = vpack.c.bf16 %v494, %v488
      %v675 = vpack.c.bf16 %v501, %v495
      %v676 = vpack.c.bf16 %v502, %v496
      %v677 = vpack.c.bf16 %v503, %v497
      %v678 = vpack.c.bf16 %v504, %v498
      %v679 = vpack.c.bf16 %v505, %v499
      %v680 = vpack.c.bf16 %v506, %v500
      %v681 = vpack.c.bf16 %v513, %v507
      %v682 = vpack.c.bf16 %v514, %v508
      %v683 = vpack.c.bf16 %v515, %v509
      %v684 = vpack.c.bf16 %v516, %v510
      %v685 = vpack.c.bf16 %v517, %v511
      %v686 = vpack.c.bf16 %v518, %v512
      %v687 = vpack.c.bf16 %v525, %v519
      %v688 = vpack.c.bf16 %v526, %v520
      %v689 = vpack.c.bf16 %v527, %v521
      %v690 = vpack.c.bf16 %v528, %v522
      %v691 = vpack.c.bf16 %v529, %v523
      %v692 = vpack.c.bf16 %v530, %v524
      %v693 = vpack.c.bf16 %v537, %v531
      %v694 = vpack.c.bf16 %v538, %v532
      %v695 = vpack.c.bf16 %v539, %v533
      %v696 = vpack.c.bf16 %v540, %v534
      %v697 = vpack.c.bf16 %v541, %v535
      %v698 = vpack.c.bf16 %v542, %v536
      %v699 = vpack.c.bf16 %v549, %v543
      %v700 = vpack.c.bf16 %v550, %v544
      %v701 = vpack.c.bf16 %v551, %v545
      %v702 = vpack.c.bf16 %v552, %v546
      %v703 = vpack.c.bf16 %v553, %v547
      %v704 = vpack.c.bf16 %v554, %v548
      %v705 = vld [vmem:[%s1] sm:$0xf]
      %v706 = vld [vmem:[%s1 + $0x4] sm:$0xf]
      %v707 = vld [vmem:[%s1 + $0x8] sm:$0xf]
      %v708 = vld [vmem:[%s1 + $0xc] sm:$0xf]
      %v709 = vld [vmem:[%s1 + $0x10] sm:$0xf]
      %v710 = vld [vmem:[%s1 + $0x14] sm:$0xf]
      %v711 = vld [vmem:[%s1 + $0x18] sm:$0xf]
      %v712 = vld [vmem:[%s1 + $0x1c] sm:$0xf]
      %v713 = vld [vmem:[%s1 + $0x20] sm:$0xf]
      %v714 = vld [vmem:[%s1 + $0x24] sm:$0xf]
      %v715 = vld [vmem:[%s1 + $0x28] sm:$0xf]
      %v716 = vld [vmem:[%s1 + $0x2c] sm:$0xf]
      %v717 = vld [vmem:[%s1 + $0x30] sm:$0xf]
      %v718 = vld [vmem:[%s1 + $0x34] sm:$0xf]
      %v719 = vld [vmem:[%s1 + $0x38] sm:$0xf]
      %v720 = vld [vmem:[%s1 + $0x3c] sm:$0xf]
      %v721 = vld [vmem:[%s1 + $0x40] sm:$0xf]
      %v722 = vld [vmem:[%s1 + $0x44] sm:$0xf]
      %v723 = vld [vmem:[%s1 + $0x48] sm:$0xf]
      %v724 = vld [vmem:[%s1 + $0x4c] sm:$0xf]
      %v725 = vld [vmem:[%s1 + $0x50] sm:$0xf]
      %v726 = vld [vmem:[%s1 + $0x54] sm:$0xf]
      %v727 = vld [vmem:[%s1 + $0x58] sm:$0xf]
      %v728 = vld [vmem:[%s1 + $0x5c] sm:$0xf]
      %v729 = vld [vmem:[%s1 + $0x60] sm:$0xf]
      %v730 = vld [vmem:[%s1 + $0x64] sm:$0xf]
      %v731 = vld [vmem:[%s1 + $0x68] sm:$0xf]
      %v732 = vld [vmem:[%s1 + $0x6c] sm:$0xf]
      %v733 = vld [vmem:[%s1 + $0x70] sm:$0xf]
      %v734 = vld [vmem:[%s1 + $0x74] sm:$0xf]
      %v735 = vld [vmem:[%s1 + $0x78] sm:$0xf]
      %v736 = vld [vmem:[%s1 + $0x7c] sm:$0xf]
      %v737 = vld [vmem:[%s1 + $0x80] sm:$0xf]
      %v738 = vld [vmem:[%s1 + $0x84] sm:$0xf]
      %v739 = vld [vmem:[%s1 + $0x88] sm:$0xf]
      %v740 = vld [vmem:[%s1 + $0x8c] sm:$0xf]
      %v741 = vld [vmem:[%s1 + $0x90] sm:$0xf]
      %v742 = vld [vmem:[%s1 + $0x94] sm:$0xf]
      %v743 = vld [vmem:[%s1 + $0x98] sm:$0xf]
      %v744 = vld [vmem:[%s1 + $0x9c] sm:$0xf]
      %v745 = vld [vmem:[%s1 + $0xa0] sm:$0xf]
      %v746 = vld [vmem:[%s1 + $0xa4] sm:$0xf]
      %v747 = vld [vmem:[%s1 + $0xa8] sm:$0xf]
      %v748 = vld [vmem:[%s1 + $0xac] sm:$0xf]
      %v749 = vld [vmem:[%s1 + $0xb0] sm:$0xf]
      %v750 = vld [vmem:[%s1 + $0xb4] sm:$0xf]
      %v751 = vld [vmem:[%s1 + $0xb8] sm:$0xf]
      %v752 = vld [vmem:[%s1 + $0xbc] sm:$0xf]
      %v753 = vld [vmem:[%s1 + $0xc0] sm:$0xf]
      %v754 = vld [vmem:[%s1 + $0xc4] sm:$0xf]
      %v755 = vld [vmem:[%s1 + $0xc8] sm:$0xf]
      %v756 = vld [vmem:[%s1 + $0xcc] sm:$0xf]
      %v757 = vld [vmem:[%s1 + $0xd0] sm:$0xf]
      %v758 = vld [vmem:[%s1 + $0xd4] sm:$0xf]
      %v759 = vld [vmem:[%s1 + $0xd8] sm:$0xf]
      %v760 = vld [vmem:[%s1 + $0xdc] sm:$0xf]
      %v761 = vld [vmem:[%s1 + $0xe0] sm:$0xf]
      %v762 = vld [vmem:[%s1 + $0xe4] sm:$0xf]
      %v763 = vld [vmem:[%s1 + $0xe8] sm:$0xf]
      %v764 = vld [vmem:[%s1 + $0xec] sm:$0xf]
      %v765 = vld [vmem:[%s1 + $0xf0] sm:$0xf]
      %v766 = vld [vmem:[%s1 + $0xf4] sm:$0xf]
      %v767 = vld [vmem:[%s1 + $0xf8] sm:$0xf]
      %v768 = vld [vmem:[%s1 + $0xfc] sm:$0xf]
      %v769 = vld [vmem:[%s1 + $0x100] sm:$0xf]
      %v770 = vld [vmem:[%s1 + $0x104] sm:$0xf]
      %v771 = vld [vmem:[%s1 + $0x108] sm:$0xf]
      %v772 = vld [vmem:[%s1 + $0x10c] sm:$0xf]
      %v773 = vld [vmem:[%s1 + $0x110] sm:$0xf]
      %v774 = vld [vmem:[%s1 + $0x114] sm:$0xf]
      %v775 = vld [vmem:[%s1 + $0x118] sm:$0xf]
      %v776 = vld [vmem:[%s1 + $0x11c] sm:$0xf]
      %v777 = vld [vmem:[%s1 + $0x120] sm:$0xf]
      %v778 = vld [vmem:[%s1 + $0x124] sm:$0xf]
      %v779 = vld [vmem:[%s1 + $0x128] sm:$0xf]
      %v780 = vld [vmem:[%s1 + $0x12c] sm:$0xf]
      %v781 = vld [vmem:[%s1 + $0x130] sm:$0xf]
      %v782 = vld [vmem:[%s1 + $0x134] sm:$0xf]
      %v783 = vld [vmem:[%s1 + $0x138] sm:$0xf]
      %v784 = vld [vmem:[%s1 + $0x13c] sm:$0xf]
      %v785 = vld [vmem:[%s1 + $0x140] sm:$0xf]
      %v786 = vld [vmem:[%s1 + $0x144] sm:$0xf]
      %v787 = vld [vmem:[%s1 + $0x148] sm:$0xf]
      %v788 = vld [vmem:[%s1 + $0x14c] sm:$0xf]
      %v789 = vld [vmem:[%s1 + $0x150] sm:$0xf]
      %v790 = vld [vmem:[%s1 + $0x154] sm:$0xf]
      %v791 = vld [vmem:[%s1 + $0x158] sm:$0xf]
      %v792 = vld [vmem:[%s1 + $0x15c] sm:$0xf]
      %v793 = vld [vmem:[%s1 + $0x160] sm:$0xf]
      %v794 = vld [vmem:[%s1 + $0x164] sm:$0xf]
      %v795 = vld [vmem:[%s1 + $0x168] sm:$0xf]
      %v796 = vld [vmem:[%s1 + $0x16c] sm:$0xf]
      %v797 = vld [vmem:[%s1 + $0x170] sm:$0xf]
      %v798 = vld [vmem:[%s1 + $0x174] sm:$0xf]
      %v799 = vld [vmem:[%s1 + $0x178] sm:$0xf]
      %v800 = vld [vmem:[%s1 + $0x17c] sm:$0xf]
      %v801 = vld [vmem:[%s2] sm:$0x1]
      %v803 = vlaneseq
      %v804 = vshrl.u32 %v803, 7
      %v805 = vsub.s32 0, %v804
      %v806 = vrot.slane %v801, %v805
      %v904 = vunpack.c.l.b16 %v705
      %v905 = vunpack.c.l.b16 %v706
      %v906 = vunpack.c.l.b16 %v707
      %v907 = vunpack.c.l.b16 %v708
      %v908 = vunpack.c.l.b16 %v709
      %v909 = vunpack.c.l.b16 %v710
      %v910 = vunpack.c.l.b16 %v711
      %v911 = vunpack.c.l.b16 %v712
      %v912 = vunpack.c.l.b16 %v713
      %v913 = vunpack.c.l.b16 %v714
      %v914 = vunpack.c.l.b16 %v715
      %v915 = vunpack.c.l.b16 %v716
      %v916 = vunpack.c.l.b16 %v717
      %v917 = vunpack.c.l.b16 %v718
      %v918 = vunpack.c.l.b16 %v719
      %v919 = vunpack.c.l.b16 %v720
      %v920 = vunpack.c.l.b16 %v721
      %v921 = vunpack.c.l.b16 %v722
      %v922 = vunpack.c.l.b16 %v723
      %v923 = vunpack.c.l.b16 %v724
      %v924 = vunpack.c.l.b16 %v725
      %v925 = vunpack.c.l.b16 %v726
      %v926 = vunpack.c.l.b16 %v727
      %v927 = vunpack.c.l.b16 %v728
      %v928 = vunpack.c.l.b16 %v729
      %v929 = vunpack.c.l.b16 %v730
      %v930 = vunpack.c.l.b16 %v731
      %v931 = vunpack.c.l.b16 %v732
      %v932 = vunpack.c.l.b16 %v733
      %v933 = vunpack.c.l.b16 %v734
      %v934 = vunpack.c.l.b16 %v735
      %v935 = vunpack.c.l.b16 %v736
      %v936 = vunpack.c.l.b16 %v737
      %v937 = vunpack.c.l.b16 %v738
      %v938 = vunpack.c.l.b16 %v739
      %v939 = vunpack.c.l.b16 %v740
      %v940 = vunpack.c.l.b16 %v741
      %v941 = vunpack.c.l.b16 %v742
      %v942 = vunpack.c.l.b16 %v743
      %v943 = vunpack.c.l.b16 %v744
      %v944 = vunpack.c.l.b16 %v745
      %v945 = vunpack.c.l.b16 %v746
      %v946 = vunpack.c.l.b16 %v747
      %v947 = vunpack.c.l.b16 %v748
      %v948 = vunpack.c.l.b16 %v749
      %v949 = vunpack.c.l.b16 %v750
      %v950 = vunpack.c.l.b16 %v751
      %v951 = vunpack.c.l.b16 %v752
      %v952 = vunpack.c.l.b16 %v753
      %v953 = vunpack.c.l.b16 %v754
      %v954 = vunpack.c.l.b16 %v755
      %v955 = vunpack.c.l.b16 %v756
      %v956 = vunpack.c.l.b16 %v757
      %v957 = vunpack.c.l.b16 %v758
      %v958 = vunpack.c.l.b16 %v759
      %v959 = vunpack.c.l.b16 %v760
      %v960 = vunpack.c.l.b16 %v761
      %v961 = vunpack.c.l.b16 %v762
      %v962 = vunpack.c.l.b16 %v763
      %v963 = vunpack.c.l.b16 %v764
      %v964 = vunpack.c.l.b16 %v765
      %v965 = vunpack.c.l.b16 %v766
      %v966 = vunpack.c.l.b16 %v767
      %v967 = vunpack.c.l.b16 %v768
      %v968 = vunpack.c.l.b16 %v769
      %v969 = vunpack.c.l.b16 %v770
      %v970 = vunpack.c.l.b16 %v771
      %v971 = vunpack.c.l.b16 %v772
      %v972 = vunpack.c.l.b16 %v773
      %v973 = vunpack.c.l.b16 %v774
      %v974 = vunpack.c.l.b16 %v775
      %v975 = vunpack.c.l.b16 %v776
      %v976 = vunpack.c.l.b16 %v777
      %v977 = vunpack.c.l.b16 %v778
      %v978 = vunpack.c.l.b16 %v779
      %v979 = vunpack.c.l.b16 %v780
      %v980 = vunpack.c.l.b16 %v781
      %v981 = vunpack.c.l.b16 %v782
      %v982 = vunpack.c.l.b16 %v783
      %v983 = vunpack.c.l.b16 %v784
      %v984 = vunpack.c.l.b16 %v785
      %v985 = vunpack.c.l.b16 %v786
      %v986 = vunpack.c.l.b16 %v787
      %v987 = vunpack.c.l.b16 %v788
      %v988 = vunpack.c.l.b16 %v789
      %v989 = vunpack.c.l.b16 %v790
      %v990 = vunpack.c.l.b16 %v791
      %v991 = vunpack.c.l.b16 %v792
      %v992 = vunpack.c.l.b16 %v793
      %v993 = vunpack.c.l.b16 %v794
      %v994 = vunpack.c.l.b16 %v795
      %v995 = vunpack.c.l.b16 %v796
      %v996 = vunpack.c.l.b16 %v797
      %v997 = vunpack.c.l.b16 %v798
      %v998 = vunpack.c.l.b16 %v799
      %v999 = vunpack.c.l.b16 %v800
      %v1000 = vpack.c.b16 %v905, %v904
      %v1001 = vpack.c.b16 %v907, %v906
      %v1002 = vpack.c.b16 %v909, %v908
      %v1003 = vpack.c.b16 %v911, %v910
      %v1004 = vpack.c.b16 %v913, %v912
      %v1005 = vpack.c.b16 %v915, %v914
      %v1006 = vpack.c.b16 %v917, %v916
      %v1007 = vpack.c.b16 %v919, %v918
      %v1008 = vpack.c.b16 %v921, %v920
      %v1009 = vpack.c.b16 %v923, %v922
      %v1010 = vpack.c.b16 %v925, %v924
      %v1011 = vpack.c.b16 %v927, %v926
      %v1012 = vpack.c.b16 %v929, %v928
      %v1013 = vpack.c.b16 %v931, %v930
      %v1014 = vpack.c.b16 %v933, %v932
      %v1015 = vpack.c.b16 %v935, %v934
      %v1016 = vpack.c.b16 %v937, %v936
      %v1017 = vpack.c.b16 %v939, %v938
      %v1018 = vpack.c.b16 %v941, %v940
      %v1019 = vpack.c.b16 %v943, %v942
      %v1020 = vpack.c.b16 %v945, %v944
      %v1021 = vpack.c.b16 %v947, %v946
      %v1022 = vpack.c.b16 %v949, %v948
      %v1023 = vpack.c.b16 %v951, %v950
      %v1024 = vpack.c.b16 %v953, %v952
      %v1025 = vpack.c.b16 %v955, %v954
      %v1026 = vpack.c.b16 %v957, %v956
      %v1027 = vpack.c.b16 %v959, %v958
      %v1028 = vpack.c.b16 %v961, %v960
      %v1029 = vpack.c.b16 %v963, %v962
      %v1030 = vpack.c.b16 %v965, %v964
      %v1031 = vpack.c.b16 %v967, %v966
      %v1032 = vpack.c.b16 %v969, %v968
      %v1033 = vpack.c.b16 %v971, %v970
      %v1034 = vpack.c.b16 %v973, %v972
      %v1035 = vpack.c.b16 %v975, %v974
      %v1036 = vpack.c.b16 %v977, %v976
      %v1037 = vpack.c.b16 %v979, %v978
      %v1038 = vpack.c.b16 %v981, %v980
      %v1039 = vpack.c.b16 %v983, %v982
      %v1040 = vpack.c.b16 %v985, %v984
      %v1041 = vpack.c.b16 %v987, %v986
      %v1042 = vpack.c.b16 %v989, %v988
      %v1043 = vpack.c.b16 %v991, %v990
      %v1044 = vpack.c.b16 %v993, %v992
      %v1045 = vpack.c.b16 %v995, %v994
      %v1046 = vpack.c.b16 %v997, %v996
      %v1047 = vpack.c.b16 %v999, %v998
      %1096 = vmatprep.subr.bf16.mxu0 0
      %1097 = vmatpush1.bf16.msra.mxu0 %v1007
      %1098 = vmatprep.subr.bf16.mxu0 0
      %1099 = vmatpush1.bf16.msra.mxu0 %v1006
      %1100 = vmatprep.subr.bf16.mxu0 0
      %1101 = vmatpush1.bf16.msra.mxu0 %v1005
      %1102 = vmatprep.subr.bf16.mxu0 0
      %1103 = vmatpush1.bf16.msra.mxu0 %v1004
      %1104 = vmatprep.subr.bf16.mxu0 0
      %1105 = vmatpush1.bf16.msra.mxu0 %v1003
      %1106 = vmatprep.subr.bf16.mxu0 0
      %1107 = vmatpush1.bf16.msra.mxu0 %v1002
      %1108 = vmatprep.subr.bf16.mxu0 0
      %1109 = vmatpush1.bf16.msra.mxu0 %v1001
      %1110 = vmatprep.subr.bf16.mxu0 0
      %1111 = vmatpush1.bf16.msra.mxu0 %v1000
      %1112 = vmatprep.subr.bf16.mxu0 0
      %1113 = vmatpush2.bf16.msra.mxu0 %v1015
      %1114 = vmatprep.subr.bf16.mxu0 0
      %1115 = vmatpush2.bf16.msra.mxu0 %v1014
      %1116 = vmatprep.subr.bf16.mxu0 0
      %1117 = vmatpush2.bf16.msra.mxu0 %v1013
      %1118 = vmatprep.subr.bf16.mxu0 0
      %1119 = vmatpush2.bf16.msra.mxu0 %v1012
      %1120 = vmatprep.subr.bf16.mxu0 0
      %1121 = vmatpush2.bf16.msra.mxu0 %v1011
      %1122 = vmatprep.subr.bf16.mxu0 0
      %1123 = vmatpush2.bf16.msra.mxu0 %v1010
      %1124 = vmatprep.subr.bf16.mxu0 0
      %1125 = vmatpush2.bf16.msra.mxu0 %v1009
      %1126 = vmatprep.subr.bf16.mxu0 0
      %1127 = vmatpush2.bf16.msra.mxu0 %v1008
      %1128 = vmatprep.mubr.bf16.mxu0 %v556
      %1129 = vmatmul.mubr.bf16.gmra.mxu0 %v555
      %v1130 = vpop.f32.mrf.mxu0
      %v1131 = vadd.f32 %v806, %v1130
      %v1132 = vpop.f32.mrf.mxu0
      %v1133 = vpop.f32.mrf.mxu0
      %v1134 = vadd.f32 %v806, %v1133
      %v1135 = vpop.f32.mrf.mxu0
      %1136 = vmatprep.mubr.bf16.mxu0 %v562
      %1137 = vmatmul.mubr.bf16.gmra.mxu0 %v561
      %v1138 = vpop.f32.mrf.mxu0
      %v1139 = vadd.f32 %v806, %v1138
      %v1140 = vpop.f32.mrf.mxu0
      %v1141 = vpop.f32.mrf.mxu0
      %v1142 = vadd.f32 %v806, %v1141
      %v1143 = vpop.f32.mrf.mxu0
      %1144 = vmatprep.mubr.bf16.mxu0 %v568
      %1145 = vmatmul.mubr.bf16.gmra.mxu0 %v567
      %v1146 = vpop.f32.mrf.mxu0
      %v1147 = vadd.f32 %v806, %v1146
      %v1148 = vpop.f32.mrf.mxu0
      %v1149 = vpop.f32.mrf.mxu0
      %v1150 = vadd.f32 %v806, %v1149
      %v1151 = vpop.f32.mrf.mxu0
      %1152 = vmatprep.mubr.bf16.mxu0 %v574
      %1153 = vmatmul.mubr.bf16.gmra.mxu0 %v573
      %v1154 = vpop.f32.mrf.mxu0
      %v1155 = vadd.f32 %v806, %v1154
      %v1156 = vpop.f32.mrf.mxu0
      %v1157 = vpop.f32.mrf.mxu0
      %v1158 = vadd.f32 %v806, %v1157
      %v1159 = vpop.f32.mrf.mxu0
      %1160 = vmatprep.mubr.bf16.mxu0 %v580
      %1161 = vmatmul.mubr.bf16.gmra.mxu0 %v579
      %v1162 = vpop.f32.mrf.mxu0
      %v1163 = vadd.f32 %v806, %v1162
      %v1164 = vpop.f32.mrf.mxu0
      %v1165 = vpop.f32.mrf.mxu0
      %v1166 = vadd.f32 %v806, %v1165
      %v1167 = vpop.f32.mrf.mxu0
      %1168 = vmatprep.mubr.bf16.mxu0 %v586
      %1169 = vmatmul.mubr.bf16.gmra.mxu0 %v585
      %v1170 = vpop.f32.mrf.mxu0
      %v1171 = vadd.f32 %v806, %v1170
      %v1172 = vpop.f32.mrf.mxu0
      %v1173 = vpop.f32.mrf.mxu0
      %v1174 = vadd.f32 %v806, %v1173
      %v1175 = vpop.f32.mrf.mxu0
      %1176 = vmatprep.mubr.bf16.mxu0 %v592
      %1177 = vmatmul.mubr.bf16.gmra.mxu0 %v591
      %v1178 = vpop.f32.mrf.mxu0
      %v1179 = vadd.f32 %v806, %v1178
      %v1180 = vpop.f32.mrf.mxu0
      %v1181 = vpop.f32.mrf.mxu0
      %v1182 = vadd.f32 %v806, %v1181
      %v1183 = vpop.f32.mrf.mxu0
      %1184 = vmatprep.mubr.bf16.mxu0 %v598
      %1185 = vmatmul.mubr.bf16.gmra.mxu0 %v597
      %v1186 = vpop.f32.mrf.mxu0
      %v1187 = vadd.f32 %v806, %v1186
      %v1188 = vpop.f32.mrf.mxu0
      %v1189 = vpop.f32.mrf.mxu0
      %v1190 = vadd.f32 %v806, %v1189
      %v1191 = vpop.f32.mrf.mxu0
      %1192 = vmatprep.mubr.bf16.mxu0 %v604
      %1193 = vmatmul.mubr.bf16.gmra.mxu0 %v603
      %v1194 = vpop.f32.mrf.mxu0
      %v1195 = vadd.f32 %v806, %v1194
      %v1196 = vpop.f32.mrf.mxu0
      %v1197 = vpop.f32.mrf.mxu0
      %v1198 = vadd.f32 %v806, %v1197
      %v1199 = vpop.f32.mrf.mxu0
      %1200 = vmatprep.mubr.bf16.mxu0 %v610
      %1201 = vmatmul.mubr.bf16.gmra.mxu0 %v609
      %v1202 = vpop.f32.mrf.mxu0
      %v1203 = vadd.f32 %v806, %v1202
      %v1204 = vpop.f32.mrf.mxu0
      %v1205 = vpop.f32.mrf.mxu0
      %v1206 = vadd.f32 %v806, %v1205
      %v1207 = vpop.f32.mrf.mxu0
      %1208 = vmatprep.mubr.bf16.mxu0 %v616
      %1209 = vmatmul.mubr.bf16.gmra.mxu0 %v615
      %v1210 = vpop.f32.mrf.mxu0
      %v1211 = vadd.f32 %v806, %v1210
      %v1212 = vpop.f32.mrf.mxu0
      %v1213 = vpop.f32.mrf.mxu0
      %v1214 = vadd.f32 %v806, %v1213
      %v1215 = vpop.f32.mrf.mxu0
      %1216 = vmatprep.mubr.bf16.mxu0 %v622
      %1217 = vmatmul.mubr.bf16.gmra.mxu0 %v621
      %v1218 = vpop.f32.mrf.mxu0
      %v1219 = vadd.f32 %v806, %v1218
      %v1220 = vpop.f32.mrf.mxu0
      %v1221 = vpop.f32.mrf.mxu0
      %v1222 = vadd.f32 %v806, %v1221
      %v1223 = vpop.f32.mrf.mxu0
      %1224 = vmatprep.mubr.bf16.mxu0 %v628
      %1225 = vmatmul.mubr.bf16.gmra.mxu0 %v627
      %v1226 = vpop.f32.mrf.mxu0
      %v1227 = vadd.f32 %v806, %v1226
      %v1228 = vpop.f32.mrf.mxu0
      %v1229 = vpop.f32.mrf.mxu0
      %v1230 = vadd.f32 %v806, %v1229
      %v1231 = vpop.f32.mrf.mxu0
      %1232 = vmatprep.mubr.bf16.mxu0 %v634
      %1233 = vmatmul.mubr.bf16.gmra.mxu0 %v633
      %v1234 = vpop.f32.mrf.mxu0
      %v1235 = vadd.f32 %v806, %v1234
      %v1236 = vpop.f32.mrf.mxu0
      %v1237 = vpop.f32.mrf.mxu0
      %v1238 = vadd.f32 %v806, %v1237
      %v1239 = vpop.f32.mrf.mxu0
      %1240 = vmatprep.mubr.bf16.mxu0 %v640
      %1241 = vmatmul.mubr.bf16.gmra.mxu0 %v639
      %v1242 = vpop.f32.mrf.mxu0
      %v1243 = vadd.f32 %v806, %v1242
      %v1244 = vpop.f32.mrf.mxu0
      %v1245 = vpop.f32.mrf.mxu0
      %v1246 = vadd.f32 %v806, %v1245
      %v1247 = vpop.f32.mrf.mxu0
      %1248 = vmatprep.mubr.bf16.mxu0 %v646
      %1249 = vmatmul.mubr.bf16.gmra.mxu0 %v645
      %v1250 = vpop.f32.mrf.mxu0
      %v1251 = vadd.f32 %v806, %v1250
      %v1252 = vpop.f32.mrf.mxu0
      %v1253 = vpop.f32.mrf.mxu0
      %v1254 = vadd.f32 %v806, %v1253
      %v1255 = vpop.f32.mrf.mxu0
      %1256 = vmatprep.mubr.bf16.mxu0 %v652
      %1257 = vmatmul.mubr.bf16.gmra.mxu0 %v651
      %v1258 = vpop.f32.mrf.mxu0
      %v1259 = vadd.f32 %v806, %v1258
      %v1260 = vpop.f32.mrf.mxu0
      %v1261 = vpop.f32.mrf.mxu0
      %v1262 = vadd.f32 %v806, %v1261
      %v1263 = vpop.f32.mrf.mxu0
      %1264 = vmatprep.mubr.bf16.mxu0 %v658
      %1265 = vmatmul.mubr.bf16.gmra.mxu0 %v657
      %v1266 = vpop.f32.mrf.mxu0
      %v1267 = vadd.f32 %v806, %v1266
      %v1268 = vpop.f32.mrf.mxu0
      %v1269 = vpop.f32.mrf.mxu0
      %v1270 = vadd.f32 %v806, %v1269
      %v1271 = vpop.f32.mrf.mxu0
      %1272 = vmatprep.mubr.bf16.mxu0 %v664
      %1273 = vmatmul.mubr.bf16.gmra.mxu0 %v663
      %v1274 = vpop.f32.mrf.mxu0
      %v1275 = vadd.f32 %v806, %v1274
      %v1276 = vpop.f32.mrf.mxu0
      %v1277 = vpop.f32.mrf.mxu0
      %v1278 = vadd.f32 %v806, %v1277
      %v1279 = vpop.f32.mrf.mxu0
      %1280 = vmatprep.mubr.bf16.mxu0 %v670
      %1281 = vmatmul.mubr.bf16.gmra.mxu0 %v669
      %v1282 = vpop.f32.mrf.mxu0
      %v1283 = vadd.f32 %v806, %v1282
      %v1284 = vpop.f32.mrf.mxu0
      %v1285 = vpop.f32.mrf.mxu0
      %v1286 = vadd.f32 %v806, %v1285
      %v1287 = vpop.f32.mrf.mxu0
      %1288 = vmatprep.mubr.bf16.mxu0 %v676
      %1289 = vmatmul.mubr.bf16.gmra.mxu0 %v675
      %v1290 = vpop.f32.mrf.mxu0
      %v1291 = vadd.f32 %v806, %v1290
      %v1292 = vpop.f32.mrf.mxu0
      %v1293 = vpop.f32.mrf.mxu0
      %v1294 = vadd.f32 %v806, %v1293
      %v1295 = vpop.f32.mrf.mxu0
      %1296 = vmatprep.mubr.bf16.mxu0 %v682
      %1297 = vmatmul.mubr.bf16.gmra.mxu0 %v681
      %v1298 = vpop.f32.mrf.mxu0
      %v1299 = vadd.f32 %v806, %v1298
      %v1300 = vpop.f32.mrf.mxu0
      %v1301 = vpop.f32.mrf.mxu0
      %v1302 = vadd.f32 %v806, %v1301
      %v1303 = vpop.f32.mrf.mxu0
      %1304 = vmatprep.mubr.bf16.mxu0 %v688
      %1305 = vmatmul.mubr.bf16.gmra.mxu0 %v687
      %v1306 = vpop.f32.mrf.mxu0
      %v1307 = vadd.f32 %v806, %v1306
      %v1308 = vpop.f32.mrf.mxu0
      %v1309 = vpop.f32.mrf.mxu0
      %v1310 = vadd.f32 %v806, %v1309
      %v1311 = vpop.f32.mrf.mxu0
      %1312 = vmatprep.mubr.bf16.mxu0 %v694
      %1313 = vmatmul.mubr.bf16.gmra.mxu0 %v693
      %v1314 = vpop.f32.mrf.mxu0
      %v1315 = vadd.f32 %v806, %v1314
      %v1316 = vpop.f32.mrf.mxu0
      %v1317 = vpop.f32.mrf.mxu0
      %v1318 = vadd.f32 %v806, %v1317
      %v1319 = vpop.f32.mrf.mxu0
      %1320 = vmatprep.mubr.bf16.mxu0 %v700
      %1321 = vmatmul.mubr.bf16.gmra.mxu0 %v699
      %v1322 = vpop.f32.mrf.mxu0
      %v1323 = vadd.f32 %v806, %v1322
      %v1324 = vpop.f32.mrf.mxu0
      %v1325 = vpop.f32.mrf.mxu0
      %v1326 = vadd.f32 %v806, %v1325
      %v1327 = vpop.f32.mrf.mxu0
      %1328 = vdwg.mxu0
      %1329 = vmatprep.subr.bf16.mxu0 0
      %1330 = vmatpush1.bf16.msra.mxu0 %v1023
      %1331 = vmatprep.subr.bf16.mxu0 0
      %1332 = vmatpush1.bf16.msra.mxu0 %v1022
      %1333 = vmatprep.subr.bf16.mxu0 0
      %1334 = vmatpush1.bf16.msra.mxu0 %v1021
      %1335 = vmatprep.subr.bf16.mxu0 0
      %1336 = vmatpush1.bf16.msra.mxu0 %v1020
      %1337 = vmatprep.subr.bf16.mxu0 0
      %1338 = vmatpush1.bf16.msra.mxu0 %v1019
      %1339 = vmatprep.subr.bf16.mxu0 0
      %1340 = vmatpush1.bf16.msra.mxu0 %v1018
      %1341 = vmatprep.subr.bf16.mxu0 0
      %1342 = vmatpush1.bf16.msra.mxu0 %v1017
      %1343 = vmatprep.subr.bf16.mxu0 0
      %1344 = vmatpush1.bf16.msra.mxu0 %v1016
      %1345 = vmatprep.subr.bf16.mxu0 0
      %1346 = vmatpush2.bf16.msra.mxu0 %v1031
      %1347 = vmatprep.subr.bf16.mxu0 0
      %1348 = vmatpush2.bf16.msra.mxu0 %v1030
      %1349 = vmatprep.subr.bf16.mxu0 0
      %1350 = vmatpush2.bf16.msra.mxu0 %v1029
      %1351 = vmatprep.subr.bf16.mxu0 0
      %1352 = vmatpush2.bf16.msra.mxu0 %v1028
      %1353 = vmatprep.subr.bf16.mxu0 0
      %1354 = vmatpush2.bf16.msra.mxu0 %v1027
      %1355 = vmatprep.subr.bf16.mxu0 0
      %1356 = vmatpush2.bf16.msra.mxu0 %v1026
      %1357 = vmatprep.subr.bf16.mxu0 0
      %1358 = vmatpush2.bf16.msra.mxu0 %v1025
      %1359 = vmatprep.subr.bf16.mxu0 0
      %1360 = vmatpush2.bf16.msra.mxu0 %v1024
      %1361 = vmatprep.mubr.bf16.mxu0 %v558
      %1362 = vmatmul.mubr.bf16.gmra.mxu0 %v557
      %v1363 = vpop.f32.mrf.mxu0
      %v1364 = vadd.f32 %v1131, %v1363
      %v1365 = vpop.f32.mrf.mxu0
      %v1366 = vpop.f32.mrf.mxu0
      %v1367 = vadd.f32 %v1134, %v1366
      %v1368 = vpop.f32.mrf.mxu0
      %1369 = vmatprep.mubr.bf16.mxu0 %v564
      %1370 = vmatmul.mubr.bf16.gmra.mxu0 %v563
      %v1371 = vpop.f32.mrf.mxu0
      %v1372 = vadd.f32 %v1139, %v1371
      %v1373 = vpop.f32.mrf.mxu0
      %v1374 = vpop.f32.mrf.mxu0
      %v1375 = vadd.f32 %v1142, %v1374
      %v1376 = vpop.f32.mrf.mxu0
      %1377 = vmatprep.mubr.bf16.mxu0 %v570
      %1378 = vmatmul.mubr.bf16.gmra.mxu0 %v569
      %v1379 = vpop.f32.mrf.mxu0
      %v1380 = vadd.f32 %v1147, %v1379
      %v1381 = vpop.f32.mrf.mxu0
      %v1382 = vpop.f32.mrf.mxu0
      %v1383 = vadd.f32 %v1150, %v1382
      %v1384 = vpop.f32.mrf.mxu0
      %1385 = vmatprep.mubr.bf16.mxu0 %v576
      %1386 = vmatmul.mubr.bf16.gmra.mxu0 %v575
      %v1387 = vpop.f32.mrf.mxu0
      %v1388 = vadd.f32 %v1155, %v1387
      %v1389 = vpop.f32.mrf.mxu0
      %v1390 = vpop.f32.mrf.mxu0
      %v1391 = vadd.f32 %v1158, %v1390
      %v1392 = vpop.f32.mrf.mxu0
      %1393 = vmatprep.mubr.bf16.mxu0 %v582
      %1394 = vmatmul.mubr.bf16.gmra.mxu0 %v581
      %v1395 = vpop.f32.mrf.mxu0
      %v1396 = vadd.f32 %v1163, %v1395
      %v1397 = vpop.f32.mrf.mxu0
      %v1398 = vpop.f32.mrf.mxu0
      %v1399 = vadd.f32 %v1166, %v1398
      %v1400 = vpop.f32.mrf.mxu0
      %1401 = vmatprep.mubr.bf16.mxu0 %v588
      %1402 = vmatmul.mubr.bf16.gmra.mxu0 %v587
      %v1403 = vpop.f32.mrf.mxu0
      %v1404 = vadd.f32 %v1171, %v1403
      %v1405 = vpop.f32.mrf.mxu0
      %v1406 = vpop.f32.mrf.mxu0
      %v1407 = vadd.f32 %v1174, %v1406
      %v1408 = vpop.f32.mrf.mxu0
      %1409 = vmatprep.mubr.bf16.mxu0 %v594
      %1410 = vmatmul.mubr.bf16.gmra.mxu0 %v593
      %v1411 = vpop.f32.mrf.mxu0
      %v1412 = vadd.f32 %v1179, %v1411
      %v1413 = vpop.f32.mrf.mxu0
      %v1414 = vpop.f32.mrf.mxu0
      %v1415 = vadd.f32 %v1182, %v1414
      %v1416 = vpop.f32.mrf.mxu0
      %1417 = vmatprep.mubr.bf16.mxu0 %v600
      %1418 = vmatmul.mubr.bf16.gmra.mxu0 %v599
      %v1419 = vpop.f32.mrf.mxu0
      %v1420 = vadd.f32 %v1187, %v1419
      %v1421 = vpop.f32.mrf.mxu0
      %v1422 = vpop.f32.mrf.mxu0
      %v1423 = vadd.f32 %v1190, %v1422
      %v1424 = vpop.f32.mrf.mxu0
      %1425 = vmatprep.mubr.bf16.mxu0 %v606
      %1426 = vmatmul.mubr.bf16.gmra.mxu0 %v605
      %v1427 = vpop.f32.mrf.mxu0
      %v1428 = vadd.f32 %v1195, %v1427
      %v1429 = vpop.f32.mrf.mxu0
      %v1430 = vpop.f32.mrf.mxu0
      %v1431 = vadd.f32 %v1198, %v1430
      %v1432 = vpop.f32.mrf.mxu0
      %1433 = vmatprep.mubr.bf16.mxu0 %v612
      %1434 = vmatmul.mubr.bf16.gmra.mxu0 %v611
      %v1435 = vpop.f32.mrf.mxu0
      %v1436 = vadd.f32 %v1203, %v1435
      %v1437 = vpop.f32.mrf.mxu0
      %v1438 = vpop.f32.mrf.mxu0
      %v1439 = vadd.f32 %v1206, %v1438
      %v1440 = vpop.f32.mrf.mxu0
      %1441 = vmatprep.mubr.bf16.mxu0 %v618
      %1442 = vmatmul.mubr.bf16.gmra.mxu0 %v617
      %v1443 = vpop.f32.mrf.mxu0
      %v1444 = vadd.f32 %v1211, %v1443
      %v1445 = vpop.f32.mrf.mxu0
      %v1446 = vpop.f32.mrf.mxu0
      %v1447 = vadd.f32 %v1214, %v1446
      %v1448 = vpop.f32.mrf.mxu0
      %1449 = vmatprep.mubr.bf16.mxu0 %v624
      %1450 = vmatmul.mubr.bf16.gmra.mxu0 %v623
      %v1451 = vpop.f32.mrf.mxu0
      %v1452 = vadd.f32 %v1219, %v1451
      %v1453 = vpop.f32.mrf.mxu0
      %v1454 = vpop.f32.mrf.mxu0
      %v1455 = vadd.f32 %v1222, %v1454
      %v1456 = vpop.f32.mrf.mxu0
      %1457 = vmatprep.mubr.bf16.mxu0 %v630
      %1458 = vmatmul.mubr.bf16.gmra.mxu0 %v629
      %v1459 = vpop.f32.mrf.mxu0
      %v1460 = vadd.f32 %v1227, %v1459
      %v1461 = vpop.f32.mrf.mxu0
      %v1462 = vpop.f32.mrf.mxu0
      %v1463 = vadd.f32 %v1230, %v1462
      %v1464 = vpop.f32.mrf.mxu0
      %1465 = vmatprep.mubr.bf16.mxu0 %v636
      %1466 = vmatmul.mubr.bf16.gmra.mxu0 %v635
      %v1467 = vpop.f32.mrf.mxu0
      %v1468 = vadd.f32 %v1235, %v1467
      %v1469 = vpop.f32.mrf.mxu0
      %v1470 = vpop.f32.mrf.mxu0
      %v1471 = vadd.f32 %v1238, %v1470
      %v1472 = vpop.f32.mrf.mxu0
      %1473 = vmatprep.mubr.bf16.mxu0 %v642
      %1474 = vmatmul.mubr.bf16.gmra.mxu0 %v641
      %v1475 = vpop.f32.mrf.mxu0
      %v1476 = vadd.f32 %v1243, %v1475
      %v1477 = vpop.f32.mrf.mxu0
      %v1478 = vpop.f32.mrf.mxu0
      %v1479 = vadd.f32 %v1246, %v1478
      %v1480 = vpop.f32.mrf.mxu0
      %1481 = vmatprep.mubr.bf16.mxu0 %v648
      %1482 = vmatmul.mubr.bf16.gmra.mxu0 %v647
      %v1483 = vpop.f32.mrf.mxu0
      %v1484 = vadd.f32 %v1251, %v1483
      %v1485 = vpop.f32.mrf.mxu0
      %v1486 = vpop.f32.mrf.mxu0
      %v1487 = vadd.f32 %v1254, %v1486
      %v1488 = vpop.f32.mrf.mxu0
      %1489 = vmatprep.mubr.bf16.mxu0 %v654
      %1490 = vmatmul.mubr.bf16.gmra.mxu0 %v653
      %v1491 = vpop.f32.mrf.mxu0
      %v1492 = vadd.f32 %v1259, %v1491
      %v1493 = vpop.f32.mrf.mxu0
      %v1494 = vpop.f32.mrf.mxu0
      %v1495 = vadd.f32 %v1262, %v1494
      %v1496 = vpop.f32.mrf.mxu0
      %1497 = vmatprep.mubr.bf16.mxu0 %v660
      %1498 = vmatmul.mubr.bf16.gmra.mxu0 %v659
      %v1499 = vpop.f32.mrf.mxu0
      %v1500 = vadd.f32 %v1267, %v1499
      %v1501 = vpop.f32.mrf.mxu0
      %v1502 = vpop.f32.mrf.mxu0
      %v1503 = vadd.f32 %v1270, %v1502
      %v1504 = vpop.f32.mrf.mxu0
      %1505 = vmatprep.mubr.bf16.mxu0 %v666
      %1506 = vmatmul.mubr.bf16.gmra.mxu0 %v665
      %v1507 = vpop.f32.mrf.mxu0
      %v1508 = vadd.f32 %v1275, %v1507
      %v1509 = vpop.f32.mrf.mxu0
      %v1510 = vpop.f32.mrf.mxu0
      %v1511 = vadd.f32 %v1278, %v1510
      %v1512 = vpop.f32.mrf.mxu0
      %1513 = vmatprep.mubr.bf16.mxu0 %v672
      %1514 = vmatmul.mubr.bf16.gmra.mxu0 %v671
      %v1515 = vpop.f32.mrf.mxu0
      %v1516 = vadd.f32 %v1283, %v1515
      %v1517 = vpop.f32.mrf.mxu0
      %v1518 = vpop.f32.mrf.mxu0
      %v1519 = vadd.f32 %v1286, %v1518
      %v1520 = vpop.f32.mrf.mxu0
      %1521 = vmatprep.mubr.bf16.mxu0 %v678
      %1522 = vmatmul.mubr.bf16.gmra.mxu0 %v677
      %v1523 = vpop.f32.mrf.mxu0
      %v1524 = vadd.f32 %v1291, %v1523
      %v1525 = vpop.f32.mrf.mxu0
      %v1526 = vpop.f32.mrf.mxu0
      %v1527 = vadd.f32 %v1294, %v1526
      %v1528 = vpop.f32.mrf.mxu0
      %1529 = vmatprep.mubr.bf16.mxu0 %v684
      %1530 = vmatmul.mubr.bf16.gmra.mxu0 %v683
      %v1531 = vpop.f32.mrf.mxu0
      %v1532 = vadd.f32 %v1299, %v1531
      %v1533 = vpop.f32.mrf.mxu0
      %v1534 = vpop.f32.mrf.mxu0
      %v1535 = vadd.f32 %v1302, %v1534
      %v1536 = vpop.f32.mrf.mxu0
      %1537 = vmatprep.mubr.bf16.mxu0 %v690
      %1538 = vmatmul.mubr.bf16.gmra.mxu0 %v689
      %v1539 = vpop.f32.mrf.mxu0
      %v1540 = vadd.f32 %v1307, %v1539
      %v1541 = vpop.f32.mrf.mxu0
      %v1542 = vpop.f32.mrf.mxu0
      %v1543 = vadd.f32 %v1310, %v1542
      %v1544 = vpop.f32.mrf.mxu0
      %1545 = vmatprep.mubr.bf16.mxu0 %v696
      %1546 = vmatmul.mubr.bf16.gmra.mxu0 %v695
      %v1547 = vpop.f32.mrf.mxu0
      %v1548 = vadd.f32 %v1315, %v1547
      %v1549 = vpop.f32.mrf.mxu0
      %v1550 = vpop.f32.mrf.mxu0
      %v1551 = vadd.f32 %v1318, %v1550
      %v1552 = vpop.f32.mrf.mxu0
      %1553 = vmatprep.mubr.bf16.mxu0 %v702
      %1554 = vmatmul.mubr.bf16.gmra.mxu0 %v701
      %v1555 = vpop.f32.mrf.mxu0
      %v1556 = vadd.f32 %v1323, %v1555
      %v1557 = vpop.f32.mrf.mxu0
      %v1558 = vpop.f32.mrf.mxu0
      %v1559 = vadd.f32 %v1326, %v1558
      %v1560 = vpop.f32.mrf.mxu0
      %1561 = vdwg.mxu0
      %1562 = vmatprep.subr.bf16.mxu0 0
      %1563 = vmatpush1.bf16.msra.mxu0 %v1039
      %1564 = vmatprep.subr.bf16.mxu0 0
      %1565 = vmatpush1.bf16.msra.mxu0 %v1038
      %1566 = vmatprep.subr.bf16.mxu0 0
      %1567 = vmatpush1.bf16.msra.mxu0 %v1037
      %1568 = vmatprep.subr.bf16.mxu0 0
      %1569 = vmatpush1.bf16.msra.mxu0 %v1036
      %1570 = vmatprep.subr.bf16.mxu0 0
      %1571 = vmatpush1.bf16.msra.mxu0 %v1035
      %1572 = vmatprep.subr.bf16.mxu0 0
      %1573 = vmatpush1.bf16.msra.mxu0 %v1034
      %1574 = vmatprep.subr.bf16.mxu0 0
      %1575 = vmatpush1.bf16.msra.mxu0 %v1033
      %1576 = vmatprep.subr.bf16.mxu0 0
      %1577 = vmatpush1.bf16.msra.mxu0 %v1032
      %1578 = vmatprep.subr.bf16.mxu0 0
      %1579 = vmatpush2.bf16.msra.mxu0 %v1047
      %1580 = vmatprep.subr.bf16.mxu0 0
      %1581 = vmatpush2.bf16.msra.mxu0 %v1046
      %1582 = vmatprep.subr.bf16.mxu0 0
      %1583 = vmatpush2.bf16.msra.mxu0 %v1045
      %1584 = vmatprep.subr.bf16.mxu0 0
      %1585 = vmatpush2.bf16.msra.mxu0 %v1044
      %1586 = vmatprep.subr.bf16.mxu0 0
      %1587 = vmatpush2.bf16.msra.mxu0 %v1043
      %1588 = vmatprep.subr.bf16.mxu0 0
      %1589 = vmatpush2.bf16.msra.mxu0 %v1042
      %1590 = vmatprep.subr.bf16.mxu0 0
      %1591 = vmatpush2.bf16.msra.mxu0 %v1041
      %1592 = vmatprep.subr.bf16.mxu0 0
      %1593 = vmatpush2.bf16.msra.mxu0 %v1040
      %1594 = vmatprep.mubr.bf16.mxu0 %v560
      %1595 = vmatmul.mubr.bf16.gmra.mxu0 %v559
      %v1596 = vpop.f32.mrf.mxu0
      %v1597 = vadd.f32 %v1364, %v1596
      %v1598 = vpop.f32.mrf.mxu0
      %v1599 = vpop.f32.mrf.mxu0
      %v1600 = vadd.f32 %v1367, %v1599
      %v1601 = vpop.f32.mrf.mxu0
      %1602 = vmatprep.mubr.bf16.mxu0 %v566
      %1603 = vmatmul.mubr.bf16.gmra.mxu0 %v565
      %v1604 = vpop.f32.mrf.mxu0
      %v1605 = vadd.f32 %v1372, %v1604
      %v1606 = vpop.f32.mrf.mxu0
      %v1607 = vpop.f32.mrf.mxu0
      %v1608 = vadd.f32 %v1375, %v1607
      %v1609 = vpop.f32.mrf.mxu0
      %1610 = vmatprep.mubr.bf16.mxu0 %v572
      %1611 = vmatmul.mubr.bf16.gmra.mxu0 %v571
      %v1612 = vpop.f32.mrf.mxu0
      %v1613 = vadd.f32 %v1380, %v1612
      %v1614 = vpop.f32.mrf.mxu0
      %v1615 = vpop.f32.mrf.mxu0
      %v1616 = vadd.f32 %v1383, %v1615
      %v1617 = vpop.f32.mrf.mxu0
      %1618 = vmatprep.mubr.bf16.mxu0 %v578
      %1619 = vmatmul.mubr.bf16.gmra.mxu0 %v577
      %v1620 = vpop.f32.mrf.mxu0
      %v1621 = vadd.f32 %v1388, %v1620
      %v1622 = vpop.f32.mrf.mxu0
      %v1623 = vpop.f32.mrf.mxu0
      %v1624 = vadd.f32 %v1391, %v1623
      %v1625 = vpop.f32.mrf.mxu0
      %1626 = vmatprep.mubr.bf16.mxu0 %v584
      %1627 = vmatmul.mubr.bf16.gmra.mxu0 %v583
      %v1628 = vpop.f32.mrf.mxu0
      %v1629 = vadd.f32 %v1396, %v1628
      %v1630 = vpop.f32.mrf.mxu0
      %v1631 = vpop.f32.mrf.mxu0
      %v1632 = vadd.f32 %v1399, %v1631
      %v1633 = vpop.f32.mrf.mxu0
      %1634 = vmatprep.mubr.bf16.mxu0 %v590
      %1635 = vmatmul.mubr.bf16.gmra.mxu0 %v589
      %v1636 = vpop.f32.mrf.mxu0
      %v1637 = vadd.f32 %v1404, %v1636
      %v1638 = vpop.f32.mrf.mxu0
      %v1639 = vpop.f32.mrf.mxu0
      %v1640 = vadd.f32 %v1407, %v1639
      %v1641 = vpop.f32.mrf.mxu0
      %1642 = vmatprep.mubr.bf16.mxu0 %v596
      %1643 = vmatmul.mubr.bf16.gmra.mxu0 %v595
      %v1644 = vpop.f32.mrf.mxu0
      %v1645 = vadd.f32 %v1412, %v1644
      %v1646 = vpop.f32.mrf.mxu0
      %v1647 = vpop.f32.mrf.mxu0
      %v1648 = vadd.f32 %v1415, %v1647
      %v1649 = vpop.f32.mrf.mxu0
      %1650 = vmatprep.mubr.bf16.mxu0 %v602
      %1651 = vmatmul.mubr.bf16.gmra.mxu0 %v601
      %v1652 = vpop.f32.mrf.mxu0
      %v1653 = vadd.f32 %v1420, %v1652
      %v1654 = vpop.f32.mrf.mxu0
      %v1655 = vpop.f32.mrf.mxu0
      %v1656 = vadd.f32 %v1423, %v1655
      %v1657 = vpop.f32.mrf.mxu0
      %1658 = vmatprep.mubr.bf16.mxu0 %v608
      %1659 = vmatmul.mubr.bf16.gmra.mxu0 %v607
      %v1660 = vpop.f32.mrf.mxu0
      %v1661 = vadd.f32 %v1428, %v1660
      %v1662 = vpop.f32.mrf.mxu0
      %v1663 = vpop.f32.mrf.mxu0
      %v1664 = vadd.f32 %v1431, %v1663
      %v1665 = vpop.f32.mrf.mxu0
      %1666 = vmatprep.mubr.bf16.mxu0 %v614
      %1667 = vmatmul.mubr.bf16.gmra.mxu0 %v613
      %v1668 = vpop.f32.mrf.mxu0
      %v1669 = vadd.f32 %v1436, %v1668
      %v1670 = vpop.f32.mrf.mxu0
      %v1671 = vpop.f32.mrf.mxu0
      %v1672 = vadd.f32 %v1439, %v1671
      %v1673 = vpop.f32.mrf.mxu0
      %1674 = vmatprep.mubr.bf16.mxu0 %v620
      %1675 = vmatmul.mubr.bf16.gmra.mxu0 %v619
      %v1676 = vpop.f32.mrf.mxu0
      %v1677 = vadd.f32 %v1444, %v1676
      %v1678 = vpop.f32.mrf.mxu0
      %v1679 = vpop.f32.mrf.mxu0
      %v1680 = vadd.f32 %v1447, %v1679
      %v1681 = vpop.f32.mrf.mxu0
      %1682 = vmatprep.mubr.bf16.mxu0 %v626
      %1683 = vmatmul.mubr.bf16.gmra.mxu0 %v625
      %v1684 = vpop.f32.mrf.mxu0
      %v1685 = vadd.f32 %v1452, %v1684
      %v1686 = vpop.f32.mrf.mxu0
      %v1687 = vpop.f32.mrf.mxu0
      %v1688 = vadd.f32 %v1455, %v1687
      %v1689 = vpop.f32.mrf.mxu0
      %1690 = vmatprep.mubr.bf16.mxu0 %v632
      %1691 = vmatmul.mubr.bf16.gmra.mxu0 %v631
      %v1692 = vpop.f32.mrf.mxu0
      %v1693 = vadd.f32 %v1460, %v1692
      %v1694 = vpop.f32.mrf.mxu0
      %v1695 = vpop.f32.mrf.mxu0
      %v1696 = vadd.f32 %v1463, %v1695
      %v1697 = vpop.f32.mrf.mxu0
      %1698 = vmatprep.mubr.bf16.mxu0 %v638
      %1699 = vmatmul.mubr.bf16.gmra.mxu0 %v637
      %v1700 = vpop.f32.mrf.mxu0
      %v1701 = vadd.f32 %v1468, %v1700
      %v1702 = vpop.f32.mrf.mxu0
      %v1703 = vpop.f32.mrf.mxu0
      %v1704 = vadd.f32 %v1471, %v1703
      %v1705 = vpop.f32.mrf.mxu0
      %1706 = vmatprep.mubr.bf16.mxu0 %v644
      %1707 = vmatmul.mubr.bf16.gmra.mxu0 %v643
      %v1708 = vpop.f32.mrf.mxu0
      %v1709 = vadd.f32 %v1476, %v1708
      %v1710 = vpop.f32.mrf.mxu0
      %v1711 = vpop.f32.mrf.mxu0
      %v1712 = vadd.f32 %v1479, %v1711
      %v1713 = vpop.f32.mrf.mxu0
      %1714 = vmatprep.mubr.bf16.mxu0 %v650
      %1715 = vmatmul.mubr.bf16.gmra.mxu0 %v649
      %v1716 = vpop.f32.mrf.mxu0
      %v1717 = vadd.f32 %v1484, %v1716
      %v1718 = vpop.f32.mrf.mxu0
      %v1719 = vpop.f32.mrf.mxu0
      %v1720 = vadd.f32 %v1487, %v1719
      %v1721 = vpop.f32.mrf.mxu0
      %1722 = vmatprep.mubr.bf16.mxu0 %v656
      %1723 = vmatmul.mubr.bf16.gmra.mxu0 %v655
      %v1724 = vpop.f32.mrf.mxu0
      %v1725 = vadd.f32 %v1492, %v1724
      %v1726 = vpop.f32.mrf.mxu0
      %v1727 = vpop.f32.mrf.mxu0
      %v1728 = vadd.f32 %v1495, %v1727
      %v1729 = vpop.f32.mrf.mxu0
      %1730 = vmatprep.mubr.bf16.mxu0 %v662
      %1731 = vmatmul.mubr.bf16.gmra.mxu0 %v661
      %v1732 = vpop.f32.mrf.mxu0
      %v1733 = vadd.f32 %v1500, %v1732
      %v1734 = vpop.f32.mrf.mxu0
      %v1735 = vpop.f32.mrf.mxu0
      %v1736 = vadd.f32 %v1503, %v1735
      %v1737 = vpop.f32.mrf.mxu0
      %1738 = vmatprep.mubr.bf16.mxu0 %v668
      %1739 = vmatmul.mubr.bf16.gmra.mxu0 %v667
      %v1740 = vpop.f32.mrf.mxu0
      %v1741 = vadd.f32 %v1508, %v1740
      %v1742 = vpop.f32.mrf.mxu0
      %v1743 = vpop.f32.mrf.mxu0
      %v1744 = vadd.f32 %v1511, %v1743
      %v1745 = vpop.f32.mrf.mxu0
      %1746 = vmatprep.mubr.bf16.mxu0 %v674
      %1747 = vmatmul.mubr.bf16.gmra.mxu0 %v673
      %v1748 = vpop.f32.mrf.mxu0
      %v1749 = vadd.f32 %v1516, %v1748
      %v1750 = vpop.f32.mrf.mxu0
      %v1751 = vpop.f32.mrf.mxu0
      %v1752 = vadd.f32 %v1519, %v1751
      %v1753 = vpop.f32.mrf.mxu0
      %1754 = vmatprep.mubr.bf16.mxu0 %v680
      %1755 = vmatmul.mubr.bf16.gmra.mxu0 %v679
      %v1756 = vpop.f32.mrf.mxu0
      %v1757 = vadd.f32 %v1524, %v1756
      %v1758 = vpop.f32.mrf.mxu0
      %v1759 = vpop.f32.mrf.mxu0
      %v1760 = vadd.f32 %v1527, %v1759
      %v1761 = vpop.f32.mrf.mxu0
      %1762 = vmatprep.mubr.bf16.mxu0 %v686
      %1763 = vmatmul.mubr.bf16.gmra.mxu0 %v685
      %v1764 = vpop.f32.mrf.mxu0
      %v1765 = vadd.f32 %v1532, %v1764
      %v1766 = vpop.f32.mrf.mxu0
      %v1767 = vpop.f32.mrf.mxu0
      %v1768 = vadd.f32 %v1535, %v1767
      %v1769 = vpop.f32.mrf.mxu0
      %1770 = vmatprep.mubr.bf16.mxu0 %v692
      %1771 = vmatmul.mubr.bf16.gmra.mxu0 %v691
      %v1772 = vpop.f32.mrf.mxu0
      %v1773 = vadd.f32 %v1540, %v1772
      %v1774 = vpop.f32.mrf.mxu0
      %v1775 = vpop.f32.mrf.mxu0
      %v1776 = vadd.f32 %v1543, %v1775
      %v1777 = vpop.f32.mrf.mxu0
      %1778 = vmatprep.mubr.bf16.mxu0 %v698
      %1779 = vmatmul.mubr.bf16.gmra.mxu0 %v697
      %v1780 = vpop.f32.mrf.mxu0
      %v1781 = vadd.f32 %v1548, %v1780
      %v1782 = vpop.f32.mrf.mxu0
      %v1783 = vpop.f32.mrf.mxu0
      %v1784 = vadd.f32 %v1551, %v1783
      %v1785 = vpop.f32.mrf.mxu0
      %1786 = vmatprep.mubr.bf16.mxu0 %v704
      %1787 = vmatmul.mubr.bf16.gmra.mxu0 %v703
      %v1788 = vpop.f32.mrf.mxu0
      %v1789 = vadd.f32 %v1556, %v1788
      %v1790 = vpop.f32.mrf.mxu0
      %v1791 = vpop.f32.mrf.mxu0
      %v1792 = vadd.f32 %v1559, %v1791
      %v1793 = vpop.f32.mrf.mxu0
      %1794 = vdwg.mxu0
      %v1795 = vmul.f32 %v1597, -1.702
      %v1796 = vmul.f32 %v1600, -1.702
      %v1797 = vmul.f32 %v1605, -1.702
      %v1798 = vmul.f32 %v1608, -1.702
      %v1799 = vmul.f32 %v1613, -1.702
      %v1800 = vmul.f32 %v1616, -1.702
      %v1801 = vmul.f32 %v1621, -1.702
      %v1802 = vmul.f32 %v1624, -1.702
      %v1803 = vmul.f32 %v1629, -1.702
      %v1804 = vmul.f32 %v1632, -1.702
      %v1805 = vmul.f32 %v1637, -1.702
      %v1806 = vmul.f32 %v1640, -1.702
      %v1807 = vmul.f32 %v1645, -1.702
      %v1808 = vmul.f32 %v1648, -1.702
      %v1809 = vmul.f32 %v1653, -1.702
      %v1810 = vmul.f32 %v1656, -1.702
      %v1811 = vmul.f32 %v1661, -1.702
      %v1812 = vmul.f32 %v1664, -1.702
      %v1813 = vmul.f32 %v1669, -1.702
      %v1814 = vmul.f32 %v1672, -1.702
      %v1815 = vmul.f32 %v1677, -1.702
      %v1816 = vmul.f32 %v1680, -1.702
      %v1817 = vmul.f32 %v1685, -1.702
      %v1818 = vmul.f32 %v1688, -1.702
      %v1819 = vmul.f32 %v1693, -1.702
      %v1820 = vmul.f32 %v1696, -1.702
      %v1821 = vmul.f32 %v1701, -1.702
      %v1822 = vmul.f32 %v1704, -1.702
      %v1823 = vmul.f32 %v1709, -1.702
      %v1824 = vmul.f32 %v1712, -1.702
      %v1825 = vmul.f32 %v1717, -1.702
      %v1826 = vmul.f32 %v1720, -1.702
      %v1827 = vmul.f32 %v1725, -1.702
      %v1828 = vmul.f32 %v1728, -1.702
      %v1829 = vmul.f32 %v1733, -1.702
      %v1830 = vmul.f32 %v1736, -1.702
      %v1831 = vmul.f32 %v1741, -1.702
      %v1832 = vmul.f32 %v1744, -1.702
      %v1833 = vmul.f32 %v1749, -1.702
      %v1834 = vmul.f32 %v1752, -1.702
      %v1835 = vmul.f32 %v1757, -1.702
      %v1836 = vmul.f32 %v1760, -1.702
      %v1837 = vmul.f32 %v1765, -1.702
      %v1838 = vmul.f32 %v1768, -1.702
      %v1839 = vmul.f32 %v1773, -1.702
      %v1840 = vmul.f32 %v1776, -1.702
      %v1841 = vmul.f32 %v1781, -1.702
      %v1842 = vmul.f32 %v1784, -1.702
      %v1843 = vmul.f32 %v1789, -1.702
      %v1844 = vmul.f32 %v1792, -1.702
      %v1845 = vmul.f32 %v1795, 1.442695
      %v1846 = vpow.pop %v1845
      %v1847 = vmul.f32 %v1796, 1.442695
      %v1848 = vpow.pop %v1847
      %v1849 = vmul.f32 %v1797, 1.442695
      %v1850 = vpow.pop %v1849
      %v1851 = vmul.f32 %v1798, 1.442695
      %v1852 = vpow.pop %v1851
      %v1853 = vmul.f32 %v1799, 1.442695
      %v1854 = vpow.pop %v1853
      %v1855 = vmul.f32 %v1800, 1.442695
      %v1856 = vpow.pop %v1855
      %v1857 = vmul.f32 %v1801, 1.442695
      %v1858 = vpow.pop %v1857
      %v1859 = vmul.f32 %v1802, 1.442695
      %v1860 = vpow.pop %v1859
      %v1861 = vmul.f32 %v1803, 1.442695
      %v1862 = vpow.pop %v1861
      %v1863 = vmul.f32 %v1804, 1.442695
      %v1864 = vpow.pop %v1863
      %v1865 = vmul.f32 %v1805, 1.442695
      %v1866 = vpow.pop %v1865
      %v1867 = vmul.f32 %v1806, 1.442695
      %v1868 = vpow.pop %v1867
      %v1869 = vmul.f32 %v1807, 1.442695
      %v1870 = vpow.pop %v1869
      %v1871 = vmul.f32 %v1808, 1.442695
      %v1872 = vpow.pop %v1871
      %v1873 = vmul.f32 %v1809, 1.442695
      %v1874 = vpow.pop %v1873
      %v1875 = vmul.f32 %v1810, 1.442695
      %v1876 = vpow.pop %v1875
      %v1877 = vmul.f32 %v1811, 1.442695
      %v1878 = vpow.pop %v1877
      %v1879 = vmul.f32 %v1812, 1.442695
      %v1880 = vpow.pop %v1879
      %v1881 = vmul.f32 %v1813, 1.442695
      %v1882 = vpow.pop %v1881
      %v1883 = vmul.f32 %v1814, 1.442695
      %v1884 = vpow.pop %v1883
      %v1885 = vmul.f32 %v1815, 1.442695
      %v1886 = vpow.pop %v1885
      %v1887 = vmul.f32 %v1816, 1.442695
      %v1888 = vpow.pop %v1887
      %v1889 = vmul.f32 %v1817, 1.442695
      %v1890 = vpow.pop %v1889
      %v1891 = vmul.f32 %v1818, 1.442695
      %v1892 = vpow.pop %v1891
      %v1893 = vmul.f32 %v1819, 1.442695
      %v1894 = vpow.pop %v1893
      %v1895 = vmul.f32 %v1820, 1.442695
      %v1896 = vpow.pop %v1895
      %v1897 = vmul.f32 %v1821, 1.442695
      %v1898 = vpow.pop %v1897
      %v1899 = vmul.f32 %v1822, 1.442695
      %v1900 = vpow.pop %v1899
      %v1901 = vmul.f32 %v1823, 1.442695
      %v1902 = vpow.pop %v1901
      %v1903 = vmul.f32 %v1824, 1.442695
      %v1904 = vpow.pop %v1903
      %v1905 = vmul.f32 %v1825, 1.442695
      %v1906 = vpow.pop %v1905
      %v1907 = vmul.f32 %v1826, 1.442695
      %v1908 = vpow.pop %v1907
      %v1909 = vmul.f32 %v1827, 1.442695
      %v1910 = vpow.pop %v1909
      %v1911 = vmul.f32 %v1828, 1.442695
      %v1912 = vpow.pop %v1911
      %v1913 = vmul.f32 %v1829, 1.442695
      %v1914 = vpow.pop %v1913
      %v1915 = vmul.f32 %v1830, 1.442695
      %v1916 = vpow.pop %v1915
      %v1917 = vmul.f32 %v1831, 1.442695
      %v1918 = vpow.pop %v1917
      %v1919 = vmul.f32 %v1832, 1.442695
      %v1920 = vpow.pop %v1919
      %v1921 = vmul.f32 %v1833, 1.442695
      %v1922 = vpow.pop %v1921
      %v1923 = vmul.f32 %v1834, 1.442695
      %v1924 = vpow.pop %v1923
      %v1925 = vmul.f32 %v1835, 1.442695
      %v1926 = vpow.pop %v1925
      %v1927 = vmul.f32 %v1836, 1.442695
      %v1928 = vpow.pop %v1927
      %v1929 = vmul.f32 %v1837, 1.442695
      %v1930 = vpow.pop %v1929
      %v1931 = vmul.f32 %v1838, 1.442695
      %v1932 = vpow.pop %v1931
      %v1933 = vmul.f32 %v1839, 1.442695
      %v1934 = vpow.pop %v1933
      %v1935 = vmul.f32 %v1840, 1.442695
      %v1936 = vpow.pop %v1935
      %v1937 = vmul.f32 %v1841, 1.442695
      %v1938 = vpow.pop %v1937
      %v1939 = vmul.f32 %v1842, 1.442695
      %v1940 = vpow.pop %v1939
      %v1941 = vmul.f32 %v1843, 1.442695
      %v1942 = vpow.pop %v1941
      %v1943 = vmul.f32 %v1844, 1.442695
      %v1944 = vpow.pop %v1943
      %v1945 = vadd.f32 %v1846, 1.0
      %v1946 = vadd.f32 %v1848, 1.0
      %v1947 = vadd.f32 %v1850, 1.0
      %v1948 = vadd.f32 %v1852, 1.0
      %v1949 = vadd.f32 %v1854, 1.0
      %v1950 = vadd.f32 %v1856, 1.0
      %v1951 = vadd.f32 %v1858, 1.0
      %v1952 = vadd.f32 %v1860, 1.0
      %v1953 = vadd.f32 %v1862, 1.0
      %v1954 = vadd.f32 %v1864, 1.0
      %v1955 = vadd.f32 %v1866, 1.0
      %v1956 = vadd.f32 %v1868, 1.0
      %v1957 = vadd.f32 %v1870, 1.0
      %v1958 = vadd.f32 %v1872, 1.0
      %v1959 = vadd.f32 %v1874, 1.0
      %v1960 = vadd.f32 %v1876, 1.0
      %v1961 = vadd.f32 %v1878, 1.0
      %v1962 = vadd.f32 %v1880, 1.0
      %v1963 = vadd.f32 %v1882, 1.0
      %v1964 = vadd.f32 %v1884, 1.0
      %v1965 = vadd.f32 %v1886, 1.0
      %v1966 = vadd.f32 %v1888, 1.0
      %v1967 = vadd.f32 %v1890, 1.0
      %v1968 = vadd.f32 %v1892, 1.0
      %v1969 = vadd.f32 %v1894, 1.0
      %v1970 = vadd.f32 %v1896, 1.0
      %v1971 = vadd.f32 %v1898, 1.0
      %v1972 = vadd.f32 %v1900, 1.0
      %v1973 = vadd.f32 %v1902, 1.0
      %v1974 = vadd.f32 %v1904, 1.0
      %v1975 = vadd.f32 %v1906, 1.0
      %v1976 = vadd.f32 %v1908, 1.0
      %v1977 = vadd.f32 %v1910, 1.0
      %v1978 = vadd.f32 %v1912, 1.0
      %v1979 = vadd.f32 %v1914, 1.0
      %v1980 = vadd.f32 %v1916, 1.0
      %v1981 = vadd.f32 %v1918, 1.0
      %v1982 = vadd.f32 %v1920, 1.0
      %v1983 = vadd.f32 %v1922, 1.0
      %v1984 = vadd.f32 %v1924, 1.0
      %v1985 = vadd.f32 %v1926, 1.0
      %v1986 = vadd.f32 %v1928, 1.0
      %v1987 = vadd.f32 %v1930, 1.0
      %v1988 = vadd.f32 %v1932, 1.0
      %v1989 = vadd.f32 %v1934, 1.0
      %v1990 = vadd.f32 %v1936, 1.0
      %v1991 = vadd.f32 %v1938, 1.0
      %v1992 = vadd.f32 %v1940, 1.0
      %v1993 = vadd.f32 %v1942, 1.0
      %v1994 = vadd.f32 %v1944, 1.0
      %v1995 = vrcp.pop %v1945
      %v1996 = vrcp.pop %v1946
      %v1997 = vrcp.pop %v1947
      %v1998 = vrcp.pop %v1948
      %v1999 = vrcp.pop %v1949
      %v2000 = vrcp.pop %v1950
      %v2001 = vrcp.pop %v1951
      %v2002 = vrcp.pop %v1952
      %v2003 = vrcp.pop %v1953
      %v2004 = vrcp.pop %v1954
      %v2005 = vrcp.pop %v1955
      %v2006 = vrcp.pop %v1956
      %v2007 = vrcp.pop %v1957
      %v2008 = vrcp.pop %v1958
      %v2009 = vrcp.pop %v1959
      %v2010 = vrcp.pop %v1960
      %v2011 = vrcp.pop %v1961
      %v2012 = vrcp.pop %v1962
      %v2013 = vrcp.pop %v1963
      %v2014 = vrcp.pop %v1964
      %v2015 = vrcp.pop %v1965
      %v2016 = vrcp.pop %v1966
      %v2017 = vrcp.pop %v1967
      %v2018 = vrcp.pop %v1968
      %v2019 = vrcp.pop %v1969
      %v2020 = vrcp.pop %v1970
      %v2021 = vrcp.pop %v1971
      %v2022 = vrcp.pop %v1972
      %v2023 = vrcp.pop %v1973
      %v2024 = vrcp.pop %v1974
      %v2025 = vrcp.pop %v1975
      %v2026 = vrcp.pop %v1976
      %v2027 = vrcp.pop %v1977
      %v2028 = vrcp.pop %v1978
      %v2029 = vrcp.pop %v1979
      %v2030 = vrcp.pop %v1980
      %v2031 = vrcp.pop %v1981
      %v2032 = vrcp.pop %v1982
      %v2033 = vrcp.pop %v1983
      %v2034 = vrcp.pop %v1984
      %v2035 = vrcp.pop %v1985
      %v2036 = vrcp.pop %v1986
      %v2037 = vrcp.pop %v1987
      %v2038 = vrcp.pop %v1988
      %v2039 = vrcp.pop %v1989
      %v2040 = vrcp.pop %v1990
      %v2041 = vrcp.pop %v1991
      %v2042 = vrcp.pop %v1992
      %v2043 = vrcp.pop %v1993
      %v2044 = vrcp.pop %v1994
      %v2045 = vmul.f32 %v1597, %v1995
      %v2046 = vmul.f32 %v1600, %v1996
      %v2047 = vmul.f32 %v1605, %v1997
      %v2048 = vmul.f32 %v1608, %v1998
      %v2049 = vmul.f32 %v1613, %v1999
      %v2050 = vmul.f32 %v1616, %v2000
      %v2051 = vmul.f32 %v1621, %v2001
      %v2052 = vmul.f32 %v1624, %v2002
      %v2053 = vmul.f32 %v1629, %v2003
      %v2054 = vmul.f32 %v1632, %v2004
      %v2055 = vmul.f32 %v1637, %v2005
      %v2056 = vmul.f32 %v1640, %v2006
      %v2057 = vmul.f32 %v1645, %v2007
      %v2058 = vmul.f32 %v1648, %v2008
      %v2059 = vmul.f32 %v1653, %v2009
      %v2060 = vmul.f32 %v1656, %v2010
      %v2061 = vmul.f32 %v1661, %v2011
      %v2062 = vmul.f32 %v1664, %v2012
      %v2063 = vmul.f32 %v1669, %v2013
      %v2064 = vmul.f32 %v1672, %v2014
      %v2065 = vmul.f32 %v1677, %v2015
      %v2066 = vmul.f32 %v1680, %v2016
      %v2067 = vmul.f32 %v1685, %v2017
      %v2068 = vmul.f32 %v1688, %v2018
      %v2069 = vmul.f32 %v1693, %v2019
      %v2070 = vmul.f32 %v1696, %v2020
      %v2071 = vmul.f32 %v1701, %v2021
      %v2072 = vmul.f32 %v1704, %v2022
      %v2073 = vmul.f32 %v1709, %v2023
      %v2074 = vmul.f32 %v1712, %v2024
      %v2075 = vmul.f32 %v1717, %v2025
      %v2076 = vmul.f32 %v1720, %v2026
      %v2077 = vmul.f32 %v1725, %v2027
      %v2078 = vmul.f32 %v1728, %v2028
      %v2079 = vmul.f32 %v1733, %v2029
      %v2080 = vmul.f32 %v1736, %v2030
      %v2081 = vmul.f32 %v1741, %v2031
      %v2082 = vmul.f32 %v1744, %v2032
      %v2083 = vmul.f32 %v1749, %v2033
      %v2084 = vmul.f32 %v1752, %v2034
      %v2085 = vmul.f32 %v1757, %v2035
      %v2086 = vmul.f32 %v1760, %v2036
      %v2087 = vmul.f32 %v1765, %v2037
      %v2088 = vmul.f32 %v1768, %v2038
      %v2089 = vmul.f32 %v1773, %v2039
      %v2090 = vmul.f32 %v1776, %v2040
      %v2091 = vmul.f32 %v1781, %v2041
      %v2092 = vmul.f32 %v1784, %v2042
      %v2093 = vmul.f32 %v1789, %v2043
      %v2094 = vmul.f32 %v1792, %v2044
      %2095 = vst [vmem:[#allocation2] sm:$0xf] 0
      %2096 = vst [vmem:[#allocation2 + $0x4] sm:$0xf] 0
      %2097 = vst [vmem:[#allocation2 + $0x8] sm:$0xf] 0
      %2098 = vst [vmem:[#allocation2 + $0xc] sm:$0xf] 0
      %2099 = vst [vmem:[#allocation2 + $0x10] sm:$0xf] 0
      %2100 = vst [vmem:[#allocation2 + $0x14] sm:$0xf] 0
      %2101 = vst [vmem:[#allocation2 + $0x18] sm:$0xf] 0
      %2102 = vst [vmem:[#allocation2 + $0x1c] sm:$0xf] 0
      %2103 = vst [vmem:[#allocation2 + $0x20] sm:$0xf] 0
      %2104 = vst [vmem:[#allocation2 + $0x24] sm:$0xf] 0
      %2105 = vst [vmem:[#allocation2 + $0x28] sm:$0xf] 0
      %2106 = vst [vmem:[#allocation2 + $0x2c] sm:$0xf] 0
      %2107 = vst [vmem:[#allocation2 + $0x30] sm:$0xf] 0
      %2108 = vst [vmem:[#allocation2 + $0x34] sm:$0xf] 0
      %2109 = vst [vmem:[#allocation2 + $0x38] sm:$0xf] 0
      %2110 = vst [vmem:[#allocation2 + $0x3c] sm:$0xf] 0
      %2111 = vst [vmem:[#allocation2 + $0x40] sm:$0xf] 0
      %2112 = vst [vmem:[#allocation2 + $0x44] sm:$0xf] 0
      %2113 = vst [vmem:[#allocation2 + $0x48] sm:$0xf] 0
      %2114 = vst [vmem:[#allocation2 + $0x4c] sm:$0xf] 0
      %2115 = vst [vmem:[#allocation2 + $0x50] sm:$0xf] 0
      %2116 = vst [vmem:[#allocation2 + $0x54] sm:$0xf] 0
      %2117 = vst [vmem:[#allocation2 + $0x58] sm:$0xf] 0
      %2118 = vst [vmem:[#allocation2 + $0x5c] sm:$0xf] 0
      %2119 = vst [vmem:[#allocation2 + $0x60] sm:$0xf] 0
      %2120 = vst [vmem:[#allocation2 + $0x64] sm:$0xf] 0
      %2121 = vst [vmem:[#allocation2 + $0x68] sm:$0xf] 0
      %2122 = vst [vmem:[#allocation2 + $0x6c] sm:$0xf] 0
      %2123 = vst [vmem:[#allocation2 + $0x70] sm:$0xf] 0
      %v2124 = vpack.c.bf16 %v2046, %v2045
      %v2125 = vpack.c.bf16 %v2048, %v2047
      %v2126 = vpack.c.bf16 %v2050, %v2049
      %v2127 = vpack.c.bf16 %v2052, %v2051
      %v2128 = vpack.c.bf16 %v2054, %v2053
      %v2129 = vpack.c.bf16 %v2056, %v2055
      %v2130 = vpack.c.bf16 %v2058, %v2057
      %v2131 = vpack.c.bf16 %v2060, %v2059
      %v2132 = vpack.c.bf16 %v2062, %v2061
      %v2133 = vpack.c.bf16 %v2064, %v2063
      %v2134 = vpack.c.bf16 %v2066, %v2065
      %v2135 = vpack.c.bf16 %v2068, %v2067
      %v2136 = vpack.c.bf16 %v2069, %v2069
      %v2150 = vunpack.c.l.b16 %v2124
      %v2151 = vunpack.c.h.b16 %v2124
      %v2152 = vunpack.c.l.b16 %v2125
      %v2153 = vunpack.c.h.b16 %v2125
      %v2154 = vunpack.c.l.b16 %v2126
      %v2155 = vunpack.c.h.b16 %v2126
      %v2156 = vunpack.c.l.b16 %v2127
      %v2157 = vunpack.c.h.b16 %v2127
      %v2158 = vunpack.c.l.b16 %v2128
      %v2159 = vunpack.c.h.b16 %v2128
      %v2160 = vunpack.c.l.b16 %v2129
      %v2161 = vunpack.c.h.b16 %v2129
      %v2162 = vunpack.c.l.b16 %v2130
      %v2163 = vunpack.c.h.b16 %v2130
      %v2164 = vunpack.c.l.b16 %v2131
      %v2165 = vunpack.c.h.b16 %v2131
      %v2166 = vunpack.c.l.b16 %v2132
      %v2167 = vunpack.c.h.b16 %v2132
      %v2168 = vunpack.c.l.b16 %v2133
      %v2169 = vunpack.c.h.b16 %v2133
      %v2170 = vunpack.c.l.b16 %v2134
      %v2171 = vunpack.c.h.b16 %v2134
      %v2172 = vunpack.c.l.b16 %v2135
      %v2173 = vunpack.c.h.b16 %v2135
      %v2174 = vunpack.c.l.b16 %v2136
      %v2175 = vpack.c.b16 %v2150, %v2150
      %v2176 = vpack.c.b16 %v2151, %v2151
      %v2177 = vpack.c.b16 %v2152, %v2152
      %v2178 = vpack.c.b16 %v2153, %v2153
      %v2179 = vpack.c.b16 %v2154, %v2154
      %v2180 = vpack.c.b16 %v2155, %v2155
      %v2181 = vpack.c.b16 %v2156, %v2156
      %v2182 = vpack.c.b16 %v2157, %v2157
      %v2183 = vpack.c.b16 %v2158, %v2158
      %v2184 = vpack.c.b16 %v2159, %v2159
      %v2185 = vpack.c.b16 %v2160, %v2160
      %v2186 = vpack.c.b16 %v2161, %v2161
      %v2187 = vpack.c.b16 %v2162, %v2162
      %v2188 = vpack.c.b16 %v2163, %v2163
      %v2189 = vpack.c.b16 %v2164, %v2164
      %v2190 = vpack.c.b16 %v2165, %v2165
      %v2191 = vpack.c.b16 %v2166, %v2166
      %v2192 = vpack.c.b16 %v2167, %v2167
      %v2193 = vpack.c.b16 %v2168, %v2168
      %v2194 = vpack.c.b16 %v2169, %v2169
      %v2195 = vpack.c.b16 %v2170, %v2170
      %v2196 = vpack.c.b16 %v2171, %v2171
      %v2197 = vpack.c.b16 %v2172, %v2172
      %v2198 = vpack.c.b16 %v2173, %v2173
      %v2199 = vpack.c.b16 %v2174, %v2174
      %vm2200 = vsmask.f32 3328
      %vm2201 = vsmask.f32 7440
      %vm2202 = vmor %vm2200, %vm2201
      %v2204 = vshrl.u32 %v2175, 16
      %v2206 = vrot.slane %v2204, 4
      %v2207 = vshll.u32 %v2175, 16
      %v2209 = vrot.slane %v2207, 5
      %v2210 = vor.u32 %v2206, %v2209
      %v2211 = vrot.slane %v2210, 4
      %v2213 = vshll.u32 %v2176, 16
      %v2215 = vrot.slane %v2213, 5
      %v2216 = vsel %vm2202, %v2211, %v2215
      %v2217 = vshrl.u32 %v2176, 16
      %v2219 = vrot.slane %v2217, 4
      %v2220 = vor.u32 %v2219, %v2215
      %v2221 = vrot.slane %v2220, 4
      %v2223 = vshll.u32 %v2177, 16
      %v2225 = vrot.slane %v2223, 5
      %v2226 = vsel %vm2202, %v2221, %v2225
      %v2227 = vshrl.u32 %v2177, 16
      %v2229 = vrot.slane %v2227, 4
      %v2230 = vor.u32 %v2229, %v2225
      %v2231 = vrot.slane %v2230, 4
      %v2233 = vshll.u32 %v2178, 16
      %v2235 = vrot.slane %v2233, 5
      %v2236 = vsel %vm2202, %v2231, %v2235
      %v2237 = vshrl.u32 %v2178, 16
      %v2239 = vrot.slane %v2237, 4
      %v2240 = vor.u32 %v2239, %v2235
      %v2241 = vrot.slane %v2240, 4
      %v2243 = vshll.u32 %v2179, 16
      %v2245 = vrot.slane %v2243, 5
      %v2246 = vsel %vm2202, %v2241, %v2245
      %v2247 = vshrl.u32 %v2179, 16
      %v2249 = vrot.slane %v2247, 4
      %v2250 = vor.u32 %v2249, %v2245
      %v2251 = vrot.slane %v2250, 4
      %v2253 = vshll.u32 %v2180, 16
      %v2255 = vrot.slane %v2253, 5
      %v2256 = vsel %vm2202, %v2251, %v2255
      %v2257 = vshrl.u32 %v2180, 16
      %v2259 = vrot.slane %v2257, 4
      %v2260 = vor.u32 %v2259, %v2255
      %v2261 = vrot.slane %v2260, 4
      %v2263 = vshll.u32 %v2181, 16
      %v2265 = vrot.slane %v2263, 5
      %v2266 = vsel %vm2202, %v2261, %v2265
      %v2267 = vshrl.u32 %v2181, 16
      %v2269 = vrot.slane %v2267, 4
      %v2270 = vor.u32 %v2269, %v2265
      %v2271 = vrot.slane %v2270, 4
      %v2273 = vshll.u32 %v2182, 16
      %v2275 = vrot.slane %v2273, 5
      %v2276 = vsel %vm2202, %v2271, %v2275
      %v2277 = vshrl.u32 %v2182, 16
      %v2279 = vrot.slane %v2277, 4
      %v2280 = vor.u32 %v2279, %v2275
      %v2281 = vrot.slane %v2280, 4
      %v2283 = vshll.u32 %v2183, 16
      %v2285 = vrot.slane %v2283, 5
      %v2286 = vsel %vm2202, %v2281, %v2285
      %v2287 = vshrl.u32 %v2183, 16
      %v2289 = vrot.slane %v2287, 4
      %v2290 = vor.u32 %v2289, %v2285
      %v2291 = vrot.slane %v2290, 4
      %v2293 = vshll.u32 %v2184, 16
      %v2295 = vrot.slane %v2293, 5
      %v2296 = vsel %vm2202, %v2291, %v2295
      %v2297 = vshrl.u32 %v2184, 16
      %v2299 = vrot.slane %v2297, 4
      %v2300 = vor.u32 %v2299, %v2295
      %v2301 = vrot.slane %v2300, 4
      %v2303 = vshll.u32 %v2185, 16
      %v2305 = vrot.slane %v2303, 5
      %v2306 = vsel %vm2202, %v2301, %v2305
      %v2307 = vshrl.u32 %v2185, 16
      %v2309 = vrot.slane %v2307, 4
      %v2310 = vor.u32 %v2309, %v2305
      %v2311 = vrot.slane %v2310, 4
      %v2313 = vshll.u32 %v2186, 16
      %v2315 = vrot.slane %v2313, 5
      %v2316 = vsel %vm2202, %v2311, %v2315
      %v2317 = vshrl.u32 %v2186, 16
      %v2319 = vrot.slane %v2317, 4
      %v2320 = vor.u32 %v2319, %v2315
      %v2321 = vrot.slane %v2320, 4
      %v2323 = vshll.u32 %v2187, 16
      %v2325 = vrot.slane %v2323, 5
      %v2326 = vsel %vm2202, %v2321, %v2325
      %v2327 = vshrl.u32 %v2187, 16
      %v2329 = vrot.slane %v2327, 4
      %v2330 = vor.u32 %v2329, %v2325
      %v2331 = vrot.slane %v2330, 4
      %v2333 = vshll.u32 %v2188, 16
      %v2335 = vrot.slane %v2333, 5
      %v2336 = vsel %vm2202, %v2331, %v2335
      %v2337 = vshrl.u32 %v2188, 16
      %v2339 = vrot.slane %v2337, 4
      %v2340 = vor.u32 %v2339, %v2335
      %v2341 = vrot.slane %v2340, 4
      %v2343 = vshll.u32 %v2189, 16
      %v2345 = vrot.slane %v2343, 5
      %v2346 = vsel %vm2202, %v2341, %v2345
      %v2347 = vshrl.u32 %v2189, 16
      %v2349 = vrot.slane %v2347, 4
      %v2350 = vor.u32 %v2349, %v2345
      %v2351 = vrot.slane %v2350, 4
      %v2353 = vshll.u32 %v2190, 16
      %v2355 = vrot.slane %v2353, 5
      %v2356 = vsel %vm2202, %v2351, %v2355
      %v2357 = vshrl.u32 %v2190, 16
      %v2359 = vrot.slane %v2357, 4
      %v2360 = vor.u32 %v2359, %v2355
      %v2361 = vrot.slane %v2360, 4
      %v2363 = vshll.u32 %v2191, 16
      %v2365 = vrot.slane %v2363, 5
      %v2366 = vsel %vm2202, %v2361, %v2365
      %v2367 = vshrl.u32 %v2191, 16
      %v2369 = vrot.slane %v2367, 4
      %v2370 = vor.u32 %v2369, %v2365
      %v2371 = vrot.slane %v2370, 4
      %v2373 = vshll.u32 %v2192, 16
      %v2375 = vrot.slane %v2373, 5
      %v2376 = vsel %vm2202, %v2371, %v2375
      %v2377 = vshrl.u32 %v2192, 16
      %v2379 = vrot.slane %v2377, 4
      %v2380 = vor.u32 %v2379, %v2375
      %v2381 = vrot.slane %v2380, 4
      %v2383 = vshll.u32 %v2193, 16
      %v2385 = vrot.slane %v2383, 5
      %v2386 = vsel %vm2202, %v2381, %v2385
      %v2387 = vshrl.u32 %v2193, 16
      %v2389 = vrot.slane %v2387, 4
      %v2390 = vor.u32 %v2389, %v2385
      %v2391 = vrot.slane %v2390, 4
      %v2393 = vshll.u32 %v2194, 16
      %v2395 = vrot.slane %v2393, 5
      %v2396 = vsel %vm2202, %v2391, %v2395
      %v2397 = vshrl.u32 %v2194, 16
      %v2399 = vrot.slane %v2397, 4
      %v2400 = vor.u32 %v2399, %v2395
      %v2401 = vrot.slane %v2400, 4
      %v2403 = vshll.u32 %v2195, 16
      %v2405 = vrot.slane %v2403, 5
      %v2406 = vsel %vm2202, %v2401, %v2405
      %v2407 = vshrl.u32 %v2195, 16
      %v2409 = vrot.slane %v2407, 4
      %v2410 = vor.u32 %v2409, %v2405
      %v2411 = vrot.slane %v2410, 4
      %v2413 = vshll.u32 %v2196, 16
      %v2415 = vrot.slane %v2413, 5
      %v2416 = vsel %vm2202, %v2411, %v2415
      %v2417 = vshrl.u32 %v2196, 16
      %v2419 = vrot.slane %v2417, 4
      %v2420 = vor.u32 %v2419, %v2415
      %v2421 = vrot.slane %v2420, 4
      %v2423 = vshll.u32 %v2197, 16
      %v2425 = vrot.slane %v2423, 5
      %v2426 = vsel %vm2202, %v2421, %v2425
      %v2427 = vshrl.u32 %v2197, 16
      %v2429 = vrot.slane %v2427, 4
      %v2430 = vor.u32 %v2429, %v2425
      %v2431 = vrot.slane %v2430, 4
      %v2433 = vshll.u32 %v2198, 16
      %v2435 = vrot.slane %v2433, 5
      %v2436 = vsel %vm2202, %v2431, %v2435
      %v2437 = vshrl.u32 %v2198, 16
      %v2439 = vrot.slane %v2437, 4
      %v2440 = vor.u32 %v2439, %v2435
      %v2441 = vrot.slane %v2440, 4
      %v2443 = vshll.u32 %v2199, 16
      %v2445 = vrot.slane %v2443, 5
      %v2446 = vsel %vm2202, %v2441, %v2445
      %v2447 = vshrl.u32 %v2199, 16
      %v2449 = vrot.slane %v2447, 4
      %v2450 = vor.u32 %v2449, %v2445
      %v2451 = vrot.slane %v2450, 4
      %vm2477 = vcmask 519168
      %2478 = vst.msk [vmem:[#allocation2 + $0x8] sm:$0xf] %vm2477, %v2216
      %2479 = vst.msk [vmem:[#allocation2 + $0xc] sm:$0xf] %vm2477, %v2226
      %2480 = vst.msk [vmem:[#allocation2 + $0x10] sm:$0xf] %vm2477, %v2236
      %2481 = vst.msk [vmem:[#allocation2 + $0x14] sm:$0xf] %vm2477, %v2246
      %2482 = vst.msk [vmem:[#allocation2 + $0x18] sm:$0xf] %vm2477, %v2256
      %2483 = vst.msk [vmem:[#allocation2 + $0x1c] sm:$0xf] %vm2477, %v2266
      %2484 = vst.msk [vmem:[#allocation2 + $0x20] sm:$0xf] %vm2477, %v2276
      %2485 = vst.msk [vmem:[#allocation2 + $0x24] sm:$0xf] %vm2477, %v2286
      %2486 = vst.msk [vmem:[#allocation2 + $0x28] sm:$0xf] %vm2477, %v2296
      %2487 = vst.msk [vmem:[#allocation2 + $0x2c] sm:$0xf] %vm2477, %v2306
      %2488 = vst.msk [vmem:[#allocation2 + $0x30] sm:$0xf] %vm2477, %v2316
      %2489 = vst.msk [vmem:[#allocation2 + $0x34] sm:$0xf] %vm2477, %v2326
      %2490 = vst.msk [vmem:[#allocation2 + $0x38] sm:$0xf] %vm2477, %v2336
      %2491 = vst.msk [vmem:[#allocation2 + $0x3c] sm:$0xf] %vm2477, %v2346
      %2492 = vst.msk [vmem:[#allocation2 + $0x40] sm:$0xf] %vm2477, %v2356
      %2493 = vst.msk [vmem:[#allocation2 + $0x44] sm:$0xf] %vm2477, %v2366
      %2494 = vst.msk [vmem:[#allocation2 + $0x48] sm:$0xf] %vm2477, %v2376
      %2495 = vst.msk [vmem:[#allocation2 + $0x4c] sm:$0xf] %vm2477, %v2386
      %2496 = vst.msk [vmem:[#allocation2 + $0x50] sm:$0xf] %vm2477, %v2396
      %2497 = vst.msk [vmem:[#allocation2 + $0x54] sm:$0xf] %vm2477, %v2406
      %2498 = vst.msk [vmem:[#allocation2 + $0x58] sm:$0xf] %vm2477, %v2416
      %2499 = vst.msk [vmem:[#allocation2 + $0x5c] sm:$0xf] %vm2477, %v2426
      %2500 = vst.msk [vmem:[#allocation2 + $0x60] sm:$0xf] %vm2477, %v2436
      %2501 = vst.msk [vmem:[#allocation2 + $0x64] sm:$0xf] %vm2477, %v2446
      %vm2502 = vcmask 517120
      %2503 = vst.msk [vmem:[#allocation2 + $0x68] sm:$0x3] %vm2502, %v2451
      %v2504 = vpack.c.bf16 %v2070, %v2069
      %v2505 = vpack.c.bf16 %v2072, %v2071
      %v2506 = vpack.c.bf16 %v2074, %v2073
      %v2507 = vpack.c.bf16 %v2076, %v2075
      %v2508 = vpack.c.bf16 %v2078, %v2077
      %v2509 = vpack.c.bf16 %v2080, %v2079
      %v2510 = vpack.c.bf16 %v2082, %v2081
      %v2511 = vpack.c.bf16 %v2084, %v2083
      %v2512 = vpack.c.bf16 %v2086, %v2085
      %v2513 = vpack.c.bf16 %v2088, %v2087
      %v2514 = vpack.c.bf16 %v2090, %v2089
      %v2515 = vpack.c.bf16 %v2092, %v2091
      %v2516 = vpack.c.bf16 %v2094, %v2093
      %v2530 = vunpack.c.l.b16 %v2504
      %v2531 = vunpack.c.h.b16 %v2504
      %v2532 = vunpack.c.l.b16 %v2505
      %v2533 = vunpack.c.h.b16 %v2505
      %v2534 = vunpack.c.l.b16 %v2506
      %v2535 = vunpack.c.h.b16 %v2506
      %v2536 = vunpack.c.l.b16 %v2507
      %v2537 = vunpack.c.h.b16 %v2507
      %v2538 = vunpack.c.l.b16 %v2508
      %v2539 = vunpack.c.h.b16 %v2508
      %v2540 = vunpack.c.l.b16 %v2509
      %v2541 = vunpack.c.h.b16 %v2509
      %v2542 = vunpack.c.l.b16 %v2510
      %v2543 = vunpack.c.h.b16 %v2510
      %v2544 = vunpack.c.l.b16 %v2511
      %v2545 = vunpack.c.h.b16 %v2511
      %v2546 = vunpack.c.l.b16 %v2512
      %v2547 = vunpack.c.h.b16 %v2512
      %v2548 = vunpack.c.l.b16 %v2513
      %v2549 = vunpack.c.h.b16 %v2513
      %v2550 = vunpack.c.l.b16 %v2514
      %v2551 = vunpack.c.h.b16 %v2514
      %v2552 = vunpack.c.l.b16 %v2515
      %v2553 = vunpack.c.h.b16 %v2515
      %v2554 = vunpack.c.l.b16 %v2516
      %v2555 = vunpack.c.h.b16 %v2516
      %v2556 = vpack.c.b16 %v2530, %v2530
      %v2557 = vpack.c.b16 %v2531, %v2531
      %v2558 = vpack.c.b16 %v2532, %v2532
      %v2559 = vpack.c.b16 %v2533, %v2533
      %v2560 = vpack.c.b16 %v2534, %v2534
      %v2561 = vpack.c.b16 %v2535, %v2535
      %v2562 = vpack.c.b16 %v2536, %v2536
      %v2563 = vpack.c.b16 %v2537, %v2537
      %v2564 = vpack.c.b16 %v2538, %v2538
      %v2565 = vpack.c.b16 %v2539, %v2539
      %v2566 = vpack.c.b16 %v2540, %v2540
      %v2567 = vpack.c.b16 %v2541, %v2541
      %v2568 = vpack.c.b16 %v2542, %v2542
      %v2569 = vpack.c.b16 %v2543, %v2543
      %v2570 = vpack.c.b16 %v2544, %v2544
      %v2571 = vpack.c.b16 %v2545, %v2545
      %v2572 = vpack.c.b16 %v2546, %v2546
      %v2573 = vpack.c.b16 %v2547, %v2547
      %v2574 = vpack.c.b16 %v2548, %v2548
      %v2575 = vpack.c.b16 %v2549, %v2549
      %v2576 = vpack.c.b16 %v2550, %v2550
      %v2577 = vpack.c.b16 %v2551, %v2551
      %v2578 = vpack.c.b16 %v2552, %v2552
      %v2579 = vpack.c.b16 %v2553, %v2553
      %v2580 = vpack.c.b16 %v2554, %v2554
      %v2581 = vpack.c.b16 %v2555, %v2555
      %vm2582 = vsmask.f32 1280
      %vm2583 = vsmask.f32 5392
      %vm2584 = vmor %vm2582, %vm2583
      %v2586 = vshrl.u32 %v2556, 16
      %v2588 = vrot.slane %v2586, 6
      %v2589 = vshll.u32 %v2556, 16
      %v2591 = vrot.slane %v2589, 7
      %v2592 = vor.u32 %v2588, %v2591
      %v2593 = vrot.slane %v2592, 4
      %v2595 = vshrl.u32 %v2557, 16
      %v2597 = vrot.slane %v2595, 6
      %v2598 = vshll.u32 %v2557, 16
      %v2600 = vrot.slane %v2598, 7
      %v2601 = vor.u32 %v2597, %v2600
      %v2602 = vsel %vm2584, %v2593, %v2601
      %v2603 = vrot.slane %v2601, 4
      %v2605 = vshrl.u32 %v2558, 16
      %v2607 = vrot.slane %v2605, 6
      %v2608 = vshll.u32 %v2558, 16
      %v2610 = vrot.slane %v2608, 7
      %v2611 = vor.u32 %v2607, %v2610
      %v2612 = vsel %vm2584, %v2603, %v2611
      %v2613 = vrot.slane %v2611, 4
      %v2615 = vshrl.u32 %v2559, 16
      %v2617 = vrot.slane %v2615, 6
      %v2618 = vshll.u32 %v2559, 16
      %v2620 = vrot.slane %v2618, 7
      %v2621 = vor.u32 %v2617, %v2620
      %v2622 = vsel %vm2584, %v2613, %v2621
      %v2623 = vrot.slane %v2621, 4
      %v2625 = vshrl.u32 %v2560, 16
      %v2627 = vrot.slane %v2625, 6
      %v2628 = vshll.u32 %v2560, 16
      %v2630 = vrot.slane %v2628, 7
      %v2631 = vor.u32 %v2627, %v2630
      %v2632 = vsel %vm2584, %v2623, %v2631
      %v2633 = vrot.slane %v2631, 4
      %v2635 = vshrl.u32 %v2561, 16
      %v2637 = vrot.slane %v2635, 6
      %v2638 = vshll.u32 %v2561, 16
      %v2640 = vrot.slane %v2638, 7
      %v2641 = vor.u32 %v2637, %v2640
      %v2642 = vsel %vm2584, %v2633, %v2641
      %v2643 = vrot.slane %v2641, 4
      %v2645 = vshrl.u32 %v2562, 16
      %v2647 = vrot.slane %v2645, 6
      %v2648 = vshll.u32 %v2562, 16
      %v2650 = vrot.slane %v2648, 7
      %v2651 = vor.u32 %v2647, %v2650
      %v2652 = vsel %vm2584, %v2643, %v2651
      %v2653 = vrot.slane %v2651, 4
      %v2655 = vshrl.u32 %v2563, 16
      %v2657 = vrot.slane %v2655, 6
      %v2658 = vshll.u32 %v2563, 16
      %v2660 = vrot.slane %v2658, 7
      %v2661 = vor.u32 %v2657, %v2660
      %v2662 = vsel %vm2584, %v2653, %v2661
      %v2663 = vrot.slane %v2661, 4
      %v2665 = vshrl.u32 %v2564, 16
      %v2667 = vrot.slane %v2665, 6
      %v2668 = vshll.u32 %v2564, 16
      %v2670 = vrot.slane %v2668, 7
      %v2671 = vor.u32 %v2667, %v2670
      %v2672 = vsel %vm2584, %v2663, %v2671
      %v2673 = vrot.slane %v2671, 4
      %v2675 = vshrl.u32 %v2565, 16
      %v2677 = vrot.slane %v2675, 6
      %v2678 = vshll.u32 %v2565, 16
      %v2680 = vrot.slane %v2678, 7
      %v2681 = vor.u32 %v2677, %v2680
      %v2682 = vsel %vm2584, %v2673, %v2681
      %v2683 = vrot.slane %v2681, 4
      %v2685 = vshrl.u32 %v2566, 16
      %v2687 = vrot.slane %v2685, 6
      %v2688 = vshll.u32 %v2566, 16
      %v2690 = vrot.slane %v2688, 7
      %v2691 = vor.u32 %v2687, %v2690
      %v2692 = vsel %vm2584, %v2683, %v2691
      %v2693 = vrot.slane %v2691, 4
      %v2695 = vshrl.u32 %v2567, 16
      %v2697 = vrot.slane %v2695, 6
      %v2698 = vshll.u32 %v2567, 16
      %v2700 = vrot.slane %v2698, 7
      %v2701 = vor.u32 %v2697, %v2700
      %v2702 = vsel %vm2584, %v2693, %v2701
      %v2703 = vrot.slane %v2701, 4
      %v2705 = vshrl.u32 %v2568, 16
      %v2707 = vrot.slane %v2705, 6
      %v2708 = vshll.u32 %v2568, 16
      %v2710 = vrot.slane %v2708, 7
      %v2711 = vor.u32 %v2707, %v2710
      %v2712 = vsel %vm2584, %v2703, %v2711
      %v2713 = vrot.slane %v2711, 4
      %v2715 = vshrl.u32 %v2569, 16
      %v2717 = vrot.slane %v2715, 6
      %v2718 = vshll.u32 %v2569, 16
      %v2720 = vrot.slane %v2718, 7
      %v2721 = vor.u32 %v2717, %v2720
      %v2722 = vsel %vm2584, %v2713, %v2721
      %v2723 = vrot.slane %v2721, 4
      %v2725 = vshrl.u32 %v2570, 16
      %v2727 = vrot.slane %v2725, 6
      %v2728 = vshll.u32 %v2570, 16
      %v2730 = vrot.slane %v2728, 7
      %v2731 = vor.u32 %v2727, %v2730
      %v2732 = vsel %vm2584, %v2723, %v2731
      %v2733 = vrot.slane %v2731, 4
      %v2735 = vshrl.u32 %v2571, 16
      %v2737 = vrot.slane %v2735, 6
      %v2738 = vshll.u32 %v2571, 16
      %v2740 = vrot.slane %v2738, 7
      %v2741 = vor.u32 %v2737, %v2740
      %v2742 = vsel %vm2584, %v2733, %v2741
      %v2743 = vrot.slane %v2741, 4
      %v2745 = vshrl.u32 %v2572, 16
      %v2747 = vrot.slane %v2745, 6
      %v2748 = vshll.u32 %v2572, 16
      %v2750 = vrot.slane %v2748, 7
      %v2751 = vor.u32 %v2747, %v2750
      %v2752 = vsel %vm2584, %v2743, %v2751
      %v2753 = vrot.slane %v2751, 4
      %v2755 = vshrl.u32 %v2573, 16
      %v2757 = vrot.slane %v2755, 6
      %v2758 = vshll.u32 %v2573, 16
      %v2760 = vrot.slane %v2758, 7
      %v2761 = vor.u32 %v2757, %v2760
      %v2762 = vsel %vm2584, %v2753, %v2761
      %v2763 = vrot.slane %v2761, 4
      %v2765 = vshrl.u32 %v2574, 16
      %v2767 = vrot.slane %v2765, 6
      %v2768 = vshll.u32 %v2574, 16
      %v2770 = vrot.slane %v2768, 7
      %v2771 = vor.u32 %v2767, %v2770
      %v2772 = vsel %vm2584, %v2763, %v2771
      %v2773 = vrot.slane %v2771, 4
      %v2775 = vshrl.u32 %v2575, 16
      %v2777 = vrot.slane %v2775, 6
      %v2778 = vshll.u32 %v2575, 16
      %v2780 = vrot.slane %v2778, 7
      %v2781 = vor.u32 %v2777, %v2780
      %v2782 = vsel %vm2584, %v2773, %v2781
      %v2783 = vrot.slane %v2781, 4
      %v2785 = vshrl.u32 %v2576, 16
      %v2787 = vrot.slane %v2785, 6
      %v2788 = vshll.u32 %v2576, 16
      %v2790 = vrot.slane %v2788, 7
      %v2791 = vor.u32 %v2787, %v2790
      %v2792 = vsel %vm2584, %v2783, %v2791
      %v2793 = vrot.slane %v2791, 4
      %v2795 = vshrl.u32 %v2577, 16
      %v2797 = vrot.slane %v2795, 6
      %v2798 = vshll.u32 %v2577, 16
      %v2800 = vrot.slane %v2798, 7
      %v2801 = vor.u32 %v2797, %v2800
      %v2802 = vsel %vm2584, %v2793, %v2801
      %v2803 = vrot.slane %v2801, 4
      %v2805 = vshrl.u32 %v2578, 16
      %v2807 = vrot.slane %v2805, 6
      %v2808 = vshll.u32 %v2578, 16
      %v2810 = vrot.slane %v2808, 7
      %v2811 = vor.u32 %v2807, %v2810
      %v2812 = vsel %vm2584, %v2803, %v2811
      %v2813 = vrot.slane %v2811, 4
      %v2815 = vshrl.u32 %v2579, 16
      %v2817 = vrot.slane %v2815, 6
      %v2818 = vshll.u32 %v2579, 16
      %v2820 = vrot.slane %v2818, 7
      %v2821 = vor.u32 %v2817, %v2820
      %v2822 = vsel %vm2584, %v2813, %v2821
      %v2823 = vrot.slane %v2821, 4
      %v2825 = vshrl.u32 %v2580, 16
      %v2827 = vrot.slane %v2825, 6
      %v2828 = vshll.u32 %v2580, 16
      %v2830 = vrot.slane %v2828, 7
      %v2831 = vor.u32 %v2827, %v2830
      %v2832 = vsel %vm2584, %v2823, %v2831
      %v2833 = vrot.slane %v2831, 4
      %v2835 = vshll.u32 %v2581, 16
      %v2837 = vrot.slane %v2835, 7
      %v2838 = vsel %vm2584, %v2833, %v2837
      %2839 = vrot.lane.b32.xlu0 %v2602, 64
      %v2840 = vpop.permute.xlu0 %2839
      %2841 = vrot.lane.b32.xlu0 %v2612, 64
      %v2842 = vpop.permute.xlu0 %2841
      %2843 = vrot.lane.b32.xlu0 %v2622, 64
      %v2844 = vpop.permute.xlu0 %2843
      %2845 = vrot.lane.b32.xlu0 %v2632, 64
      %v2846 = vpop.permute.xlu0 %2845
      %2847 = vrot.lane.b32.xlu0 %v2642, 64
      %v2848 = vpop.permute.xlu0 %2847
      %2849 = vrot.lane.b32.xlu0 %v2652, 64
      %v2850 = vpop.permute.xlu0 %2849
      %2851 = vrot.lane.b32.xlu0 %v2662, 64
      %v2852 = vpop.permute.xlu0 %2851
      %2853 = vrot.lane.b32.xlu0 %v2672, 64
      %v2854 = vpop.permute.xlu0 %2853
      %2855 = vrot.lane.b32.xlu0 %v2682, 64
      %v2856 = vpop.permute.xlu0 %2855
      %2857 = vrot.lane.b32.xlu0 %v2692, 64
      %v2858 = vpop.permute.xlu0 %2857
      %2859 = vrot.lane.b32.xlu0 %v2702, 64
      %v2860 = vpop.permute.xlu0 %2859
      %2861 = vrot.lane.b32.xlu0 %v2712, 64
      %v2862 = vpop.permute.xlu0 %2861
      %2863 = vrot.lane.b32.xlu0 %v2722, 64
      %v2864 = vpop.permute.xlu0 %2863
      %2865 = vrot.lane.b32.xlu0 %v2732, 64
      %v2866 = vpop.permute.xlu0 %2865
      %2867 = vrot.lane.b32.xlu0 %v2742, 64
      %v2868 = vpop.permute.xlu0 %2867
      %2869 = vrot.lane.b32.xlu0 %v2752, 64
      %v2870 = vpop.permute.xlu0 %2869
      %2871 = vrot.lane.b32.xlu0 %v2762, 64
      %v2872 = vpop.permute.xlu0 %2871
      %2873 = vrot.lane.b32.xlu0 %v2772, 64
      %v2874 = vpop.permute.xlu0 %2873
      %2875 = vrot.lane.b32.xlu0 %v2782, 64
      %v2876 = vpop.permute.xlu0 %2875
      %2877 = vrot.lane.b32.xlu0 %v2792, 64
      %v2878 = vpop.permute.xlu0 %2877
      %2879 = vrot.lane.b32.xlu0 %v2802, 64
      %v2880 = vpop.permute.xlu0 %2879
      %2881 = vrot.lane.b32.xlu0 %v2812, 64
      %v2882 = vpop.permute.xlu0 %2881
      %2883 = vrot.lane.b32.xlu0 %v2822, 64
      %v2884 = vpop.permute.xlu0 %2883
      %2885 = vrot.lane.b32.xlu0 %v2832, 64
      %v2886 = vpop.permute.xlu0 %2885
      %2887 = vrot.lane.b32.xlu0 %v2838, 64
      %v2888 = vpop.permute.xlu0 %2887
      %vm2914 = vcmask 1043968
      %2915 = vst.msk [vmem:[#allocation2 + $0x8] sm:$0xf] %vm2914, %v2840
      %2916 = vst.msk [vmem:[#allocation2 + $0xc] sm:$0xf] %vm2914, %v2842
      %2917 = vst.msk [vmem:[#allocation2 + $0x10] sm:$0xf] %vm2914, %v2844
      %2918 = vst.msk [vmem:[#allocation2 + $0x14] sm:$0xf] %vm2914, %v2846
      %2919 = vst.msk [vmem:[#allocation2 + $0x18] sm:$0xf] %vm2914, %v2848
      %2920 = vst.msk [vmem:[#allocation2 + $0x1c] sm:$0xf] %vm2914, %v2850
      %2921 = vst.msk [vmem:[#allocation2 + $0x20] sm:$0xf] %vm2914, %v2852
      %2922 = vst.msk [vmem:[#allocation2 + $0x24] sm:$0xf] %vm2914, %v2854
      %2923 = vst.msk [vmem:[#allocation2 + $0x28] sm:$0xf] %vm2914, %v2856
      %2924 = vst.msk [vmem:[#allocation2 + $0x2c] sm:$0xf] %vm2914, %v2858
      %2925 = vst.msk [vmem:[#allocation2 + $0x30] sm:$0xf] %vm2914, %v2860
      %2926 = vst.msk [vmem:[#allocation2 + $0x34] sm:$0xf] %vm2914, %v2862
      %2927 = vst.msk [vmem:[#allocation2 + $0x38] sm:$0xf] %vm2914, %v2864
      %2928 = vst.msk [vmem:[#allocation2 + $0x3c] sm:$0xf] %vm2914, %v2866
      %2929 = vst.msk [vmem:[#allocation2 + $0x40] sm:$0xf] %vm2914, %v2868
      %2930 = vst.msk [vmem:[#allocation2 + $0x44] sm:$0xf] %vm2914, %v2870
      %2931 = vst.msk [vmem:[#allocation2 + $0x48] sm:$0xf] %vm2914, %v2872
      %2932 = vst.msk [vmem:[#allocation2 + $0x4c] sm:$0xf] %vm2914, %v2874
      %2933 = vst.msk [vmem:[#allocation2 + $0x50] sm:$0xf] %vm2914, %v2876
      %2934 = vst.msk [vmem:[#allocation2 + $0x54] sm:$0xf] %vm2914, %v2878
      %2935 = vst.msk [vmem:[#allocation2 + $0x58] sm:$0xf] %vm2914, %v2880
      %2936 = vst.msk [vmem:[#allocation2 + $0x5c] sm:$0xf] %vm2914, %v2882
      %2937 = vst.msk [vmem:[#allocation2 + $0x60] sm:$0xf] %vm2914, %v2884
      %2938 = vst.msk [vmem:[#allocation2 + $0x64] sm:$0xf] %vm2914, %v2886
      %vm2939 = vcmask 1041920
      %2940 = vst.msk [vmem:[#allocation2 + $0x68] sm:$0x3] %vm2939, %v2888
      %v2941 = vlaneseq
      %v2942 = vshrl.u32 %v2941, 7
      %v2943 = vadd.s32 %v2942, 8
      %v2944 = vadd.s32 %v2942, 16
      %v2945 = vadd.s32 %v2942, 24
      %v2946 = vadd.s32 %v2942, 32
      %v2947 = vadd.s32 %v2942, 40
      %v2948 = vadd.s32 %v2942, 48
      %v2949 = vadd.s32 %v2942, 56
      %v2950 = vadd.s32 %v2942, 64
      %v2951 = vadd.s32 %v2942, 72
      %v2952 = vadd.s32 %v2942, 80
      %v2953 = vadd.s32 %v2942, 88
      %v2954 = vadd.s32 %v2942, 96
      %v2955 = vadd.s32 %v2942, 104
      %v2956 = vadd.s32 %v2942, 112
      %v2957 = vadd.s32 %v2942, 120
      %v2958 = vadd.s32 %v2942, 128
      %v2959 = vadd.s32 %v2942, 136
      %v2960 = vadd.s32 %v2942, 144
      %v2961 = vadd.s32 %v2942, 152
      %v2962 = vadd.s32 %v2942, 160
      %v2963 = vadd.s32 %v2942, 168
      %v2964 = vadd.s32 %v2942, 176
      %v2965 = vadd.s32 %v2942, 184
      %v2966 = vadd.s32 %v2942, 192
      %vm2967 = vcmp.lt.s32.totalorder %v2942, 0
      %v2968 = vsub.s32 0, %v2942
      %v2969 = vsel %vm2967, %v2968, %v2942
      %v2970 = vmul.u32.u64.compose %v2969, 2454267026
      %v2971 = vextract.low.u32 %v2970
      %v2972 = vextract.high.u32 %v2970
      %vm2973 = vc.u32 %v2971, 2454267026
      %v2974 = vsel %vm2973, 1, 0
      %v2975 = vadd.s32 %v2972, %v2974
      %v2976 = vshrl.u32 %v2975, 3
      %v2977 = vmul.u32 %v2976, 14
      %v2978 = vsub.s32 %v2969, %v2977
      %v2979 = vsub.s32 0, %v2978
      %v2980 = vsel %vm2967, %v2979, %v2978
      %vm2981 = vcmp.lt.s32.totalorder %v2943, 0
      %v2982 = vsub.s32 0, %v2943
      %v2983 = vsel %vm2981, %v2982, %v2943
      %v2984 = vmul.u32.u64.compose %v2983, 2454267026
      %v2985 = vextract.low.u32 %v2984
      %v2986 = vextract.high.u32 %v2984
      %vm2987 = vc.u32 %v2985, 2454267026
      %v2988 = vsel %vm2987, 1, 0
      %v2989 = vadd.s32 %v2986, %v2988
      %v2990 = vshrl.u32 %v2989, 3
      %v2991 = vmul.u32 %v2990, 14
      %v2992 = vsub.s32 %v2983, %v2991
      %v2993 = vsub.s32 0, %v2992
      %v2994 = vsel %vm2981, %v2993, %v2992
      %vm2995 = vcmp.lt.s32.totalorder %v2944, 0
      %v2996 = vsub.s32 0, %v2944
      %v2997 = vsel %vm2995, %v2996, %v2944
      %v2998 = vmul.u32.u64.compose %v2997, 2454267026
      %v2999 = vextract.low.u32 %v2998
      %v3000 = vextract.high.u32 %v2998
      %vm3001 = vc.u32 %v2999, 2454267026
      %v3002 = vsel %vm3001, 1, 0
      %v3003 = vadd.s32 %v3000, %v3002
      %v3004 = vshrl.u32 %v3003, 3
      %v3005 = vmul.u32 %v3004, 14
      %v3006 = vsub.s32 %v2997, %v3005
      %v3007 = vsub.s32 0, %v3006
      %v3008 = vsel %vm2995, %v3007, %v3006
      %vm3009 = vcmp.lt.s32.totalorder %v2945, 0
      %v3010 = vsub.s32 0, %v2945
      %v3011 = vsel %vm3009, %v3010, %v2945
      %v3012 = vmul.u32.u64.compose %v3011, 2454267026
      %v3013 = vextract.low.u32 %v3012
      %v3014 = vextract.high.u32 %v3012
      %vm3015 = vc.u32 %v3013, 2454267026
      %v3016 = vsel %vm3015, 1, 0
      %v3017 = vadd.s32 %v3014, %v3016
      %v3018 = vshrl.u32 %v3017, 3
      %v3019 = vmul.u32 %v3018, 14
      %v3020 = vsub.s32 %v3011, %v3019
      %v3021 = vsub.s32 0, %v3020
      %v3022 = vsel %vm3009, %v3021, %v3020
      %vm3023 = vcmp.lt.s32.totalorder %v2946, 0
      %v3024 = vsub.s32 0, %v2946
      %v3025 = vsel %vm3023, %v3024, %v2946
      %v3026 = vmul.u32.u64.compose %v3025, 2454267026
      %v3027 = vextract.low.u32 %v3026
      %v3028 = vextract.high.u32 %v3026
      %vm3029 = vc.u32 %v3027, 2454267026
      %v3030 = vsel %vm3029, 1, 0
      %v3031 = vadd.s32 %v3028, %v3030
      %v3032 = vshrl.u32 %v3031, 3
      %v3033 = vmul.u32 %v3032, 14
      %v3034 = vsub.s32 %v3025, %v3033
      %v3035 = vsub.s32 0, %v3034
      %v3036 = vsel %vm3023, %v3035, %v3034
      %vm3037 = vcmp.lt.s32.totalorder %v2947, 0
      %v3038 = vsub.s32 0, %v2947
      %v3039 = vsel %vm3037, %v3038, %v2947
      %v3040 = vmul.u32.u64.compose %v3039, 2454267026
      %v3041 = vextract.low.u32 %v3040
      %v3042 = vextract.high.u32 %v3040
      %vm3043 = vc.u32 %v3041, 2454267026
      %v3044 = vsel %vm3043, 1, 0
      %v3045 = vadd.s32 %v3042, %v3044
      %v3046 = vshrl.u32 %v3045, 3
      %v3047 = vmul.u32 %v3046, 14
      %v3048 = vsub.s32 %v3039, %v3047
      %v3049 = vsub.s32 0, %v3048
      %v3050 = vsel %vm3037, %v3049, %v3048
      %vm3051 = vcmp.lt.s32.totalorder %v2948, 0
      %v3052 = vsub.s32 0, %v2948
      %v3053 = vsel %vm3051, %v3052, %v2948
      %v3054 = vmul.u32.u64.compose %v3053, 2454267026
      %v3055 = vextract.low.u32 %v3054
      %v3056 = vextract.high.u32 %v3054
      %vm3057 = vc.u32 %v3055, 2454267026
      %v3058 = vsel %vm3057, 1, 0
      %v3059 = vadd.s32 %v3056, %v3058
      %v3060 = vshrl.u32 %v3059, 3
      %v3061 = vmul.u32 %v3060, 14
      %v3062 = vsub.s32 %v3053, %v3061
      %v3063 = vsub.s32 0, %v3062
      %v3064 = vsel %vm3051, %v3063, %v3062
      %vm3065 = vcmp.lt.s32.totalorder %v2949, 0
      %v3066 = vsub.s32 0, %v2949
      %v3067 = vsel %vm3065, %v3066, %v2949
      %v3068 = vmul.u32.u64.compose %v3067, 2454267026
      %v3069 = vextract.low.u32 %v3068
      %v3070 = vextract.high.u32 %v3068
      %vm3071 = vc.u32 %v3069, 2454267026
      %v3072 = vsel %vm3071, 1, 0
      %v3073 = vadd.s32 %v3070, %v3072
      %v3074 = vshrl.u32 %v3073, 3
      %v3075 = vmul.u32 %v3074, 14
      %v3076 = vsub.s32 %v3067, %v3075
      %v3077 = vsub.s32 0, %v3076
      %v3078 = vsel %vm3065, %v3077, %v3076
      %vm3079 = vcmp.lt.s32.totalorder %v2950, 0
      %v3080 = vsub.s32 0, %v2950
      %v3081 = vsel %vm3079, %v3080, %v2950
      %v3082 = vmul.u32.u64.compose %v3081, 2454267026
      %v3083 = vextract.low.u32 %v3082
      %v3084 = vextract.high.u32 %v3082
      %vm3085 = vc.u32 %v3083, 2454267026
      %v3086 = vsel %vm3085, 1, 0
      %v3087 = vadd.s32 %v3084, %v3086
      %v3088 = vshrl.u32 %v3087, 3
      %v3089 = vmul.u32 %v3088, 14
      %v3090 = vsub.s32 %v3081, %v3089
      %v3091 = vsub.s32 0, %v3090
      %v3092 = vsel %vm3079, %v3091, %v3090
      %vm3093 = vcmp.lt.s32.totalorder %v2951, 0
      %v3094 = vsub.s32 0, %v2951
      %v3095 = vsel %vm3093, %v3094, %v2951
      %v3096 = vmul.u32.u64.compose %v3095, 2454267026
      %v3097 = vextract.low.u32 %v3096
      %v3098 = vextract.high.u32 %v3096
      %vm3099 = vc.u32 %v3097, 2454267026
      %v3100 = vsel %vm3099, 1, 0
      %v3101 = vadd.s32 %v3098, %v3100
      %v3102 = vshrl.u32 %v3101, 3
      %v3103 = vmul.u32 %v3102, 14
      %v3104 = vsub.s32 %v3095, %v3103
      %v3105 = vsub.s32 0, %v3104
      %v3106 = vsel %vm3093, %v3105, %v3104
      %vm3107 = vcmp.lt.s32.totalorder %v2952, 0
      %v3108 = vsub.s32 0, %v2952
      %v3109 = vsel %vm3107, %v3108, %v2952
      %v3110 = vmul.u32.u64.compose %v3109, 2454267026
      %v3111 = vextract.low.u32 %v3110
      %v3112 = vextract.high.u32 %v3110
      %vm3113 = vc.u32 %v3111, 2454267026
      %v3114 = vsel %vm3113, 1, 0
      %v3115 = vadd.s32 %v3112, %v3114
      %v3116 = vshrl.u32 %v3115, 3
      %v3117 = vmul.u32 %v3116, 14
      %v3118 = vsub.s32 %v3109, %v3117
      %v3119 = vsub.s32 0, %v3118
      %v3120 = vsel %vm3107, %v3119, %v3118
      %vm3121 = vcmp.lt.s32.totalorder %v2953, 0
      %v3122 = vsub.s32 0, %v2953
      %v3123 = vsel %vm3121, %v3122, %v2953
      %v3124 = vmul.u32.u64.compose %v3123, 2454267026
      %v3125 = vextract.low.u32 %v3124
      %v3126 = vextract.high.u32 %v3124
      %vm3127 = vc.u32 %v3125, 2454267026
      %v3128 = vsel %vm3127, 1, 0
      %v3129 = vadd.s32 %v3126, %v3128
      %v3130 = vshrl.u32 %v3129, 3
      %v3131 = vmul.u32 %v3130, 14
      %v3132 = vsub.s32 %v3123, %v3131
      %v3133 = vsub.s32 0, %v3132
      %v3134 = vsel %vm3121, %v3133, %v3132
      %vm3135 = vcmp.lt.s32.totalorder %v2954, 0
      %v3136 = vsub.s32 0, %v2954
      %v3137 = vsel %vm3135, %v3136, %v2954
      %v3138 = vmul.u32.u64.compose %v3137, 2454267026
      %v3139 = vextract.low.u32 %v3138
      %v3140 = vextract.high.u32 %v3138
      %vm3141 = vc.u32 %v3139, 2454267026
      %v3142 = vsel %vm3141, 1, 0
      %v3143 = vadd.s32 %v3140, %v3142
      %v3144 = vshrl.u32 %v3143, 3
      %v3145 = vmul.u32 %v3144, 14
      %v3146 = vsub.s32 %v3137, %v3145
      %v3147 = vsub.s32 0, %v3146
      %v3148 = vsel %vm3135, %v3147, %v3146
      %vm3149 = vcmp.lt.s32.totalorder %v2955, 0
      %v3150 = vsub.s32 0, %v2955
      %v3151 = vsel %vm3149, %v3150, %v2955
      %v3152 = vmul.u32.u64.compose %v3151, 2454267026
      %v3153 = vextract.low.u32 %v3152
      %v3154 = vextract.high.u32 %v3152
      %vm3155 = vc.u32 %v3153, 2454267026
      %v3156 = vsel %vm3155, 1, 0
      %v3157 = vadd.s32 %v3154, %v3156
      %v3158 = vshrl.u32 %v3157, 3
      %v3159 = vmul.u32 %v3158, 14
      %v3160 = vsub.s32 %v3151, %v3159
      %v3161 = vsub.s32 0, %v3160
      %v3162 = vsel %vm3149, %v3161, %v3160
      %vm3163 = vcmp.lt.s32.totalorder %v2956, 0
      %v3164 = vsub.s32 0, %v2956
      %v3165 = vsel %vm3163, %v3164, %v2956
      %v3166 = vmul.u32.u64.compose %v3165, 2454267026
      %v3167 = vextract.low.u32 %v3166
      %v3168 = vextract.high.u32 %v3166
      %vm3169 = vc.u32 %v3167, 2454267026
      %v3170 = vsel %vm3169, 1, 0
      %v3171 = vadd.s32 %v3168, %v3170
      %v3172 = vshrl.u32 %v3171, 3
      %v3173 = vmul.u32 %v3172, 14
      %v3174 = vsub.s32 %v3165, %v3173
      %v3175 = vsub.s32 0, %v3174
      %v3176 = vsel %vm3163, %v3175, %v3174
      %vm3177 = vcmp.lt.s32.totalorder %v2957, 0
      %v3178 = vsub.s32 0, %v2957
      %v3179 = vsel %vm3177, %v3178, %v2957
      %v3180 = vmul.u32.u64.compose %v3179, 2454267026
      %v3181 = vextract.low.u32 %v3180
      %v3182 = vextract.high.u32 %v3180
      %vm3183 = vc.u32 %v3181, 2454267026
      %v3184 = vsel %vm3183, 1, 0
      %v3185 = vadd.s32 %v3182, %v3184
      %v3186 = vshrl.u32 %v3185, 3
      %v3187 = vmul.u32 %v3186, 14
      %v3188 = vsub.s32 %v3179, %v3187
      %v3189 = vsub.s32 0, %v3188
      %v3190 = vsel %vm3177, %v3189, %v3188
      %vm3191 = vcmp.lt.s32.totalorder %v2958, 0
      %v3192 = vsub.s32 0, %v2958
      %v3193 = vsel %vm3191, %v3192, %v2958
      %v3194 = vmul.u32.u64.compose %v3193, 2454267026
      %v3195 = vextract.low.u32 %v3194
      %v3196 = vextract.high.u32 %v3194
      %vm3197 = vc.u32 %v3195, 2454267026
      %v3198 = vsel %vm3197, 1, 0
      %v3199 = vadd.s32 %v3196, %v3198
      %v3200 = vshrl.u32 %v3199, 3
      %v3201 = vmul.u32 %v3200, 14
      %v3202 = vsub.s32 %v3193, %v3201
      %v3203 = vsub.s32 0, %v3202
      %v3204 = vsel %vm3191, %v3203, %v3202
      %vm3205 = vcmp.lt.s32.totalorder %v2959, 0
      %v3206 = vsub.s32 0, %v2959
      %v3207 = vsel %vm3205, %v3206, %v2959
      %v3208 = vmul.u32.u64.compose %v3207, 2454267026
      %v3209 = vextract.low.u32 %v3208
      %v3210 = vextract.high.u32 %v3208
      %vm3211 = vc.u32 %v3209, 2454267026
      %v3212 = vsel %vm3211, 1, 0
      %v3213 = vadd.s32 %v3210, %v3212
      %v3214 = vshrl.u32 %v3213, 3
      %v3215 = vmul.u32 %v3214, 14
      %v3216 = vsub.s32 %v3207, %v3215
      %v3217 = vsub.s32 0, %v3216
      %v3218 = vsel %vm3205, %v3217, %v3216
      %vm3219 = vcmp.lt.s32.totalorder %v2960, 0
      %v3220 = vsub.s32 0, %v2960
      %v3221 = vsel %vm3219, %v3220, %v2960
      %v3222 = vmul.u32.u64.compose %v3221, 2454267026
      %v3223 = vextract.low.u32 %v3222
      %v3224 = vextract.high.u32 %v3222
      %vm3225 = vc.u32 %v3223, 2454267026
      %v3226 = vsel %vm3225, 1, 0
      %v3227 = vadd.s32 %v3224, %v3226
      %v3228 = vshrl.u32 %v3227, 3
      %v3229 = vmul.u32 %v3228, 14
      %v3230 = vsub.s32 %v3221, %v3229
      %v3231 = vsub.s32 0, %v3230
      %v3232 = vsel %vm3219, %v3231, %v3230
      %vm3233 = vcmp.lt.s32.totalorder %v2961, 0
      %v3234 = vsub.s32 0, %v2961
      %v3235 = vsel %vm3233, %v3234, %v2961
      %v3236 = vmul.u32.u64.compose %v3235, 2454267026
      %v3237 = vextract.low.u32 %v3236
      %v3238 = vextract.high.u32 %v3236
      %vm3239 = vc.u32 %v3237, 2454267026
      %v3240 = vsel %vm3239, 1, 0
      %v3241 = vadd.s32 %v3238, %v3240
      %v3242 = vshrl.u32 %v3241, 3
      %v3243 = vmul.u32 %v3242, 14
      %v3244 = vsub.s32 %v3235, %v3243
      %v3245 = vsub.s32 0, %v3244
      %v3246 = vsel %vm3233, %v3245, %v3244
      %vm3247 = vcmp.lt.s32.totalorder %v2962, 0
      %v3248 = vsub.s32 0, %v2962
      %v3249 = vsel %vm3247, %v3248, %v2962
      %v3250 = vmul.u32.u64.compose %v3249, 2454267026
      %v3251 = vextract.low.u32 %v3250
      %v3252 = vextract.high.u32 %v3250
      %vm3253 = vc.u32 %v3251, 2454267026
      %v3254 = vsel %vm3253, 1, 0
      %v3255 = vadd.s32 %v3252, %v3254
      %v3256 = vshrl.u32 %v3255, 3
      %v3257 = vmul.u32 %v3256, 14
      %v3258 = vsub.s32 %v3249, %v3257
      %v3259 = vsub.s32 0, %v3258
      %v3260 = vsel %vm3247, %v3259, %v3258
      %vm3261 = vcmp.lt.s32.totalorder %v2963, 0
      %v3262 = vsub.s32 0, %v2963
      %v3263 = vsel %vm3261, %v3262, %v2963
      %v3264 = vmul.u32.u64.compose %v3263, 2454267026
      %v3265 = vextract.low.u32 %v3264
      %v3266 = vextract.high.u32 %v3264
      %vm3267 = vc.u32 %v3265, 2454267026
      %v3268 = vsel %vm3267, 1, 0
      %v3269 = vadd.s32 %v3266, %v3268
      %v3270 = vshrl.u32 %v3269, 3
      %v3271 = vmul.u32 %v3270, 14
      %v3272 = vsub.s32 %v3263, %v3271
      %v3273 = vsub.s32 0, %v3272
      %v3274 = vsel %vm3261, %v3273, %v3272
      %vm3275 = vcmp.lt.s32.totalorder %v2964, 0
      %v3276 = vsub.s32 0, %v2964
      %v3277 = vsel %vm3275, %v3276, %v2964
      %v3278 = vmul.u32.u64.compose %v3277, 2454267026
      %v3279 = vextract.low.u32 %v3278
      %v3280 = vextract.high.u32 %v3278
      %vm3281 = vc.u32 %v3279, 2454267026
      %v3282 = vsel %vm3281, 1, 0
      %v3283 = vadd.s32 %v3280, %v3282
      %v3284 = vshrl.u32 %v3283, 3
      %v3285 = vmul.u32 %v3284, 14
      %v3286 = vsub.s32 %v3277, %v3285
      %v3287 = vsub.s32 0, %v3286
      %v3288 = vsel %vm3275, %v3287, %v3286
      %vm3289 = vcmp.lt.s32.totalorder %v2965, 0
      %v3290 = vsub.s32 0, %v2965
      %v3291 = vsel %vm3289, %v3290, %v2965
      %v3292 = vmul.u32.u64.compose %v3291, 2454267026
      %v3293 = vextract.low.u32 %v3292
      %v3294 = vextract.high.u32 %v3292
      %vm3295 = vc.u32 %v3293, 2454267026
      %v3296 = vsel %vm3295, 1, 0
      %v3297 = vadd.s32 %v3294, %v3296
      %v3298 = vshrl.u32 %v3297, 3
      %v3299 = vmul.u32 %v3298, 14
      %v3300 = vsub.s32 %v3291, %v3299
      %v3301 = vsub.s32 0, %v3300
      %v3302 = vsel %vm3289, %v3301, %v3300
      %vm3303 = vcmp.lt.s32.totalorder %v2966, 0
      %v3304 = vsub.s32 0, %v2966
      %v3305 = vsel %vm3303, %v3304, %v2966
      %v3306 = vmul.u32.u64.compose %v3305, 2454267026
      %v3307 = vextract.low.u32 %v3306
      %v3308 = vextract.high.u32 %v3306
      %vm3309 = vc.u32 %v3307, 2454267026
      %v3310 = vsel %vm3309, 1, 0
      %v3311 = vadd.s32 %v3308, %v3310
      %v3312 = vshrl.u32 %v3311, 3
      %v3313 = vmul.u32 %v3312, 14
      %v3314 = vsub.s32 %v3305, %v3313
      %v3315 = vsub.s32 0, %v3314
      %v3316 = vsel %vm3303, %v3315, %v3314
      %vm3317 = vcmp.ne.s32.totalorder %v2980, 0
      %vm3318 = vcmp.ne.s32.totalorder %v2994, 0
      %vm3319 = vcmp.ne.s32.totalorder %v3008, 0
      %vm3320 = vcmp.ne.s32.totalorder %v3022, 0
      %vm3321 = vcmp.ne.s32.totalorder %v3036, 0
      %vm3322 = vcmp.ne.s32.totalorder %v3050, 0
      %vm3323 = vcmp.ne.s32.totalorder %v3064, 0
      %vm3324 = vcmp.ne.s32.totalorder %v3078, 0
      %vm3325 = vcmp.ne.s32.totalorder %v3092, 0
      %vm3326 = vcmp.ne.s32.totalorder %v3106, 0
      %vm3327 = vcmp.ne.s32.totalorder %v3120, 0
      %vm3328 = vcmp.ne.s32.totalorder %v3134, 0
      %vm3329 = vcmp.ne.s32.totalorder %v3148, 0
      %vm3330 = vcmp.ne.s32.totalorder %v3162, 0
      %vm3331 = vcmp.ne.s32.totalorder %v3176, 0
      %vm3332 = vcmp.ne.s32.totalorder %v3190, 0
      %vm3333 = vcmp.ne.s32.totalorder %v3204, 0
      %vm3334 = vcmp.ne.s32.totalorder %v3218, 0
      %vm3335 = vcmp.ne.s32.totalorder %v3232, 0
      %vm3336 = vcmp.ne.s32.totalorder %v3246, 0
      %vm3337 = vcmp.ne.s32.totalorder %v3260, 0
      %vm3338 = vcmp.ne.s32.totalorder %v3274, 0
      %vm3339 = vcmp.ne.s32.totalorder %v3288, 0
      %vm3340 = vcmp.ne.s32.totalorder %v3302, 0
      %vm3341 = vcmp.ne.s32.totalorder %v3316, 0
      %vm3342 = vcmp.lt.s32.totalorder %v2980, 0
      %vm3343 = vcmp.lt.s32.totalorder %v2994, 0
      %vm3344 = vcmp.lt.s32.totalorder %v3008, 0
      %vm3345 = vcmp.lt.s32.totalorder %v3022, 0
      %vm3346 = vcmp.lt.s32.totalorder %v3036, 0
      %vm3347 = vcmp.lt.s32.totalorder %v3050, 0
      %vm3348 = vcmp.lt.s32.totalorder %v3064, 0
      %vm3349 = vcmp.lt.s32.totalorder %v3078, 0
      %vm3350 = vcmp.lt.s32.totalorder %v3092, 0
      %vm3351 = vcmp.lt.s32.totalorder %v3106, 0
      %vm3352 = vcmp.lt.s32.totalorder %v3120, 0
      %vm3353 = vcmp.lt.s32.totalorder %v3134, 0
      %vm3354 = vcmp.lt.s32.totalorder %v3148, 0
      %vm3355 = vcmp.lt.s32.totalorder %v3162, 0
      %vm3356 = vcmp.lt.s32.totalorder %v3176, 0
      %vm3357 = vcmp.lt.s32.totalorder %v3190, 0
      %vm3358 = vcmp.lt.s32.totalorder %v3204, 0
      %vm3359 = vcmp.lt.s32.totalorder %v3218, 0
      %vm3360 = vcmp.lt.s32.totalorder %v3232, 0
      %vm3361 = vcmp.lt.s32.totalorder %v3246, 0
      %vm3362 = vcmp.lt.s32.totalorder %v3260, 0
      %vm3363 = vcmp.lt.s32.totalorder %v3274, 0
      %vm3364 = vcmp.lt.s32.totalorder %v3288, 0
      %vm3365 = vcmp.lt.s32.totalorder %v3302, 0
      %vm3366 = vcmp.lt.s32.totalorder %v3316, 0
      %vm3367 = vmand %vm3342, %vm3317
      %vm3368 = vmand %vm3343, %vm3318
      %vm3369 = vmand %vm3344, %vm3319
      %vm3370 = vmand %vm3345, %vm3320
      %vm3371 = vmand %vm3346, %vm3321
      %vm3372 = vmand %vm3347, %vm3322
      %vm3373 = vmand %vm3348, %vm3323
      %vm3374 = vmand %vm3349, %vm3324
      %vm3375 = vmand %vm3350, %vm3325
      %vm3376 = vmand %vm3351, %vm3326
      %vm3377 = vmand %vm3352, %vm3327
      %vm3378 = vmand %vm3353, %vm3328
      %vm3379 = vmand %vm3354, %vm3329
      %vm3380 = vmand %vm3355, %vm3330
      %vm3381 = vmand %vm3356, %vm3331
      %vm3382 = vmand %vm3357, %vm3332
      %vm3383 = vmand %vm3358, %vm3333
      %vm3384 = vmand %vm3359, %vm3334
      %vm3385 = vmand %vm3360, %vm3335
      %vm3386 = vmand %vm3361, %vm3336
      %vm3387 = vmand %vm3362, %vm3337
      %vm3388 = vmand %vm3363, %vm3338
      %vm3389 = vmand %vm3364, %vm3339
      %vm3390 = vmand %vm3365, %vm3340
      %vm3391 = vmand %vm3366, %vm3341
      %v3392 = vadd.s32 %v2980, 14
      %v3393 = vadd.s32 %v2994, 14
      %v3394 = vadd.s32 %v3008, 14
      %v3395 = vadd.s32 %v3022, 14
      %v3396 = vadd.s32 %v3036, 14
      %v3397 = vadd.s32 %v3050, 14
      %v3398 = vadd.s32 %v3064, 14
      %v3399 = vadd.s32 %v3078, 14
      %v3400 = vadd.s32 %v3092, 14
      %v3401 = vadd.s32 %v3106, 14
      %v3402 = vadd.s32 %v3120, 14
      %v3403 = vadd.s32 %v3134, 14
      %v3404 = vadd.s32 %v3148, 14
      %v3405 = vadd.s32 %v3162, 14
      %v3406 = vadd.s32 %v3176, 14
      %v3407 = vadd.s32 %v3190, 14
      %v3408 = vadd.s32 %v3204, 14
      %v3409 = vadd.s32 %v3218, 14
      %v3410 = vadd.s32 %v3232, 14
      %v3411 = vadd.s32 %v3246, 14
      %v3412 = vadd.s32 %v3260, 14
      %v3413 = vadd.s32 %v3274, 14
      %v3414 = vadd.s32 %v3288, 14
      %v3415 = vadd.s32 %v3302, 14
      %v3416 = vadd.s32 %v3316, 14
      %v3417 = vsel %vm3367, %v3392, %v2980
      %v3418 = vsel %vm3368, %v3393, %v2994
      %v3419 = vsel %vm3369, %v3394, %v3008
      %v3420 = vsel %vm3370, %v3395, %v3022
      %v3421 = vsel %vm3371, %v3396, %v3036
      %v3422 = vsel %vm3372, %v3397, %v3050
      %v3423 = vsel %vm3373, %v3398, %v3064
      %v3424 = vsel %vm3374, %v3399, %v3078
      %v3425 = vsel %vm3375, %v3400, %v3092
      %v3426 = vsel %vm3376, %v3401, %v3106
      %v3427 = vsel %vm3377, %v3402, %v3120
      %v3428 = vsel %vm3378, %v3403, %v3134
      %v3429 = vsel %vm3379, %v3404, %v3148
      %v3430 = vsel %vm3380, %v3405, %v3162
      %v3431 = vsel %vm3381, %v3406, %v3176
      %v3432 = vsel %vm3382, %v3407, %v3190
      %v3433 = vsel %vm3383, %v3408, %v3204
      %v3434 = vsel %vm3384, %v3409, %v3218
      %v3435 = vsel %vm3385, %v3410, %v3232
      %v3436 = vsel %vm3386, %v3411, %v3246
      %v3437 = vsel %vm3387, %v3412, %v3260
      %v3438 = vsel %vm3388, %v3413, %v3274
      %v3439 = vsel %vm3389, %v3414, %v3288
      %v3440 = vsel %vm3390, %v3415, %v3302
      %v3441 = vsel %vm3391, %v3416, %v3316
      %v3442 = vld [vmem:[#allocation2] sm:$0xf]
      %v3443 = vld [vmem:[#allocation2 + $0x4] sm:$0xf]
      %v3444 = vld [vmem:[#allocation2 + $0x8] sm:$0xf]
      %v3445 = vld [vmem:[#allocation2 + $0xc] sm:$0xf]
      %v3446 = vld [vmem:[#allocation2 + $0x10] sm:$0xf]
      %v3447 = vld [vmem:[#allocation2 + $0x14] sm:$0xf]
      %v3448 = vld [vmem:[#allocation2 + $0x18] sm:$0xf]
      %v3449 = vld [vmem:[#allocation2 + $0x1c] sm:$0xf]
      %v3450 = vld [vmem:[#allocation2 + $0x20] sm:$0xf]
      %v3451 = vld [vmem:[#allocation2 + $0x24] sm:$0xf]
      %v3452 = vld [vmem:[#allocation2 + $0x28] sm:$0xf]
      %v3453 = vld [vmem:[#allocation2 + $0x2c] sm:$0xf]
      %v3454 = vld [vmem:[#allocation2 + $0x30] sm:$0xf]
      %v3455 = vld [vmem:[#allocation2 + $0x34] sm:$0xf]
      %v3456 = vld [vmem:[#allocation2 + $0x38] sm:$0xf]
      %v3457 = vld [vmem:[#allocation2 + $0x3c] sm:$0xf]
      %v3458 = vld [vmem:[#allocation2 + $0x40] sm:$0xf]
      %v3459 = vld [vmem:[#allocation2 + $0x44] sm:$0xf]
      %v3460 = vld [vmem:[#allocation2 + $0x48] sm:$0xf]
      %v3461 = vld [vmem:[#allocation2 + $0x4c] sm:$0xf]
      %v3462 = vld [vmem:[#allocation2 + $0x50] sm:$0xf]
      %v3463 = vld [vmem:[#allocation2 + $0x54] sm:$0xf]
      %v3464 = vld [vmem:[#allocation2 + $0x58] sm:$0xf]
      %v3465 = vld [vmem:[#allocation2 + $0x5c] sm:$0xf]
      %v3466 = vld [vmem:[#allocation2 + $0x60] sm:$0x7]
      %vm3467 = vcmp.ge.s32.totalorder %v3417, 1
      %vm3468 = vcmp.ge.s32.totalorder %v3418, 1
      %vm3469 = vcmp.ge.s32.totalorder %v3419, 1
      %vm3470 = vcmp.ge.s32.totalorder %v3420, 1
      %vm3471 = vcmp.ge.s32.totalorder %v3421, 1
      %vm3472 = vcmp.ge.s32.totalorder %v3422, 1
      %vm3473 = vcmp.ge.s32.totalorder %v3423, 1
      %vm3474 = vcmp.ge.s32.totalorder %v3424, 1
      %vm3475 = vcmp.ge.s32.totalorder %v3425, 1
      %vm3476 = vcmp.ge.s32.totalorder %v3426, 1
      %vm3477 = vcmp.ge.s32.totalorder %v3427, 1
      %vm3478 = vcmp.ge.s32.totalorder %v3428, 1
      %vm3479 = vcmp.ge.s32.totalorder %v3429, 1
      %vm3480 = vcmp.ge.s32.totalorder %v3430, 1
      %vm3481 = vcmp.ge.s32.totalorder %v3431, 1
      %vm3482 = vcmp.ge.s32.totalorder %v3432, 1
      %vm3483 = vcmp.ge.s32.totalorder %v3433, 1
      %vm3484 = vcmp.ge.s32.totalorder %v3434, 1
      %vm3485 = vcmp.ge.s32.totalorder %v3435, 1
      %vm3486 = vcmp.ge.s32.totalorder %v3436, 1
      %vm3487 = vcmp.ge.s32.totalorder %v3437, 1
      %vm3488 = vcmp.ge.s32.totalorder %v3438, 1
      %vm3489 = vcmp.ge.s32.totalorder %v3439, 1
      %vm3490 = vcmp.ge.s32.totalorder %v3440, 1
      %vm3491 = vcmp.ge.s32.totalorder %v3441, 1
      %v3492 = vsel %vm3467, 1, 0
      %v3493 = vsel %vm3468, 1, 0
      %v3494 = vsel %vm3469, 1, 0
      %v3495 = vsel %vm3470, 1, 0
      %v3496 = vsel %vm3471, 1, 0
      %v3497 = vsel %vm3472, 1, 0
      %v3498 = vsel %vm3473, 1, 0
      %v3499 = vsel %vm3474, 1, 0
      %v3500 = vsel %vm3475, 1, 0
      %v3501 = vsel %vm3476, 1, 0
      %v3502 = vsel %vm3477, 1, 0
      %v3503 = vsel %vm3478, 1, 0
      %v3504 = vsel %vm3479, 1, 0
      %v3505 = vsel %vm3480, 1, 0
      %v3506 = vsel %vm3481, 1, 0
      %v3507 = vsel %vm3482, 1, 0
      %v3508 = vsel %vm3483, 1, 0
      %v3509 = vsel %vm3484, 1, 0
      %v3510 = vsel %vm3485, 1, 0
      %v3511 = vsel %vm3486, 1, 0
      %v3512 = vsel %vm3487, 1, 0
      %v3513 = vsel %vm3488, 1, 0
      %v3514 = vsel %vm3489, 1, 0
      %v3515 = vsel %vm3490, 1, 0
      %v3516 = vsel %vm3491, 1, 0
      %vm3517 = vcmp.eq.s32.totalorder %v3492, 1
      %vm3518 = vcmp.eq.s32.totalorder %v3493, 1
      %vm3519 = vcmp.eq.s32.totalorder %v3494, 1
      %vm3520 = vcmp.eq.s32.totalorder %v3495, 1
      %vm3521 = vcmp.eq.s32.totalorder %v3496, 1
      %vm3522 = vcmp.eq.s32.totalorder %v3497, 1
      %vm3523 = vcmp.eq.s32.totalorder %v3498, 1
      %vm3524 = vcmp.eq.s32.totalorder %v3499, 1
      %vm3525 = vcmp.eq.s32.totalorder %v3500, 1
      %vm3526 = vcmp.eq.s32.totalorder %v3501, 1
      %vm3527 = vcmp.eq.s32.totalorder %v3502, 1
      %vm3528 = vcmp.eq.s32.totalorder %v3503, 1
      %vm3529 = vcmp.eq.s32.totalorder %v3504, 1
      %vm3530 = vcmp.eq.s32.totalorder %v3505, 1
      %vm3531 = vcmp.eq.s32.totalorder %v3506, 1
      %vm3532 = vcmp.eq.s32.totalorder %v3507, 1
      %vm3533 = vcmp.eq.s32.totalorder %v3508, 1
      %vm3534 = vcmp.eq.s32.totalorder %v3509, 1
      %vm3535 = vcmp.eq.s32.totalorder %v3510, 1
      %vm3536 = vcmp.eq.s32.totalorder %v3511, 1
      %vm3537 = vcmp.eq.s32.totalorder %v3512, 1
      %vm3538 = vcmp.eq.s32.totalorder %v3513, 1
      %vm3539 = vcmp.eq.s32.totalorder %v3514, 1
      %vm3540 = vcmp.eq.s32.totalorder %v3515, 1
      %vm3541 = vcmp.eq.s32.totalorder %v3516, 1
      %vm3542 = vmpackc.low %vm3517, %vm3517
      %vm3543 = vmpackc.low %vm3518, %vm3518
      %vm3544 = vmpackc.low %vm3519, %vm3519
      %vm3545 = vmpackc.low %vm3520, %vm3520
      %vm3546 = vmpackc.low %vm3521, %vm3521
      %vm3547 = vmpackc.low %vm3522, %vm3522
      %vm3548 = vmpackc.low %vm3523, %vm3523
      %vm3549 = vmpackc.low %vm3524, %vm3524
      %vm3550 = vmpackc.low %vm3525, %vm3525
      %vm3551 = vmpackc.low %vm3526, %vm3526
      %vm3552 = vmpackc.low %vm3527, %vm3527
      %vm3553 = vmpackc.low %vm3528, %vm3528
      %vm3554 = vmpackc.low %vm3529, %vm3529
      %vm3555 = vmpackc.low %vm3530, %vm3530
      %vm3556 = vmpackc.low %vm3531, %vm3531
      %vm3557 = vmpackc.low %vm3532, %vm3532
      %vm3558 = vmpackc.low %vm3533, %vm3533
      %vm3559 = vmpackc.low %vm3534, %vm3534
      %vm3560 = vmpackc.low %vm3535, %vm3535
      %vm3561 = vmpackc.low %vm3536, %vm3536
      %vm3562 = vmpackc.low %vm3537, %vm3537
      %vm3563 = vmpackc.low %vm3538, %vm3538
      %vm3564 = vmpackc.low %vm3539, %vm3539
      %vm3565 = vmpackc.low %vm3540, %vm3540
      %vm3566 = vmpackc.low %vm3541, %vm3541
      %v3567 = vsel %vm3542, 65537, 0
      %v3568 = vsel %vm3543, 65537, 0
      %v3569 = vsel %vm3544, 65537, 0
      %v3570 = vsel %vm3545, 65537, 0
      %v3571 = vsel %vm3546, 65537, 0
      %v3572 = vsel %vm3547, 65537, 0
      %v3573 = vsel %vm3548, 65537, 0
      %v3574 = vsel %vm3549, 65537, 0
      %v3575 = vsel %vm3550, 65537, 0
      %v3576 = vsel %vm3551, 65537, 0
      %v3577 = vsel %vm3552, 65537, 0
      %v3578 = vsel %vm3553, 65537, 0
      %v3579 = vsel %vm3554, 65537, 0
      %v3580 = vsel %vm3555, 65537, 0
      %v3581 = vsel %vm3556, 65537, 0
      %v3582 = vsel %vm3557, 65537, 0
      %v3583 = vsel %vm3558, 65537, 0
      %v3584 = vsel %vm3559, 65537, 0
      %v3585 = vsel %vm3560, 65537, 0
      %v3586 = vsel %vm3561, 65537, 0
      %v3587 = vsel %vm3562, 65537, 0
      %v3588 = vsel %vm3563, 65537, 0
      %v3589 = vsel %vm3564, 65537, 0
      %v3590 = vsel %vm3565, 65537, 0
      %v3591 = vsel %vm3566, 65537, 0
      %vm3592 = vsmask.f32 256
      %vm3593 = vsmask.f32 4368
      %vm3594 = vmor %vm3592, %vm3593
      %v3596 = vshrl.u32 %v3567, 16
      %v3598 = vrot.slane %v3596, 7
      %v3599 = vshll.u32 %v3567, 16
      %v3601 = vor.u32 %v3598, %v3599
      %v3602 = vrot.slane %v3598, 4
      %v3604 = vshrl.u32 %v3568, 16
      %v3606 = vrot.slane %v3604, 7
      %v3607 = vshll.u32 %v3568, 16
      %v3609 = vor.u32 %v3606, %v3607
      %v3610 = vsel %vm3594, %v3602, %v3609
      %v3611 = vrot.slane %v3606, 4
      %v3613 = vshrl.u32 %v3569, 16
      %v3615 = vrot.slane %v3613, 7
      %v3616 = vshll.u32 %v3569, 16
      %v3618 = vor.u32 %v3615, %v3616
      %v3619 = vsel %vm3594, %v3611, %v3618
      %v3620 = vrot.slane %v3615, 4
      %v3622 = vshrl.u32 %v3570, 16
      %v3624 = vrot.slane %v3622, 7
      %v3625 = vshll.u32 %v3570, 16
      %v3627 = vor.u32 %v3624, %v3625
      %v3628 = vsel %vm3594, %v3620, %v3627
      %v3629 = vrot.slane %v3624, 4
      %v3631 = vshrl.u32 %v3571, 16
      %v3633 = vrot.slane %v3631, 7
      %v3634 = vshll.u32 %v3571, 16
      %v3636 = vor.u32 %v3633, %v3634
      %v3637 = vsel %vm3594, %v3629, %v3636
      %v3638 = vrot.slane %v3633, 4
      %v3640 = vshrl.u32 %v3572, 16
      %v3642 = vrot.slane %v3640, 7
      %v3643 = vshll.u32 %v3572, 16
      %v3645 = vor.u32 %v3642, %v3643
      %v3646 = vsel %vm3594, %v3638, %v3645
      %v3647 = vrot.slane %v3642, 4
      %v3649 = vshrl.u32 %v3573, 16
      %v3651 = vrot.slane %v3649, 7
      %v3652 = vshll.u32 %v3573, 16
      %v3654 = vor.u32 %v3651, %v3652
      %v3655 = vsel %vm3594, %v3647, %v3654
      %v3656 = vrot.slane %v3651, 4
      %v3658 = vshrl.u32 %v3574, 16
      %v3660 = vrot.slane %v3658, 7
      %v3661 = vshll.u32 %v3574, 16
      %v3663 = vor.u32 %v3660, %v3661
      %v3664 = vsel %vm3594, %v3656, %v3663
      %v3665 = vrot.slane %v3660, 4
      %v3667 = vshrl.u32 %v3575, 16
      %v3669 = vrot.slane %v3667, 7
      %v3670 = vshll.u32 %v3575, 16
      %v3672 = vor.u32 %v3669, %v3670
      %v3673 = vsel %vm3594, %v3665, %v3672
      %v3674 = vrot.slane %v3669, 4
      %v3676 = vshrl.u32 %v3576, 16
      %v3678 = vrot.slane %v3676, 7
      %v3679 = vshll.u32 %v3576, 16
      %v3681 = vor.u32 %v3678, %v3679
      %v3682 = vsel %vm3594, %v3674, %v3681
      %v3683 = vrot.slane %v3678, 4
      %v3685 = vshrl.u32 %v3577, 16
      %v3687 = vrot.slane %v3685, 7
      %v3688 = vshll.u32 %v3577, 16
      %v3690 = vor.u32 %v3687, %v3688
      %v3691 = vsel %vm3594, %v3683, %v3690
      %v3692 = vrot.slane %v3687, 4
      %v3694 = vshrl.u32 %v3578, 16
      %v3696 = vrot.slane %v3694, 7
      %v3697 = vshll.u32 %v3578, 16
      %v3699 = vor.u32 %v3696, %v3697
      %v3700 = vsel %vm3594, %v3692, %v3699
      %v3701 = vrot.slane %v3696, 4
      %v3703 = vshrl.u32 %v3579, 16
      %v3705 = vrot.slane %v3703, 7
      %v3706 = vshll.u32 %v3579, 16
      %v3708 = vor.u32 %v3705, %v3706
      %v3709 = vsel %vm3594, %v3701, %v3708
      %v3710 = vrot.slane %v3705, 4
      %v3712 = vshrl.u32 %v3580, 16
      %v3714 = vrot.slane %v3712, 7
      %v3715 = vshll.u32 %v3580, 16
      %v3717 = vor.u32 %v3714, %v3715
      %v3718 = vsel %vm3594, %v3710, %v3717
      %v3719 = vrot.slane %v3714, 4
      %v3721 = vshrl.u32 %v3581, 16
      %v3723 = vrot.slane %v3721, 7
      %v3724 = vshll.u32 %v3581, 16
      %v3726 = vor.u32 %v3723, %v3724
      %v3727 = vsel %vm3594, %v3719, %v3726
      %v3728 = vrot.slane %v3723, 4
      %v3730 = vshrl.u32 %v3582, 16
      %v3732 = vrot.slane %v3730, 7
      %v3733 = vshll.u32 %v3582, 16
      %v3735 = vor.u32 %v3732, %v3733
      %v3736 = vsel %vm3594, %v3728, %v3735
      %v3737 = vrot.slane %v3732, 4
      %v3739 = vshrl.u32 %v3583, 16
      %v3741 = vrot.slane %v3739, 7
      %v3742 = vshll.u32 %v3583, 16
      %v3744 = vor.u32 %v3741, %v3742
      %v3745 = vsel %vm3594, %v3737, %v3744
      %v3746 = vrot.slane %v3741, 4
      %v3748 = vshrl.u32 %v3584, 16
      %v3750 = vrot.slane %v3748, 7
      %v3751 = vshll.u32 %v3584, 16
      %v3753 = vor.u32 %v3750, %v3751
      %v3754 = vsel %vm3594, %v3746, %v3753
      %v3755 = vrot.slane %v3750, 4
      %v3757 = vshrl.u32 %v3585, 16
      %v3759 = vrot.slane %v3757, 7
      %v3760 = vshll.u32 %v3585, 16
      %v3762 = vor.u32 %v3759, %v3760
      %v3763 = vsel %vm3594, %v3755, %v3762
      %v3764 = vrot.slane %v3759, 4
      %v3766 = vshrl.u32 %v3586, 16
      %v3768 = vrot.slane %v3766, 7
      %v3769 = vshll.u32 %v3586, 16
      %v3771 = vor.u32 %v3768, %v3769
      %v3772 = vsel %vm3594, %v3764, %v3771
      %v3773 = vrot.slane %v3768, 4
      %v3775 = vshrl.u32 %v3587, 16
      %v3777 = vrot.slane %v3775, 7
      %v3778 = vshll.u32 %v3587, 16
      %v3780 = vor.u32 %v3777, %v3778
      %v3781 = vsel %vm3594, %v3773, %v3780
      %v3782 = vrot.slane %v3777, 4
      %v3784 = vshrl.u32 %v3588, 16
      %v3786 = vrot.slane %v3784, 7
      %v3787 = vshll.u32 %v3588, 16
      %v3789 = vor.u32 %v3786, %v3787
      %v3790 = vsel %vm3594, %v3782, %v3789
      %v3791 = vrot.slane %v3786, 4
      %v3793 = vshrl.u32 %v3589, 16
      %v3795 = vrot.slane %v3793, 7
      %v3796 = vshll.u32 %v3589, 16
      %v3798 = vor.u32 %v3795, %v3796
      %v3799 = vsel %vm3594, %v3791, %v3798
      %v3800 = vrot.slane %v3795, 4
      %v3802 = vshrl.u32 %v3590, 16
      %v3804 = vrot.slane %v3802, 7
      %v3805 = vshll.u32 %v3590, 16
      %v3807 = vor.u32 %v3804, %v3805
      %v3808 = vsel %vm3594, %v3800, %v3807
      %v3809 = vrot.slane %v3804, 4
      %v3811 = vshrl.u32 %v3591, 16
      %v3813 = vrot.slane %v3811, 7
      %v3814 = vshll.u32 %v3591, 16
      %v3816 = vor.u32 %v3813, %v3814
      %v3817 = vsel %vm3594, %v3809, %v3816
      %vm3818 = vcmp.ne.s16.totalorder %v3601, 0
      %vm3819 = vcmp.ne.s16.totalorder %v3610, 0
      %vm3820 = vcmp.ne.s16.totalorder %v3619, 0
      %vm3821 = vcmp.ne.s16.totalorder %v3628, 0
      %vm3822 = vcmp.ne.s16.totalorder %v3637, 0
      %vm3823 = vcmp.ne.s16.totalorder %v3646, 0
      %vm3824 = vcmp.ne.s16.totalorder %v3655, 0
      %vm3825 = vcmp.ne.s16.totalorder %v3664, 0
      %vm3826 = vcmp.ne.s16.totalorder %v3673, 0
      %vm3827 = vcmp.ne.s16.totalorder %v3682, 0
      %vm3828 = vcmp.ne.s16.totalorder %v3691, 0
      %vm3829 = vcmp.ne.s16.totalorder %v3700, 0
      %vm3830 = vcmp.ne.s16.totalorder %v3709, 0
      %vm3831 = vcmp.ne.s16.totalorder %v3718, 0
      %vm3832 = vcmp.ne.s16.totalorder %v3727, 0
      %vm3833 = vcmp.ne.s16.totalorder %v3736, 0
      %vm3834 = vcmp.ne.s16.totalorder %v3745, 0
      %vm3835 = vcmp.ne.s16.totalorder %v3754, 0
      %vm3836 = vcmp.ne.s16.totalorder %v3763, 0
      %vm3837 = vcmp.ne.s16.totalorder %v3772, 0
      %vm3838 = vcmp.ne.s16.totalorder %v3781, 0
      %vm3839 = vcmp.ne.s16.totalorder %v3790, 0
      %vm3840 = vcmp.ne.s16.totalorder %v3799, 0
      %vm3841 = vcmp.ne.s16.totalorder %v3808, 0
      %vm3842 = vcmp.ne.s16.totalorder %v3817, 0
      %v3843 = vsel %vm3818, %v3442, 0
      %v3844 = vsel %vm3819, %v3443, 0
      %v3845 = vsel %vm3820, %v3444, 0
      %v3846 = vsel %vm3821, %v3445, 0
      %v3847 = vsel %vm3822, %v3446, 0
      %v3848 = vsel %vm3823, %v3447, 0
      %v3849 = vsel %vm3824, %v3448, 0
      %v3850 = vsel %vm3825, %v3449, 0
      %v3851 = vsel %vm3826, %v3450, 0
      %v3852 = vsel %vm3827, %v3451, 0
      %v3853 = vsel %vm3828, %v3452, 0
      %v3854 = vsel %vm3829, %v3453, 0
      %v3855 = vsel %vm3830, %v3454, 0
      %v3856 = vsel %vm3831, %v3455, 0
      %v3857 = vsel %vm3832, %v3456, 0
      %v3858 = vsel %vm3833, %v3457, 0
      %v3859 = vsel %vm3834, %v3458, 0
      %v3860 = vsel %vm3835, %v3459, 0
      %v3861 = vsel %vm3836, %v3460, 0
      %v3862 = vsel %vm3837, %v3461, 0
      %v3863 = vsel %vm3838, %v3462, 0
      %v3864 = vsel %vm3839, %v3463, 0
      %v3865 = vsel %vm3840, %v3464, 0
      %v3866 = vsel %vm3841, %v3465, 0
      %v3867 = vsel %vm3842, %v3466, 0
      %v3868 = vld [vmem:[%s3] sm:$0xf]
      %v3869 = vld [vmem:[%s3 + $0x4] sm:$0xf]
      %v3870 = vld [vmem:[%s3 + $0x8] sm:$0xf]
      %v3871 = vld [vmem:[%s3 + $0xc] sm:$0xf]
      %v3872 = vld [vmem:[%s3 + $0x10] sm:$0xf]
      %v3873 = vld [vmem:[%s3 + $0x14] sm:$0xf]
      %v3874 = vld [vmem:[%s3 + $0x18] sm:$0xf]
      %v3875 = vld [vmem:[%s3 + $0x1c] sm:$0xf]
      %v3876 = vld [vmem:[%s3 + $0x20] sm:$0xf]
      %v3877 = vld [vmem:[%s3 + $0x24] sm:$0xf]
      %v3878 = vld [vmem:[%s3 + $0x28] sm:$0xf]
      %v3879 = vld [vmem:[%s3 + $0x2c] sm:$0xf]
      %v3880 = vld [vmem:[%s3 + $0x30] sm:$0xf]
      %v3881 = vld [vmem:[%s3 + $0x34] sm:$0xf]
      %v3882 = vld [vmem:[%s3 + $0x38] sm:$0xf]
      %v3883 = vld [vmem:[%s3 + $0x3c] sm:$0xf]
      %v3884 = vld [vmem:[#allocation2] sm:$0xe]
      %s3885 = scalar_lea.vmem %s3, 64
      %v3886 = vld [vmem:[%s3885] sm:$0xf]
      %v3887 = vld [vmem:[%s3885 + $0x4] sm:$0xf]
      %v3888 = vld [vmem:[%s3885 + $0x8] sm:$0xf]
      %v3889 = vld [vmem:[%s3885 + $0xc] sm:$0xf]
      %v3890 = vld [vmem:[%s3885 + $0x10] sm:$0xf]
      %v3891 = vld [vmem:[%s3885 + $0x14] sm:$0xf]
      %v3892 = vld [vmem:[%s3885 + $0x18] sm:$0xf]
      %v3893 = vld [vmem:[%s3885 + $0x1c] sm:$0xf]
      %v3894 = vld [vmem:[%s3885 + $0x20] sm:$0xf]
      %v3895 = vld [vmem:[%s3885 + $0x24] sm:$0xf]
      %v3896 = vld [vmem:[%s3885 + $0x28] sm:$0xf]
      %v3897 = vld [vmem:[%s3885 + $0x2c] sm:$0xf]
      %v3898 = vld [vmem:[%s3885 + $0x30] sm:$0xf]
      %v3899 = vld [vmem:[%s3885 + $0x34] sm:$0xf]
      %v3900 = vld [vmem:[%s3885 + $0x38] sm:$0xf]
      %v3901 = vld [vmem:[%s3885 + $0x3c] sm:$0xf]
      %v3927 = vunpack.c.l.b16 %v3884
      %v3928 = vunpack.c.l.b16 %v3443
      %v3929 = vunpack.c.l.b16 %v3444
      %v3930 = vunpack.c.l.b16 %v3445
      %v3931 = vunpack.c.l.b16 %v3446
      %v3932 = vunpack.c.l.b16 %v3447
      %v3933 = vunpack.c.l.b16 %v3448
      %v3934 = vunpack.c.l.b16 %v3449
      %v3935 = vunpack.c.l.b16 %v3450
      %v3936 = vunpack.c.l.b16 %v3451
      %v3937 = vunpack.c.l.b16 %v3452
      %v3938 = vunpack.c.l.b16 %v3453
      %v3939 = vunpack.c.l.b16 %v3454
      %v3940 = vunpack.c.l.b16 %v3455
      %v3941 = vunpack.c.l.b16 %v3456
      %v3942 = vunpack.c.l.b16 %v3457
      %v3943 = vunpack.c.l.b16 %v3458
      %v3944 = vunpack.c.l.b16 %v3459
      %v3945 = vunpack.c.l.b16 %v3460
      %v3946 = vunpack.c.l.b16 %v3461
      %v3947 = vunpack.c.l.b16 %v3462
      %v3948 = vunpack.c.l.b16 %v3463
      %v3949 = vunpack.c.l.b16 %v3464
      %v3950 = vunpack.c.l.b16 %v3465
      %v3951 = vunpack.c.l.b16 %v3466
      %v3952 = vpack.c.b16 %v3928, %v3927
      %v3953 = vpack.c.b16 %v3930, %v3929
      %v3954 = vpack.c.b16 %v3932, %v3931
      %v3955 = vpack.c.b16 %v3934, %v3933
      %v3956 = vpack.c.b16 %v3936, %v3935
      %v3957 = vpack.c.b16 %v3938, %v3937
      %v3958 = vpack.c.b16 %v3940, %v3939
      %v3959 = vpack.c.b16 %v3942, %v3941
      %v3960 = vpack.c.b16 %v3944, %v3943
      %v3961 = vpack.c.b16 %v3946, %v3945
      %v3962 = vpack.c.b16 %v3948, %v3947
      %v3963 = vpack.c.b16 %v3950, %v3949
      %v3964 = vpack.c.b16 %v3951, %v3951
      %vm3965 = vcmask 1046528
      %v3966 = vrot.slane %v3952, 1
      %v3967 = vrot.slane %v3953, 1
      %v3968 = vsel %vm3965, %v3966, %v3967
      %v3969 = vrot.slane %v3954, 1
      %v3970 = vsel %vm3965, %v3967, %v3969
      %v3971 = vrot.slane %v3955, 1
      %v3972 = vsel %vm3965, %v3969, %v3971
      %v3973 = vrot.slane %v3956, 1
      %v3974 = vsel %vm3965, %v3971, %v3973
      %v3975 = vrot.slane %v3957, 1
      %v3976 = vsel %vm3965, %v3973, %v3975
      %v3977 = vrot.slane %v3958, 1
      %v3978 = vsel %vm3965, %v3975, %v3977
      %v3979 = vrot.slane %v3959, 1
      %v3980 = vsel %vm3965, %v3977, %v3979
      %v3981 = vrot.slane %v3960, 1
      %v3982 = vsel %vm3965, %v3979, %v3981
      %v3983 = vrot.slane %v3961, 1
      %v3984 = vsel %vm3965, %v3981, %v3983
      %v3985 = vrot.slane %v3962, 1
      %v3986 = vsel %vm3965, %v3983, %v3985
      %v3987 = vrot.slane %v3963, 1
      %v3988 = vsel %vm3965, %v3985, %v3987
      %v3989 = vrot.slane %v3964, 1
      %v3990 = vsel %vm3965, %v3987, %v3989
      %v4020 = vunpack.c.l.b16 %v3886
      %v4021 = vunpack.c.l.b16 %v3887
      %v4022 = vunpack.c.l.b16 %v3888
      %v4023 = vunpack.c.l.b16 %v3889
      %v4024 = vunpack.c.l.b16 %v3890
      %v4025 = vunpack.c.l.b16 %v3891
      %v4026 = vunpack.c.l.b16 %v3892
      %v4027 = vunpack.c.l.b16 %v3893
      %v4028 = vunpack.c.l.b16 %v3894
      %v4029 = vunpack.c.l.b16 %v3895
      %v4030 = vunpack.c.l.b16 %v3896
      %v4031 = vunpack.c.l.b16 %v3897
      %v4032 = vunpack.c.l.b16 %v3898
      %v4033 = vunpack.c.l.b16 %v3899
      %v4034 = vunpack.c.l.b16 %v3900
      %v4035 = vunpack.c.l.b16 %v3901
      %v4036 = vpack.c.b16 %v4021, %v4020
      %v4037 = vpack.c.b16 %v4023, %v4022
      %v4038 = vpack.c.b16 %v4025, %v4024
      %v4039 = vpack.c.b16 %v4027, %v4026
      %v4040 = vpack.c.b16 %v4029, %v4028
      %v4041 = vpack.c.b16 %v4031, %v4030
      %v4042 = vpack.c.b16 %v4033, %v4032
      %v4043 = vpack.c.b16 %v4035, %v4034
      %4052 = vmatprep.subr.bf16.mxu0 0
      %4053 = vmatpush1.bf16.msra.mxu0 %v4043
      %4054 = vmatprep.subr.bf16.mxu0 0
      %4055 = vmatpush1.bf16.msra.mxu0 %v4042
      %4056 = vmatprep.subr.bf16.mxu0 0
      %4057 = vmatpush1.bf16.msra.mxu0 %v4041
      %4058 = vmatprep.subr.bf16.mxu0 0
      %4059 = vmatpush1.bf16.msra.mxu0 %v4040
      %4060 = vmatprep.subr.bf16.mxu0 0
      %4061 = vmatpush1.bf16.msra.mxu0 %v4039
      %4062 = vmatprep.subr.bf16.mxu0 0
      %4063 = vmatpush1.bf16.msra.mxu0 %v4038
      %4064 = vmatprep.subr.bf16.mxu0 0
      %4065 = vmatpush1.bf16.msra.mxu0 %v4037
      %4066 = vmatprep.subr.bf16.mxu0 0
      %4067 = vmatpush1.bf16.msra.mxu0 %v4036
      %4068 = vmatprep.subr.bf16.mxu0 0
      %4069 = vmatpush2.bf16.msra.mxu0 0
      %4070 = vmatprep.subr.bf16.mxu0 0
      %4071 = vmatpush2.bf16.msra.mxu0 0
      %4072 = vmatprep.subr.bf16.mxu0 0
      %4073 = vmatpush2.bf16.msra.mxu0 0
      %4074 = vmatprep.subr.bf16.mxu0 0
      %4075 = vmatpush2.bf16.msra.mxu0 0
      %4076 = vmatprep.subr.bf16.mxu0 0
      %4077 = vmatpush2.bf16.msra.mxu0 0
      %4078 = vmatprep.subr.bf16.mxu0 0
      %4079 = vmatpush2.bf16.msra.mxu0 0
      %4080 = vmatprep.subr.bf16.mxu0 0
      %4081 = vmatpush2.bf16.msra.mxu0 0
      %4082 = vmatprep.subr.bf16.mxu0 0
      %4083 = vmatpush2.bf16.msra.mxu0 0
      %4084 = vmatprep.mubr.bf16.mxu0 0
      %4085 = vmatmul.mubr.bf16.gmra.mxu0 %v3968
      %v4086 = vpop.f32.mrf.mxu0
      %v4087 = vadd.f32 0.0, %v4086
      %v4088 = vpop.f32.mrf.mxu0
      %v4089 = vpop.f32.mrf.mxu0
      %v4090 = vadd.f32 0.0, %v4089
      %v4091 = vpop.f32.mrf.mxu0
      %4092 = vmatprep.mubr.bf16.mxu0 0
      %4093 = vmatmul.mubr.bf16.gmra.mxu0 %v3970
      %v4094 = vpop.f32.mrf.mxu0
      %v4095 = vadd.f32 0.0, %v4094
      %v4096 = vpop.f32.mrf.mxu0
      %v4097 = vpop.f32.mrf.mxu0
      %v4098 = vadd.f32 0.0, %v4097
      %v4099 = vpop.f32.mrf.mxu0
      %4100 = vmatprep.mubr.bf16.mxu0 0
      %4101 = vmatmul.mubr.bf16.gmra.mxu0 %v3972
      %v4102 = vpop.f32.mrf.mxu0
      %v4103 = vadd.f32 0.0, %v4102
      %v4104 = vpop.f32.mrf.mxu0
      %v4105 = vpop.f32.mrf.mxu0
      %v4106 = vadd.f32 0.0, %v4105
      %v4107 = vpop.f32.mrf.mxu0
      %4108 = vmatprep.mubr.bf16.mxu0 0
      %4109 = vmatmul.mubr.bf16.gmra.mxu0 %v3974
      %v4110 = vpop.f32.mrf.mxu0
      %v4111 = vadd.f32 0.0, %v4110
      %v4112 = vpop.f32.mrf.mxu0
      %v4113 = vpop.f32.mrf.mxu0
      %v4114 = vadd.f32 0.0, %v4113
      %v4115 = vpop.f32.mrf.mxu0
      %4116 = vmatprep.mubr.bf16.mxu0 0
      %4117 = vmatmul.mubr.bf16.gmra.mxu0 %v3976
      %v4118 = vpop.f32.mrf.mxu0
      %v4119 = vadd.f32 0.0, %v4118
      %v4120 = vpop.f32.mrf.mxu0
      %v4121 = vpop.f32.mrf.mxu0
      %v4122 = vadd.f32 0.0, %v4121
      %v4123 = vpop.f32.mrf.mxu0
      %4124 = vmatprep.mubr.bf16.mxu0 0
      %4125 = vmatmul.mubr.bf16.gmra.mxu0 %v3978
      %v4126 = vpop.f32.mrf.mxu0
      %v4127 = vadd.f32 0.0, %v4126
      %v4128 = vpop.f32.mrf.mxu0
      %v4129 = vpop.f32.mrf.mxu0
      %v4130 = vadd.f32 0.0, %v4129
      %v4131 = vpop.f32.mrf.mxu0
      %4132 = vmatprep.mubr.bf16.mxu0 0
      %4133 = vmatmul.mubr.bf16.gmra.mxu0 %v3980
      %v4134 = vpop.f32.mrf.mxu0
      %v4135 = vadd.f32 0.0, %v4134
      %v4136 = vpop.f32.mrf.mxu0
      %v4137 = vpop.f32.mrf.mxu0
      %v4138 = vadd.f32 0.0, %v4137
      %v4139 = vpop.f32.mrf.mxu0
      %4140 = vmatprep.mubr.bf16.mxu0 0
      %4141 = vmatmul.mubr.bf16.gmra.mxu0 %v3982
      %v4142 = vpop.f32.mrf.mxu0
      %v4143 = vadd.f32 0.0, %v4142
      %v4144 = vpop.f32.mrf.mxu0
      %v4145 = vpop.f32.mrf.mxu0
      %v4146 = vadd.f32 0.0, %v4145
      %v4147 = vpop.f32.mrf.mxu0
      %4148 = vmatprep.mubr.bf16.mxu0 0
      %4149 = vmatmul.mubr.bf16.gmra.mxu0 %v3984
      %v4150 = vpop.f32.mrf.mxu0
      %v4151 = vadd.f32 0.0, %v4150
      %v4152 = vpop.f32.mrf.mxu0
      %v4153 = vpop.f32.mrf.mxu0
      %v4154 = vadd.f32 0.0, %v4153
      %v4155 = vpop.f32.mrf.mxu0
      %4156 = vmatprep.mubr.bf16.mxu0 0
      %4157 = vmatmul.mubr.bf16.gmra.mxu0 %v3986
      %v4158 = vpop.f32.mrf.mxu0
      %v4159 = vadd.f32 0.0, %v4158
      %v4160 = vpop.f32.mrf.mxu0
      %v4161 = vpop.f32.mrf.mxu0
      %v4162 = vadd.f32 0.0, %v4161
      %v4163 = vpop.f32.mrf.mxu0
      %4164 = vmatprep.mubr.bf16.mxu0 0
      %4165 = vmatmul.mubr.bf16.gmra.mxu0 %v3988
      %v4166 = vpop.f32.mrf.mxu0
      %v4167 = vadd.f32 0.0, %v4166
      %v4168 = vpop.f32.mrf.mxu0
      %v4169 = vpop.f32.mrf.mxu0
      %v4170 = vadd.f32 0.0, %v4169
      %v4171 = vpop.f32.mrf.mxu0
      %4172 = vmatprep.mubr.bf16.mxu0 0
      %4173 = vmatmul.mubr.bf16.gmra.mxu0 %v3990
      %v4174 = vpop.f32.mrf.mxu0
      %v4175 = vadd.f32 0.0, %v4174
      %v4176 = vpop.f32.mrf.mxu0
      %v4177 = vpop.f32.mrf.mxu0
      %v4178 = vadd.f32 0.0, %v4177
      %v4179 = vpop.f32.mrf.mxu0
      %4180 = vmatprep.mubr.bf16.mxu0 0
      %4181 = vmatmul.mubr.bf16.gmra.mxu0 %v3989
      %v4182 = vpop.f32.mrf.mxu0
      %v4183 = vadd.f32 0.0, %v4182
      %v4184 = vpop.f32.mrf.mxu0
      %v4185 = vpop.f32.mrf.mxu0
      %v4186 = vpop.f32.mrf.mxu0
      %4187 = vdwg.mxu0
      %v4213 = vunpack.c.l.b16 %v3843
      %v4214 = vunpack.c.l.b16 %v3844
      %v4215 = vunpack.c.l.b16 %v3845
      %v4216 = vunpack.c.l.b16 %v3846
      %v4217 = vunpack.c.l.b16 %v3847
      %v4218 = vunpack.c.l.b16 %v3848
      %v4219 = vunpack.c.l.b16 %v3849
      %v4220 = vunpack.c.l.b16 %v3850
      %v4221 = vunpack.c.l.b16 %v3851
      %v4222 = vunpack.c.l.b16 %v3852
      %v4223 = vunpack.c.l.b16 %v3853
      %v4224 = vunpack.c.l.b16 %v3854
      %v4225 = vunpack.c.l.b16 %v3855
      %v4226 = vunpack.c.l.b16 %v3856
      %v4227 = vunpack.c.l.b16 %v3857
      %v4228 = vunpack.c.l.b16 %v3858
      %v4229 = vunpack.c.l.b16 %v3859
      %v4230 = vunpack.c.l.b16 %v3860
      %v4231 = vunpack.c.l.b16 %v3861
      %v4232 = vunpack.c.l.b16 %v3862
      %v4233 = vunpack.c.l.b16 %v3863
      %v4234 = vunpack.c.l.b16 %v3864
      %v4235 = vunpack.c.l.b16 %v3865
      %v4236 = vunpack.c.l.b16 %v3866
      %v4237 = vunpack.c.l.b16 %v3867
      %v4238 = vpack.c.b16 %v4214, %v4213
      %v4239 = vpack.c.b16 %v4216, %v4215
      %v4240 = vpack.c.b16 %v4218, %v4217
      %v4241 = vpack.c.b16 %v4220, %v4219
      %v4242 = vpack.c.b16 %v4222, %v4221
      %v4243 = vpack.c.b16 %v4224, %v4223
      %v4244 = vpack.c.b16 %v4226, %v4225
      %v4245 = vpack.c.b16 %v4228, %v4227
      %v4246 = vpack.c.b16 %v4230, %v4229
      %v4247 = vpack.c.b16 %v4232, %v4231
      %v4248 = vpack.c.b16 %v4234, %v4233
      %v4249 = vpack.c.b16 %v4236, %v4235
      %v4250 = vpack.c.b16 %v4237, %v4237
      %vm4251 = vsmask.f32 7424
      %v4253 = vshrl.u32 %v4238, 16
      %v4255 = vshll.u32 %v4238, 16
      %v4257 = vrot.slane %v4255, 1
      %v4258 = vor.u32 %v4253, %v4257
      %v4260 = vshll.u32 %v4239, 16
      %v4262 = vrot.slane %v4260, 1
      %v4263 = vsel %vm4251, %v4258, %v4262
      %v4264 = vshrl.u32 %v4239, 16
      %v4266 = vor.u32 %v4264, %v4262
      %v4268 = vshll.u32 %v4240, 16
      %v4270 = vrot.slane %v4268, 1
      %v4271 = vsel %vm4251, %v4266, %v4270
      %v4272 = vshrl.u32 %v4240, 16
      %v4274 = vor.u32 %v4272, %v4270
      %v4276 = vshll.u32 %v4241, 16
      %v4278 = vrot.slane %v4276, 1
      %v4279 = vsel %vm4251, %v4274, %v4278
      %v4280 = vshrl.u32 %v4241, 16
      %v4282 = vor.u32 %v4280, %v4278
      %v4284 = vshll.u32 %v4242, 16
      %v4286 = vrot.slane %v4284, 1
      %v4287 = vsel %vm4251, %v4282, %v4286
      %v4288 = vshrl.u32 %v4242, 16
      %v4290 = vor.u32 %v4288, %v4286
      %v4292 = vshll.u32 %v4243, 16
      %v4294 = vrot.slane %v4292, 1
      %v4295 = vsel %vm4251, %v4290, %v4294
      %v4296 = vshrl.u32 %v4243, 16
      %v4298 = vor.u32 %v4296, %v4294
      %v4300 = vshll.u32 %v4244, 16
      %v4302 = vrot.slane %v4300, 1
      %v4303 = vsel %vm4251, %v4298, %v4302
      %v4304 = vshrl.u32 %v4244, 16
      %v4306 = vor.u32 %v4304, %v4302
      %v4308 = vshll.u32 %v4245, 16
      %v4310 = vrot.slane %v4308, 1
      %v4311 = vsel %vm4251, %v4306, %v4310
      %v4312 = vshrl.u32 %v4245, 16
      %v4314 = vor.u32 %v4312, %v4310
      %v4316 = vshll.u32 %v4246, 16
      %v4318 = vrot.slane %v4316, 1
      %v4319 = vsel %vm4251, %v4314, %v4318
      %v4320 = vshrl.u32 %v4246, 16
      %v4322 = vor.u32 %v4320, %v4318
      %v4324 = vshll.u32 %v4247, 16
      %v4326 = vrot.slane %v4324, 1
      %v4327 = vsel %vm4251, %v4322, %v4326
      %v4328 = vshrl.u32 %v4247, 16
      %v4330 = vor.u32 %v4328, %v4326
      %v4332 = vshll.u32 %v4248, 16
      %v4334 = vrot.slane %v4332, 1
      %v4335 = vsel %vm4251, %v4330, %v4334
      %v4336 = vshrl.u32 %v4248, 16
      %v4338 = vor.u32 %v4336, %v4334
      %v4340 = vshll.u32 %v4249, 16
      %v4342 = vrot.slane %v4340, 1
      %v4343 = vsel %vm4251, %v4338, %v4342
      %v4344 = vshrl.u32 %v4249, 16
      %v4346 = vor.u32 %v4344, %v4342
      %v4348 = vshll.u32 %v4250, 16
      %v4350 = vrot.slane %v4348, 1
      %v4351 = vsel %vm4251, %v4346, %v4350
      %v4352 = vshrl.u32 %v4250, 16
      %v4354 = vor.u32 %v4352, %v4350
      %v4384 = vunpack.c.l.b16 %v3868
      %v4385 = vunpack.c.l.b16 %v3869
      %v4386 = vunpack.c.l.b16 %v3870
      %v4387 = vunpack.c.l.b16 %v3871
      %v4388 = vunpack.c.l.b16 %v3872
      %v4389 = vunpack.c.l.b16 %v3873
      %v4390 = vunpack.c.l.b16 %v3874
      %v4391 = vunpack.c.l.b16 %v3875
      %v4392 = vunpack.c.l.b16 %v3876
      %v4393 = vunpack.c.l.b16 %v3877
      %v4394 = vunpack.c.l.b16 %v3878
      %v4395 = vunpack.c.l.b16 %v3879
      %v4396 = vunpack.c.l.b16 %v3880
      %v4397 = vunpack.c.l.b16 %v3881
      %v4398 = vunpack.c.l.b16 %v3882
      %v4399 = vunpack.c.l.b16 %v3883
      %v4400 = vpack.c.b16 %v4385, %v4384
      %v4401 = vpack.c.b16 %v4387, %v4386
      %v4402 = vpack.c.b16 %v4389, %v4388
      %v4403 = vpack.c.b16 %v4391, %v4390
      %v4404 = vpack.c.b16 %v4393, %v4392
      %v4405 = vpack.c.b16 %v4395, %v4394
      %v4406 = vpack.c.b16 %v4397, %v4396
      %v4407 = vpack.c.b16 %v4399, %v4398
      %4416 = vmatprep.subr.bf16.mxu0 0
      %4417 = vmatpush1.bf16.msra.mxu0 %v4407
      %4418 = vmatprep.subr.bf16.mxu0 0
      %4419 = vmatpush1.bf16.msra.mxu0 %v4406
      %4420 = vmatprep.subr.bf16.mxu0 0
      %4421 = vmatpush1.bf16.msra.mxu0 %v4405
      %4422 = vmatprep.subr.bf16.mxu0 0
      %4423 = vmatpush1.bf16.msra.mxu0 %v4404
      %4424 = vmatprep.subr.bf16.mxu0 0
      %4425 = vmatpush1.bf16.msra.mxu0 %v4403
      %4426 = vmatprep.subr.bf16.mxu0 0
      %4427 = vmatpush1.bf16.msra.mxu0 %v4402
      %4428 = vmatprep.subr.bf16.mxu0 0
      %4429 = vmatpush1.bf16.msra.mxu0 %v4401
      %4430 = vmatprep.subr.bf16.mxu0 0
      %4431 = vmatpush1.bf16.msra.mxu0 %v4400
      %4432 = vmatprep.subr.bf16.mxu0 0
      %4433 = vmatpush2.bf16.msra.mxu0 0
      %4434 = vmatprep.subr.bf16.mxu0 0
      %4435 = vmatpush2.bf16.msra.mxu0 0
      %4436 = vmatprep.subr.bf16.mxu0 0
      %4437 = vmatpush2.bf16.msra.mxu0 0
      %4438 = vmatprep.subr.bf16.mxu0 0
      %4439 = vmatpush2.bf16.msra.mxu0 0
      %4440 = vmatprep.subr.bf16.mxu0 0
      %4441 = vmatpush2.bf16.msra.mxu0 0
      %4442 = vmatprep.subr.bf16.mxu0 0
      %4443 = vmatpush2.bf16.msra.mxu0 0
      %4444 = vmatprep.subr.bf16.mxu0 0
      %4445 = vmatpush2.bf16.msra.mxu0 0
      %4446 = vmatprep.subr.bf16.mxu0 0
      %4447 = vmatpush2.bf16.msra.mxu0 0
      %4448 = vmatprep.mubr.bf16.mxu0 0
      %4449 = vmatmul.mubr.bf16.gmra.mxu0 %v4263
      %v4450 = vpop.f32.mrf.mxu0
      %v4451 = vadd.f32 %v4087, %v4450
      %v4452 = vpop.f32.mrf.mxu0
      %v4453 = vpop.f32.mrf.mxu0
      %v4454 = vadd.f32 %v4090, %v4453
      %v4455 = vpop.f32.mrf.mxu0
      %4456 = vmatprep.mubr.bf16.mxu0 0
      %4457 = vmatmul.mubr.bf16.gmra.mxu0 %v4271
      %v4458 = vpop.f32.mrf.mxu0
      %v4459 = vadd.f32 %v4095, %v4458
      %v4460 = vpop.f32.mrf.mxu0
      %v4461 = vpop.f32.mrf.mxu0
      %v4462 = vadd.f32 %v4098, %v4461
      %v4463 = vpop.f32.mrf.mxu0
      %4464 = vmatprep.mubr.bf16.mxu0 0
      %4465 = vmatmul.mubr.bf16.gmra.mxu0 %v4279
      %v4466 = vpop.f32.mrf.mxu0
      %v4467 = vadd.f32 %v4103, %v4466
      %v4468 = vpop.f32.mrf.mxu0
      %v4469 = vpop.f32.mrf.mxu0
      %v4470 = vadd.f32 %v4106, %v4469
      %v4471 = vpop.f32.mrf.mxu0
      %4472 = vmatprep.mubr.bf16.mxu0 0
      %4473 = vmatmul.mubr.bf16.gmra.mxu0 %v4287
      %v4474 = vpop.f32.mrf.mxu0
      %v4475 = vadd.f32 %v4111, %v4474
      %v4476 = vpop.f32.mrf.mxu0
      %v4477 = vpop.f32.mrf.mxu0
      %v4478 = vadd.f32 %v4114, %v4477
      %v4479 = vpop.f32.mrf.mxu0
      %4480 = vmatprep.mubr.bf16.mxu0 0
      %4481 = vmatmul.mubr.bf16.gmra.mxu0 %v4295
      %v4482 = vpop.f32.mrf.mxu0
      %v4483 = vadd.f32 %v4119, %v4482
      %v4484 = vpop.f32.mrf.mxu0
      %v4485 = vpop.f32.mrf.mxu0
      %v4486 = vadd.f32 %v4122, %v4485
      %v4487 = vpop.f32.mrf.mxu0
      %4488 = vmatprep.mubr.bf16.mxu0 0
      %4489 = vmatmul.mubr.bf16.gmra.mxu0 %v4303
      %v4490 = vpop.f32.mrf.mxu0
      %v4491 = vadd.f32 %v4127, %v4490
      %v4492 = vpop.f32.mrf.mxu0
      %v4493 = vpop.f32.mrf.mxu0
      %v4494 = vadd.f32 %v4130, %v4493
      %v4495 = vpop.f32.mrf.mxu0
      %4496 = vmatprep.mubr.bf16.mxu0 0
      %4497 = vmatmul.mubr.bf16.gmra.mxu0 %v4311
      %v4498 = vpop.f32.mrf.mxu0
      %v4499 = vadd.f32 %v4135, %v4498
      %v4500 = vpop.f32.mrf.mxu0
      %v4501 = vpop.f32.mrf.mxu0
      %v4502 = vadd.f32 %v4138, %v4501
      %v4503 = vpop.f32.mrf.mxu0
      %4504 = vmatprep.mubr.bf16.mxu0 0
      %4505 = vmatmul.mubr.bf16.gmra.mxu0 %v4319
      %v4506 = vpop.f32.mrf.mxu0
      %v4507 = vadd.f32 %v4143, %v4506
      %v4508 = vpop.f32.mrf.mxu0
      %v4509 = vpop.f32.mrf.mxu0
      %v4510 = vadd.f32 %v4146, %v4509
      %v4511 = vpop.f32.mrf.mxu0
      %4512 = vmatprep.mubr.bf16.mxu0 0
      %4513 = vmatmul.mubr.bf16.gmra.mxu0 %v4327
      %v4514 = vpop.f32.mrf.mxu0
      %v4515 = vadd.f32 %v4151, %v4514
      %v4516 = vpop.f32.mrf.mxu0
      %v4517 = vpop.f32.mrf.mxu0
      %v4518 = vadd.f32 %v4154, %v4517
      %v4519 = vpop.f32.mrf.mxu0
      %4520 = vmatprep.mubr.bf16.mxu0 0
      %4521 = vmatmul.mubr.bf16.gmra.mxu0 %v4335
      %v4522 = vpop.f32.mrf.mxu0
      %v4523 = vadd.f32 %v4159, %v4522
      %v4524 = vpop.f32.mrf.mxu0
      %v4525 = vpop.f32.mrf.mxu0
      %v4526 = vadd.f32 %v4162, %v4525
      %v4527 = vpop.f32.mrf.mxu0
      %4528 = vmatprep.mubr.bf16.mxu0 0
      %4529 = vmatmul.mubr.bf16.gmra.mxu0 %v4343
      %v4530 = vpop.f32.mrf.mxu0
      %v4531 = vadd.f32 %v4167, %v4530
      %v4532 = vpop.f32.mrf.mxu0
      %v4533 = vpop.f32.mrf.mxu0
      %v4534 = vadd.f32 %v4170, %v4533
      %v4535 = vpop.f32.mrf.mxu0
      %4536 = vmatprep.mubr.bf16.mxu0 0
      %4537 = vmatmul.mubr.bf16.gmra.mxu0 %v4351
      %v4538 = vpop.f32.mrf.mxu0
      %v4539 = vadd.f32 %v4175, %v4538
      %v4540 = vpop.f32.mrf.mxu0
      %v4541 = vpop.f32.mrf.mxu0
      %v4542 = vadd.f32 %v4178, %v4541
      %v4543 = vpop.f32.mrf.mxu0
      %4544 = vmatprep.mubr.bf16.mxu0 0
      %4545 = vmatmul.mubr.bf16.gmra.mxu0 %v4354
      %v4546 = vpop.f32.mrf.mxu0
      %v4547 = vadd.f32 %v4183, %v4546
      %v4548 = vpop.f32.mrf.mxu0
      %v4549 = vpop.f32.mrf.mxu0
      %v4550 = vpop.f32.mrf.mxu0
      %4551 = vdwg.mxu0
      %v4552 = vld [vmem:[#allocation2 + $0x60] sm:$0xf]
      %vm4553 = vcmp.le.s32.totalorder %v3417, 12
      %vm4554 = vcmp.le.s32.totalorder %v3418, 12
      %vm4555 = vcmp.le.s32.totalorder %v3419, 12
      %vm4556 = vcmp.le.s32.totalorder %v3420, 12
      %vm4557 = vcmp.le.s32.totalorder %v3421, 12
      %vm4558 = vcmp.le.s32.totalorder %v3422, 12
      %vm4559 = vcmp.le.s32.totalorder %v3423, 12
      %vm4560 = vcmp.le.s32.totalorder %v3424, 12
      %vm4561 = vcmp.le.s32.totalorder %v3425, 12
      %vm4562 = vcmp.le.s32.totalorder %v3426, 12
      %vm4563 = vcmp.le.s32.totalorder %v3427, 12
      %vm4564 = vcmp.le.s32.totalorder %v3428, 12
      %vm4565 = vcmp.le.s32.totalorder %v3429, 12
      %vm4566 = vcmp.le.s32.totalorder %v3430, 12
      %vm4567 = vcmp.le.s32.totalorder %v3431, 12
      %vm4568 = vcmp.le.s32.totalorder %v3432, 12
      %vm4569 = vcmp.le.s32.totalorder %v3433, 12
      %vm4570 = vcmp.le.s32.totalorder %v3434, 12
      %vm4571 = vcmp.le.s32.totalorder %v3435, 12
      %vm4572 = vcmp.le.s32.totalorder %v3436, 12
      %vm4573 = vcmp.le.s32.totalorder %v3437, 12
      %vm4574 = vcmp.le.s32.totalorder %v3438, 12
      %vm4575 = vcmp.le.s32.totalorder %v3439, 12
      %vm4576 = vcmp.le.s32.totalorder %v3440, 12
      %vm4577 = vcmp.le.s32.totalorder %v3441, 12
      %v4578 = vsel %vm4553, 1, 0
      %v4579 = vsel %vm4554, 1, 0
      %v4580 = vsel %vm4555, 1, 0
      %v4581 = vsel %vm4556, 1, 0
      %v4582 = vsel %vm4557, 1, 0
      %v4583 = vsel %vm4558, 1, 0
      %v4584 = vsel %vm4559, 1, 0
      %v4585 = vsel %vm4560, 1, 0
      %v4586 = vsel %vm4561, 1, 0
      %v4587 = vsel %vm4562, 1, 0
      %v4588 = vsel %vm4563, 1, 0
      %v4589 = vsel %vm4564, 1, 0
      %v4590 = vsel %vm4565, 1, 0
      %v4591 = vsel %vm4566, 1, 0
      %v4592 = vsel %vm4567, 1, 0
      %v4593 = vsel %vm4568, 1, 0
      %v4594 = vsel %vm4569, 1, 0
      %v4595 = vsel %vm4570, 1, 0
      %v4596 = vsel %vm4571, 1, 0
      %v4597 = vsel %vm4572, 1, 0
      %v4598 = vsel %vm4573, 1, 0
      %v4599 = vsel %vm4574, 1, 0
      %v4600 = vsel %vm4575, 1, 0
      %v4601 = vsel %vm4576, 1, 0
      %v4602 = vsel %vm4577, 1, 0
      %vm4603 = vcmp.eq.s32.totalorder %v4578, 1
      %vm4604 = vcmp.eq.s32.totalorder %v4579, 1
      %vm4605 = vcmp.eq.s32.totalorder %v4580, 1
      %vm4606 = vcmp.eq.s32.totalorder %v4581, 1
      %vm4607 = vcmp.eq.s32.totalorder %v4582, 1
      %vm4608 = vcmp.eq.s32.totalorder %v4583, 1
      %vm4609 = vcmp.eq.s32.totalorder %v4584, 1
      %vm4610 = vcmp.eq.s32.totalorder %v4585, 1
      %vm4611 = vcmp.eq.s32.totalorder %v4586, 1
      %vm4612 = vcmp.eq.s32.totalorder %v4587, 1
      %vm4613 = vcmp.eq.s32.totalorder %v4588, 1
      %vm4614 = vcmp.eq.s32.totalorder %v4589, 1
      %vm4615 = vcmp.eq.s32.totalorder %v4590, 1
      %vm4616 = vcmp.eq.s32.totalorder %v4591, 1
      %vm4617 = vcmp.eq.s32.totalorder %v4592, 1
      %vm4618 = vcmp.eq.s32.totalorder %v4593, 1
      %vm4619 = vcmp.eq.s32.totalorder %v4594, 1
      %vm4620 = vcmp.eq.s32.totalorder %v4595, 1
      %vm4621 = vcmp.eq.s32.totalorder %v4596, 1
      %vm4622 = vcmp.eq.s32.totalorder %v4597, 1
      %vm4623 = vcmp.eq.s32.totalorder %v4598, 1
      %vm4624 = vcmp.eq.s32.totalorder %v4599, 1
      %vm4625 = vcmp.eq.s32.totalorder %v4600, 1
      %vm4626 = vcmp.eq.s32.totalorder %v4601, 1
      %vm4627 = vcmp.eq.s32.totalorder %v4602, 1
      %vm4628 = vmpackc.low %vm4603, %vm4603
      %vm4629 = vmpackc.low %vm4604, %vm4604
      %vm4630 = vmpackc.low %vm4605, %vm4605
      %vm4631 = vmpackc.low %vm4606, %vm4606
      %vm4632 = vmpackc.low %vm4607, %vm4607
      %vm4633 = vmpackc.low %vm4608, %vm4608
      %vm4634 = vmpackc.low %vm4609, %vm4609
      %vm4635 = vmpackc.low %vm4610, %vm4610
      %vm4636 = vmpackc.low %vm4611, %vm4611
      %vm4637 = vmpackc.low %vm4612, %vm4612
      %vm4638 = vmpackc.low %vm4613, %vm4613
      %vm4639 = vmpackc.low %vm4614, %vm4614
      %vm4640 = vmpackc.low %vm4615, %vm4615
      %vm4641 = vmpackc.low %vm4616, %vm4616
      %vm4642 = vmpackc.low %vm4617, %vm4617
      %vm4643 = vmpackc.low %vm4618, %vm4618
      %vm4644 = vmpackc.low %vm4619, %vm4619
      %vm4645 = vmpackc.low %vm4620, %vm4620
      %vm4646 = vmpackc.low %vm4621, %vm4621
      %vm4647 = vmpackc.low %vm4622, %vm4622
      %vm4648 = vmpackc.low %vm4623, %vm4623
      %vm4649 = vmpackc.low %vm4624, %vm4624
      %vm4650 = vmpackc.low %vm4625, %vm4625
      %vm4651 = vmpackc.low %vm4626, %vm4626
      %vm4652 = vmpackc.low %vm4627, %vm4627
      %v4653 = vsel %vm4628, 65537, 0
      %v4654 = vsel %vm4629, 65537, 0
      %v4655 = vsel %vm4630, 65537, 0
      %v4656 = vsel %vm4631, 65537, 0
      %v4657 = vsel %vm4632, 65537, 0
      %v4658 = vsel %vm4633, 65537, 0
      %v4659 = vsel %vm4634, 65537, 0
      %v4660 = vsel %vm4635, 65537, 0
      %v4661 = vsel %vm4636, 65537, 0
      %v4662 = vsel %vm4637, 65537, 0
      %v4663 = vsel %vm4638, 65537, 0
      %v4664 = vsel %vm4639, 65537, 0
      %v4665 = vsel %vm4640, 65537, 0
      %v4666 = vsel %vm4641, 65537, 0
      %v4667 = vsel %vm4642, 65537, 0
      %v4668 = vsel %vm4643, 65537, 0
      %v4669 = vsel %vm4644, 65537, 0
      %v4670 = vsel %vm4645, 65537, 0
      %v4671 = vsel %vm4646, 65537, 0
      %v4672 = vsel %vm4647, 65537, 0
      %v4673 = vsel %vm4648, 65537, 0
      %v4674 = vsel %vm4649, 65537, 0
      %v4675 = vsel %vm4650, 65537, 0
      %v4676 = vsel %vm4651, 65537, 0
      %v4677 = vsel %vm4652, 65537, 0
      %v4679 = vshrl.u32 %v4653, 16
      %v4681 = vrot.slane %v4679, 6
      %v4682 = vshll.u32 %v4653, 16
      %v4684 = vrot.slane %v4682, 7
      %v4685 = vor.u32 %v4681, %v4684
      %v4686 = vrot.slane %v4685, 4
      %v4688 = vshrl.u32 %v4654, 16
      %v4690 = vrot.slane %v4688, 6
      %v4691 = vshll.u32 %v4654, 16
      %v4693 = vrot.slane %v4691, 7
      %v4694 = vor.u32 %v4690, %v4693
      %v4695 = vsel %vm2584, %v4686, %v4694
      %v4696 = vrot.slane %v4694, 4
      %v4698 = vshrl.u32 %v4655, 16
      %v4700 = vrot.slane %v4698, 6
      %v4701 = vshll.u32 %v4655, 16
      %v4703 = vrot.slane %v4701, 7
      %v4704 = vor.u32 %v4700, %v4703
      %v4705 = vsel %vm2584, %v4696, %v4704
      %v4706 = vrot.slane %v4704, 4
      %v4708 = vshrl.u32 %v4656, 16
      %v4710 = vrot.slane %v4708, 6
      %v4711 = vshll.u32 %v4656, 16
      %v4713 = vrot.slane %v4711, 7
      %v4714 = vor.u32 %v4710, %v4713
      %v4715 = vsel %vm2584, %v4706, %v4714
      %v4716 = vrot.slane %v4714, 4
      %v4718 = vshrl.u32 %v4657, 16
      %v4720 = vrot.slane %v4718, 6
      %v4721 = vshll.u32 %v4657, 16
      %v4723 = vrot.slane %v4721, 7
      %v4724 = vor.u32 %v4720, %v4723
      %v4725 = vsel %vm2584, %v4716, %v4724
      %v4726 = vrot.slane %v4724, 4
      %v4728 = vshrl.u32 %v4658, 16
      %v4730 = vrot.slane %v4728, 6
      %v4731 = vshll.u32 %v4658, 16
      %v4733 = vrot.slane %v4731, 7
      %v4734 = vor.u32 %v4730, %v4733
      %v4735 = vsel %vm2584, %v4726, %v4734
      %v4736 = vrot.slane %v4734, 4
      %v4738 = vshrl.u32 %v4659, 16
      %v4740 = vrot.slane %v4738, 6
      %v4741 = vshll.u32 %v4659, 16
      %v4743 = vrot.slane %v4741, 7
      %v4744 = vor.u32 %v4740, %v4743
      %v4745 = vsel %vm2584, %v4736, %v4744
      %v4746 = vrot.slane %v4744, 4
      %v4748 = vshrl.u32 %v4660, 16
      %v4750 = vrot.slane %v4748, 6
      %v4751 = vshll.u32 %v4660, 16
      %v4753 = vrot.slane %v4751, 7
      %v4754 = vor.u32 %v4750, %v4753
      %v4755 = vsel %vm2584, %v4746, %v4754
      %v4756 = vrot.slane %v4754, 4
      %v4758 = vshrl.u32 %v4661, 16
      %v4760 = vrot.slane %v4758, 6
      %v4761 = vshll.u32 %v4661, 16
      %v4763 = vrot.slane %v4761, 7
      %v4764 = vor.u32 %v4760, %v4763
      %v4765 = vsel %vm2584, %v4756, %v4764
      %v4766 = vrot.slane %v4764, 4
      %v4768 = vshrl.u32 %v4662, 16
      %v4770 = vrot.slane %v4768, 6
      %v4771 = vshll.u32 %v4662, 16
      %v4773 = vrot.slane %v4771, 7
      %v4774 = vor.u32 %v4770, %v4773
      %v4775 = vsel %vm2584, %v4766, %v4774
      %v4776 = vrot.slane %v4774, 4
      %v4778 = vshrl.u32 %v4663, 16
      %v4780 = vrot.slane %v4778, 6
      %v4781 = vshll.u32 %v4663, 16
      %v4783 = vrot.slane %v4781, 7
      %v4784 = vor.u32 %v4780, %v4783
      %v4785 = vsel %vm2584, %v4776, %v4784
      %v4786 = vrot.slane %v4784, 4
      %v4788 = vshrl.u32 %v4664, 16
      %v4790 = vrot.slane %v4788, 6
      %v4791 = vshll.u32 %v4664, 16
      %v4793 = vrot.slane %v4791, 7
      %v4794 = vor.u32 %v4790, %v4793
      %v4795 = vsel %vm2584, %v4786, %v4794
      %v4796 = vrot.slane %v4794, 4
      %v4798 = vshrl.u32 %v4665, 16
      %v4800 = vrot.slane %v4798, 6
      %v4801 = vshll.u32 %v4665, 16
      %v4803 = vrot.slane %v4801, 7
      %v4804 = vor.u32 %v4800, %v4803
      %v4805 = vsel %vm2584, %v4796, %v4804
      %v4806 = vrot.slane %v4804, 4
      %v4808 = vshrl.u32 %v4666, 16
      %v4810 = vrot.slane %v4808, 6
      %v4811 = vshll.u32 %v4666, 16
      %v4813 = vrot.slane %v4811, 7
      %v4814 = vor.u32 %v4810, %v4813
      %v4815 = vsel %vm2584, %v4806, %v4814
      %v4816 = vrot.slane %v4814, 4
      %v4818 = vshrl.u32 %v4667, 16
      %v4820 = vrot.slane %v4818, 6
      %v4821 = vshll.u32 %v4667, 16
      %v4823 = vrot.slane %v4821, 7
      %v4824 = vor.u32 %v4820, %v4823
      %v4825 = vsel %vm2584, %v4816, %v4824
      %v4826 = vrot.slane %v4824, 4
      %v4828 = vshrl.u32 %v4668, 16
      %v4830 = vrot.slane %v4828, 6
      %v4831 = vshll.u32 %v4668, 16
      %v4833 = vrot.slane %v4831, 7
      %v4834 = vor.u32 %v4830, %v4833
      %v4835 = vsel %vm2584, %v4826, %v4834
      %v4836 = vrot.slane %v4834, 4
      %v4838 = vshrl.u32 %v4669, 16
      %v4840 = vrot.slane %v4838, 6
      %v4841 = vshll.u32 %v4669, 16
      %v4843 = vrot.slane %v4841, 7
      %v4844 = vor.u32 %v4840, %v4843
      %v4845 = vsel %vm2584, %v4836, %v4844
      %v4846 = vrot.slane %v4844, 4
      %v4848 = vshrl.u32 %v4670, 16
      %v4850 = vrot.slane %v4848, 6
      %v4851 = vshll.u32 %v4670, 16
      %v4853 = vrot.slane %v4851, 7
      %v4854 = vor.u32 %v4850, %v4853
      %v4855 = vsel %vm2584, %v4846, %v4854
      %v4856 = vrot.slane %v4854, 4
      %v4858 = vshrl.u32 %v4671, 16
      %v4860 = vrot.slane %v4858, 6
      %v4861 = vshll.u32 %v4671, 16
      %v4863 = vrot.slane %v4861, 7
      %v4864 = vor.u32 %v4860, %v4863
      %v4865 = vsel %vm2584, %v4856, %v4864
      %v4866 = vrot.slane %v4864, 4
      %v4868 = vshrl.u32 %v4672, 16
      %v4870 = vrot.slane %v4868, 6
      %v4871 = vshll.u32 %v4672, 16
      %v4873 = vrot.slane %v4871, 7
      %v4874 = vor.u32 %v4870, %v4873
      %v4875 = vsel %vm2584, %v4866, %v4874
      %v4876 = vrot.slane %v4874, 4
      %v4878 = vshrl.u32 %v4673, 16
      %v4880 = vrot.slane %v4878, 6
      %v4881 = vshll.u32 %v4673, 16
      %v4883 = vrot.slane %v4881, 7
      %v4884 = vor.u32 %v4880, %v4883
      %v4885 = vsel %vm2584, %v4876, %v4884
      %v4886 = vrot.slane %v4884, 4
      %v4888 = vshrl.u32 %v4674, 16
      %v4890 = vrot.slane %v4888, 6
      %v4891 = vshll.u32 %v4674, 16
      %v4893 = vrot.slane %v4891, 7
      %v4894 = vor.u32 %v4890, %v4893
      %v4895 = vsel %vm2584, %v4886, %v4894
      %v4896 = vrot.slane %v4894, 4
      %v4898 = vshrl.u32 %v4675, 16
      %v4900 = vrot.slane %v4898, 6
      %v4901 = vshll.u32 %v4675, 16
      %v4903 = vrot.slane %v4901, 7
      %v4904 = vor.u32 %v4900, %v4903
      %v4905 = vsel %vm2584, %v4896, %v4904
      %v4906 = vrot.slane %v4904, 4
      %v4908 = vshrl.u32 %v4676, 16
      %v4910 = vrot.slane %v4908, 6
      %v4911 = vshll.u32 %v4676, 16
      %v4913 = vrot.slane %v4911, 7
      %v4914 = vor.u32 %v4910, %v4913
      %v4915 = vsel %vm2584, %v4906, %v4914
      %v4916 = vrot.slane %v4914, 4
      %v4918 = vshrl.u32 %v4677, 16
      %v4920 = vrot.slane %v4918, 6
      %v4921 = vshll.u32 %v4677, 16
      %v4923 = vrot.slane %v4921, 7
      %v4924 = vor.u32 %v4920, %v4923
      %v4925 = vsel %vm2584, %v4916, %v4924
      %vm4926 = vcmp.ne.s16.totalorder %v4685, 0
      %vm4927 = vcmp.ne.s16.totalorder %v4695, 0
      %vm4928 = vcmp.ne.s16.totalorder %v4705, 0
      %vm4929 = vcmp.ne.s16.totalorder %v4715, 0
      %vm4930 = vcmp.ne.s16.totalorder %v4725, 0
      %vm4931 = vcmp.ne.s16.totalorder %v4735, 0
      %vm4932 = vcmp.ne.s16.totalorder %v4745, 0
      %vm4933 = vcmp.ne.s16.totalorder %v4755, 0
      %vm4934 = vcmp.ne.s16.totalorder %v4765, 0
      %vm4935 = vcmp.ne.s16.totalorder %v4775, 0
      %vm4936 = vcmp.ne.s16.totalorder %v4785, 0
      %vm4937 = vcmp.ne.s16.totalorder %v4795, 0
      %vm4938 = vcmp.ne.s16.totalorder %v4805, 0
      %vm4939 = vcmp.ne.s16.totalorder %v4815, 0
      %vm4940 = vcmp.ne.s16.totalorder %v4825, 0
      %vm4941 = vcmp.ne.s16.totalorder %v4835, 0
      %vm4942 = vcmp.ne.s16.totalorder %v4845, 0
      %vm4943 = vcmp.ne.s16.totalorder %v4855, 0
      %vm4944 = vcmp.ne.s16.totalorder %v4865, 0
      %vm4945 = vcmp.ne.s16.totalorder %v4875, 0
      %vm4946 = vcmp.ne.s16.totalorder %v4885, 0
      %vm4947 = vcmp.ne.s16.totalorder %v4895, 0
      %vm4948 = vcmp.ne.s16.totalorder %v4905, 0
      %vm4949 = vcmp.ne.s16.totalorder %v4915, 0
      %vm4950 = vcmp.ne.s16.totalorder %v4925, 0
      %v4951 = vsel %vm4926, %v3884, 0
      %v4952 = vsel %vm4927, %v3443, 0
      %v4953 = vsel %vm4928, %v3444, 0
      %v4954 = vsel %vm4929, %v3445, 0
      %v4955 = vsel %vm4930, %v3446, 0
      %v4956 = vsel %vm4931, %v3447, 0
      %v4957 = vsel %vm4932, %v3448, 0
      %v4958 = vsel %vm4933, %v3449, 0
      %v4959 = vsel %vm4934, %v3450, 0
      %v4960 = vsel %vm4935, %v3451, 0
      %v4961 = vsel %vm4936, %v3452, 0
      %v4962 = vsel %vm4937, %v3453, 0
      %v4963 = vsel %vm4938, %v3454, 0
      %v4964 = vsel %vm4939, %v3455, 0
      %v4965 = vsel %vm4940, %v3456, 0
      %v4966 = vsel %vm4941, %v3457, 0
      %v4967 = vsel %vm4942, %v3458, 0
      %v4968 = vsel %vm4943, %v3459, 0
      %v4969 = vsel %vm4944, %v3460, 0
      %v4970 = vsel %vm4945, %v3461, 0
      %v4971 = vsel %vm4946, %v3462, 0
      %v4972 = vsel %vm4947, %v3463, 0
      %v4973 = vsel %vm4948, %v3464, 0
      %v4974 = vsel %vm4949, %v3465, 0
      %v4975 = vsel %vm4950, %v4552, 0
      %s4976 = scalar_lea.vmem %s3, 128
      %v4977 = vld [vmem:[%s4976] sm:$0xf]
      %v4978 = vld [vmem:[%s4976 + $0x4] sm:$0xf]
      %v4979 = vld [vmem:[%s4976 + $0x8] sm:$0xf]
      %v4980 = vld [vmem:[%s4976 + $0xc] sm:$0xf]
      %v4981 = vld [vmem:[%s4976 + $0x10] sm:$0xf]
      %v4982 = vld [vmem:[%s4976 + $0x14] sm:$0xf]
      %v4983 = vld [vmem:[%s4976 + $0x18] sm:$0xf]
      %v4984 = vld [vmem:[%s4976 + $0x1c] sm:$0xf]
      %v4985 = vld [vmem:[%s4976 + $0x20] sm:$0xf]
      %v4986 = vld [vmem:[%s4976 + $0x24] sm:$0xf]
      %v4987 = vld [vmem:[%s4976 + $0x28] sm:$0xf]
      %v4988 = vld [vmem:[%s4976 + $0x2c] sm:$0xf]
      %v4989 = vld [vmem:[%s4976 + $0x30] sm:$0xf]
      %v4990 = vld [vmem:[%s4976 + $0x34] sm:$0xf]
      %v4991 = vld [vmem:[%s4976 + $0x38] sm:$0xf]
      %v4992 = vld [vmem:[%s4976 + $0x3c] sm:$0xf]
      %v5018 = vunpack.c.l.b16 %v4951
      %v5019 = vunpack.c.l.b16 %v4952
      %v5020 = vunpack.c.l.b16 %v4953
      %v5021 = vunpack.c.l.b16 %v4954
      %v5022 = vunpack.c.l.b16 %v4955
      %v5023 = vunpack.c.l.b16 %v4956
      %v5024 = vunpack.c.l.b16 %v4957
      %v5025 = vunpack.c.l.b16 %v4958
      %v5026 = vunpack.c.l.b16 %v4959
      %v5027 = vunpack.c.l.b16 %v4960
      %v5028 = vunpack.c.l.b16 %v4961
      %v5029 = vunpack.c.l.b16 %v4962
      %v5030 = vunpack.c.l.b16 %v4963
      %v5031 = vunpack.c.l.b16 %v4964
      %v5032 = vunpack.c.l.b16 %v4965
      %v5033 = vunpack.c.l.b16 %v4966
      %v5034 = vunpack.c.l.b16 %v4967
      %v5035 = vunpack.c.l.b16 %v4968
      %v5036 = vunpack.c.l.b16 %v4969
      %v5037 = vunpack.c.l.b16 %v4970
      %v5038 = vunpack.c.l.b16 %v4971
      %v5039 = vunpack.c.l.b16 %v4972
      %v5040 = vunpack.c.l.b16 %v4973
      %v5041 = vunpack.c.l.b16 %v4974
      %v5042 = vunpack.c.l.b16 %v4975
      %v5043 = vpack.c.b16 %v5019, %v5018
      %v5044 = vpack.c.b16 %v5021, %v5020
      %v5045 = vpack.c.b16 %v5023, %v5022
      %v5046 = vpack.c.b16 %v5025, %v5024
      %v5047 = vpack.c.b16 %v5027, %v5026
      %v5048 = vpack.c.b16 %v5029, %v5028
      %v5049 = vpack.c.b16 %v5031, %v5030
      %v5050 = vpack.c.b16 %v5033, %v5032
      %v5051 = vpack.c.b16 %v5035, %v5034
      %v5052 = vpack.c.b16 %v5037, %v5036
      %v5053 = vpack.c.b16 %v5039, %v5038
      %v5054 = vpack.c.b16 %v5041, %v5040
      %v5055 = vpack.c.b16 %v5042, %v5042
      %vm5056 = vsmask.f32 6400
      %v5058 = vshrl.u32 %v5043, 16
      %v5060 = vrot.slane %v5058, 1
      %v5061 = vshll.u32 %v5043, 16
      %v5063 = vrot.slane %v5061, 2
      %v5064 = vor.u32 %v5060, %v5063
      %v5066 = vshrl.u32 %v5044, 16
      %v5068 = vrot.slane %v5066, 1
      %v5069 = vshll.u32 %v5044, 16
      %v5071 = vrot.slane %v5069, 2
      %v5072 = vor.u32 %v5068, %v5071
      %v5073 = vsel %vm5056, %v5064, %v5072
      %v5075 = vshrl.u32 %v5045, 16
      %v5077 = vrot.slane %v5075, 1
      %v5078 = vshll.u32 %v5045, 16
      %v5080 = vrot.slane %v5078, 2
      %v5081 = vor.u32 %v5077, %v5080
      %v5082 = vsel %vm5056, %v5072, %v5081
      %v5084 = vshrl.u32 %v5046, 16
      %v5086 = vrot.slane %v5084, 1
      %v5087 = vshll.u32 %v5046, 16
      %v5089 = vrot.slane %v5087, 2
      %v5090 = vor.u32 %v5086, %v5089
      %v5091 = vsel %vm5056, %v5081, %v5090
      %v5093 = vshrl.u32 %v5047, 16
      %v5095 = vrot.slane %v5093, 1
      %v5096 = vshll.u32 %v5047, 16
      %v5098 = vrot.slane %v5096, 2
      %v5099 = vor.u32 %v5095, %v5098
      %v5100 = vsel %vm5056, %v5090, %v5099
      %v5102 = vshrl.u32 %v5048, 16
      %v5104 = vrot.slane %v5102, 1
      %v5105 = vshll.u32 %v5048, 16
      %v5107 = vrot.slane %v5105, 2
      %v5108 = vor.u32 %v5104, %v5107
      %v5109 = vsel %vm5056, %v5099, %v5108
      %v5111 = vshrl.u32 %v5049, 16
      %v5113 = vrot.slane %v5111, 1
      %v5114 = vshll.u32 %v5049, 16
      %v5116 = vrot.slane %v5114, 2
      %v5117 = vor.u32 %v5113, %v5116
      %v5118 = vsel %vm5056, %v5108, %v5117
      %v5120 = vshrl.u32 %v5050, 16
      %v5122 = vrot.slane %v5120, 1
      %v5123 = vshll.u32 %v5050, 16
      %v5125 = vrot.slane %v5123, 2
      %v5126 = vor.u32 %v5122, %v5125
      %v5127 = vsel %vm5056, %v5117, %v5126
      %v5129 = vshrl.u32 %v5051, 16
      %v5131 = vrot.slane %v5129, 1
      %v5132 = vshll.u32 %v5051, 16
      %v5134 = vrot.slane %v5132, 2
      %v5135 = vor.u32 %v5131, %v5134
      %v5136 = vsel %vm5056, %v5126, %v5135
      %v5138 = vshrl.u32 %v5052, 16
      %v5140 = vrot.slane %v5138, 1
      %v5141 = vshll.u32 %v5052, 16
      %v5143 = vrot.slane %v5141, 2
      %v5144 = vor.u32 %v5140, %v5143
      %v5145 = vsel %vm5056, %v5135, %v5144
      %v5147 = vshrl.u32 %v5053, 16
      %v5149 = vrot.slane %v5147, 1
      %v5150 = vshll.u32 %v5053, 16
      %v5152 = vrot.slane %v5150, 2
      %v5153 = vor.u32 %v5149, %v5152
      %v5154 = vsel %vm5056, %v5144, %v5153
      %v5156 = vshrl.u32 %v5054, 16
      %v5158 = vrot.slane %v5156, 1
      %v5159 = vshll.u32 %v5054, 16
      %v5161 = vrot.slane %v5159, 2
      %v5162 = vor.u32 %v5158, %v5161
      %v5163 = vsel %vm5056, %v5153, %v5162
      %v5165 = vshrl.u32 %v5055, 16
      %v5167 = vrot.slane %v5165, 1
      %v5168 = vshll.u32 %v5055, 16
      %v5170 = vrot.slane %v5168, 2
      %v5171 = vor.u32 %v5167, %v5170
      %v5172 = vsel %vm5056, %v5162, %v5171
      %v5202 = vunpack.c.l.b16 %v4977
      %v5203 = vunpack.c.l.b16 %v4978
      %v5204 = vunpack.c.l.b16 %v4979
      %v5205 = vunpack.c.l.b16 %v4980
      %v5206 = vunpack.c.l.b16 %v4981
      %v5207 = vunpack.c.l.b16 %v4982
      %v5208 = vunpack.c.l.b16 %v4983
      %v5209 = vunpack.c.l.b16 %v4984
      %v5210 = vunpack.c.l.b16 %v4985
      %v5211 = vunpack.c.l.b16 %v4986
      %v5212 = vunpack.c.l.b16 %v4987
      %v5213 = vunpack.c.l.b16 %v4988
      %v5214 = vunpack.c.l.b16 %v4989
      %v5215 = vunpack.c.l.b16 %v4990
      %v5216 = vunpack.c.l.b16 %v4991
      %v5217 = vunpack.c.l.b16 %v4992
      %v5218 = vpack.c.b16 %v5203, %v5202
      %v5219 = vpack.c.b16 %v5205, %v5204
      %v5220 = vpack.c.b16 %v5207, %v5206
      %v5221 = vpack.c.b16 %v5209, %v5208
      %v5222 = vpack.c.b16 %v5211, %v5210
      %v5223 = vpack.c.b16 %v5213, %v5212
      %v5224 = vpack.c.b16 %v5215, %v5214
      %v5225 = vpack.c.b16 %v5217, %v5216
      %5234 = vmatprep.subr.bf16.mxu0 0
      %5235 = vmatpush1.bf16.msra.mxu0 %v5225
      %5236 = vmatprep.subr.bf16.mxu0 0
      %5237 = vmatpush1.bf16.msra.mxu0 %v5224
      %5238 = vmatprep.subr.bf16.mxu0 0
      %5239 = vmatpush1.bf16.msra.mxu0 %v5223
      %5240 = vmatprep.subr.bf16.mxu0 0
      %5241 = vmatpush1.bf16.msra.mxu0 %v5222
      %5242 = vmatprep.subr.bf16.mxu0 0
      %5243 = vmatpush1.bf16.msra.mxu0 %v5221
      %5244 = vmatprep.subr.bf16.mxu0 0
      %5245 = vmatpush1.bf16.msra.mxu0 %v5220
      %5246 = vmatprep.subr.bf16.mxu0 0
      %5247 = vmatpush1.bf16.msra.mxu0 %v5219
      %5248 = vmatprep.subr.bf16.mxu0 0
      %5249 = vmatpush1.bf16.msra.mxu0 %v5218
      %5250 = vmatprep.subr.bf16.mxu0 0
      %5251 = vmatpush2.bf16.msra.mxu0 0
      %5252 = vmatprep.subr.bf16.mxu0 0
      %5253 = vmatpush2.bf16.msra.mxu0 0
      %5254 = vmatprep.subr.bf16.mxu0 0
      %5255 = vmatpush2.bf16.msra.mxu0 0
      %5256 = vmatprep.subr.bf16.mxu0 0
      %5257 = vmatpush2.bf16.msra.mxu0 0
      %5258 = vmatprep.subr.bf16.mxu0 0
      %5259 = vmatpush2.bf16.msra.mxu0 0
      %5260 = vmatprep.subr.bf16.mxu0 0
      %5261 = vmatpush2.bf16.msra.mxu0 0
      %5262 = vmatprep.subr.bf16.mxu0 0
      %5263 = vmatpush2.bf16.msra.mxu0 0
      %5264 = vmatprep.subr.bf16.mxu0 0
      %5265 = vmatpush2.bf16.msra.mxu0 0
      %5266 = vmatprep.mubr.bf16.mxu0 0
      %5267 = vmatmul.mubr.bf16.gmra.mxu0 %v5073
      %v5268 = vpop.f32.mrf.mxu0
      %v5269 = vadd.f32 0.0, %v5268
      %v5270 = vpop.f32.mrf.mxu0
      %v5271 = vpop.f32.mrf.mxu0
      %v5272 = vadd.f32 0.0, %v5271
      %v5273 = vpop.f32.mrf.mxu0
      %5274 = vmatprep.mubr.bf16.mxu0 0
      %5275 = vmatmul.mubr.bf16.gmra.mxu0 %v5082
      %v5276 = vpop.f32.mrf.mxu0
      %v5277 = vadd.f32 0.0, %v5276
      %v5278 = vpop.f32.mrf.mxu0
      %v5279 = vpop.f32.mrf.mxu0
      %v5280 = vadd.f32 0.0, %v5279
      %v5281 = vpop.f32.mrf.mxu0
      %5282 = vmatprep.mubr.bf16.mxu0 0
      %5283 = vmatmul.mubr.bf16.gmra.mxu0 %v5091
      %v5284 = vpop.f32.mrf.mxu0
      %v5285 = vadd.f32 0.0, %v5284
      %v5286 = vpop.f32.mrf.mxu0
      %v5287 = vpop.f32.mrf.mxu0
      %v5288 = vadd.f32 0.0, %v5287
      %v5289 = vpop.f32.mrf.mxu0
      %5290 = vmatprep.mubr.bf16.mxu0 0
      %5291 = vmatmul.mubr.bf16.gmra.mxu0 %v5100
      %v5292 = vpop.f32.mrf.mxu0
      %v5293 = vadd.f32 0.0, %v5292
      %v5294 = vpop.f32.mrf.mxu0
      %v5295 = vpop.f32.mrf.mxu0
      %v5296 = vadd.f32 0.0, %v5295
      %v5297 = vpop.f32.mrf.mxu0
      %5298 = vmatprep.mubr.bf16.mxu0 0
      %5299 = vmatmul.mubr.bf16.gmra.mxu0 %v5109
      %v5300 = vpop.f32.mrf.mxu0
      %v5301 = vadd.f32 0.0, %v5300
      %v5302 = vpop.f32.mrf.mxu0
      %v5303 = vpop.f32.mrf.mxu0
      %v5304 = vadd.f32 0.0, %v5303
      %v5305 = vpop.f32.mrf.mxu0
      %5306 = vmatprep.mubr.bf16.mxu0 0
      %5307 = vmatmul.mubr.bf16.gmra.mxu0 %v5118
      %v5308 = vpop.f32.mrf.mxu0
      %v5309 = vadd.f32 0.0, %v5308
      %v5310 = vpop.f32.mrf.mxu0
      %v5311 = vpop.f32.mrf.mxu0
      %v5312 = vadd.f32 0.0, %v5311
      %v5313 = vpop.f32.mrf.mxu0
      %5314 = vmatprep.mubr.bf16.mxu0 0
      %5315 = vmatmul.mubr.bf16.gmra.mxu0 %v5127
      %v5316 = vpop.f32.mrf.mxu0
      %v5317 = vadd.f32 0.0, %v5316
      %v5318 = vpop.f32.mrf.mxu0
      %v5319 = vpop.f32.mrf.mxu0
      %v5320 = vadd.f32 0.0, %v5319
      %v5321 = vpop.f32.mrf.mxu0
      %5322 = vmatprep.mubr.bf16.mxu0 0
      %5323 = vmatmul.mubr.bf16.gmra.mxu0 %v5136
      %v5324 = vpop.f32.mrf.mxu0
      %v5325 = vadd.f32 0.0, %v5324
      %v5326 = vpop.f32.mrf.mxu0
      %v5327 = vpop.f32.mrf.mxu0
      %v5328 = vadd.f32 0.0, %v5327
      %v5329 = vpop.f32.mrf.mxu0
      %5330 = vmatprep.mubr.bf16.mxu0 0
      %5331 = vmatmul.mubr.bf16.gmra.mxu0 %v5145
      %v5332 = vpop.f32.mrf.mxu0
      %v5333 = vadd.f32 0.0, %v5332
      %v5334 = vpop.f32.mrf.mxu0
      %v5335 = vpop.f32.mrf.mxu0
      %v5336 = vadd.f32 0.0, %v5335
      %v5337 = vpop.f32.mrf.mxu0
      %5338 = vmatprep.mubr.bf16.mxu0 0
      %5339 = vmatmul.mubr.bf16.gmra.mxu0 %v5154
      %v5340 = vpop.f32.mrf.mxu0
      %v5341 = vadd.f32 0.0, %v5340
      %v5342 = vpop.f32.mrf.mxu0
      %v5343 = vpop.f32.mrf.mxu0
      %v5344 = vadd.f32 0.0, %v5343
      %v5345 = vpop.f32.mrf.mxu0
      %5346 = vmatprep.mubr.bf16.mxu0 0
      %5347 = vmatmul.mubr.bf16.gmra.mxu0 %v5163
      %v5348 = vpop.f32.mrf.mxu0
      %v5349 = vadd.f32 0.0, %v5348
      %v5350 = vpop.f32.mrf.mxu0
      %v5351 = vpop.f32.mrf.mxu0
      %v5352 = vadd.f32 0.0, %v5351
      %v5353 = vpop.f32.mrf.mxu0
      %5354 = vmatprep.mubr.bf16.mxu0 0
      %5355 = vmatmul.mubr.bf16.gmra.mxu0 %v5172
      %v5356 = vpop.f32.mrf.mxu0
      %v5357 = vadd.f32 0.0, %v5356
      %v5358 = vpop.f32.mrf.mxu0
      %v5359 = vpop.f32.mrf.mxu0
      %v5360 = vadd.f32 0.0, %v5359
      %v5361 = vpop.f32.mrf.mxu0
      %5362 = vmatprep.mubr.bf16.mxu0 0
      %5363 = vmatmul.mubr.bf16.gmra.mxu0 %v5171
      %v5364 = vpop.f32.mrf.mxu0
      %v5365 = vadd.f32 0.0, %v5364
      %v5366 = vpop.f32.mrf.mxu0
      %v5367 = vpop.f32.mrf.mxu0
      %v5368 = vpop.f32.mrf.mxu0
      %5369 = vdwg.mxu0
      %v5370 = vadd.f32 %v4451, %v5269
      %v5371 = vadd.f32 %v4454, %v5272
      %v5372 = vadd.f32 %v4459, %v5277
      %v5373 = vadd.f32 %v4462, %v5280
      %v5374 = vadd.f32 %v4467, %v5285
      %v5375 = vadd.f32 %v4470, %v5288
      %v5376 = vadd.f32 %v4475, %v5293
      %v5377 = vadd.f32 %v4478, %v5296
      %v5378 = vadd.f32 %v4483, %v5301
      %v5379 = vadd.f32 %v4486, %v5304
      %v5380 = vadd.f32 %v4491, %v5309
      %v5381 = vadd.f32 %v4494, %v5312
      %v5382 = vadd.f32 %v4499, %v5317
      %v5383 = vadd.f32 %v4502, %v5320
      %v5384 = vadd.f32 %v4507, %v5325
      %v5385 = vadd.f32 %v4510, %v5328
      %v5386 = vadd.f32 %v4515, %v5333
      %v5387 = vadd.f32 %v4518, %v5336
      %v5388 = vadd.f32 %v4523, %v5341
      %v5389 = vadd.f32 %v4526, %v5344
      %v5390 = vadd.f32 %v4531, %v5349
      %v5391 = vadd.f32 %v4534, %v5352
      %v5392 = vadd.f32 %v4539, %v5357
      %v5393 = vadd.f32 %v4542, %v5360
      %v5394 = vadd.f32 %v4547, %v5365
      %v5395 = vld [vmem:[#allocation2 + $0x4] sm:$0x8]
      %v5396 = vld [vmem:[#allocation2 + $0x8] sm:$0xf]
      %v5397 = vld [vmem:[#allocation2 + $0xc] sm:$0xf]
      %v5398 = vld [vmem:[#allocation2 + $0x10] sm:$0xf]
      %v5399 = vld [vmem:[#allocation2 + $0x14] sm:$0xf]
      %v5400 = vld [vmem:[#allocation2 + $0x18] sm:$0xf]
      %v5401 = vld [vmem:[#allocation2 + $0x1c] sm:$0xf]
      %v5402 = vld [vmem:[#allocation2 + $0x20] sm:$0xf]
      %v5403 = vld [vmem:[#allocation2 + $0x24] sm:$0xf]
      %v5404 = vld [vmem:[#allocation2 + $0x28] sm:$0xf]
      %v5405 = vld [vmem:[#allocation2 + $0x2c] sm:$0xf]
      %v5406 = vld [vmem:[#allocation2 + $0x30] sm:$0xf]
      %v5407 = vld [vmem:[#allocation2 + $0x34] sm:$0xf]
      %v5408 = vld [vmem:[#allocation2 + $0x38] sm:$0xf]
      %v5409 = vld [vmem:[#allocation2 + $0x3c] sm:$0xf]
      %v5410 = vld [vmem:[#allocation2 + $0x40] sm:$0xf]
      %v5411 = vld [vmem:[#allocation2 + $0x44] sm:$0xf]
      %v5412 = vld [vmem:[#allocation2 + $0x48] sm:$0xf]
      %v5413 = vld [vmem:[#allocation2 + $0x4c] sm:$0xf]
      %v5414 = vld [vmem:[#allocation2 + $0x50] sm:$0xf]
      %v5415 = vld [vmem:[#allocation2 + $0x54] sm:$0xf]
      %v5416 = vld [vmem:[#allocation2 + $0x58] sm:$0xf]
      %v5417 = vld [vmem:[#allocation2 + $0x5c] sm:$0xf]
      %v5418 = vld [vmem:[#allocation2 + $0x60] sm:$0xf]
      %v5419 = vld [vmem:[#allocation2 + $0x64] sm:$0xf]
      %v5420 = vld [vmem:[#allocation2 + $0x68] sm:$0x3]
      %v5421 = vrot.slane %v3599, 5
      %v5422 = vrot.slane %v3596, 4
      %v5423 = vor.u32 %v5422, %v5421
      %v5424 = vrot.slane %v5423, 4
      %v5425 = vrot.slane %v3607, 5
      %v5426 = vsel %vm2202, %v5424, %v5425
      %v5427 = vrot.slane %v3604, 4
      %v5428 = vor.u32 %v5427, %v5425
      %v5429 = vrot.slane %v5428, 4
      %v5430 = vrot.slane %v3616, 5
      %v5431 = vsel %vm2202, %v5429, %v5430
      %v5432 = vrot.slane %v3613, 4
      %v5433 = vor.u32 %v5432, %v5430
      %v5434 = vrot.slane %v5433, 4
      %v5435 = vrot.slane %v3625, 5
      %v5436 = vsel %vm2202, %v5434, %v5435
      %v5437 = vrot.slane %v3622, 4
      %v5438 = vor.u32 %v5437, %v5435
      %v5439 = vrot.slane %v5438, 4
      %v5440 = vrot.slane %v3634, 5
      %v5441 = vsel %vm2202, %v5439, %v5440
      %v5442 = vrot.slane %v3631, 4
      %v5443 = vor.u32 %v5442, %v5440
      %v5444 = vrot.slane %v5443, 4
      %v5445 = vrot.slane %v3643, 5
      %v5446 = vsel %vm2202, %v5444, %v5445
      %v5447 = vrot.slane %v3640, 4
      %v5448 = vor.u32 %v5447, %v5445
      %v5449 = vrot.slane %v5448, 4
      %v5450 = vrot.slane %v3652, 5
      %v5451 = vsel %vm2202, %v5449, %v5450
      %v5452 = vrot.slane %v3649, 4
      %v5453 = vor.u32 %v5452, %v5450
      %v5454 = vrot.slane %v5453, 4
      %v5455 = vrot.slane %v3661, 5
      %v5456 = vsel %vm2202, %v5454, %v5455
      %v5457 = vrot.slane %v3658, 4
      %v5458 = vor.u32 %v5457, %v5455
      %v5459 = vrot.slane %v5458, 4
      %v5460 = vrot.slane %v3670, 5
      %v5461 = vsel %vm2202, %v5459, %v5460
      %v5462 = vrot.slane %v3667, 4
      %v5463 = vor.u32 %v5462, %v5460
      %v5464 = vrot.slane %v5463, 4
      %v5465 = vrot.slane %v3679, 5
      %v5466 = vsel %vm2202, %v5464, %v5465
      %v5467 = vrot.slane %v3676, 4
      %v5468 = vor.u32 %v5467, %v5465
      %v5469 = vrot.slane %v5468, 4
      %v5470 = vrot.slane %v3688, 5
      %v5471 = vsel %vm2202, %v5469, %v5470
      %v5472 = vrot.slane %v3685, 4
      %v5473 = vor.u32 %v5472, %v5470
      %v5474 = vrot.slane %v5473, 4
      %v5475 = vrot.slane %v3697, 5
      %v5476 = vsel %vm2202, %v5474, %v5475
      %v5477 = vrot.slane %v3694, 4
      %v5478 = vor.u32 %v5477, %v5475
      %v5479 = vrot.slane %v5478, 4
      %v5480 = vrot.slane %v3706, 5
      %v5481 = vsel %vm2202, %v5479, %v5480
      %v5482 = vrot.slane %v3703, 4
      %v5483 = vor.u32 %v5482, %v5480
      %v5484 = vrot.slane %v5483, 4
      %v5485 = vrot.slane %v3715, 5
      %v5486 = vsel %vm2202, %v5484, %v5485
      %v5487 = vrot.slane %v3712, 4
      %v5488 = vor.u32 %v5487, %v5485
      %v5489 = vrot.slane %v5488, 4
      %v5490 = vrot.slane %v3724, 5
      %v5491 = vsel %vm2202, %v5489, %v5490
      %v5492 = vrot.slane %v3721, 4
      %v5493 = vor.u32 %v5492, %v5490
      %v5494 = vrot.slane %v5493, 4
      %v5495 = vrot.slane %v3733, 5
      %v5496 = vsel %vm2202, %v5494, %v5495
      %v5497 = vrot.slane %v3730, 4
      %v5498 = vor.u32 %v5497, %v5495
      %v5499 = vrot.slane %v5498, 4
      %v5500 = vrot.slane %v3742, 5
      %v5501 = vsel %vm2202, %v5499, %v5500
      %v5502 = vrot.slane %v3739, 4
      %v5503 = vor.u32 %v5502, %v5500
      %v5504 = vrot.slane %v5503, 4
      %v5505 = vrot.slane %v3751, 5
      %v5506 = vsel %vm2202, %v5504, %v5505
      %v5507 = vrot.slane %v3748, 4
      %v5508 = vor.u32 %v5507, %v5505
      %v5509 = vrot.slane %v5508, 4
      %v5510 = vrot.slane %v3760, 5
      %v5511 = vsel %vm2202, %v5509, %v5510
      %v5512 = vrot.slane %v3757, 4
      %v5513 = vor.u32 %v5512, %v5510
      %v5514 = vrot.slane %v5513, 4
      %v5515 = vrot.slane %v3769, 5
      %v5516 = vsel %vm2202, %v5514, %v5515
      %v5517 = vrot.slane %v3766, 4
      %v5518 = vor.u32 %v5517, %v5515
      %v5519 = vrot.slane %v5518, 4
      %v5520 = vrot.slane %v3778, 5
      %v5521 = vsel %vm2202, %v5519, %v5520
      %v5522 = vrot.slane %v3775, 4
      %v5523 = vor.u32 %v5522, %v5520
      %v5524 = vrot.slane %v5523, 4
      %v5525 = vrot.slane %v3787, 5
      %v5526 = vsel %vm2202, %v5524, %v5525
      %v5527 = vrot.slane %v3784, 4
      %v5528 = vor.u32 %v5527, %v5525
      %v5529 = vrot.slane %v5528, 4
      %v5530 = vrot.slane %v3796, 5
      %v5531 = vsel %vm2202, %v5529, %v5530
      %v5532 = vrot.slane %v3793, 4
      %v5533 = vor.u32 %v5532, %v5530
      %v5534 = vrot.slane %v5533, 4
      %v5535 = vrot.slane %v3805, 5
      %v5536 = vsel %vm2202, %v5534, %v5535
      %v5537 = vrot.slane %v3802, 4
      %v5538 = vor.u32 %v5537, %v5535
      %v5539 = vrot.slane %v5538, 4
      %v5540 = vrot.slane %v3814, 5
      %v5541 = vsel %vm2202, %v5539, %v5540
      %v5542 = vrot.slane %v3811, 4
      %v5543 = vor.u32 %v5542, %v5540
      %v5544 = vrot.slane %v5543, 4
      %vm5545 = vcmp.ne.s16.totalorder %v5421, 0
      %vm5546 = vcmp.ne.s16.totalorder %v5426, 0
      %vm5547 = vcmp.ne.s16.totalorder %v5431, 0
      %vm5548 = vcmp.ne.s16.totalorder %v5436, 0
      %vm5549 = vcmp.ne.s16.totalorder %v5441, 0
      %vm5550 = vcmp.ne.s16.totalorder %v5446, 0
      %vm5551 = vcmp.ne.s16.totalorder %v5451, 0
      %vm5552 = vcmp.ne.s16.totalorder %v5456, 0
      %vm5553 = vcmp.ne.s16.totalorder %v5461, 0
      %vm5554 = vcmp.ne.s16.totalorder %v5466, 0
      %vm5555 = vcmp.ne.s16.totalorder %v5471, 0
      %vm5556 = vcmp.ne.s16.totalorder %v5476, 0
      %vm5557 = vcmp.ne.s16.totalorder %v5481, 0
      %vm5558 = vcmp.ne.s16.totalorder %v5486, 0
      %vm5559 = vcmp.ne.s16.totalorder %v5491, 0
      %vm5560 = vcmp.ne.s16.totalorder %v5496, 0
      %vm5561 = vcmp.ne.s16.totalorder %v5501, 0
      %vm5562 = vcmp.ne.s16.totalorder %v5506, 0
      %vm5563 = vcmp.ne.s16.totalorder %v5511, 0
      %vm5564 = vcmp.ne.s16.totalorder %v5516, 0
      %vm5565 = vcmp.ne.s16.totalorder %v5521, 0
      %vm5566 = vcmp.ne.s16.totalorder %v5526, 0
      %vm5567 = vcmp.ne.s16.totalorder %v5531, 0
      %vm5568 = vcmp.ne.s16.totalorder %v5536, 0
      %vm5569 = vcmp.ne.s16.totalorder %v5541, 0
      %vm5570 = vcmp.ne.s16.totalorder %v5544, 0
      %v5571 = vsel %vm5545, %v5395, 0
      %v5572 = vsel %vm5546, %v5396, 0
      %v5573 = vsel %vm5547, %v5397, 0
      %v5574 = vsel %vm5548, %v5398, 0
      %v5575 = vsel %vm5549, %v5399, 0
      %v5576 = vsel %vm5550, %v5400, 0
      %v5577 = vsel %vm5551, %v5401, 0
      %v5578 = vsel %vm5552, %v5402, 0
      %v5579 = vsel %vm5553, %v5403, 0
      %v5580 = vsel %vm5554, %v5404, 0
      %v5581 = vsel %vm5555, %v5405, 0
      %v5582 = vsel %vm5556, %v5406, 0
      %v5583 = vsel %vm5557, %v5407, 0
      %v5584 = vsel %vm5558, %v5408, 0
      %v5585 = vsel %vm5559, %v5409, 0
      %v5586 = vsel %vm5560, %v5410, 0
      %v5587 = vsel %vm5561, %v5411, 0
      %v5588 = vsel %vm5562, %v5412, 0
      %v5589 = vsel %vm5563, %v5413, 0
      %v5590 = vsel %vm5564, %v5414, 0
      %v5591 = vsel %vm5565, %v5415, 0
      %v5592 = vsel %vm5566, %v5416, 0
      %v5593 = vsel %vm5567, %v5417, 0
      %v5594 = vsel %vm5568, %v5418, 0
      %v5595 = vsel %vm5569, %v5419, 0
      %v5596 = vsel %vm5570, %v5420, 0
      %s5597 = scalar_lea.vmem %s3, 192
      %v5598 = vld [vmem:[%s5597] sm:$0xf]
      %v5599 = vld [vmem:[%s5597 + $0x4] sm:$0xf]
      %v5600 = vld [vmem:[%s5597 + $0x8] sm:$0xf]
      %v5601 = vld [vmem:[%s5597 + $0xc] sm:$0xf]
      %v5602 = vld [vmem:[%s5597 + $0x10] sm:$0xf]
      %v5603 = vld [vmem:[%s5597 + $0x14] sm:$0xf]
      %v5604 = vld [vmem:[%s5597 + $0x18] sm:$0xf]
      %v5605 = vld [vmem:[%s5597 + $0x1c] sm:$0xf]
      %v5606 = vld [vmem:[%s5597 + $0x20] sm:$0xf]
      %v5607 = vld [vmem:[%s5597 + $0x24] sm:$0xf]
      %v5608 = vld [vmem:[%s5597 + $0x28] sm:$0xf]
      %v5609 = vld [vmem:[%s5597 + $0x2c] sm:$0xf]
      %v5610 = vld [vmem:[%s5597 + $0x30] sm:$0xf]
      %v5611 = vld [vmem:[%s5597 + $0x34] sm:$0xf]
      %v5612 = vld [vmem:[%s5597 + $0x38] sm:$0xf]
      %v5613 = vld [vmem:[%s5597 + $0x3c] sm:$0xf]
      %v5640 = vunpack.c.l.b16 %v5571
      %v5641 = vunpack.c.l.b16 %v5572
      %v5642 = vunpack.c.l.b16 %v5573
      %v5643 = vunpack.c.l.b16 %v5574
      %v5644 = vunpack.c.l.b16 %v5575
      %v5645 = vunpack.c.l.b16 %v5576
      %v5646 = vunpack.c.l.b16 %v5577
      %v5647 = vunpack.c.l.b16 %v5578
      %v5648 = vunpack.c.l.b16 %v5579
      %v5649 = vunpack.c.l.b16 %v5580
      %v5650 = vunpack.c.l.b16 %v5581
      %v5651 = vunpack.c.l.b16 %v5582
      %v5652 = vunpack.c.l.b16 %v5583
      %v5653 = vunpack.c.l.b16 %v5584
      %v5654 = vunpack.c.l.b16 %v5585
      %v5655 = vunpack.c.l.b16 %v5586
      %v5656 = vunpack.c.l.b16 %v5587
      %v5657 = vunpack.c.l.b16 %v5588
      %v5658 = vunpack.c.l.b16 %v5589
      %v5659 = vunpack.c.l.b16 %v5590
      %v5660 = vunpack.c.l.b16 %v5591
      %v5661 = vunpack.c.l.b16 %v5592
      %v5662 = vunpack.c.l.b16 %v5593
      %v5663 = vunpack.c.l.b16 %v5594
      %v5664 = vunpack.c.l.b16 %v5595
      %v5665 = vunpack.c.l.b16 %v5596
      %v5666 = vpack.c.b16 %v5641, %v5640
      %v5667 = vpack.c.b16 %v5643, %v5642
      %v5668 = vpack.c.b16 %v5645, %v5644
      %v5669 = vpack.c.b16 %v5647, %v5646
      %v5670 = vpack.c.b16 %v5649, %v5648
      %v5671 = vpack.c.b16 %v5651, %v5650
      %v5672 = vpack.c.b16 %v5653, %v5652
      %v5673 = vpack.c.b16 %v5655, %v5654
      %v5674 = vpack.c.b16 %v5657, %v5656
      %v5675 = vpack.c.b16 %v5659, %v5658
      %v5676 = vpack.c.b16 %v5661, %v5660
      %v5677 = vpack.c.b16 %v5663, %v5662
      %v5678 = vpack.c.b16 %v5665, %v5664
      %vm5679 = vsmask.f32 4352
      %v5681 = vshrl.u32 %v5666, 16
      %v5683 = vrot.slane %v5681, 3
      %v5684 = vshll.u32 %v5666, 16
      %v5686 = vrot.slane %v5684, 4
      %v5687 = vor.u32 %v5683, %v5686
      %v5689 = vshrl.u32 %v5667, 16
      %v5691 = vrot.slane %v5689, 3
      %v5692 = vshll.u32 %v5667, 16
      %v5694 = vrot.slane %v5692, 4
      %v5695 = vor.u32 %v5691, %v5694
      %v5696 = vsel %vm5679, %v5687, %v5695
      %v5698 = vshrl.u32 %v5668, 16
      %v5700 = vrot.slane %v5698, 3
      %v5701 = vshll.u32 %v5668, 16
      %v5703 = vrot.slane %v5701, 4
      %v5704 = vor.u32 %v5700, %v5703
      %v5705 = vsel %vm5679, %v5695, %v5704
      %v5707 = vshrl.u32 %v5669, 16
      %v5709 = vrot.slane %v5707, 3
      %v5710 = vshll.u32 %v5669, 16
      %v5712 = vrot.slane %v5710, 4
      %v5713 = vor.u32 %v5709, %v5712
      %v5714 = vsel %vm5679, %v5704, %v5713
      %v5716 = vshrl.u32 %v5670, 16
      %v5718 = vrot.slane %v5716, 3
      %v5719 = vshll.u32 %v5670, 16
      %v5721 = vrot.slane %v5719, 4
      %v5722 = vor.u32 %v5718, %v5721
      %v5723 = vsel %vm5679, %v5713, %v5722
      %v5725 = vshrl.u32 %v5671, 16
      %v5727 = vrot.slane %v5725, 3
      %v5728 = vshll.u32 %v5671, 16
      %v5730 = vrot.slane %v5728, 4
      %v5731 = vor.u32 %v5727, %v5730
      %v5732 = vsel %vm5679, %v5722, %v5731
      %v5734 = vshrl.u32 %v5672, 16
      %v5736 = vrot.slane %v5734, 3
      %v5737 = vshll.u32 %v5672, 16
      %v5739 = vrot.slane %v5737, 4
      %v5740 = vor.u32 %v5736, %v5739
      %v5741 = vsel %vm5679, %v5731, %v5740
      %v5743 = vshrl.u32 %v5673, 16
      %v5745 = vrot.slane %v5743, 3
      %v5746 = vshll.u32 %v5673, 16
      %v5748 = vrot.slane %v5746, 4
      %v5749 = vor.u32 %v5745, %v5748
      %v5750 = vsel %vm5679, %v5740, %v5749
      %v5752 = vshrl.u32 %v5674, 16
      %v5754 = vrot.slane %v5752, 3
      %v5755 = vshll.u32 %v5674, 16
      %v5757 = vrot.slane %v5755, 4
      %v5758 = vor.u32 %v5754, %v5757
      %v5759 = vsel %vm5679, %v5749, %v5758
      %v5761 = vshrl.u32 %v5675, 16
      %v5763 = vrot.slane %v5761, 3
      %v5764 = vshll.u32 %v5675, 16
      %v5766 = vrot.slane %v5764, 4
      %v5767 = vor.u32 %v5763, %v5766
      %v5768 = vsel %vm5679, %v5758, %v5767
      %v5770 = vshrl.u32 %v5676, 16
      %v5772 = vrot.slane %v5770, 3
      %v5773 = vshll.u32 %v5676, 16
      %v5775 = vrot.slane %v5773, 4
      %v5776 = vor.u32 %v5772, %v5775
      %v5777 = vsel %vm5679, %v5767, %v5776
      %v5779 = vshrl.u32 %v5677, 16
      %v5781 = vrot.slane %v5779, 3
      %v5782 = vshll.u32 %v5677, 16
      %v5784 = vrot.slane %v5782, 4
      %v5785 = vor.u32 %v5781, %v5784
      %v5786 = vsel %vm5679, %v5776, %v5785
      %v5788 = vshrl.u32 %v5678, 16
      %v5790 = vrot.slane %v5788, 3
      %v5791 = vshll.u32 %v5678, 16
      %v5793 = vrot.slane %v5791, 4
      %v5794 = vor.u32 %v5790, %v5793
      %v5795 = vsel %vm5679, %v5785, %v5794
      %v5825 = vunpack.c.l.b16 %v5598
      %v5826 = vunpack.c.l.b16 %v5599
      %v5827 = vunpack.c.l.b16 %v5600
      %v5828 = vunpack.c.l.b16 %v5601
      %v5829 = vunpack.c.l.b16 %v5602
      %v5830 = vunpack.c.l.b16 %v5603
      %v5831 = vunpack.c.l.b16 %v5604
      %v5832 = vunpack.c.l.b16 %v5605
      %v5833 = vunpack.c.l.b16 %v5606
      %v5834 = vunpack.c.l.b16 %v5607
      %v5835 = vunpack.c.l.b16 %v5608
      %v5836 = vunpack.c.l.b16 %v5609
      %v5837 = vunpack.c.l.b16 %v5610
      %v5838 = vunpack.c.l.b16 %v5611
      %v5839 = vunpack.c.l.b16 %v5612
      %v5840 = vunpack.c.l.b16 %v5613
      %v5841 = vpack.c.b16 %v5826, %v5825
      %v5842 = vpack.c.b16 %v5828, %v5827
      %v5843 = vpack.c.b16 %v5830, %v5829
      %v5844 = vpack.c.b16 %v5832, %v5831
      %v5845 = vpack.c.b16 %v5834, %v5833
      %v5846 = vpack.c.b16 %v5836, %v5835
      %v5847 = vpack.c.b16 %v5838, %v5837
      %v5848 = vpack.c.b16 %v5840, %v5839
      %5857 = vmatprep.subr.bf16.mxu0 0
      %5858 = vmatpush1.bf16.msra.mxu0 %v5848
      %5859 = vmatprep.subr.bf16.mxu0 0
      %5860 = vmatpush1.bf16.msra.mxu0 %v5847
      %5861 = vmatprep.subr.bf16.mxu0 0
      %5862 = vmatpush1.bf16.msra.mxu0 %v5846
      %5863 = vmatprep.subr.bf16.mxu0 0
      %5864 = vmatpush1.bf16.msra.mxu0 %v5845
      %5865 = vmatprep.subr.bf16.mxu0 0
      %5866 = vmatpush1.bf16.msra.mxu0 %v5844
      %5867 = vmatprep.subr.bf16.mxu0 0
      %5868 = vmatpush1.bf16.msra.mxu0 %v5843
      %5869 = vmatprep.subr.bf16.mxu0 0
      %5870 = vmatpush1.bf16.msra.mxu0 %v5842
      %5871 = vmatprep.subr.bf16.mxu0 0
      %5872 = vmatpush1.bf16.msra.mxu0 %v5841
      %5873 = vmatprep.subr.bf16.mxu0 0
      %5874 = vmatpush2.bf16.msra.mxu0 0
      %5875 = vmatprep.subr.bf16.mxu0 0
      %5876 = vmatpush2.bf16.msra.mxu0 0
      %5877 = vmatprep.subr.bf16.mxu0 0
      %5878 = vmatpush2.bf16.msra.mxu0 0
      %5879 = vmatprep.subr.bf16.mxu0 0
      %5880 = vmatpush2.bf16.msra.mxu0 0
      %5881 = vmatprep.subr.bf16.mxu0 0
      %5882 = vmatpush2.bf16.msra.mxu0 0
      %5883 = vmatprep.subr.bf16.mxu0 0
      %5884 = vmatpush2.bf16.msra.mxu0 0
      %5885 = vmatprep.subr.bf16.mxu0 0
      %5886 = vmatpush2.bf16.msra.mxu0 0
      %5887 = vmatprep.subr.bf16.mxu0 0
      %5888 = vmatpush2.bf16.msra.mxu0 0
      %5889 = vmatprep.mubr.bf16.mxu0 0
      %5890 = vmatmul.mubr.bf16.gmra.mxu0 %v5696
      %v5891 = vpop.f32.mrf.mxu0
      %v5892 = vadd.f32 0.0, %v5891
      %v5893 = vpop.f32.mrf.mxu0
      %v5894 = vpop.f32.mrf.mxu0
      %v5895 = vadd.f32 0.0, %v5894
      %v5896 = vpop.f32.mrf.mxu0
      %5897 = vmatprep.mubr.bf16.mxu0 0
      %5898 = vmatmul.mubr.bf16.gmra.mxu0 %v5705
      %v5899 = vpop.f32.mrf.mxu0
      %v5900 = vadd.f32 0.0, %v5899
      %v5901 = vpop.f32.mrf.mxu0
      %v5902 = vpop.f32.mrf.mxu0
      %v5903 = vadd.f32 0.0, %v5902
      %v5904 = vpop.f32.mrf.mxu0
      %5905 = vmatprep.mubr.bf16.mxu0 0
      %5906 = vmatmul.mubr.bf16.gmra.mxu0 %v5714
      %v5907 = vpop.f32.mrf.mxu0
      %v5908 = vadd.f32 0.0, %v5907
      %v5909 = vpop.f32.mrf.mxu0
      %v5910 = vpop.f32.mrf.mxu0
      %v5911 = vadd.f32 0.0, %v5910
      %v5912 = vpop.f32.mrf.mxu0
      %5913 = vmatprep.mubr.bf16.mxu0 0
      %5914 = vmatmul.mubr.bf16.gmra.mxu0 %v5723
      %v5915 = vpop.f32.mrf.mxu0
      %v5916 = vadd.f32 0.0, %v5915
      %v5917 = vpop.f32.mrf.mxu0
      %v5918 = vpop.f32.mrf.mxu0
      %v5919 = vadd.f32 0.0, %v5918
      %v5920 = vpop.f32.mrf.mxu0
      %5921 = vmatprep.mubr.bf16.mxu0 0
      %5922 = vmatmul.mubr.bf16.gmra.mxu0 %v5732
      %v5923 = vpop.f32.mrf.mxu0
      %v5924 = vadd.f32 0.0, %v5923
      %v5925 = vpop.f32.mrf.mxu0
      %v5926 = vpop.f32.mrf.mxu0
      %v5927 = vadd.f32 0.0, %v5926
      %v5928 = vpop.f32.mrf.mxu0
      %5929 = vmatprep.mubr.bf16.mxu0 0
      %5930 = vmatmul.mubr.bf16.gmra.mxu0 %v5741
      %v5931 = vpop.f32.mrf.mxu0
      %v5932 = vadd.f32 0.0, %v5931
      %v5933 = vpop.f32.mrf.mxu0
      %v5934 = vpop.f32.mrf.mxu0
      %v5935 = vadd.f32 0.0, %v5934
      %v5936 = vpop.f32.mrf.mxu0
      %5937 = vmatprep.mubr.bf16.mxu0 0
      %5938 = vmatmul.mubr.bf16.gmra.mxu0 %v5750
      %v5939 = vpop.f32.mrf.mxu0
      %v5940 = vadd.f32 0.0, %v5939
      %v5941 = vpop.f32.mrf.mxu0
      %v5942 = vpop.f32.mrf.mxu0
      %v5943 = vadd.f32 0.0, %v5942
      %v5944 = vpop.f32.mrf.mxu0
      %5945 = vmatprep.mubr.bf16.mxu0 0
      %5946 = vmatmul.mubr.bf16.gmra.mxu0 %v5759
      %v5947 = vpop.f32.mrf.mxu0
      %v5948 = vadd.f32 0.0, %v5947
      %v5949 = vpop.f32.mrf.mxu0
      %v5950 = vpop.f32.mrf.mxu0
      %v5951 = vadd.f32 0.0, %v5950
      %v5952 = vpop.f32.mrf.mxu0
      %5953 = vmatprep.mubr.bf16.mxu0 0
      %5954 = vmatmul.mubr.bf16.gmra.mxu0 %v5768
      %v5955 = vpop.f32.mrf.mxu0
      %v5956 = vadd.f32 0.0, %v5955
      %v5957 = vpop.f32.mrf.mxu0
      %v5958 = vpop.f32.mrf.mxu0
      %v5959 = vadd.f32 0.0, %v5958
      %v5960 = vpop.f32.mrf.mxu0
      %5961 = vmatprep.mubr.bf16.mxu0 0
      %5962 = vmatmul.mubr.bf16.gmra.mxu0 %v5777
      %v5963 = vpop.f32.mrf.mxu0
      %v5964 = vadd.f32 0.0, %v5963
      %v5965 = vpop.f32.mrf.mxu0
      %v5966 = vpop.f32.mrf.mxu0
      %v5967 = vadd.f32 0.0, %v5966
      %v5968 = vpop.f32.mrf.mxu0
      %5969 = vmatprep.mubr.bf16.mxu0 0
      %5970 = vmatmul.mubr.bf16.gmra.mxu0 %v5786
      %v5971 = vpop.f32.mrf.mxu0
      %v5972 = vadd.f32 0.0, %v5971
      %v5973 = vpop.f32.mrf.mxu0
      %v5974 = vpop.f32.mrf.mxu0
      %v5975 = vadd.f32 0.0, %v5974
      %v5976 = vpop.f32.mrf.mxu0
      %5977 = vmatprep.mubr.bf16.mxu0 0
      %5978 = vmatmul.mubr.bf16.gmra.mxu0 %v5795
      %v5979 = vpop.f32.mrf.mxu0
      %v5980 = vadd.f32 0.0, %v5979
      %v5981 = vpop.f32.mrf.mxu0
      %v5982 = vpop.f32.mrf.mxu0
      %v5983 = vadd.f32 0.0, %v5982
      %v5984 = vpop.f32.mrf.mxu0
      %5985 = vmatprep.mubr.bf16.mxu0 0
      %5986 = vmatmul.mubr.bf16.gmra.mxu0 %v5794
      %v5987 = vpop.f32.mrf.mxu0
      %v5988 = vadd.f32 0.0, %v5987
      %v5989 = vpop.f32.mrf.mxu0
      %v5990 = vpop.f32.mrf.mxu0
      %v5991 = vpop.f32.mrf.mxu0
      %5992 = vdwg.mxu0
      %v5993 = vadd.f32 %v5370, %v5892
      %v5994 = vadd.f32 %v5371, %v5895
      %v5995 = vadd.f32 %v5372, %v5900
      %v5996 = vadd.f32 %v5373, %v5903
      %v5997 = vadd.f32 %v5374, %v5908
      %v5998 = vadd.f32 %v5375, %v5911
      %v5999 = vadd.f32 %v5376, %v5916
      %v6000 = vadd.f32 %v5377, %v5919
      %v6001 = vadd.f32 %v5378, %v5924
      %v6002 = vadd.f32 %v5379, %v5927
      %v6003 = vadd.f32 %v5380, %v5932
      %v6004 = vadd.f32 %v5381, %v5935
      %v6005 = vadd.f32 %v5382, %v5940
      %v6006 = vadd.f32 %v5383, %v5943
      %v6007 = vadd.f32 %v5384, %v5948
      %v6008 = vadd.f32 %v5385, %v5951
      %v6009 = vadd.f32 %v5386, %v5956
      %v6010 = vadd.f32 %v5387, %v5959
      %v6011 = vadd.f32 %v5388, %v5964
      %v6012 = vadd.f32 %v5389, %v5967
      %v6013 = vadd.f32 %v5390, %v5972
      %v6014 = vadd.f32 %v5391, %v5975
      %v6015 = vadd.f32 %v5392, %v5980
      %v6016 = vadd.f32 %v5393, %v5983
      %v6017 = vadd.f32 %v5394, %v5988
      %s6018 = scalar_lea.vmem %s3, 256
      %v6019 = vld [vmem:[%s6018] sm:$0xf]
      %v6020 = vld [vmem:[%s6018 + $0x4] sm:$0xf]
      %v6021 = vld [vmem:[%s6018 + $0x8] sm:$0xf]
      %v6022 = vld [vmem:[%s6018 + $0xc] sm:$0xf]
      %v6023 = vld [vmem:[%s6018 + $0x10] sm:$0xf]
      %v6024 = vld [vmem:[%s6018 + $0x14] sm:$0xf]
      %v6025 = vld [vmem:[%s6018 + $0x18] sm:$0xf]
      %v6026 = vld [vmem:[%s6018 + $0x1c] sm:$0xf]
      %v6027 = vld [vmem:[%s6018 + $0x20] sm:$0xf]
      %v6028 = vld [vmem:[%s6018 + $0x24] sm:$0xf]
      %v6029 = vld [vmem:[%s6018 + $0x28] sm:$0xf]
      %v6030 = vld [vmem:[%s6018 + $0x2c] sm:$0xf]
      %v6031 = vld [vmem:[%s6018 + $0x30] sm:$0xf]
      %v6032 = vld [vmem:[%s6018 + $0x34] sm:$0xf]
      %v6033 = vld [vmem:[%s6018 + $0x38] sm:$0xf]
      %v6034 = vld [vmem:[%s6018 + $0x3c] sm:$0xf]
      %v6060 = vunpack.c.l.b16 %v5396
      %v6061 = vunpack.c.l.b16 %v5397
      %v6062 = vunpack.c.l.b16 %v5398
      %v6063 = vunpack.c.l.b16 %v5399
      %v6064 = vunpack.c.l.b16 %v5400
      %v6065 = vunpack.c.l.b16 %v5401
      %v6066 = vunpack.c.l.b16 %v5402
      %v6067 = vunpack.c.l.b16 %v5403
      %v6068 = vunpack.c.l.b16 %v5404
      %v6069 = vunpack.c.l.b16 %v5405
      %v6070 = vunpack.c.l.b16 %v5406
      %v6071 = vunpack.c.l.b16 %v5407
      %v6072 = vunpack.c.l.b16 %v5408
      %v6073 = vunpack.c.l.b16 %v5409
      %v6074 = vunpack.c.l.b16 %v5410
      %v6075 = vunpack.c.l.b16 %v5411
      %v6076 = vunpack.c.l.b16 %v5412
      %v6077 = vunpack.c.l.b16 %v5413
      %v6078 = vunpack.c.l.b16 %v5414
      %v6079 = vunpack.c.l.b16 %v5415
      %v6080 = vunpack.c.l.b16 %v5416
      %v6081 = vunpack.c.l.b16 %v5417
      %v6082 = vunpack.c.l.b16 %v5418
      %v6083 = vunpack.c.l.b16 %v5419
      %v6084 = vunpack.c.l.b16 %v5420
      %v6085 = vpack.c.b16 %v6061, %v6060
      %v6086 = vpack.c.b16 %v6063, %v6062
      %v6087 = vpack.c.b16 %v6065, %v6064
      %v6088 = vpack.c.b16 %v6067, %v6066
      %v6089 = vpack.c.b16 %v6069, %v6068
      %v6090 = vpack.c.b16 %v6071, %v6070
      %v6091 = vpack.c.b16 %v6073, %v6072
      %v6092 = vpack.c.b16 %v6075, %v6074
      %v6093 = vpack.c.b16 %v6077, %v6076
      %v6094 = vpack.c.b16 %v6079, %v6078
      %v6095 = vpack.c.b16 %v6081, %v6080
      %v6096 = vpack.c.b16 %v6083, %v6082
      %v6097 = vpack.c.b16 %v6084, %v6084
      %v6127 = vunpack.c.l.b16 %v6019
      %v6128 = vunpack.c.l.b16 %v6020
      %v6129 = vunpack.c.l.b16 %v6021
      %v6130 = vunpack.c.l.b16 %v6022
      %v6131 = vunpack.c.l.b16 %v6023
      %v6132 = vunpack.c.l.b16 %v6024
      %v6133 = vunpack.c.l.b16 %v6025
      %v6134 = vunpack.c.l.b16 %v6026
      %v6135 = vunpack.c.l.b16 %v6027
      %v6136 = vunpack.c.l.b16 %v6028
      %v6137 = vunpack.c.l.b16 %v6029
      %v6138 = vunpack.c.l.b16 %v6030
      %v6139 = vunpack.c.l.b16 %v6031
      %v6140 = vunpack.c.l.b16 %v6032
      %v6141 = vunpack.c.l.b16 %v6033
      %v6142 = vunpack.c.l.b16 %v6034
      %v6143 = vpack.c.b16 %v6128, %v6127
      %v6144 = vpack.c.b16 %v6130, %v6129
      %v6145 = vpack.c.b16 %v6132, %v6131
      %v6146 = vpack.c.b16 %v6134, %v6133
      %v6147 = vpack.c.b16 %v6136, %v6135
      %v6148 = vpack.c.b16 %v6138, %v6137
      %v6149 = vpack.c.b16 %v6140, %v6139
      %v6150 = vpack.c.b16 %v6142, %v6141
      %6159 = vmatprep.subr.bf16.mxu0 0
      %6160 = vmatpush1.bf16.msra.mxu0 %v6150
      %6161 = vmatprep.subr.bf16.mxu0 0
      %6162 = vmatpush1.bf16.msra.mxu0 %v6149
      %6163 = vmatprep.subr.bf16.mxu0 0
      %6164 = vmatpush1.bf16.msra.mxu0 %v6148
      %6165 = vmatprep.subr.bf16.mxu0 0
      %6166 = vmatpush1.bf16.msra.mxu0 %v6147
      %6167 = vmatprep.subr.bf16.mxu0 0
      %6168 = vmatpush1.bf16.msra.mxu0 %v6146
      %6169 = vmatprep.subr.bf16.mxu0 0
      %6170 = vmatpush1.bf16.msra.mxu0 %v6145
      %6171 = vmatprep.subr.bf16.mxu0 0
      %6172 = vmatpush1.bf16.msra.mxu0 %v6144
      %6173 = vmatprep.subr.bf16.mxu0 0
      %6174 = vmatpush1.bf16.msra.mxu0 %v6143
      %6175 = vmatprep.subr.bf16.mxu0 0
      %6176 = vmatpush2.bf16.msra.mxu0 0
      %6177 = vmatprep.subr.bf16.mxu0 0
      %6178 = vmatpush2.bf16.msra.mxu0 0
      %6179 = vmatprep.subr.bf16.mxu0 0
      %6180 = vmatpush2.bf16.msra.mxu0 0
      %6181 = vmatprep.subr.bf16.mxu0 0
      %6182 = vmatpush2.bf16.msra.mxu0 0
      %6183 = vmatprep.subr.bf16.mxu0 0
      %6184 = vmatpush2.bf16.msra.mxu0 0
      %6185 = vmatprep.subr.bf16.mxu0 0
      %6186 = vmatpush2.bf16.msra.mxu0 0
      %6187 = vmatprep.subr.bf16.mxu0 0
      %6188 = vmatpush2.bf16.msra.mxu0 0
      %6189 = vmatprep.subr.bf16.mxu0 0
      %6190 = vmatpush2.bf16.msra.mxu0 0
      %6191 = vmatprep.mubr.bf16.mxu0 0
      %6192 = vmatmul.mubr.bf16.gmra.mxu0 %v6085
      %v6193 = vpop.f32.mrf.mxu0
      %v6194 = vadd.f32 0.0, %v6193
      %v6195 = vpop.f32.mrf.mxu0
      %v6196 = vpop.f32.mrf.mxu0
      %v6197 = vadd.f32 0.0, %v6196
      %v6198 = vpop.f32.mrf.mxu0
      %6199 = vmatprep.mubr.bf16.mxu0 0
      %6200 = vmatmul.mubr.bf16.gmra.mxu0 %v6086
      %v6201 = vpop.f32.mrf.mxu0
      %v6202 = vadd.f32 0.0, %v6201
      %v6203 = vpop.f32.mrf.mxu0
      %v6204 = vpop.f32.mrf.mxu0
      %v6205 = vadd.f32 0.0, %v6204
      %v6206 = vpop.f32.mrf.mxu0
      %6207 = vmatprep.mubr.bf16.mxu0 0
      %6208 = vmatmul.mubr.bf16.gmra.mxu0 %v6087
      %v6209 = vpop.f32.mrf.mxu0
      %v6210 = vadd.f32 0.0, %v6209
      %v6211 = vpop.f32.mrf.mxu0
      %v6212 = vpop.f32.mrf.mxu0
      %v6213 = vadd.f32 0.0, %v6212
      %v6214 = vpop.f32.mrf.mxu0
      %6215 = vmatprep.mubr.bf16.mxu0 0
      %6216 = vmatmul.mubr.bf16.gmra.mxu0 %v6088
      %v6217 = vpop.f32.mrf.mxu0
      %v6218 = vadd.f32 0.0, %v6217
      %v6219 = vpop.f32.mrf.mxu0
      %v6220 = vpop.f32.mrf.mxu0
      %v6221 = vadd.f32 0.0, %v6220
      %v6222 = vpop.f32.mrf.mxu0
      %6223 = vmatprep.mubr.bf16.mxu0 0
      %6224 = vmatmul.mubr.bf16.gmra.mxu0 %v6089
      %v6225 = vpop.f32.mrf.mxu0
      %v6226 = vadd.f32 0.0, %v6225
      %v6227 = vpop.f32.mrf.mxu0
      %v6228 = vpop.f32.mrf.mxu0
      %v6229 = vadd.f32 0.0, %v6228
      %v6230 = vpop.f32.mrf.mxu0
      %6231 = vmatprep.mubr.bf16.mxu0 0
      %6232 = vmatmul.mubr.bf16.gmra.mxu0 %v6090
      %v6233 = vpop.f32.mrf.mxu0
      %v6234 = vadd.f32 0.0, %v6233
      %v6235 = vpop.f32.mrf.mxu0
      %v6236 = vpop.f32.mrf.mxu0
      %v6237 = vadd.f32 0.0, %v6236
      %v6238 = vpop.f32.mrf.mxu0
      %6239 = vmatprep.mubr.bf16.mxu0 0
      %6240 = vmatmul.mubr.bf16.gmra.mxu0 %v6091
      %v6241 = vpop.f32.mrf.mxu0
      %v6242 = vadd.f32 0.0, %v6241
      %v6243 = vpop.f32.mrf.mxu0
      %v6244 = vpop.f32.mrf.mxu0
      %v6245 = vadd.f32 0.0, %v6244
      %v6246 = vpop.f32.mrf.mxu0
      %6247 = vmatprep.mubr.bf16.mxu0 0
      %6248 = vmatmul.mubr.bf16.gmra.mxu0 %v6092
      %v6249 = vpop.f32.mrf.mxu0
      %v6250 = vadd.f32 0.0, %v6249
      %v6251 = vpop.f32.mrf.mxu0
      %v6252 = vpop.f32.mrf.mxu0
      %v6253 = vadd.f32 0.0, %v6252
      %v6254 = vpop.f32.mrf.mxu0
      %6255 = vmatprep.mubr.bf16.mxu0 0
      %6256 = vmatmul.mubr.bf16.gmra.mxu0 %v6093
      %v6257 = vpop.f32.mrf.mxu0
      %v6258 = vadd.f32 0.0, %v6257
      %v6259 = vpop.f32.mrf.mxu0
      %v6260 = vpop.f32.mrf.mxu0
      %v6261 = vadd.f32 0.0, %v6260
      %v6262 = vpop.f32.mrf.mxu0
      %6263 = vmatprep.mubr.bf16.mxu0 0
      %6264 = vmatmul.mubr.bf16.gmra.mxu0 %v6094
      %v6265 = vpop.f32.mrf.mxu0
      %v6266 = vadd.f32 0.0, %v6265
      %v6267 = vpop.f32.mrf.mxu0
      %v6268 = vpop.f32.mrf.mxu0
      %v6269 = vadd.f32 0.0, %v6268
      %v6270 = vpop.f32.mrf.mxu0
      %6271 = vmatprep.mubr.bf16.mxu0 0
      %6272 = vmatmul.mubr.bf16.gmra.mxu0 %v6095
      %v6273 = vpop.f32.mrf.mxu0
      %v6274 = vadd.f32 0.0, %v6273
      %v6275 = vpop.f32.mrf.mxu0
      %v6276 = vpop.f32.mrf.mxu0
      %v6277 = vadd.f32 0.0, %v6276
      %v6278 = vpop.f32.mrf.mxu0
      %6279 = vmatprep.mubr.bf16.mxu0 0
      %6280 = vmatmul.mubr.bf16.gmra.mxu0 %v6096
      %v6281 = vpop.f32.mrf.mxu0
      %v6282 = vadd.f32 0.0, %v6281
      %v6283 = vpop.f32.mrf.mxu0
      %v6284 = vpop.f32.mrf.mxu0
      %v6285 = vadd.f32 0.0, %v6284
      %v6286 = vpop.f32.mrf.mxu0
      %6287 = vmatprep.mubr.bf16.mxu0 0
      %6288 = vmatmul.mubr.bf16.gmra.mxu0 %v6097
      %v6289 = vpop.f32.mrf.mxu0
      %v6290 = vadd.f32 0.0, %v6289
      %v6291 = vpop.f32.mrf.mxu0
      %v6292 = vpop.f32.mrf.mxu0
      %v6293 = vpop.f32.mrf.mxu0
      %6294 = vdwg.mxu0
      %v6295 = vadd.f32 %v5993, %v6194
      %v6296 = vadd.f32 %v5994, %v6197
      %v6297 = vadd.f32 %v5995, %v6202
      %v6298 = vadd.f32 %v5996, %v6205
      %v6299 = vadd.f32 %v5997, %v6210
      %v6300 = vadd.f32 %v5998, %v6213
      %v6301 = vadd.f32 %v5999, %v6218
      %v6302 = vadd.f32 %v6000, %v6221
      %v6303 = vadd.f32 %v6001, %v6226
      %v6304 = vadd.f32 %v6002, %v6229
      %v6305 = vadd.f32 %v6003, %v6234
      %v6306 = vadd.f32 %v6004, %v6237
      %v6307 = vadd.f32 %v6005, %v6242
      %v6308 = vadd.f32 %v6006, %v6245
      %v6309 = vadd.f32 %v6007, %v6250
      %v6310 = vadd.f32 %v6008, %v6253
      %v6311 = vadd.f32 %v6009, %v6258
      %v6312 = vadd.f32 %v6010, %v6261
      %v6313 = vadd.f32 %v6011, %v6266
      %v6314 = vadd.f32 %v6012, %v6269
      %v6315 = vadd.f32 %v6013, %v6274
      %v6316 = vadd.f32 %v6014, %v6277
      %v6317 = vadd.f32 %v6015, %v6282
      %v6318 = vadd.f32 %v6016, %v6285
      %v6319 = vadd.f32 %v6017, %v6290
      %v6320 = vld [vmem:[#allocation2 + $0x68] sm:$0x7]
      %v6321 = vrot.slane %v4679, 7
      %v6322 = vor.u32 %v6321, %v4682
      %v6323 = vrot.slane %v6321, 4
      %v6324 = vrot.slane %v4688, 7
      %v6325 = vor.u32 %v6324, %v4691
      %v6326 = vsel %vm3594, %v6323, %v6325
      %v6327 = vrot.slane %v6324, 4
      %v6328 = vrot.slane %v4698, 7
      %v6329 = vor.u32 %v6328, %v4701
      %v6330 = vsel %vm3594, %v6327, %v6329
      %v6331 = vrot.slane %v6328, 4
      %v6332 = vrot.slane %v4708, 7
      %v6333 = vor.u32 %v6332, %v4711
      %v6334 = vsel %vm3594, %v6331, %v6333
      %v6335 = vrot.slane %v6332, 4
      %v6336 = vrot.slane %v4718, 7
      %v6337 = vor.u32 %v6336, %v4721
      %v6338 = vsel %vm3594, %v6335, %v6337
      %v6339 = vrot.slane %v6336, 4
      %v6340 = vrot.slane %v4728, 7
      %v6341 = vor.u32 %v6340, %v4731
      %v6342 = vsel %vm3594, %v6339, %v6341
      %v6343 = vrot.slane %v6340, 4
      %v6344 = vrot.slane %v4738, 7
      %v6345 = vor.u32 %v6344, %v4741
      %v6346 = vsel %vm3594, %v6343, %v6345
      %v6347 = vrot.slane %v6344, 4
      %v6348 = vrot.slane %v4748, 7
      %v6349 = vor.u32 %v6348, %v4751
      %v6350 = vsel %vm3594, %v6347, %v6349
      %v6351 = vrot.slane %v6348, 4
      %v6352 = vrot.slane %v4758, 7
      %v6353 = vor.u32 %v6352, %v4761
      %v6354 = vsel %vm3594, %v6351, %v6353
      %v6355 = vrot.slane %v6352, 4
      %v6356 = vrot.slane %v4768, 7
      %v6357 = vor.u32 %v6356, %v4771
      %v6358 = vsel %vm3594, %v6355, %v6357
      %v6359 = vrot.slane %v6356, 4
      %v6360 = vrot.slane %v4778, 7
      %v6361 = vor.u32 %v6360, %v4781
      %v6362 = vsel %vm3594, %v6359, %v6361
      %v6363 = vrot.slane %v6360, 4
      %v6364 = vrot.slane %v4788, 7
      %v6365 = vor.u32 %v6364, %v4791
      %v6366 = vsel %vm3594, %v6363, %v6365
      %v6367 = vrot.slane %v6364, 4
      %v6368 = vrot.slane %v4798, 7
      %v6369 = vor.u32 %v6368, %v4801
      %v6370 = vsel %vm3594, %v6367, %v6369
      %v6371 = vrot.slane %v6368, 4
      %v6372 = vrot.slane %v4808, 7
      %v6373 = vor.u32 %v6372, %v4811
      %v6374 = vsel %vm3594, %v6371, %v6373
      %v6375 = vrot.slane %v6372, 4
      %v6376 = vrot.slane %v4818, 7
      %v6377 = vor.u32 %v6376, %v4821
      %v6378 = vsel %vm3594, %v6375, %v6377
      %v6379 = vrot.slane %v6376, 4
      %v6380 = vrot.slane %v4828, 7
      %v6381 = vor.u32 %v6380, %v4831
      %v6382 = vsel %vm3594, %v6379, %v6381
      %v6383 = vrot.slane %v6380, 4
      %v6384 = vrot.slane %v4838, 7
      %v6385 = vor.u32 %v6384, %v4841
      %v6386 = vsel %vm3594, %v6383, %v6385
      %v6387 = vrot.slane %v6384, 4
      %v6388 = vrot.slane %v4848, 7
      %v6389 = vor.u32 %v6388, %v4851
      %v6390 = vsel %vm3594, %v6387, %v6389
      %v6391 = vrot.slane %v6388, 4
      %v6392 = vrot.slane %v4858, 7
      %v6393 = vor.u32 %v6392, %v4861
      %v6394 = vsel %vm3594, %v6391, %v6393
      %v6395 = vrot.slane %v6392, 4
      %v6396 = vrot.slane %v4868, 7
      %v6397 = vor.u32 %v6396, %v4871
      %v6398 = vsel %vm3594, %v6395, %v6397
      %v6399 = vrot.slane %v6396, 4
      %v6400 = vrot.slane %v4878, 7
      %v6401 = vor.u32 %v6400, %v4881
      %v6402 = vsel %vm3594, %v6399, %v6401
      %v6403 = vrot.slane %v6400, 4
      %v6404 = vrot.slane %v4888, 7
      %v6405 = vor.u32 %v6404, %v4891
      %v6406 = vsel %vm3594, %v6403, %v6405
      %v6407 = vrot.slane %v6404, 4
      %v6408 = vrot.slane %v4898, 7
      %v6409 = vor.u32 %v6408, %v4901
      %v6410 = vsel %vm3594, %v6407, %v6409
      %v6411 = vrot.slane %v6408, 4
      %v6412 = vrot.slane %v4908, 7
      %v6413 = vor.u32 %v6412, %v4911
      %v6414 = vsel %vm3594, %v6411, %v6413
      %v6415 = vrot.slane %v6412, 4
      %v6416 = vrot.slane %v4918, 7
      %v6417 = vor.u32 %v6416, %v4921
      %v6418 = vsel %vm3594, %v6415, %v6417
      %vm6419 = vcmp.ne.s16.totalorder %v6322, 0
      %vm6420 = vcmp.ne.s16.totalorder %v6326, 0
      %vm6421 = vcmp.ne.s16.totalorder %v6330, 0
      %vm6422 = vcmp.ne.s16.totalorder %v6334, 0
      %vm6423 = vcmp.ne.s16.totalorder %v6338, 0
      %vm6424 = vcmp.ne.s16.totalorder %v6342, 0
      %vm6425 = vcmp.ne.s16.totalorder %v6346, 0
      %vm6426 = vcmp.ne.s16.totalorder %v6350, 0
      %vm6427 = vcmp.ne.s16.totalorder %v6354, 0
      %vm6428 = vcmp.ne.s16.totalorder %v6358, 0
      %vm6429 = vcmp.ne.s16.totalorder %v6362, 0
      %vm6430 = vcmp.ne.s16.totalorder %v6366, 0
      %vm6431 = vcmp.ne.s16.totalorder %v6370, 0
      %vm6432 = vcmp.ne.s16.totalorder %v6374, 0
      %vm6433 = vcmp.ne.s16.totalorder %v6378, 0
      %vm6434 = vcmp.ne.s16.totalorder %v6382, 0
      %vm6435 = vcmp.ne.s16.totalorder %v6386, 0
      %vm6436 = vcmp.ne.s16.totalorder %v6390, 0
      %vm6437 = vcmp.ne.s16.totalorder %v6394, 0
      %vm6438 = vcmp.ne.s16.totalorder %v6398, 0
      %vm6439 = vcmp.ne.s16.totalorder %v6402, 0
      %vm6440 = vcmp.ne.s16.totalorder %v6406, 0
      %vm6441 = vcmp.ne.s16.totalorder %v6410, 0
      %vm6442 = vcmp.ne.s16.totalorder %v6414, 0
      %vm6443 = vcmp.ne.s16.totalorder %v6418, 0
      %v6444 = vsel %vm6419, %v5396, 0
      %v6445 = vsel %vm6420, %v5397, 0
      %v6446 = vsel %vm6421, %v5398, 0
      %v6447 = vsel %vm6422, %v5399, 0
      %v6448 = vsel %vm6423, %v5400, 0
      %v6449 = vsel %vm6424, %v5401, 0
      %v6450 = vsel %vm6425, %v5402, 0
      %v6451 = vsel %vm6426, %v5403, 0
      %v6452 = vsel %vm6427, %v5404, 0
      %v6453 = vsel %vm6428, %v5405, 0
      %v6454 = vsel %vm6429, %v5406, 0
      %v6455 = vsel %vm6430, %v5407, 0
      %v6456 = vsel %vm6431, %v5408, 0
      %v6457 = vsel %vm6432, %v5409, 0
      %v6458 = vsel %vm6433, %v5410, 0
      %v6459 = vsel %vm6434, %v5411, 0
      %v6460 = vsel %vm6435, %v5412, 0
      %v6461 = vsel %vm6436, %v5413, 0
      %v6462 = vsel %vm6437, %v5414, 0
      %v6463 = vsel %vm6438, %v5415, 0
      %v6464 = vsel %vm6439, %v5416, 0
      %v6465 = vsel %vm6440, %v5417, 0
      %v6466 = vsel %vm6441, %v5418, 0
      %v6467 = vsel %vm6442, %v5419, 0
      %v6468 = vsel %vm6443, %v6320, 0
      %s6469 = scalar_lea.vmem %s3, 320
      %v6470 = vld [vmem:[%s6469] sm:$0xf]
      %v6471 = vld [vmem:[%s6469 + $0x4] sm:$0xf]
      %v6472 = vld [vmem:[%s6469 + $0x8] sm:$0xf]
      %v6473 = vld [vmem:[%s6469 + $0xc] sm:$0xf]
      %v6474 = vld [vmem:[%s6469 + $0x10] sm:$0xf]
      %v6475 = vld [vmem:[%s6469 + $0x14] sm:$0xf]
      %v6476 = vld [vmem:[%s6469 + $0x18] sm:$0xf]
      %v6477 = vld [vmem:[%s6469 + $0x1c] sm:$0xf]
      %v6478 = vld [vmem:[%s6469 + $0x20] sm:$0xf]
      %v6479 = vld [vmem:[%s6469 + $0x24] sm:$0xf]
      %v6480 = vld [vmem:[%s6469 + $0x28] sm:$0xf]
      %v6481 = vld [vmem:[%s6469 + $0x2c] sm:$0xf]
      %v6482 = vld [vmem:[%s6469 + $0x30] sm:$0xf]
      %v6483 = vld [vmem:[%s6469 + $0x34] sm:$0xf]
      %v6484 = vld [vmem:[%s6469 + $0x38] sm:$0xf]
      %v6485 = vld [vmem:[%s6469 + $0x3c] sm:$0xf]
      %v6511 = vunpack.c.l.b16 %v6444
      %v6512 = vunpack.c.l.b16 %v6445
      %v6513 = vunpack.c.l.b16 %v6446
      %v6514 = vunpack.c.l.b16 %v6447
      %v6515 = vunpack.c.l.b16 %v6448
      %v6516 = vunpack.c.l.b16 %v6449
      %v6517 = vunpack.c.l.b16 %v6450
      %v6518 = vunpack.c.l.b16 %v6451
      %v6519 = vunpack.c.l.b16 %v6452
      %v6520 = vunpack.c.l.b16 %v6453
      %v6521 = vunpack.c.l.b16 %v6454
      %v6522 = vunpack.c.l.b16 %v6455
      %v6523 = vunpack.c.l.b16 %v6456
      %v6524 = vunpack.c.l.b16 %v6457
      %v6525 = vunpack.c.l.b16 %v6458
      %v6526 = vunpack.c.l.b16 %v6459
      %v6527 = vunpack.c.l.b16 %v6460
      %v6528 = vunpack.c.l.b16 %v6461
      %v6529 = vunpack.c.l.b16 %v6462
      %v6530 = vunpack.c.l.b16 %v6463
      %v6531 = vunpack.c.l.b16 %v6464
      %v6532 = vunpack.c.l.b16 %v6465
      %v6533 = vunpack.c.l.b16 %v6466
      %v6534 = vunpack.c.l.b16 %v6467
      %v6535 = vunpack.c.l.b16 %v6468
      %v6536 = vpack.c.b16 %v6512, %v6511
      %v6537 = vpack.c.b16 %v6514, %v6513
      %v6538 = vpack.c.b16 %v6516, %v6515
      %v6539 = vpack.c.b16 %v6518, %v6517
      %v6540 = vpack.c.b16 %v6520, %v6519
      %v6541 = vpack.c.b16 %v6522, %v6521
      %v6542 = vpack.c.b16 %v6524, %v6523
      %v6543 = vpack.c.b16 %v6526, %v6525
      %v6544 = vpack.c.b16 %v6528, %v6527
      %v6545 = vpack.c.b16 %v6530, %v6529
      %v6546 = vpack.c.b16 %v6532, %v6531
      %v6547 = vpack.c.b16 %v6534, %v6533
      %v6548 = vpack.c.b16 %v6535, %v6535
      %v6550 = vshrl.u32 %v6536, 16
      %v6552 = vshll.u32 %v6536, 16
      %v6554 = vrot.slane %v6552, 1
      %v6555 = vor.u32 %v6550, %v6554
      %v6557 = vshll.u32 %v6537, 16
      %v6559 = vrot.slane %v6557, 1
      %v6560 = vsel %vm4251, %v6555, %v6559
      %v6561 = vshrl.u32 %v6537, 16
      %v6563 = vor.u32 %v6561, %v6559
      %v6565 = vshll.u32 %v6538, 16
      %v6567 = vrot.slane %v6565, 1
      %v6568 = vsel %vm4251, %v6563, %v6567
      %v6569 = vshrl.u32 %v6538, 16
      %v6571 = vor.u32 %v6569, %v6567
      %v6573 = vshll.u32 %v6539, 16
      %v6575 = vrot.slane %v6573, 1
      %v6576 = vsel %vm4251, %v6571, %v6575
      %v6577 = vshrl.u32 %v6539, 16
      %v6579 = vor.u32 %v6577, %v6575
      %v6581 = vshll.u32 %v6540, 16
      %v6583 = vrot.slane %v6581, 1
      %v6584 = vsel %vm4251, %v6579, %v6583
      %v6585 = vshrl.u32 %v6540, 16
      %v6587 = vor.u32 %v6585, %v6583
      %v6589 = vshll.u32 %v6541, 16
      %v6591 = vrot.slane %v6589, 1
      %v6592 = vsel %vm4251, %v6587, %v6591
      %v6593 = vshrl.u32 %v6541, 16
      %v6595 = vor.u32 %v6593, %v6591
      %v6597 = vshll.u32 %v6542, 16
      %v6599 = vrot.slane %v6597, 1
      %v6600 = vsel %vm4251, %v6595, %v6599
      %v6601 = vshrl.u32 %v6542, 16
      %v6603 = vor.u32 %v6601, %v6599
      %v6605 = vshll.u32 %v6543, 16
      %v6607 = vrot.slane %v6605, 1
      %v6608 = vsel %vm4251, %v6603, %v6607
      %v6609 = vshrl.u32 %v6543, 16
      %v6611 = vor.u32 %v6609, %v6607
      %v6613 = vshll.u32 %v6544, 16
      %v6615 = vrot.slane %v6613, 1
      %v6616 = vsel %vm4251, %v6611, %v6615
      %v6617 = vshrl.u32 %v6544, 16
      %v6619 = vor.u32 %v6617, %v6615
      %v6621 = vshll.u32 %v6545, 16
      %v6623 = vrot.slane %v6621, 1
      %v6624 = vsel %vm4251, %v6619, %v6623
      %v6625 = vshrl.u32 %v6545, 16
      %v6627 = vor.u32 %v6625, %v6623
      %v6629 = vshll.u32 %v6546, 16
      %v6631 = vrot.slane %v6629, 1
      %v6632 = vsel %vm4251, %v6627, %v6631
      %v6633 = vshrl.u32 %v6546, 16
      %v6635 = vor.u32 %v6633, %v6631
      %v6637 = vshll.u32 %v6547, 16
      %v6639 = vrot.slane %v6637, 1
      %v6640 = vsel %vm4251, %v6635, %v6639
      %v6641 = vshrl.u32 %v6547, 16
      %v6643 = vor.u32 %v6641, %v6639
      %v6645 = vshll.u32 %v6548, 16
      %v6647 = vrot.slane %v6645, 1
      %v6648 = vsel %vm4251, %v6643, %v6647
      %v6649 = vshrl.u32 %v6548, 16
      %v6651 = vor.u32 %v6649, %v6647
      %v6681 = vunpack.c.l.b16 %v6470
      %v6682 = vunpack.c.l.b16 %v6471
      %v6683 = vunpack.c.l.b16 %v6472
      %v6684 = vunpack.c.l.b16 %v6473
      %v6685 = vunpack.c.l.b16 %v6474
      %v6686 = vunpack.c.l.b16 %v6475
      %v6687 = vunpack.c.l.b16 %v6476
      %v6688 = vunpack.c.l.b16 %v6477
      %v6689 = vunpack.c.l.b16 %v6478
      %v6690 = vunpack.c.l.b16 %v6479
      %v6691 = vunpack.c.l.b16 %v6480
      %v6692 = vunpack.c.l.b16 %v6481
      %v6693 = vunpack.c.l.b16 %v6482
      %v6694 = vunpack.c.l.b16 %v6483
      %v6695 = vunpack.c.l.b16 %v6484
      %v6696 = vunpack.c.l.b16 %v6485
      %v6697 = vpack.c.b16 %v6682, %v6681
      %v6698 = vpack.c.b16 %v6684, %v6683
      %v6699 = vpack.c.b16 %v6686, %v6685
      %v6700 = vpack.c.b16 %v6688, %v6687
      %v6701 = vpack.c.b16 %v6690, %v6689
      %v6702 = vpack.c.b16 %v6692, %v6691
      %v6703 = vpack.c.b16 %v6694, %v6693
      %v6704 = vpack.c.b16 %v6696, %v6695
      %6713 = vmatprep.subr.bf16.mxu0 0
      %6714 = vmatpush1.bf16.msra.mxu0 %v6704
      %6715 = vmatprep.subr.bf16.mxu0 0
      %6716 = vmatpush1.bf16.msra.mxu0 %v6703
      %6717 = vmatprep.subr.bf16.mxu0 0
      %6718 = vmatpush1.bf16.msra.mxu0 %v6702
      %6719 = vmatprep.subr.bf16.mxu0 0
      %6720 = vmatpush1.bf16.msra.mxu0 %v6701
      %6721 = vmatprep.subr.bf16.mxu0 0
      %6722 = vmatpush1.bf16.msra.mxu0 %v6700
      %6723 = vmatprep.subr.bf16.mxu0 0
      %6724 = vmatpush1.bf16.msra.mxu0 %v6699
      %6725 = vmatprep.subr.bf16.mxu0 0
      %6726 = vmatpush1.bf16.msra.mxu0 %v6698
      %6727 = vmatprep.subr.bf16.mxu0 0
      %6728 = vmatpush1.bf16.msra.mxu0 %v6697
      %6729 = vmatprep.subr.bf16.mxu0 0
      %6730 = vmatpush2.bf16.msra.mxu0 0
      %6731 = vmatprep.subr.bf16.mxu0 0
      %6732 = vmatpush2.bf16.msra.mxu0 0
      %6733 = vmatprep.subr.bf16.mxu0 0
      %6734 = vmatpush2.bf16.msra.mxu0 0
      %6735 = vmatprep.subr.bf16.mxu0 0
      %6736 = vmatpush2.bf16.msra.mxu0 0
      %6737 = vmatprep.subr.bf16.mxu0 0
      %6738 = vmatpush2.bf16.msra.mxu0 0
      %6739 = vmatprep.subr.bf16.mxu0 0
      %6740 = vmatpush2.bf16.msra.mxu0 0
      %6741 = vmatprep.subr.bf16.mxu0 0
      %6742 = vmatpush2.bf16.msra.mxu0 0
      %6743 = vmatprep.subr.bf16.mxu0 0
      %6744 = vmatpush2.bf16.msra.mxu0 0
      %6745 = vmatprep.mubr.bf16.mxu0 0
      %6746 = vmatmul.mubr.bf16.gmra.mxu0 %v6560
      %v6747 = vpop.f32.mrf.mxu0
      %v6748 = vadd.f32 0.0, %v6747
      %v6749 = vpop.f32.mrf.mxu0
      %v6750 = vpop.f32.mrf.mxu0
      %v6751 = vadd.f32 0.0, %v6750
      %v6752 = vpop.f32.mrf.mxu0
      %6753 = vmatprep.mubr.bf16.mxu0 0
      %6754 = vmatmul.mubr.bf16.gmra.mxu0 %v6568
      %v6755 = vpop.f32.mrf.mxu0
      %v6756 = vadd.f32 0.0, %v6755
      %v6757 = vpop.f32.mrf.mxu0
      %v6758 = vpop.f32.mrf.mxu0
      %v6759 = vadd.f32 0.0, %v6758
      %v6760 = vpop.f32.mrf.mxu0
      %6761 = vmatprep.mubr.bf16.mxu0 0
      %6762 = vmatmul.mubr.bf16.gmra.mxu0 %v6576
      %v6763 = vpop.f32.mrf.mxu0
      %v6764 = vadd.f32 0.0, %v6763
      %v6765 = vpop.f32.mrf.mxu0
      %v6766 = vpop.f32.mrf.mxu0
      %v6767 = vadd.f32 0.0, %v6766
      %v6768 = vpop.f32.mrf.mxu0
      %6769 = vmatprep.mubr.bf16.mxu0 0
      %6770 = vmatmul.mubr.bf16.gmra.mxu0 %v6584
      %v6771 = vpop.f32.mrf.mxu0
      %v6772 = vadd.f32 0.0, %v6771
      %v6773 = vpop.f32.mrf.mxu0
      %v6774 = vpop.f32.mrf.mxu0
      %v6775 = vadd.f32 0.0, %v6774
      %v6776 = vpop.f32.mrf.mxu0
      %6777 = vmatprep.mubr.bf16.mxu0 0
      %6778 = vmatmul.mubr.bf16.gmra.mxu0 %v6592
      %v6779 = vpop.f32.mrf.mxu0
      %v6780 = vadd.f32 0.0, %v6779
      %v6781 = vpop.f32.mrf.mxu0
      %v6782 = vpop.f32.mrf.mxu0
      %v6783 = vadd.f32 0.0, %v6782
      %v6784 = vpop.f32.mrf.mxu0
      %6785 = vmatprep.mubr.bf16.mxu0 0
      %6786 = vmatmul.mubr.bf16.gmra.mxu0 %v6600
      %v6787 = vpop.f32.mrf.mxu0
      %v6788 = vadd.f32 0.0, %v6787
      %v6789 = vpop.f32.mrf.mxu0
      %v6790 = vpop.f32.mrf.mxu0
      %v6791 = vadd.f32 0.0, %v6790
      %v6792 = vpop.f32.mrf.mxu0
      %6793 = vmatprep.mubr.bf16.mxu0 0
      %6794 = vmatmul.mubr.bf16.gmra.mxu0 %v6608
      %v6795 = vpop.f32.mrf.mxu0
      %v6796 = vadd.f32 0.0, %v6795
      %v6797 = vpop.f32.mrf.mxu0
      %v6798 = vpop.f32.mrf.mxu0
      %v6799 = vadd.f32 0.0, %v6798
      %v6800 = vpop.f32.mrf.mxu0
      %6801 = vmatprep.mubr.bf16.mxu0 0
      %6802 = vmatmul.mubr.bf16.gmra.mxu0 %v6616
      %v6803 = vpop.f32.mrf.mxu0
      %v6804 = vadd.f32 0.0, %v6803
      %v6805 = vpop.f32.mrf.mxu0
      %v6806 = vpop.f32.mrf.mxu0
      %v6807 = vadd.f32 0.0, %v6806
      %v6808 = vpop.f32.mrf.mxu0
      %6809 = vmatprep.mubr.bf16.mxu0 0
      %6810 = vmatmul.mubr.bf16.gmra.mxu0 %v6624
      %v6811 = vpop.f32.mrf.mxu0
      %v6812 = vadd.f32 0.0, %v6811
      %v6813 = vpop.f32.mrf.mxu0
      %v6814 = vpop.f32.mrf.mxu0
      %v6815 = vadd.f32 0.0, %v6814
      %v6816 = vpop.f32.mrf.mxu0
      %6817 = vmatprep.mubr.bf16.mxu0 0
      %6818 = vmatmul.mubr.bf16.gmra.mxu0 %v6632
      %v6819 = vpop.f32.mrf.mxu0
      %v6820 = vadd.f32 0.0, %v6819
      %v6821 = vpop.f32.mrf.mxu0
      %v6822 = vpop.f32.mrf.mxu0
      %v6823 = vadd.f32 0.0, %v6822
      %v6824 = vpop.f32.mrf.mxu0
      %6825 = vmatprep.mubr.bf16.mxu0 0
      %6826 = vmatmul.mubr.bf16.gmra.mxu0 %v6640
      %v6827 = vpop.f32.mrf.mxu0
      %v6828 = vadd.f32 0.0, %v6827
      %v6829 = vpop.f32.mrf.mxu0
      %v6830 = vpop.f32.mrf.mxu0
      %v6831 = vadd.f32 0.0, %v6830
      %v6832 = vpop.f32.mrf.mxu0
      %6833 = vmatprep.mubr.bf16.mxu0 0
      %6834 = vmatmul.mubr.bf16.gmra.mxu0 %v6648
      %v6835 = vpop.f32.mrf.mxu0
      %v6836 = vadd.f32 0.0, %v6835
      %v6837 = vpop.f32.mrf.mxu0
      %v6838 = vpop.f32.mrf.mxu0
      %v6839 = vadd.f32 0.0, %v6838
      %v6840 = vpop.f32.mrf.mxu0
      %6841 = vmatprep.mubr.bf16.mxu0 0
      %6842 = vmatmul.mubr.bf16.gmra.mxu0 %v6651
      %v6843 = vpop.f32.mrf.mxu0
      %v6844 = vadd.f32 0.0, %v6843
      %v6845 = vpop.f32.mrf.mxu0
      %v6846 = vpop.f32.mrf.mxu0
      %v6847 = vpop.f32.mrf.mxu0
      %6848 = vdwg.mxu0
      %v6849 = vadd.f32 %v6295, %v6748
      %v6850 = vadd.f32 %v6296, %v6751
      %v6851 = vadd.f32 %v6297, %v6756
      %v6852 = vadd.f32 %v6298, %v6759
      %v6853 = vadd.f32 %v6299, %v6764
      %v6854 = vadd.f32 %v6300, %v6767
      %v6855 = vadd.f32 %v6301, %v6772
      %v6856 = vadd.f32 %v6302, %v6775
      %v6857 = vadd.f32 %v6303, %v6780
      %v6858 = vadd.f32 %v6304, %v6783
      %v6859 = vadd.f32 %v6305, %v6788
      %v6860 = vadd.f32 %v6306, %v6791
      %v6861 = vadd.f32 %v6307, %v6796
      %v6862 = vadd.f32 %v6308, %v6799
      %v6863 = vadd.f32 %v6309, %v6804
      %v6864 = vadd.f32 %v6310, %v6807
      %v6865 = vadd.f32 %v6311, %v6812
      %v6866 = vadd.f32 %v6312, %v6815
      %v6867 = vadd.f32 %v6313, %v6820
      %v6868 = vadd.f32 %v6314, %v6823
      %v6869 = vadd.f32 %v6315, %v6828
      %v6870 = vadd.f32 %v6316, %v6831
      %v6871 = vadd.f32 %v6317, %v6836
      %v6872 = vadd.f32 %v6318, %v6839
      %v6873 = vadd.f32 %v6319, %v6844
      %v6874 = vld [vmem:[#allocation2 + $0xc] sm:$0xc]
      %v6875 = vld [vmem:[#allocation2 + $0x10] sm:$0xf]
      %v6876 = vld [vmem:[#allocation2 + $0x14] sm:$0xf]
      %v6877 = vld [vmem:[#allocation2 + $0x18] sm:$0xf]
      %v6878 = vld [vmem:[#allocation2 + $0x1c] sm:$0xf]
      %v6879 = vld [vmem:[#allocation2 + $0x20] sm:$0xf]
      %v6880 = vld [vmem:[#allocation2 + $0x24] sm:$0xf]
      %v6881 = vld [vmem:[#allocation2 + $0x28] sm:$0xf]
      %v6882 = vld [vmem:[#allocation2 + $0x2c] sm:$0xf]
      %v6883 = vld [vmem:[#allocation2 + $0x30] sm:$0xf]
      %v6884 = vld [vmem:[#allocation2 + $0x34] sm:$0xf]
      %v6885 = vld [vmem:[#allocation2 + $0x38] sm:$0xf]
      %v6886 = vld [vmem:[#allocation2 + $0x3c] sm:$0xf]
      %v6887 = vld [vmem:[#allocation2 + $0x40] sm:$0xf]
      %v6888 = vld [vmem:[#allocation2 + $0x44] sm:$0xf]
      %v6889 = vld [vmem:[#allocation2 + $0x48] sm:$0xf]
      %v6890 = vld [vmem:[#allocation2 + $0x4c] sm:$0xf]
      %v6891 = vld [vmem:[#allocation2 + $0x50] sm:$0xf]
      %v6892 = vld [vmem:[#allocation2 + $0x54] sm:$0xf]
      %v6893 = vld [vmem:[#allocation2 + $0x58] sm:$0xf]
      %v6894 = vld [vmem:[#allocation2 + $0x5c] sm:$0xf]
      %v6895 = vld [vmem:[#allocation2 + $0x60] sm:$0xf]
      %v6896 = vld [vmem:[#allocation2 + $0x64] sm:$0xf]
      %v6897 = vld [vmem:[#allocation2 + $0x68] sm:$0xf]
      %v6898 = vld [vmem:[#allocation2 + $0x6c] sm:$0xf]
      %v6899 = vld [vmem:[#allocation2 + $0x70] sm:$0x1]
      %vm6900 = vsmask.f32 2304
      %vm6901 = vsmask.f32 6416
      %vm6902 = vmor %vm6900, %vm6901
      %v6903 = vrot.slane %v3596, 5
      %v6904 = vrot.slane %v3599, 6
      %v6905 = vor.u32 %v6903, %v6904
      %v6906 = vrot.slane %v6905, 4
      %v6907 = vrot.slane %v3604, 5
      %v6908 = vrot.slane %v3607, 6
      %v6909 = vor.u32 %v6907, %v6908
      %v6910 = vsel %vm6902, %v6906, %v6909
      %v6911 = vrot.slane %v6909, 4
      %v6912 = vrot.slane %v3613, 5
      %v6913 = vrot.slane %v3616, 6
      %v6914 = vor.u32 %v6912, %v6913
      %v6915 = vsel %vm6902, %v6911, %v6914
      %v6916 = vrot.slane %v6914, 4
      %v6917 = vrot.slane %v3622, 5
      %v6918 = vrot.slane %v3625, 6
      %v6919 = vor.u32 %v6917, %v6918
      %v6920 = vsel %vm6902, %v6916, %v6919
      %v6921 = vrot.slane %v6919, 4
      %v6922 = vrot.slane %v3631, 5
      %v6923 = vrot.slane %v3634, 6
      %v6924 = vor.u32 %v6922, %v6923
      %v6925 = vsel %vm6902, %v6921, %v6924
      %v6926 = vrot.slane %v6924, 4
      %v6927 = vrot.slane %v3640, 5
      %v6928 = vrot.slane %v3643, 6
      %v6929 = vor.u32 %v6927, %v6928
      %v6930 = vsel %vm6902, %v6926, %v6929
      %v6931 = vrot.slane %v6929, 4
      %v6932 = vrot.slane %v3649, 5
      %v6933 = vrot.slane %v3652, 6
      %v6934 = vor.u32 %v6932, %v6933
      %v6935 = vsel %vm6902, %v6931, %v6934
      %v6936 = vrot.slane %v6934, 4
      %v6937 = vrot.slane %v3658, 5
      %v6938 = vrot.slane %v3661, 6
      %v6939 = vor.u32 %v6937, %v6938
      %v6940 = vsel %vm6902, %v6936, %v6939
      %v6941 = vrot.slane %v6939, 4
      %v6942 = vrot.slane %v3667, 5
      %v6943 = vrot.slane %v3670, 6
      %v6944 = vor.u32 %v6942, %v6943
      %v6945 = vsel %vm6902, %v6941, %v6944
      %v6946 = vrot.slane %v6944, 4
      %v6947 = vrot.slane %v3676, 5
      %v6948 = vrot.slane %v3679, 6
      %v6949 = vor.u32 %v6947, %v6948
      %v6950 = vsel %vm6902, %v6946, %v6949
      %v6951 = vrot.slane %v6949, 4
      %v6952 = vrot.slane %v3685, 5
      %v6953 = vrot.slane %v3688, 6
      %v6954 = vor.u32 %v6952, %v6953
      %v6955 = vsel %vm6902, %v6951, %v6954
      %v6956 = vrot.slane %v6954, 4
      %v6957 = vrot.slane %v3694, 5
      %v6958 = vrot.slane %v3697, 6
      %v6959 = vor.u32 %v6957, %v6958
      %v6960 = vsel %vm6902, %v6956, %v6959
      %v6961 = vrot.slane %v6959, 4
      %v6962 = vrot.slane %v3703, 5
      %v6963 = vrot.slane %v3706, 6
      %v6964 = vor.u32 %v6962, %v6963
      %v6965 = vsel %vm6902, %v6961, %v6964
      %v6966 = vrot.slane %v6964, 4
      %v6967 = vrot.slane %v3712, 5
      %v6968 = vrot.slane %v3715, 6
      %v6969 = vor.u32 %v6967, %v6968
      %v6970 = vsel %vm6902, %v6966, %v6969
      %v6971 = vrot.slane %v6969, 4
      %v6972 = vrot.slane %v3721, 5
      %v6973 = vrot.slane %v3724, 6
      %v6974 = vor.u32 %v6972, %v6973
      %v6975 = vsel %vm6902, %v6971, %v6974
      %v6976 = vrot.slane %v6974, 4
      %v6977 = vrot.slane %v3730, 5
      %v6978 = vrot.slane %v3733, 6
      %v6979 = vor.u32 %v6977, %v6978
      %v6980 = vsel %vm6902, %v6976, %v6979
      %v6981 = vrot.slane %v6979, 4
      %v6982 = vrot.slane %v3739, 5
      %v6983 = vrot.slane %v3742, 6
      %v6984 = vor.u32 %v6982, %v6983
      %v6985 = vsel %vm6902, %v6981, %v6984
      %v6986 = vrot.slane %v6984, 4
      %v6987 = vrot.slane %v3748, 5
      %v6988 = vrot.slane %v3751, 6
      %v6989 = vor.u32 %v6987, %v6988
      %v6990 = vsel %vm6902, %v6986, %v6989
      %v6991 = vrot.slane %v6989, 4
      %v6992 = vrot.slane %v3757, 5
      %v6993 = vrot.slane %v3760, 6
      %v6994 = vor.u32 %v6992, %v6993
      %v6995 = vsel %vm6902, %v6991, %v6994
      %v6996 = vrot.slane %v6994, 4
      %v6997 = vrot.slane %v3766, 5
      %v6998 = vrot.slane %v3769, 6
      %v6999 = vor.u32 %v6997, %v6998
      %v7000 = vsel %vm6902, %v6996, %v6999
      %v7001 = vrot.slane %v6999, 4
      %v7002 = vrot.slane %v3775, 5
      %v7003 = vrot.slane %v3778, 6
      %v7004 = vor.u32 %v7002, %v7003
      %v7005 = vsel %vm6902, %v7001, %v7004
      %v7006 = vrot.slane %v7004, 4
      %v7007 = vrot.slane %v3784, 5
      %v7008 = vrot.slane %v3787, 6
      %v7009 = vor.u32 %v7007, %v7008
      %v7010 = vsel %vm6902, %v7006, %v7009
      %v7011 = vrot.slane %v7009, 4
      %v7012 = vrot.slane %v3793, 5
      %v7013 = vrot.slane %v3796, 6
      %v7014 = vor.u32 %v7012, %v7013
      %v7015 = vsel %vm6902, %v7011, %v7014
      %v7016 = vrot.slane %v7014, 4
      %v7017 = vrot.slane %v3802, 5
      %v7018 = vrot.slane %v3805, 6
      %v7019 = vor.u32 %v7017, %v7018
      %v7020 = vsel %vm6902, %v7016, %v7019
      %v7021 = vrot.slane %v7019, 4
      %v7022 = vrot.slane %v3811, 5
      %v7023 = vrot.slane %v3814, 6
      %v7024 = vor.u32 %v7022, %v7023
      %v7025 = vsel %vm6902, %v7021, %v7024
      %v7026 = vrot.slane %v7022, 4
      %vm7027 = vcmp.ne.s16.totalorder %v6905, 0
      %vm7028 = vcmp.ne.s16.totalorder %v6910, 0
      %vm7029 = vcmp.ne.s16.totalorder %v6915, 0
      %vm7030 = vcmp.ne.s16.totalorder %v6920, 0
      %vm7031 = vcmp.ne.s16.totalorder %v6925, 0
      %vm7032 = vcmp.ne.s16.totalorder %v6930, 0
      %vm7033 = vcmp.ne.s16.totalorder %v6935, 0
      %vm7034 = vcmp.ne.s16.totalorder %v6940, 0
      %vm7035 = vcmp.ne.s16.totalorder %v6945, 0
      %vm7036 = vcmp.ne.s16.totalorder %v6950, 0
      %vm7037 = vcmp.ne.s16.totalorder %v6955, 0
      %vm7038 = vcmp.ne.s16.totalorder %v6960, 0
      %vm7039 = vcmp.ne.s16.totalorder %v6965, 0
      %vm7040 = vcmp.ne.s16.totalorder %v6970, 0
      %vm7041 = vcmp.ne.s16.totalorder %v6975, 0
      %vm7042 = vcmp.ne.s16.totalorder %v6980, 0
      %vm7043 = vcmp.ne.s16.totalorder %v6985, 0
      %vm7044 = vcmp.ne.s16.totalorder %v6990, 0
      %vm7045 = vcmp.ne.s16.totalorder %v6995, 0
      %vm7046 = vcmp.ne.s16.totalorder %v7000, 0
      %vm7047 = vcmp.ne.s16.totalorder %v7005, 0
      %vm7048 = vcmp.ne.s16.totalorder %v7010, 0
      %vm7049 = vcmp.ne.s16.totalorder %v7015, 0
      %vm7050 = vcmp.ne.s16.totalorder %v7020, 0
      %vm7051 = vcmp.ne.s16.totalorder %v7025, 0
      %vm7052 = vcmp.ne.s16.totalorder %v7026, 0
      %v7053 = vsel %vm7027, %v6874, 0
      %v7054 = vsel %vm7028, %v6875, 0
      %v7055 = vsel %vm7029, %v6876, 0
      %v7056 = vsel %vm7030, %v6877, 0
      %v7057 = vsel %vm7031, %v6878, 0
      %v7058 = vsel %vm7032, %v6879, 0
      %v7059 = vsel %vm7033, %v6880, 0
      %v7060 = vsel %vm7034, %v6881, 0
      %v7061 = vsel %vm7035, %v6882, 0
      %v7062 = vsel %vm7036, %v6883, 0
      %v7063 = vsel %vm7037, %v6884, 0
      %v7064 = vsel %vm7038, %v6885, 0
      %v7065 = vsel %vm7039, %v6886, 0
      %v7066 = vsel %vm7040, %v6887, 0
      %v7067 = vsel %vm7041, %v6888, 0
      %v7068 = vsel %vm7042, %v6889, 0
      %v7069 = vsel %vm7043, %v6890, 0
      %v7070 = vsel %vm7044, %v6891, 0
      %v7071 = vsel %vm7045, %v6892, 0
      %v7072 = vsel %vm7046, %v6893, 0
      %v7073 = vsel %vm7047, %v6894, 0
      %v7074 = vsel %vm7048, %v6895, 0
      %v7075 = vsel %vm7049, %v6896, 0
      %v7076 = vsel %vm7050, %v6897, 0
      %v7077 = vsel %vm7051, %v6898, 0
      %v7078 = vsel %vm7052, %v6899, 0
      %s7079 = scalar_lea.vmem %s3, 384
      %v7080 = vld [vmem:[%s7079] sm:$0xf]
      %v7081 = vld [vmem:[%s7079 + $0x4] sm:$0xf]
      %v7082 = vld [vmem:[%s7079 + $0x8] sm:$0xf]
      %v7083 = vld [vmem:[%s7079 + $0xc] sm:$0xf]
      %v7084 = vld [vmem:[%s7079 + $0x10] sm:$0xf]
      %v7085 = vld [vmem:[%s7079 + $0x14] sm:$0xf]
      %v7086 = vld [vmem:[%s7079 + $0x18] sm:$0xf]
      %v7087 = vld [vmem:[%s7079 + $0x1c] sm:$0xf]
      %v7088 = vld [vmem:[%s7079 + $0x20] sm:$0xf]
      %v7089 = vld [vmem:[%s7079 + $0x24] sm:$0xf]
      %v7090 = vld [vmem:[%s7079 + $0x28] sm:$0xf]
      %v7091 = vld [vmem:[%s7079 + $0x2c] sm:$0xf]
      %v7092 = vld [vmem:[%s7079 + $0x30] sm:$0xf]
      %v7093 = vld [vmem:[%s7079 + $0x34] sm:$0xf]
      %v7094 = vld [vmem:[%s7079 + $0x38] sm:$0xf]
      %v7095 = vld [vmem:[%s7079 + $0x3c] sm:$0xf]
      %v7122 = vunpack.c.l.b16 %v7053
      %v7123 = vunpack.c.l.b16 %v7054
      %v7124 = vunpack.c.l.b16 %v7055
      %v7125 = vunpack.c.l.b16 %v7056
      %v7126 = vunpack.c.l.b16 %v7057
      %v7127 = vunpack.c.l.b16 %v7058
      %v7128 = vunpack.c.l.b16 %v7059
      %v7129 = vunpack.c.l.b16 %v7060
      %v7130 = vunpack.c.l.b16 %v7061
      %v7131 = vunpack.c.l.b16 %v7062
      %v7132 = vunpack.c.l.b16 %v7063
      %v7133 = vunpack.c.l.b16 %v7064
      %v7134 = vunpack.c.l.b16 %v7065
      %v7135 = vunpack.c.l.b16 %v7066
      %v7136 = vunpack.c.l.b16 %v7067
      %v7137 = vunpack.c.l.b16 %v7068
      %v7138 = vunpack.c.l.b16 %v7069
      %v7139 = vunpack.c.l.b16 %v7070
      %v7140 = vunpack.c.l.b16 %v7071
      %v7141 = vunpack.c.l.b16 %v7072
      %v7142 = vunpack.c.l.b16 %v7073
      %v7143 = vunpack.c.l.b16 %v7074
      %v7144 = vunpack.c.l.b16 %v7075
      %v7145 = vunpack.c.l.b16 %v7076
      %v7146 = vunpack.c.l.b16 %v7077
      %v7147 = vunpack.c.l.b16 %v7078
      %v7148 = vpack.c.b16 %v7123, %v7122
      %v7149 = vpack.c.b16 %v7125, %v7124
      %v7150 = vpack.c.b16 %v7127, %v7126
      %v7151 = vpack.c.b16 %v7129, %v7128
      %v7152 = vpack.c.b16 %v7131, %v7130
      %v7153 = vpack.c.b16 %v7133, %v7132
      %v7154 = vpack.c.b16 %v7135, %v7134
      %v7155 = vpack.c.b16 %v7137, %v7136
      %v7156 = vpack.c.b16 %v7139, %v7138
      %v7157 = vpack.c.b16 %v7141, %v7140
      %v7158 = vpack.c.b16 %v7143, %v7142
      %v7159 = vpack.c.b16 %v7145, %v7144
      %v7160 = vpack.c.b16 %v7147, %v7146
      %vm7161 = vsmask.f32 5376
      %v7163 = vshrl.u32 %v7148, 16
      %v7165 = vrot.slane %v7163, 2
      %v7166 = vshll.u32 %v7148, 16
      %v7168 = vrot.slane %v7166, 3
      %v7169 = vor.u32 %v7165, %v7168
      %v7171 = vshrl.u32 %v7149, 16
      %v7173 = vrot.slane %v7171, 2
      %v7174 = vshll.u32 %v7149, 16
      %v7176 = vrot.slane %v7174, 3
      %v7177 = vor.u32 %v7173, %v7176
      %v7178 = vsel %vm7161, %v7169, %v7177
      %v7180 = vshrl.u32 %v7150, 16
      %v7182 = vrot.slane %v7180, 2
      %v7183 = vshll.u32 %v7150, 16
      %v7185 = vrot.slane %v7183, 3
      %v7186 = vor.u32 %v7182, %v7185
      %v7187 = vsel %vm7161, %v7177, %v7186
      %v7189 = vshrl.u32 %v7151, 16
      %v7191 = vrot.slane %v7189, 2
      %v7192 = vshll.u32 %v7151, 16
      %v7194 = vrot.slane %v7192, 3
      %v7195 = vor.u32 %v7191, %v7194
      %v7196 = vsel %vm7161, %v7186, %v7195
      %v7198 = vshrl.u32 %v7152, 16
      %v7200 = vrot.slane %v7198, 2
      %v7201 = vshll.u32 %v7152, 16
      %v7203 = vrot.slane %v7201, 3
      %v7204 = vor.u32 %v7200, %v7203
      %v7205 = vsel %vm7161, %v7195, %v7204
      %v7207 = vshrl.u32 %v7153, 16
      %v7209 = vrot.slane %v7207, 2
      %v7210 = vshll.u32 %v7153, 16
      %v7212 = vrot.slane %v7210, 3
      %v7213 = vor.u32 %v7209, %v7212
      %v7214 = vsel %vm7161, %v7204, %v7213
      %v7216 = vshrl.u32 %v7154, 16
      %v7218 = vrot.slane %v7216, 2
      %v7219 = vshll.u32 %v7154, 16
      %v7221 = vrot.slane %v7219, 3
      %v7222 = vor.u32 %v7218, %v7221
      %v7223 = vsel %vm7161, %v7213, %v7222
      %v7225 = vshrl.u32 %v7155, 16
      %v7227 = vrot.slane %v7225, 2
      %v7228 = vshll.u32 %v7155, 16
      %v7230 = vrot.slane %v7228, 3
      %v7231 = vor.u32 %v7227, %v7230
      %v7232 = vsel %vm7161, %v7222, %v7231
      %v7234 = vshrl.u32 %v7156, 16
      %v7236 = vrot.slane %v7234, 2
      %v7237 = vshll.u32 %v7156, 16
      %v7239 = vrot.slane %v7237, 3
      %v7240 = vor.u32 %v7236, %v7239
      %v7241 = vsel %vm7161, %v7231, %v7240
      %v7243 = vshrl.u32 %v7157, 16
      %v7245 = vrot.slane %v7243, 2
      %v7246 = vshll.u32 %v7157, 16
      %v7248 = vrot.slane %v7246, 3
      %v7249 = vor.u32 %v7245, %v7248
      %v7250 = vsel %vm7161, %v7240, %v7249
      %v7252 = vshrl.u32 %v7158, 16
      %v7254 = vrot.slane %v7252, 2
      %v7255 = vshll.u32 %v7158, 16
      %v7257 = vrot.slane %v7255, 3
      %v7258 = vor.u32 %v7254, %v7257
      %v7259 = vsel %vm7161, %v7249, %v7258
      %v7261 = vshrl.u32 %v7159, 16
      %v7263 = vrot.slane %v7261, 2
      %v7264 = vshll.u32 %v7159, 16
      %v7266 = vrot.slane %v7264, 3
      %v7267 = vor.u32 %v7263, %v7266
      %v7268 = vsel %vm7161, %v7258, %v7267
      %v7270 = vshrl.u32 %v7160, 16
      %v7272 = vrot.slane %v7270, 2
      %v7273 = vshll.u32 %v7160, 16
      %v7275 = vrot.slane %v7273, 3
      %v7276 = vor.u32 %v7272, %v7275
      %v7277 = vsel %vm7161, %v7267, %v7276
      %v7307 = vunpack.c.l.b16 %v7080
      %v7308 = vunpack.c.l.b16 %v7081
      %v7309 = vunpack.c.l.b16 %v7082
      %v7310 = vunpack.c.l.b16 %v7083
      %v7311 = vunpack.c.l.b16 %v7084
      %v7312 = vunpack.c.l.b16 %v7085
      %v7313 = vunpack.c.l.b16 %v7086
      %v7314 = vunpack.c.l.b16 %v7087
      %v7315 = vunpack.c.l.b16 %v7088
      %v7316 = vunpack.c.l.b16 %v7089
      %v7317 = vunpack.c.l.b16 %v7090
      %v7318 = vunpack.c.l.b16 %v7091
      %v7319 = vunpack.c.l.b16 %v7092
      %v7320 = vunpack.c.l.b16 %v7093
      %v7321 = vunpack.c.l.b16 %v7094
      %v7322 = vunpack.c.l.b16 %v7095
      %v7323 = vpack.c.b16 %v7308, %v7307
      %v7324 = vpack.c.b16 %v7310, %v7309
      %v7325 = vpack.c.b16 %v7312, %v7311
      %v7326 = vpack.c.b16 %v7314, %v7313
      %v7327 = vpack.c.b16 %v7316, %v7315
      %v7328 = vpack.c.b16 %v7318, %v7317
      %v7329 = vpack.c.b16 %v7320, %v7319
      %v7330 = vpack.c.b16 %v7322, %v7321
      %7339 = vmatprep.subr.bf16.mxu0 0
      %7340 = vmatpush1.bf16.msra.mxu0 %v7330
      %7341 = vmatprep.subr.bf16.mxu0 0
      %7342 = vmatpush1.bf16.msra.mxu0 %v7329
      %7343 = vmatprep.subr.bf16.mxu0 0
      %7344 = vmatpush1.bf16.msra.mxu0 %v7328
      %7345 = vmatprep.subr.bf16.mxu0 0
      %7346 = vmatpush1.bf16.msra.mxu0 %v7327
      %7347 = vmatprep.subr.bf16.mxu0 0
      %7348 = vmatpush1.bf16.msra.mxu0 %v7326
      %7349 = vmatprep.subr.bf16.mxu0 0
      %7350 = vmatpush1.bf16.msra.mxu0 %v7325
      %7351 = vmatprep.subr.bf16.mxu0 0
      %7352 = vmatpush1.bf16.msra.mxu0 %v7324
      %7353 = vmatprep.subr.bf16.mxu0 0
      %7354 = vmatpush1.bf16.msra.mxu0 %v7323
      %7355 = vmatprep.subr.bf16.mxu0 0
      %7356 = vmatpush2.bf16.msra.mxu0 0
      %7357 = vmatprep.subr.bf16.mxu0 0
      %7358 = vmatpush2.bf16.msra.mxu0 0
      %7359 = vmatprep.subr.bf16.mxu0 0
      %7360 = vmatpush2.bf16.msra.mxu0 0
      %7361 = vmatprep.subr.bf16.mxu0 0
      %7362 = vmatpush2.bf16.msra.mxu0 0
      %7363 = vmatprep.subr.bf16.mxu0 0
      %7364 = vmatpush2.bf16.msra.mxu0 0
      %7365 = vmatprep.subr.bf16.mxu0 0
      %7366 = vmatpush2.bf16.msra.mxu0 0
      %7367 = vmatprep.subr.bf16.mxu0 0
      %7368 = vmatpush2.bf16.msra.mxu0 0
      %7369 = vmatprep.subr.bf16.mxu0 0
      %7370 = vmatpush2.bf16.msra.mxu0 0
      %7371 = vmatprep.mubr.bf16.mxu0 0
      %7372 = vmatmul.mubr.bf16.gmra.mxu0 %v7178
      %v7373 = vpop.f32.mrf.mxu0
      %v7374 = vadd.f32 0.0, %v7373
      %v7375 = vpop.f32.mrf.mxu0
      %v7376 = vpop.f32.mrf.mxu0
      %v7377 = vadd.f32 0.0, %v7376
      %v7378 = vpop.f32.mrf.mxu0
      %7379 = vmatprep.mubr.bf16.mxu0 0
      %7380 = vmatmul.mubr.bf16.gmra.mxu0 %v7187
      %v7381 = vpop.f32.mrf.mxu0
      %v7382 = vadd.f32 0.0, %v7381
      %v7383 = vpop.f32.mrf.mxu0
      %v7384 = vpop.f32.mrf.mxu0
      %v7385 = vadd.f32 0.0, %v7384
      %v7386 = vpop.f32.mrf.mxu0
      %7387 = vmatprep.mubr.bf16.mxu0 0
      %7388 = vmatmul.mubr.bf16.gmra.mxu0 %v7196
      %v7389 = vpop.f32.mrf.mxu0
      %v7390 = vadd.f32 0.0, %v7389
      %v7391 = vpop.f32.mrf.mxu0
      %v7392 = vpop.f32.mrf.mxu0
      %v7393 = vadd.f32 0.0, %v7392
      %v7394 = vpop.f32.mrf.mxu0
      %7395 = vmatprep.mubr.bf16.mxu0 0
      %7396 = vmatmul.mubr.bf16.gmra.mxu0 %v7205
      %v7397 = vpop.f32.mrf.mxu0
      %v7398 = vadd.f32 0.0, %v7397
      %v7399 = vpop.f32.mrf.mxu0
      %v7400 = vpop.f32.mrf.mxu0
      %v7401 = vadd.f32 0.0, %v7400
      %v7402 = vpop.f32.mrf.mxu0
      %7403 = vmatprep.mubr.bf16.mxu0 0
      %7404 = vmatmul.mubr.bf16.gmra.mxu0 %v7214
      %v7405 = vpop.f32.mrf.mxu0
      %v7406 = vadd.f32 0.0, %v7405
      %v7407 = vpop.f32.mrf.mxu0
      %v7408 = vpop.f32.mrf.mxu0
      %v7409 = vadd.f32 0.0, %v7408
      %v7410 = vpop.f32.mrf.mxu0
      %7411 = vmatprep.mubr.bf16.mxu0 0
      %7412 = vmatmul.mubr.bf16.gmra.mxu0 %v7223
      %v7413 = vpop.f32.mrf.mxu0
      %v7414 = vadd.f32 0.0, %v7413
      %v7415 = vpop.f32.mrf.mxu0
      %v7416 = vpop.f32.mrf.mxu0
      %v7417 = vadd.f32 0.0, %v7416
      %v7418 = vpop.f32.mrf.mxu0
      %7419 = vmatprep.mubr.bf16.mxu0 0
      %7420 = vmatmul.mubr.bf16.gmra.mxu0 %v7232
      %v7421 = vpop.f32.mrf.mxu0
      %v7422 = vadd.f32 0.0, %v7421
      %v7423 = vpop.f32.mrf.mxu0
      %v7424 = vpop.f32.mrf.mxu0
      %v7425 = vadd.f32 0.0, %v7424
      %v7426 = vpop.f32.mrf.mxu0
      %7427 = vmatprep.mubr.bf16.mxu0 0
      %7428 = vmatmul.mubr.bf16.gmra.mxu0 %v7241
      %v7429 = vpop.f32.mrf.mxu0
      %v7430 = vadd.f32 0.0, %v7429
      %v7431 = vpop.f32.mrf.mxu0
      %v7432 = vpop.f32.mrf.mxu0
      %v7433 = vadd.f32 0.0, %v7432
      %v7434 = vpop.f32.mrf.mxu0
      %7435 = vmatprep.mubr.bf16.mxu0 0
      %7436 = vmatmul.mubr.bf16.gmra.mxu0 %v7250
      %v7437 = vpop.f32.mrf.mxu0
      %v7438 = vadd.f32 0.0, %v7437
      %v7439 = vpop.f32.mrf.mxu0
      %v7440 = vpop.f32.mrf.mxu0
      %v7441 = vadd.f32 0.0, %v7440
      %v7442 = vpop.f32.mrf.mxu0
      %7443 = vmatprep.mubr.bf16.mxu0 0
      %7444 = vmatmul.mubr.bf16.gmra.mxu0 %v7259
      %v7445 = vpop.f32.mrf.mxu0
      %v7446 = vadd.f32 0.0, %v7445
      %v7447 = vpop.f32.mrf.mxu0
      %v7448 = vpop.f32.mrf.mxu0
      %v7449 = vadd.f32 0.0, %v7448
      %v7450 = vpop.f32.mrf.mxu0
      %7451 = vmatprep.mubr.bf16.mxu0 0
      %7452 = vmatmul.mubr.bf16.gmra.mxu0 %v7268
      %v7453 = vpop.f32.mrf.mxu0
      %v7454 = vadd.f32 0.0, %v7453
      %v7455 = vpop.f32.mrf.mxu0
      %v7456 = vpop.f32.mrf.mxu0
      %v7457 = vadd.f32 0.0, %v7456
      %v7458 = vpop.f32.mrf.mxu0
      %7459 = vmatprep.mubr.bf16.mxu0 0
      %7460 = vmatmul.mubr.bf16.gmra.mxu0 %v7277
      %v7461 = vpop.f32.mrf.mxu0
      %v7462 = vadd.f32 0.0, %v7461
      %v7463 = vpop.f32.mrf.mxu0
      %v7464 = vpop.f32.mrf.mxu0
      %v7465 = vadd.f32 0.0, %v7464
      %v7466 = vpop.f32.mrf.mxu0
      %7467 = vmatprep.mubr.bf16.mxu0 0
      %7468 = vmatmul.mubr.bf16.gmra.mxu0 %v7276
      %v7469 = vpop.f32.mrf.mxu0
      %v7470 = vadd.f32 0.0, %v7469
      %v7471 = vpop.f32.mrf.mxu0
      %v7472 = vpop.f32.mrf.mxu0
      %v7473 = vpop.f32.mrf.mxu0
      %7474 = vdwg.mxu0
      %v7475 = vadd.f32 %v6849, %v7374
      %v7476 = vadd.f32 %v6850, %v7377
      %v7477 = vadd.f32 %v6851, %v7382
      %v7478 = vadd.f32 %v6852, %v7385
      %v7479 = vadd.f32 %v6853, %v7390
      %v7480 = vadd.f32 %v6854, %v7393
      %v7481 = vadd.f32 %v6855, %v7398
      %v7482 = vadd.f32 %v6856, %v7401
      %v7483 = vadd.f32 %v6857, %v7406
      %v7484 = vadd.f32 %v6858, %v7409
      %v7485 = vadd.f32 %v6859, %v7414
      %v7486 = vadd.f32 %v6860, %v7417
      %v7487 = vadd.f32 %v6861, %v7422
      %v7488 = vadd.f32 %v6862, %v7425
      %v7489 = vadd.f32 %v6863, %v7430
      %v7490 = vadd.f32 %v6864, %v7433
      %v7491 = vadd.f32 %v6865, %v7438
      %v7492 = vadd.f32 %v6866, %v7441
      %v7493 = vadd.f32 %v6867, %v7446
      %v7494 = vadd.f32 %v6868, %v7449
      %v7495 = vadd.f32 %v6869, %v7454
      %v7496 = vadd.f32 %v6870, %v7457
      %v7497 = vadd.f32 %v6871, %v7462
      %v7498 = vadd.f32 %v6872, %v7465
      %v7499 = vadd.f32 %v6873, %v7470
      %v7500 = vld [vmem:[#allocation2 + $0xc] sm:$0x8]
      %s7501 = scalar_lea.vmem %s3, 448
      %v7502 = vld [vmem:[%s7501] sm:$0xf]
      %v7503 = vld [vmem:[%s7501 + $0x4] sm:$0xf]
      %v7504 = vld [vmem:[%s7501 + $0x8] sm:$0xf]
      %v7505 = vld [vmem:[%s7501 + $0xc] sm:$0xf]
      %v7506 = vld [vmem:[%s7501 + $0x10] sm:$0xf]
      %v7507 = vld [vmem:[%s7501 + $0x14] sm:$0xf]
      %v7508 = vld [vmem:[%s7501 + $0x18] sm:$0xf]
      %v7509 = vld [vmem:[%s7501 + $0x1c] sm:$0xf]
      %v7510 = vld [vmem:[%s7501 + $0x20] sm:$0xf]
      %v7511 = vld [vmem:[%s7501 + $0x24] sm:$0xf]
      %v7512 = vld [vmem:[%s7501 + $0x28] sm:$0xf]
      %v7513 = vld [vmem:[%s7501 + $0x2c] sm:$0xf]
      %v7514 = vld [vmem:[%s7501 + $0x30] sm:$0xf]
      %v7515 = vld [vmem:[%s7501 + $0x34] sm:$0xf]
      %v7516 = vld [vmem:[%s7501 + $0x38] sm:$0xf]
      %v7517 = vld [vmem:[%s7501 + $0x3c] sm:$0xf]
      %v7544 = vunpack.c.l.b16 %v7500
      %v7545 = vunpack.c.l.b16 %v6875
      %v7546 = vunpack.c.l.b16 %v6876
      %v7547 = vunpack.c.l.b16 %v6877
      %v7548 = vunpack.c.l.b16 %v6878
      %v7549 = vunpack.c.l.b16 %v6879
      %v7550 = vunpack.c.l.b16 %v6880
      %v7551 = vunpack.c.l.b16 %v6881
      %v7552 = vunpack.c.l.b16 %v6882
      %v7553 = vunpack.c.l.b16 %v6883
      %v7554 = vunpack.c.l.b16 %v6884
      %v7555 = vunpack.c.l.b16 %v6885
      %v7556 = vunpack.c.l.b16 %v6886
      %v7557 = vunpack.c.l.b16 %v6887
      %v7558 = vunpack.c.l.b16 %v6888
      %v7559 = vunpack.c.l.b16 %v6889
      %v7560 = vunpack.c.l.b16 %v6890
      %v7561 = vunpack.c.l.b16 %v6891
      %v7562 = vunpack.c.l.b16 %v6892
      %v7563 = vunpack.c.l.b16 %v6893
      %v7564 = vunpack.c.l.b16 %v6894
      %v7565 = vunpack.c.l.b16 %v6895
      %v7566 = vunpack.c.l.b16 %v6896
      %v7567 = vunpack.c.l.b16 %v6897
      %v7568 = vunpack.c.l.b16 %v6898
      %v7569 = vunpack.c.l.b16 %v6899
      %v7570 = vpack.c.b16 %v7545, %v7544
      %v7571 = vpack.c.b16 %v7547, %v7546
      %v7572 = vpack.c.b16 %v7549, %v7548
      %v7573 = vpack.c.b16 %v7551, %v7550
      %v7574 = vpack.c.b16 %v7553, %v7552
      %v7575 = vpack.c.b16 %v7555, %v7554
      %v7576 = vpack.c.b16 %v7557, %v7556
      %v7577 = vpack.c.b16 %v7559, %v7558
      %v7578 = vpack.c.b16 %v7561, %v7560
      %v7579 = vpack.c.b16 %v7563, %v7562
      %v7580 = vpack.c.b16 %v7565, %v7564
      %v7581 = vpack.c.b16 %v7567, %v7566
      %v7582 = vpack.c.b16 %v7569, %v7568
      %vm7583 = vcmask 1044480
      %v7584 = vrot.slane %v7570, 3
      %v7585 = vrot.slane %v7571, 3
      %v7586 = vsel %vm7583, %v7584, %v7585
      %v7587 = vrot.slane %v7572, 3
      %v7588 = vsel %vm7583, %v7585, %v7587
      %v7589 = vrot.slane %v7573, 3
      %v7590 = vsel %vm7583, %v7587, %v7589
      %v7591 = vrot.slane %v7574, 3
      %v7592 = vsel %vm7583, %v7589, %v7591
      %v7593 = vrot.slane %v7575, 3
      %v7594 = vsel %vm7583, %v7591, %v7593
      %v7595 = vrot.slane %v7576, 3
      %v7596 = vsel %vm7583, %v7593, %v7595
      %v7597 = vrot.slane %v7577, 3
      %v7598 = vsel %vm7583, %v7595, %v7597
      %v7599 = vrot.slane %v7578, 3
      %v7600 = vsel %vm7583, %v7597, %v7599
      %v7601 = vrot.slane %v7579, 3
      %v7602 = vsel %vm7583, %v7599, %v7601
      %v7603 = vrot.slane %v7580, 3
      %v7604 = vsel %vm7583, %v7601, %v7603
      %v7605 = vrot.slane %v7581, 3
      %v7606 = vsel %vm7583, %v7603, %v7605
      %v7607 = vrot.slane %v7582, 3
      %v7608 = vsel %vm7583, %v7605, %v7607
      %v7638 = vunpack.c.l.b16 %v7502
      %v7639 = vunpack.c.l.b16 %v7503
      %v7640 = vunpack.c.l.b16 %v7504
      %v7641 = vunpack.c.l.b16 %v7505
      %v7642 = vunpack.c.l.b16 %v7506
      %v7643 = vunpack.c.l.b16 %v7507
      %v7644 = vunpack.c.l.b16 %v7508
      %v7645 = vunpack.c.l.b16 %v7509
      %v7646 = vunpack.c.l.b16 %v7510
      %v7647 = vunpack.c.l.b16 %v7511
      %v7648 = vunpack.c.l.b16 %v7512
      %v7649 = vunpack.c.l.b16 %v7513
      %v7650 = vunpack.c.l.b16 %v7514
      %v7651 = vunpack.c.l.b16 %v7515
      %v7652 = vunpack.c.l.b16 %v7516
      %v7653 = vunpack.c.l.b16 %v7517
      %v7654 = vpack.c.b16 %v7639, %v7638
      %v7655 = vpack.c.b16 %v7641, %v7640
      %v7656 = vpack.c.b16 %v7643, %v7642
      %v7657 = vpack.c.b16 %v7645, %v7644
      %v7658 = vpack.c.b16 %v7647, %v7646
      %v7659 = vpack.c.b16 %v7649, %v7648
      %v7660 = vpack.c.b16 %v7651, %v7650
      %v7661 = vpack.c.b16 %v7653, %v7652
      %7670 = vmatprep.subr.bf16.mxu0 0
      %7671 = vmatpush1.bf16.msra.mxu0 %v7661
      %7672 = vmatprep.subr.bf16.mxu0 0
      %7673 = vmatpush1.bf16.msra.mxu0 %v7660
      %7674 = vmatprep.subr.bf16.mxu0 0
      %7675 = vmatpush1.bf16.msra.mxu0 %v7659
      %7676 = vmatprep.subr.bf16.mxu0 0
      %7677 = vmatpush1.bf16.msra.mxu0 %v7658
      %7678 = vmatprep.subr.bf16.mxu0 0
      %7679 = vmatpush1.bf16.msra.mxu0 %v7657
      %7680 = vmatprep.subr.bf16.mxu0 0
      %7681 = vmatpush1.bf16.msra.mxu0 %v7656
      %7682 = vmatprep.subr.bf16.mxu0 0
      %7683 = vmatpush1.bf16.msra.mxu0 %v7655
      %7684 = vmatprep.subr.bf16.mxu0 0
      %7685 = vmatpush1.bf16.msra.mxu0 %v7654
      %7686 = vmatprep.subr.bf16.mxu0 0
      %7687 = vmatpush2.bf16.msra.mxu0 0
      %7688 = vmatprep.subr.bf16.mxu0 0
      %7689 = vmatpush2.bf16.msra.mxu0 0
      %7690 = vmatprep.subr.bf16.mxu0 0
      %7691 = vmatpush2.bf16.msra.mxu0 0
      %7692 = vmatprep.subr.bf16.mxu0 0
      %7693 = vmatpush2.bf16.msra.mxu0 0
      %7694 = vmatprep.subr.bf16.mxu0 0
      %7695 = vmatpush2.bf16.msra.mxu0 0
      %7696 = vmatprep.subr.bf16.mxu0 0
      %7697 = vmatpush2.bf16.msra.mxu0 0
      %7698 = vmatprep.subr.bf16.mxu0 0
      %7699 = vmatpush2.bf16.msra.mxu0 0
      %7700 = vmatprep.subr.bf16.mxu0 0
      %7701 = vmatpush2.bf16.msra.mxu0 0
      %7702 = vmatprep.mubr.bf16.mxu0 0
      %7703 = vmatmul.mubr.bf16.gmra.mxu0 %v7586
      %v7704 = vpop.f32.mrf.mxu0
      %v7705 = vadd.f32 0.0, %v7704
      %v7706 = vpop.f32.mrf.mxu0
      %v7707 = vpop.f32.mrf.mxu0
      %v7708 = vadd.f32 0.0, %v7707
      %v7709 = vpop.f32.mrf.mxu0
      %7710 = vmatprep.mubr.bf16.mxu0 0
      %7711 = vmatmul.mubr.bf16.gmra.mxu0 %v7588
      %v7712 = vpop.f32.mrf.mxu0
      %v7713 = vadd.f32 0.0, %v7712
      %v7714 = vpop.f32.mrf.mxu0
      %v7715 = vpop.f32.mrf.mxu0
      %v7716 = vadd.f32 0.0, %v7715
      %v7717 = vpop.f32.mrf.mxu0
      %7718 = vmatprep.mubr.bf16.mxu0 0
      %7719 = vmatmul.mubr.bf16.gmra.mxu0 %v7590
      %v7720 = vpop.f32.mrf.mxu0
      %v7721 = vadd.f32 0.0, %v7720
      %v7722 = vpop.f32.mrf.mxu0
      %v7723 = vpop.f32.mrf.mxu0
      %v7724 = vadd.f32 0.0, %v7723
      %v7725 = vpop.f32.mrf.mxu0
      %7726 = vmatprep.mubr.bf16.mxu0 0
      %7727 = vmatmul.mubr.bf16.gmra.mxu0 %v7592
      %v7728 = vpop.f32.mrf.mxu0
      %v7729 = vadd.f32 0.0, %v7728
      %v7730 = vpop.f32.mrf.mxu0
      %v7731 = vpop.f32.mrf.mxu0
      %v7732 = vadd.f32 0.0, %v7731
      %v7733 = vpop.f32.mrf.mxu0
      %7734 = vmatprep.mubr.bf16.mxu0 0
      %7735 = vmatmul.mubr.bf16.gmra.mxu0 %v7594
      %v7736 = vpop.f32.mrf.mxu0
      %v7737 = vadd.f32 0.0, %v7736
      %v7738 = vpop.f32.mrf.mxu0
      %v7739 = vpop.f32.mrf.mxu0
      %v7740 = vadd.f32 0.0, %v7739
      %v7741 = vpop.f32.mrf.mxu0
      %7742 = vmatprep.mubr.bf16.mxu0 0
      %7743 = vmatmul.mubr.bf16.gmra.mxu0 %v7596
      %v7744 = vpop.f32.mrf.mxu0
      %v7745 = vadd.f32 0.0, %v7744
      %v7746 = vpop.f32.mrf.mxu0
      %v7747 = vpop.f32.mrf.mxu0
      %v7748 = vadd.f32 0.0, %v7747
      %v7749 = vpop.f32.mrf.mxu0
      %7750 = vmatprep.mubr.bf16.mxu0 0
      %7751 = vmatmul.mubr.bf16.gmra.mxu0 %v7598
      %v7752 = vpop.f32.mrf.mxu0
      %v7753 = vadd.f32 0.0, %v7752
      %v7754 = vpop.f32.mrf.mxu0
      %v7755 = vpop.f32.mrf.mxu0
      %v7756 = vadd.f32 0.0, %v7755
      %v7757 = vpop.f32.mrf.mxu0
      %7758 = vmatprep.mubr.bf16.mxu0 0
      %7759 = vmatmul.mubr.bf16.gmra.mxu0 %v7600
      %v7760 = vpop.f32.mrf.mxu0
      %v7761 = vadd.f32 0.0, %v7760
      %v7762 = vpop.f32.mrf.mxu0
      %v7763 = vpop.f32.mrf.mxu0
      %v7764 = vadd.f32 0.0, %v7763
      %v7765 = vpop.f32.mrf.mxu0
      %7766 = vmatprep.mubr.bf16.mxu0 0
      %7767 = vmatmul.mubr.bf16.gmra.mxu0 %v7602
      %v7768 = vpop.f32.mrf.mxu0
      %v7769 = vadd.f32 0.0, %v7768
      %v7770 = vpop.f32.mrf.mxu0
      %v7771 = vpop.f32.mrf.mxu0
      %v7772 = vadd.f32 0.0, %v7771
      %v7773 = vpop.f32.mrf.mxu0
      %7774 = vmatprep.mubr.bf16.mxu0 0
      %7775 = vmatmul.mubr.bf16.gmra.mxu0 %v7604
      %v7776 = vpop.f32.mrf.mxu0
      %v7777 = vadd.f32 0.0, %v7776
      %v7778 = vpop.f32.mrf.mxu0
      %v7779 = vpop.f32.mrf.mxu0
      %v7780 = vadd.f32 0.0, %v7779
      %v7781 = vpop.f32.mrf.mxu0
      %7782 = vmatprep.mubr.bf16.mxu0 0
      %7783 = vmatmul.mubr.bf16.gmra.mxu0 %v7606
      %v7784 = vpop.f32.mrf.mxu0
      %v7785 = vadd.f32 0.0, %v7784
      %v7786 = vpop.f32.mrf.mxu0
      %v7787 = vpop.f32.mrf.mxu0
      %v7788 = vadd.f32 0.0, %v7787
      %v7789 = vpop.f32.mrf.mxu0
      %7790 = vmatprep.mubr.bf16.mxu0 0
      %7791 = vmatmul.mubr.bf16.gmra.mxu0 %v7608
      %v7792 = vpop.f32.mrf.mxu0
      %v7793 = vadd.f32 0.0, %v7792
      %v7794 = vpop.f32.mrf.mxu0
      %v7795 = vpop.f32.mrf.mxu0
      %v7796 = vadd.f32 0.0, %v7795
      %v7797 = vpop.f32.mrf.mxu0
      %7798 = vmatprep.mubr.bf16.mxu0 0
      %7799 = vmatmul.mubr.bf16.gmra.mxu0 %v7607
      %v7800 = vpop.f32.mrf.mxu0
      %v7801 = vadd.f32 0.0, %v7800
      %v7802 = vpop.f32.mrf.mxu0
      %v7803 = vpop.f32.mrf.mxu0
      %v7804 = vpop.f32.mrf.mxu0
      %7805 = vdwg.mxu0
      %v7806 = vadd.f32 %v7475, %v7705
      %v7807 = vadd.f32 %v7476, %v7708
      %v7808 = vadd.f32 %v7477, %v7713
      %v7809 = vadd.f32 %v7478, %v7716
      %v7810 = vadd.f32 %v7479, %v7721
      %v7811 = vadd.f32 %v7480, %v7724
      %v7812 = vadd.f32 %v7481, %v7729
      %v7813 = vadd.f32 %v7482, %v7732
      %v7814 = vadd.f32 %v7483, %v7737
      %v7815 = vadd.f32 %v7484, %v7740
      %v7816 = vadd.f32 %v7485, %v7745
      %v7817 = vadd.f32 %v7486, %v7748
      %v7818 = vadd.f32 %v7487, %v7753
      %v7819 = vadd.f32 %v7488, %v7756
      %v7820 = vadd.f32 %v7489, %v7761
      %v7821 = vadd.f32 %v7490, %v7764
      %v7822 = vadd.f32 %v7491, %v7769
      %v7823 = vadd.f32 %v7492, %v7772
      %v7824 = vadd.f32 %v7493, %v7777
      %v7825 = vadd.f32 %v7494, %v7780
      %v7826 = vadd.f32 %v7495, %v7785
      %v7827 = vadd.f32 %v7496, %v7788
      %v7828 = vadd.f32 %v7497, %v7793
      %v7829 = vadd.f32 %v7498, %v7796
      %v7830 = vadd.f32 %v7499, %v7801
      %v7831 = vld [vmem:[#allocation2 + $0x70] sm:$0x3]
      %v7832 = vrot.slane %v4682, 5
      %v7833 = vrot.slane %v4679, 4
      %v7834 = vor.u32 %v7833, %v7832
      %v7835 = vrot.slane %v7834, 4
      %v7836 = vrot.slane %v4691, 5
      %v7837 = vsel %vm2202, %v7835, %v7836
      %v7838 = vrot.slane %v4688, 4
      %v7839 = vor.u32 %v7838, %v7836
      %v7840 = vrot.slane %v7839, 4
      %v7841 = vrot.slane %v4701, 5
      %v7842 = vsel %vm2202, %v7840, %v7841
      %v7843 = vrot.slane %v4698, 4
      %v7844 = vor.u32 %v7843, %v7841
      %v7845 = vrot.slane %v7844, 4
      %v7846 = vrot.slane %v4711, 5
      %v7847 = vsel %vm2202, %v7845, %v7846
      %v7848 = vrot.slane %v4708, 4
      %v7849 = vor.u32 %v7848, %v7846
      %v7850 = vrot.slane %v7849, 4
      %v7851 = vrot.slane %v4721, 5
      %v7852 = vsel %vm2202, %v7850, %v7851
      %v7853 = vrot.slane %v4718, 4
      %v7854 = vor.u32 %v7853, %v7851
      %v7855 = vrot.slane %v7854, 4
      %v7856 = vrot.slane %v4731, 5
      %v7857 = vsel %vm2202, %v7855, %v7856
      %v7858 = vrot.slane %v4728, 4
      %v7859 = vor.u32 %v7858, %v7856
      %v7860 = vrot.slane %v7859, 4
      %v7861 = vrot.slane %v4741, 5
      %v7862 = vsel %vm2202, %v7860, %v7861
      %v7863 = vrot.slane %v4738, 4
      %v7864 = vor.u32 %v7863, %v7861
      %v7865 = vrot.slane %v7864, 4
      %v7866 = vrot.slane %v4751, 5
      %v7867 = vsel %vm2202, %v7865, %v7866
      %v7868 = vrot.slane %v4748, 4
      %v7869 = vor.u32 %v7868, %v7866
      %v7870 = vrot.slane %v7869, 4
      %v7871 = vrot.slane %v4761, 5
      %v7872 = vsel %vm2202, %v7870, %v7871
      %v7873 = vrot.slane %v4758, 4
      %v7874 = vor.u32 %v7873, %v7871
      %v7875 = vrot.slane %v7874, 4
      %v7876 = vrot.slane %v4771, 5
      %v7877 = vsel %vm2202, %v7875, %v7876
      %v7878 = vrot.slane %v4768, 4
      %v7879 = vor.u32 %v7878, %v7876
      %v7880 = vrot.slane %v7879, 4
      %v7881 = vrot.slane %v4781, 5
      %v7882 = vsel %vm2202, %v7880, %v7881
      %v7883 = vrot.slane %v4778, 4
      %v7884 = vor.u32 %v7883, %v7881
      %v7885 = vrot.slane %v7884, 4
      %v7886 = vrot.slane %v4791, 5
      %v7887 = vsel %vm2202, %v7885, %v7886
      %v7888 = vrot.slane %v4788, 4
      %v7889 = vor.u32 %v7888, %v7886
      %v7890 = vrot.slane %v7889, 4
      %v7891 = vrot.slane %v4801, 5
      %v7892 = vsel %vm2202, %v7890, %v7891
      %v7893 = vrot.slane %v4798, 4
      %v7894 = vor.u32 %v7893, %v7891
      %v7895 = vrot.slane %v7894, 4
      %v7896 = vrot.slane %v4811, 5
      %v7897 = vsel %vm2202, %v7895, %v7896
      %v7898 = vrot.slane %v4808, 4
      %v7899 = vor.u32 %v7898, %v7896
      %v7900 = vrot.slane %v7899, 4
      %v7901 = vrot.slane %v4821, 5
      %v7902 = vsel %vm2202, %v7900, %v7901
      %v7903 = vrot.slane %v4818, 4
      %v7904 = vor.u32 %v7903, %v7901
      %v7905 = vrot.slane %v7904, 4
      %v7906 = vrot.slane %v4831, 5
      %v7907 = vsel %vm2202, %v7905, %v7906
      %v7908 = vrot.slane %v4828, 4
      %v7909 = vor.u32 %v7908, %v7906
      %v7910 = vrot.slane %v7909, 4
      %v7911 = vrot.slane %v4841, 5
      %v7912 = vsel %vm2202, %v7910, %v7911
      %v7913 = vrot.slane %v4838, 4
      %v7914 = vor.u32 %v7913, %v7911
      %v7915 = vrot.slane %v7914, 4
      %v7916 = vrot.slane %v4851, 5
      %v7917 = vsel %vm2202, %v7915, %v7916
      %v7918 = vrot.slane %v4848, 4
      %v7919 = vor.u32 %v7918, %v7916
      %v7920 = vrot.slane %v7919, 4
      %v7921 = vrot.slane %v4861, 5
      %v7922 = vsel %vm2202, %v7920, %v7921
      %v7923 = vrot.slane %v4858, 4
      %v7924 = vor.u32 %v7923, %v7921
      %v7925 = vrot.slane %v7924, 4
      %v7926 = vrot.slane %v4871, 5
      %v7927 = vsel %vm2202, %v7925, %v7926
      %v7928 = vrot.slane %v4868, 4
      %v7929 = vor.u32 %v7928, %v7926
      %v7930 = vrot.slane %v7929, 4
      %v7931 = vrot.slane %v4881, 5
      %v7932 = vsel %vm2202, %v7930, %v7931
      %v7933 = vrot.slane %v4878, 4
      %v7934 = vor.u32 %v7933, %v7931
      %v7935 = vrot.slane %v7934, 4
      %v7936 = vrot.slane %v4891, 5
      %v7937 = vsel %vm2202, %v7935, %v7936
      %v7938 = vrot.slane %v4888, 4
      %v7939 = vor.u32 %v7938, %v7936
      %v7940 = vrot.slane %v7939, 4
      %v7941 = vrot.slane %v4901, 5
      %v7942 = vsel %vm2202, %v7940, %v7941
      %v7943 = vrot.slane %v4898, 4
      %v7944 = vor.u32 %v7943, %v7941
      %v7945 = vrot.slane %v7944, 4
      %v7946 = vrot.slane %v4911, 5
      %v7947 = vsel %vm2202, %v7945, %v7946
      %v7948 = vrot.slane %v4908, 4
      %v7949 = vor.u32 %v7948, %v7946
      %v7950 = vrot.slane %v7949, 4
      %v7951 = vrot.slane %v4921, 5
      %v7952 = vsel %vm2202, %v7950, %v7951
      %v7953 = vrot.slane %v4918, 4
      %v7954 = vor.u32 %v7953, %v7951
      %v7955 = vrot.slane %v7954, 4
      %vm7956 = vcmp.ne.s16.totalorder %v7832, 0
      %vm7957 = vcmp.ne.s16.totalorder %v7837, 0
      %vm7958 = vcmp.ne.s16.totalorder %v7842, 0
      %vm7959 = vcmp.ne.s16.totalorder %v7847, 0
      %vm7960 = vcmp.ne.s16.totalorder %v7852, 0
      %vm7961 = vcmp.ne.s16.totalorder %v7857, 0
      %vm7962 = vcmp.ne.s16.totalorder %v7862, 0
      %vm7963 = vcmp.ne.s16.totalorder %v7867, 0
      %vm7964 = vcmp.ne.s16.totalorder %v7872, 0
      %vm7965 = vcmp.ne.s16.totalorder %v7877, 0
      %vm7966 = vcmp.ne.s16.totalorder %v7882, 0
      %vm7967 = vcmp.ne.s16.totalorder %v7887, 0
      %vm7968 = vcmp.ne.s16.totalorder %v7892, 0
      %vm7969 = vcmp.ne.s16.totalorder %v7897, 0
      %vm7970 = vcmp.ne.s16.totalorder %v7902, 0
      %vm7971 = vcmp.ne.s16.totalorder %v7907, 0
      %vm7972 = vcmp.ne.s16.totalorder %v7912, 0
      %vm7973 = vcmp.ne.s16.totalorder %v7917, 0
      %vm7974 = vcmp.ne.s16.totalorder %v7922, 0
      %vm7975 = vcmp.ne.s16.totalorder %v7927, 0
      %vm7976 = vcmp.ne.s16.totalorder %v7932, 0
      %vm7977 = vcmp.ne.s16.totalorder %v7937, 0
      %vm7978 = vcmp.ne.s16.totalorder %v7942, 0
      %vm7979 = vcmp.ne.s16.totalorder %v7947, 0
      %vm7980 = vcmp.ne.s16.totalorder %v7952, 0
      %vm7981 = vcmp.ne.s16.totalorder %v7955, 0
      %v7982 = vsel %vm7956, %v7500, 0
      %v7983 = vsel %vm7957, %v6875, 0
      %v7984 = vsel %vm7958, %v6876, 0
      %v7985 = vsel %vm7959, %v6877, 0
      %v7986 = vsel %vm7960, %v6878, 0
      %v7987 = vsel %vm7961, %v6879, 0
      %v7988 = vsel %vm7962, %v6880, 0
      %v7989 = vsel %vm7963, %v6881, 0
      %v7990 = vsel %vm7964, %v6882, 0
      %v7991 = vsel %vm7965, %v6883, 0
      %v7992 = vsel %vm7966, %v6884, 0
      %v7993 = vsel %vm7967, %v6885, 0
      %v7994 = vsel %vm7968, %v6886, 0
      %v7995 = vsel %vm7969, %v6887, 0
      %v7996 = vsel %vm7970, %v6888, 0
      %v7997 = vsel %vm7971, %v6889, 0
      %v7998 = vsel %vm7972, %v6890, 0
      %v7999 = vsel %vm7973, %v6891, 0
      %v8000 = vsel %vm7974, %v6892, 0
      %v8001 = vsel %vm7975, %v6893, 0
      %v8002 = vsel %vm7976, %v6894, 0
      %v8003 = vsel %vm7977, %v6895, 0
      %v8004 = vsel %vm7978, %v6896, 0
      %v8005 = vsel %vm7979, %v6897, 0
      %v8006 = vsel %vm7980, %v6898, 0
      %v8007 = vsel %vm7981, %v7831, 0
      %s8008 = scalar_lea.vmem %s3, 512
      %v8009 = vld [vmem:[%s8008] sm:$0xf]
      %v8010 = vld [vmem:[%s8008 + $0x4] sm:$0xf]
      %v8011 = vld [vmem:[%s8008 + $0x8] sm:$0xf]
      %v8012 = vld [vmem:[%s8008 + $0xc] sm:$0xf]
      %v8013 = vld [vmem:[%s8008 + $0x10] sm:$0xf]
      %v8014 = vld [vmem:[%s8008 + $0x14] sm:$0xf]
      %v8015 = vld [vmem:[%s8008 + $0x18] sm:$0xf]
      %v8016 = vld [vmem:[%s8008 + $0x1c] sm:$0xf]
      %v8017 = vld [vmem:[%s8008 + $0x20] sm:$0xf]
      %v8018 = vld [vmem:[%s8008 + $0x24] sm:$0xf]
      %v8019 = vld [vmem:[%s8008 + $0x28] sm:$0xf]
      %v8020 = vld [vmem:[%s8008 + $0x2c] sm:$0xf]
      %v8021 = vld [vmem:[%s8008 + $0x30] sm:$0xf]
      %v8022 = vld [vmem:[%s8008 + $0x34] sm:$0xf]
      %v8023 = vld [vmem:[%s8008 + $0x38] sm:$0xf]
      %v8024 = vld [vmem:[%s8008 + $0x3c] sm:$0xf]
      %v8051 = vunpack.c.l.b16 %v7982
      %v8052 = vunpack.c.l.b16 %v7983
      %v8053 = vunpack.c.l.b16 %v7984
      %v8054 = vunpack.c.l.b16 %v7985
      %v8055 = vunpack.c.l.b16 %v7986
      %v8056 = vunpack.c.l.b16 %v7987
      %v8057 = vunpack.c.l.b16 %v7988
      %v8058 = vunpack.c.l.b16 %v7989
      %v8059 = vunpack.c.l.b16 %v7990
      %v8060 = vunpack.c.l.b16 %v7991
      %v8061 = vunpack.c.l.b16 %v7992
      %v8062 = vunpack.c.l.b16 %v7993
      %v8063 = vunpack.c.l.b16 %v7994
      %v8064 = vunpack.c.l.b16 %v7995
      %v8065 = vunpack.c.l.b16 %v7996
      %v8066 = vunpack.c.l.b16 %v7997
      %v8067 = vunpack.c.l.b16 %v7998
      %v8068 = vunpack.c.l.b16 %v7999
      %v8069 = vunpack.c.l.b16 %v8000
      %v8070 = vunpack.c.l.b16 %v8001
      %v8071 = vunpack.c.l.b16 %v8002
      %v8072 = vunpack.c.l.b16 %v8003
      %v8073 = vunpack.c.l.b16 %v8004
      %v8074 = vunpack.c.l.b16 %v8005
      %v8075 = vunpack.c.l.b16 %v8006
      %v8076 = vunpack.c.l.b16 %v8007
      %v8077 = vpack.c.b16 %v8052, %v8051
      %v8078 = vpack.c.b16 %v8054, %v8053
      %v8079 = vpack.c.b16 %v8056, %v8055
      %v8080 = vpack.c.b16 %v8058, %v8057
      %v8081 = vpack.c.b16 %v8060, %v8059
      %v8082 = vpack.c.b16 %v8062, %v8061
      %v8083 = vpack.c.b16 %v8064, %v8063
      %v8084 = vpack.c.b16 %v8066, %v8065
      %v8085 = vpack.c.b16 %v8068, %v8067
      %v8086 = vpack.c.b16 %v8070, %v8069
      %v8087 = vpack.c.b16 %v8072, %v8071
      %v8088 = vpack.c.b16 %v8074, %v8073
      %v8089 = vpack.c.b16 %v8076, %v8075
      %v8091 = vshrl.u32 %v8077, 16
      %v8093 = vrot.slane %v8091, 3
      %v8094 = vshll.u32 %v8077, 16
      %v8096 = vrot.slane %v8094, 4
      %v8097 = vor.u32 %v8093, %v8096
      %v8099 = vshrl.u32 %v8078, 16
      %v8101 = vrot.slane %v8099, 3
      %v8102 = vshll.u32 %v8078, 16
      %v8104 = vrot.slane %v8102, 4
      %v8105 = vor.u32 %v8101, %v8104
      %v8106 = vsel %vm5679, %v8097, %v8105
      %v8108 = vshrl.u32 %v8079, 16
      %v8110 = vrot.slane %v8108, 3
      %v8111 = vshll.u32 %v8079, 16
      %v8113 = vrot.slane %v8111, 4
      %v8114 = vor.u32 %v8110, %v8113
      %v8115 = vsel %vm5679, %v8105, %v8114
      %v8117 = vshrl.u32 %v8080, 16
      %v8119 = vrot.slane %v8117, 3
      %v8120 = vshll.u32 %v8080, 16
      %v8122 = vrot.slane %v8120, 4
      %v8123 = vor.u32 %v8119, %v8122
      %v8124 = vsel %vm5679, %v8114, %v8123
      %v8126 = vshrl.u32 %v8081, 16
      %v8128 = vrot.slane %v8126, 3
      %v8129 = vshll.u32 %v8081, 16
      %v8131 = vrot.slane %v8129, 4
      %v8132 = vor.u32 %v8128, %v8131
      %v8133 = vsel %vm5679, %v8123, %v8132
      %v8135 = vshrl.u32 %v8082, 16
      %v8137 = vrot.slane %v8135, 3
      %v8138 = vshll.u32 %v8082, 16
      %v8140 = vrot.slane %v8138, 4
      %v8141 = vor.u32 %v8137, %v8140
      %v8142 = vsel %vm5679, %v8132, %v8141
      %v8144 = vshrl.u32 %v8083, 16
      %v8146 = vrot.slane %v8144, 3
      %v8147 = vshll.u32 %v8083, 16
      %v8149 = vrot.slane %v8147, 4
      %v8150 = vor.u32 %v8146, %v8149
      %v8151 = vsel %vm5679, %v8141, %v8150
      %v8153 = vshrl.u32 %v8084, 16
      %v8155 = vrot.slane %v8153, 3
      %v8156 = vshll.u32 %v8084, 16
      %v8158 = vrot.slane %v8156, 4
      %v8159 = vor.u32 %v8155, %v8158
      %v8160 = vsel %vm5679, %v8150, %v8159
      %v8162 = vshrl.u32 %v8085, 16
      %v8164 = vrot.slane %v8162, 3
      %v8165 = vshll.u32 %v8085, 16
      %v8167 = vrot.slane %v8165, 4
      %v8168 = vor.u32 %v8164, %v8167
      %v8169 = vsel %vm5679, %v8159, %v8168
      %v8171 = vshrl.u32 %v8086, 16
      %v8173 = vrot.slane %v8171, 3
      %v8174 = vshll.u32 %v8086, 16
      %v8176 = vrot.slane %v8174, 4
      %v8177 = vor.u32 %v8173, %v8176
      %v8178 = vsel %vm5679, %v8168, %v8177
      %v8180 = vshrl.u32 %v8087, 16
      %v8182 = vrot.slane %v8180, 3
      %v8183 = vshll.u32 %v8087, 16
      %v8185 = vrot.slane %v8183, 4
      %v8186 = vor.u32 %v8182, %v8185
      %v8187 = vsel %vm5679, %v8177, %v8186
      %v8189 = vshrl.u32 %v8088, 16
      %v8191 = vrot.slane %v8189, 3
      %v8192 = vshll.u32 %v8088, 16
      %v8194 = vrot.slane %v8192, 4
      %v8195 = vor.u32 %v8191, %v8194
      %v8196 = vsel %vm5679, %v8186, %v8195
      %v8198 = vshrl.u32 %v8089, 16
      %v8200 = vrot.slane %v8198, 3
      %v8201 = vshll.u32 %v8089, 16
      %v8203 = vrot.slane %v8201, 4
      %v8204 = vor.u32 %v8200, %v8203
      %v8205 = vsel %vm5679, %v8195, %v8204
      %v8235 = vunpack.c.l.b16 %v8009
      %v8236 = vunpack.c.l.b16 %v8010
      %v8237 = vunpack.c.l.b16 %v8011
      %v8238 = vunpack.c.l.b16 %v8012
      %v8239 = vunpack.c.l.b16 %v8013
      %v8240 = vunpack.c.l.b16 %v8014
      %v8241 = vunpack.c.l.b16 %v8015
      %v8242 = vunpack.c.l.b16 %v8016
      %v8243 = vunpack.c.l.b16 %v8017
      %v8244 = vunpack.c.l.b16 %v8018
      %v8245 = vunpack.c.l.b16 %v8019
      %v8246 = vunpack.c.l.b16 %v8020
      %v8247 = vunpack.c.l.b16 %v8021
      %v8248 = vunpack.c.l.b16 %v8022
      %v8249 = vunpack.c.l.b16 %v8023
      %v8250 = vunpack.c.l.b16 %v8024
      %v8251 = vpack.c.b16 %v8236, %v8235
      %v8252 = vpack.c.b16 %v8238, %v8237
      %v8253 = vpack.c.b16 %v8240, %v8239
      %v8254 = vpack.c.b16 %v8242, %v8241
      %v8255 = vpack.c.b16 %v8244, %v8243
      %v8256 = vpack.c.b16 %v8246, %v8245
      %v8257 = vpack.c.b16 %v8248, %v8247
      %v8258 = vpack.c.b16 %v8250, %v8249
      %8267 = vmatprep.subr.bf16.mxu0 0
      %8268 = vmatpush1.bf16.msra.mxu0 %v8258
      %8269 = vmatprep.subr.bf16.mxu0 0
      %8270 = vmatpush1.bf16.msra.mxu0 %v8257
      %8271 = vmatprep.subr.bf16.mxu0 0
      %8272 = vmatpush1.bf16.msra.mxu0 %v8256
      %8273 = vmatprep.subr.bf16.mxu0 0
      %8274 = vmatpush1.bf16.msra.mxu0 %v8255
      %8275 = vmatprep.subr.bf16.mxu0 0
      %8276 = vmatpush1.bf16.msra.mxu0 %v8254
      %8277 = vmatprep.subr.bf16.mxu0 0
      %8278 = vmatpush1.bf16.msra.mxu0 %v8253
      %8279 = vmatprep.subr.bf16.mxu0 0
      %8280 = vmatpush1.bf16.msra.mxu0 %v8252
      %8281 = vmatprep.subr.bf16.mxu0 0
      %8282 = vmatpush1.bf16.msra.mxu0 %v8251
      %8283 = vmatprep.subr.bf16.mxu0 0
      %8284 = vmatpush2.bf16.msra.mxu0 0
      %8285 = vmatprep.subr.bf16.mxu0 0
      %8286 = vmatpush2.bf16.msra.mxu0 0
      %8287 = vmatprep.subr.bf16.mxu0 0
      %8288 = vmatpush2.bf16.msra.mxu0 0
      %8289 = vmatprep.subr.bf16.mxu0 0
      %8290 = vmatpush2.bf16.msra.mxu0 0
      %8291 = vmatprep.subr.bf16.mxu0 0
      %8292 = vmatpush2.bf16.msra.mxu0 0
      %8293 = vmatprep.subr.bf16.mxu0 0
      %8294 = vmatpush2.bf16.msra.mxu0 0
      %8295 = vmatprep.subr.bf16.mxu0 0
      %8296 = vmatpush2.bf16.msra.mxu0 0
      %8297 = vmatprep.subr.bf16.mxu0 0
      %8298 = vmatpush2.bf16.msra.mxu0 0
      %8299 = vmatprep.mubr.bf16.mxu0 0
      %8300 = vmatmul.mubr.bf16.gmra.mxu0 %v8106
      %v8301 = vpop.f32.mrf.mxu0
      %v8302 = vadd.f32 0.0, %v8301
      %v8303 = vpop.f32.mrf.mxu0
      %v8304 = vpop.f32.mrf.mxu0
      %v8305 = vadd.f32 0.0, %v8304
      %v8306 = vpop.f32.mrf.mxu0
      %8307 = vmatprep.mubr.bf16.mxu0 0
      %8308 = vmatmul.mubr.bf16.gmra.mxu0 %v8115
      %v8309 = vpop.f32.mrf.mxu0
      %v8310 = vadd.f32 0.0, %v8309
      %v8311 = vpop.f32.mrf.mxu0
      %v8312 = vpop.f32.mrf.mxu0
      %v8313 = vadd.f32 0.0, %v8312
      %v8314 = vpop.f32.mrf.mxu0
      %8315 = vmatprep.mubr.bf16.mxu0 0
      %8316 = vmatmul.mubr.bf16.gmra.mxu0 %v8124
      %v8317 = vpop.f32.mrf.mxu0
      %v8318 = vadd.f32 0.0, %v8317
      %v8319 = vpop.f32.mrf.mxu0
      %v8320 = vpop.f32.mrf.mxu0
      %v8321 = vadd.f32 0.0, %v8320
      %v8322 = vpop.f32.mrf.mxu0
      %8323 = vmatprep.mubr.bf16.mxu0 0
      %8324 = vmatmul.mubr.bf16.gmra.mxu0 %v8133
      %v8325 = vpop.f32.mrf.mxu0
      %v8326 = vadd.f32 0.0, %v8325
      %v8327 = vpop.f32.mrf.mxu0
      %v8328 = vpop.f32.mrf.mxu0
      %v8329 = vadd.f32 0.0, %v8328
      %v8330 = vpop.f32.mrf.mxu0
      %8331 = vmatprep.mubr.bf16.mxu0 0
      %8332 = vmatmul.mubr.bf16.gmra.mxu0 %v8142
      %v8333 = vpop.f32.mrf.mxu0
      %v8334 = vadd.f32 0.0, %v8333
      %v8335 = vpop.f32.mrf.mxu0
      %v8336 = vpop.f32.mrf.mxu0
      %v8337 = vadd.f32 0.0, %v8336
      %v8338 = vpop.f32.mrf.mxu0
      %8339 = vmatprep.mubr.bf16.mxu0 0
      %8340 = vmatmul.mubr.bf16.gmra.mxu0 %v8151
      %v8341 = vpop.f32.mrf.mxu0
      %v8342 = vadd.f32 0.0, %v8341
      %v8343 = vpop.f32.mrf.mxu0
      %v8344 = vpop.f32.mrf.mxu0
      %v8345 = vadd.f32 0.0, %v8344
      %v8346 = vpop.f32.mrf.mxu0
      %8347 = vmatprep.mubr.bf16.mxu0 0
      %8348 = vmatmul.mubr.bf16.gmra.mxu0 %v8160
      %v8349 = vpop.f32.mrf.mxu0
      %v8350 = vadd.f32 0.0, %v8349
      %v8351 = vpop.f32.mrf.mxu0
      %v8352 = vpop.f32.mrf.mxu0
      %v8353 = vadd.f32 0.0, %v8352
      %v8354 = vpop.f32.mrf.mxu0
      %8355 = vmatprep.mubr.bf16.mxu0 0
      %8356 = vmatmul.mubr.bf16.gmra.mxu0 %v8169
      %v8357 = vpop.f32.mrf.mxu0
      %v8358 = vadd.f32 0.0, %v8357
      %v8359 = vpop.f32.mrf.mxu0
      %v8360 = vpop.f32.mrf.mxu0
      %v8361 = vadd.f32 0.0, %v8360
      %v8362 = vpop.f32.mrf.mxu0
      %8363 = vmatprep.mubr.bf16.mxu0 0
      %8364 = vmatmul.mubr.bf16.gmra.mxu0 %v8178
      %v8365 = vpop.f32.mrf.mxu0
      %v8366 = vadd.f32 0.0, %v8365
      %v8367 = vpop.f32.mrf.mxu0
      %v8368 = vpop.f32.mrf.mxu0
      %v8369 = vadd.f32 0.0, %v8368
      %v8370 = vpop.f32.mrf.mxu0
      %8371 = vmatprep.mubr.bf16.mxu0 0
      %8372 = vmatmul.mubr.bf16.gmra.mxu0 %v8187
      %v8373 = vpop.f32.mrf.mxu0
      %v8374 = vadd.f32 0.0, %v8373
      %v8375 = vpop.f32.mrf.mxu0
      %v8376 = vpop.f32.mrf.mxu0
      %v8377 = vadd.f32 0.0, %v8376
      %v8378 = vpop.f32.mrf.mxu0
      %8379 = vmatprep.mubr.bf16.mxu0 0
      %8380 = vmatmul.mubr.bf16.gmra.mxu0 %v8196
      %v8381 = vpop.f32.mrf.mxu0
      %v8382 = vadd.f32 0.0, %v8381
      %v8383 = vpop.f32.mrf.mxu0
      %v8384 = vpop.f32.mrf.mxu0
      %v8385 = vadd.f32 0.0, %v8384
      %v8386 = vpop.f32.mrf.mxu0
      %8387 = vmatprep.mubr.bf16.mxu0 0
      %8388 = vmatmul.mubr.bf16.gmra.mxu0 %v8205
      %v8389 = vpop.f32.mrf.mxu0
      %v8390 = vadd.f32 0.0, %v8389
      %v8391 = vpop.f32.mrf.mxu0
      %v8392 = vpop.f32.mrf.mxu0
      %v8393 = vadd.f32 0.0, %v8392
      %v8394 = vpop.f32.mrf.mxu0
      %8395 = vmatprep.mubr.bf16.mxu0 0
      %8396 = vmatmul.mubr.bf16.gmra.mxu0 %v8204
      %v8397 = vpop.f32.mrf.mxu0
      %v8398 = vadd.f32 0.0, %v8397
      %v8399 = vpop.f32.mrf.mxu0
      %v8400 = vpop.f32.mrf.mxu0
      %v8401 = vpop.f32.mrf.mxu0
      %8402 = vdwg.mxu0
      %v8403 = vadd.f32 %v7806, %v8302
      %v8404 = vadd.f32 %v7807, %v8305
      %v8405 = vadd.f32 %v7808, %v8310
      %v8406 = vadd.f32 %v7809, %v8313
      %v8407 = vadd.f32 %v7810, %v8318
      %v8408 = vadd.f32 %v7811, %v8321
      %v8409 = vadd.f32 %v7812, %v8326
      %v8410 = vadd.f32 %v7813, %v8329
      %v8411 = vadd.f32 %v7814, %v8334
      %v8412 = vadd.f32 %v7815, %v8337
      %v8413 = vadd.f32 %v7816, %v8342
      %v8414 = vadd.f32 %v7817, %v8345
      %v8415 = vadd.f32 %v7818, %v8350
      %v8416 = vadd.f32 %v7819, %v8353
      %v8417 = vadd.f32 %v7820, %v8358
      %v8418 = vadd.f32 %v7821, %v8361
      %v8419 = vadd.f32 %v7822, %v8366
      %v8420 = vadd.f32 %v7823, %v8369
      %v8421 = vadd.f32 %v7824, %v8374
      %v8422 = vadd.f32 %v7825, %v8377
      %v8423 = vadd.f32 %v7826, %v8382
      %v8424 = vadd.f32 %v7827, %v8385
      %v8425 = vadd.f32 %v7828, %v8390
      %v8426 = vadd.f32 %v7829, %v8393
      %v8427 = vadd.f32 %v7830, %v8398
      %v8428 = vpack.c.bf16 %v2045, %v2045
      %vm8429 = vcmask 523264
      %v8431 = vsel %vm8429, %v8428, 0
      %8433 = vmatprep.subr.bf16.mxu0 0
      %8434 = vmatpush1.bf16.msra.mxu0 0
      %8435 = vmatprep.subr.bf16.mxu0 0
      %8436 = vmatpush1.bf16.msra.mxu0 0
      %8437 = vmatprep.subr.bf16.mxu0 0
      %8438 = vmatpush1.bf16.msra.mxu0 0
      %8439 = vmatprep.subr.bf16.mxu0 0
      %8440 = vmatpush1.bf16.msra.mxu0 0
      %8441 = vmatprep.subr.bf16.mxu0 0
      %8442 = vmatpush1.bf16.msra.mxu0 %v6150
      %8443 = vmatprep.subr.bf16.mxu0 0
      %8444 = vmatpush1.bf16.msra.mxu0 %v6149
      %8445 = vmatprep.subr.bf16.mxu0 0
      %8446 = vmatpush1.bf16.msra.mxu0 %v6148
      %8447 = vmatprep.subr.bf16.mxu0 0
      %8448 = vmatpush1.bf16.msra.mxu0 %v6147
      %8449 = vmatprep.subr.bf16.mxu0 0
      %8450 = vmatpush2.bf16.msra.mxu0 0
      %8451 = vmatprep.subr.bf16.mxu0 0
      %8452 = vmatpush2.bf16.msra.mxu0 0
      %8453 = vmatprep.subr.bf16.mxu0 0
      %8454 = vmatpush2.bf16.msra.mxu0 0
      %8455 = vmatprep.subr.bf16.mxu0 0
      %8456 = vmatpush2.bf16.msra.mxu0 0
      %8457 = vmatprep.subr.bf16.mxu0 0
      %8458 = vmatpush2.bf16.msra.mxu0 0
      %8459 = vmatprep.subr.bf16.mxu0 0
      %8460 = vmatpush2.bf16.msra.mxu0 0
      %8461 = vmatprep.subr.bf16.mxu0 0
      %8462 = vmatpush2.bf16.msra.mxu0 0
      %8463 = vmatprep.subr.bf16.mxu0 0
      %8464 = vmatpush2.bf16.msra.mxu0 0
      %8465 = vmatprep.mubr.bf16.mxu0 0
      %8466 = vmatmul.mubr.bf16.gmra.mxu0 %v8431
      %v8467 = vpop.f32.mrf.mxu0
      %v8468 = vadd.f32 0.0, %v8467
      %v8469 = vpop.f32.mrf.mxu0
      %v8470 = vpop.f32.mrf.mxu0
      %v8471 = vpop.f32.mrf.mxu0
      %8472 = vdwg.mxu0
      %8473 = vmatprep.subr.bf16.mxu0 0
      %8474 = vmatpush1.bf16.msra.mxu0 0
      %8475 = vmatprep.subr.bf16.mxu0 0
      %8476 = vmatpush1.bf16.msra.mxu0 0
      %8477 = vmatprep.subr.bf16.mxu0 0
      %8478 = vmatpush1.bf16.msra.mxu0 0
      %8479 = vmatprep.subr.bf16.mxu0 0
      %8480 = vmatpush1.bf16.msra.mxu0 0
      %8481 = vmatprep.subr.bf16.mxu0 0
      %8482 = vmatpush1.bf16.msra.mxu0 %v6146
      %8483 = vmatprep.subr.bf16.mxu0 0
      %8484 = vmatpush1.bf16.msra.mxu0 %v6145
      %8485 = vmatprep.subr.bf16.mxu0 0
      %8486 = vmatpush1.bf16.msra.mxu0 %v6144
      %8487 = vmatprep.subr.bf16.mxu0 0
      %8488 = vmatpush1.bf16.msra.mxu0 %v6143
      %8489 = vmatprep.subr.bf16.mxu0 0
      %8490 = vmatpush2.bf16.msra.mxu0 0
      %8491 = vmatprep.subr.bf16.mxu0 0
      %8492 = vmatpush2.bf16.msra.mxu0 0
      %8493 = vmatprep.subr.bf16.mxu0 0
      %8494 = vmatpush2.bf16.msra.mxu0 0
      %8495 = vmatprep.subr.bf16.mxu0 0
      %8496 = vmatpush2.bf16.msra.mxu0 0
      %8497 = vmatprep.subr.bf16.mxu0 0
      %8498 = vmatpush2.bf16.msra.mxu0 0
      %8499 = vmatprep.subr.bf16.mxu0 0
      %8500 = vmatpush2.bf16.msra.mxu0 0
      %8501 = vmatprep.subr.bf16.mxu0 0
      %8502 = vmatpush2.bf16.msra.mxu0 0
      %8503 = vmatprep.subr.bf16.mxu0 0
      %8504 = vmatpush2.bf16.msra.mxu0 0
      %8505 = vmatprep.mubr.bf16.mxu0 0
      %8506 = vmatmul.mubr.bf16.gmra.mxu0 %v8431
      %v8507 = vpop.f32.mrf.mxu0
      %v8508 = vadd.f32 %v8468, %v8507
      %v8509 = vpop.f32.mrf.mxu0
      %v8510 = vpop.f32.mrf.mxu0
      %v8511 = vpop.f32.mrf.mxu0
      %8512 = vdwg.mxu0
      %v8513 = vmul.f32 %v8403, -1.702
      %v8514 = vmul.f32 %v8404, -1.702
      %v8515 = vmul.f32 %v8405, -1.702
      %v8516 = vmul.f32 %v8406, -1.702
      %v8517 = vmul.f32 %v8407, -1.702
      %v8518 = vmul.f32 %v8408, -1.702
      %v8519 = vmul.f32 %v8409, -1.702
      %v8520 = vmul.f32 %v8410, -1.702
      %v8521 = vmul.f32 %v8411, -1.702
      %v8522 = vmul.f32 %v8412, -1.702
      %v8523 = vmul.f32 %v8413, -1.702
      %v8524 = vmul.f32 %v8414, -1.702
      %v8525 = vmul.f32 %v8415, -1.702
      %v8526 = vmul.f32 %v8416, -1.702
      %v8527 = vmul.f32 %v8417, -1.702
      %v8528 = vmul.f32 %v8418, -1.702
      %v8529 = vmul.f32 %v8419, -1.702
      %v8530 = vmul.f32 %v8420, -1.702
      %v8531 = vmul.f32 %v8421, -1.702
      %v8532 = vmul.f32 %v8422, -1.702
      %v8533 = vmul.f32 %v8423, -1.702
      %v8534 = vmul.f32 %v8424, -1.702
      %v8535 = vmul.f32 %v8425, -1.702
      %v8536 = vmul.f32 %v8426, -1.702
      %v8537 = vmul.f32 %v8427, -1.702
      %v8538 = vmul.f32 %v8513, 1.442695
      %v8539 = vpow.pop %v8538
      %v8540 = vmul.f32 %v8514, 1.442695
      %v8541 = vpow.pop %v8540
      %v8542 = vmul.f32 %v8515, 1.442695
      %v8543 = vpow.pop %v8542
      %v8544 = vmul.f32 %v8516, 1.442695
      %v8545 = vpow.pop %v8544
      %v8546 = vmul.f32 %v8517, 1.442695
      %v8547 = vpow.pop %v8546
      %v8548 = vmul.f32 %v8518, 1.442695
      %v8549 = vpow.pop %v8548
      %v8550 = vmul.f32 %v8519, 1.442695
      %v8551 = vpow.pop %v8550
      %v8552 = vmul.f32 %v8520, 1.442695
      %v8553 = vpow.pop %v8552
      %v8554 = vmul.f32 %v8521, 1.442695
      %v8555 = vpow.pop %v8554
      %v8556 = vmul.f32 %v8522, 1.442695
      %v8557 = vpow.pop %v8556
      %v8558 = vmul.f32 %v8523, 1.442695
      %v8559 = vpow.pop %v8558
      %v8560 = vmul.f32 %v8524, 1.442695
      %v8561 = vpow.pop %v8560
      %v8562 = vmul.f32 %v8525, 1.442695
      %v8563 = vpow.pop %v8562
      %v8564 = vmul.f32 %v8526, 1.442695
      %v8565 = vpow.pop %v8564
      %v8566 = vmul.f32 %v8527, 1.442695
      %v8567 = vpow.pop %v8566
      %v8568 = vmul.f32 %v8528, 1.442695
      %v8569 = vpow.pop %v8568
      %v8570 = vmul.f32 %v8529, 1.442695
      %v8571 = vpow.pop %v8570
      %v8572 = vmul.f32 %v8530, 1.442695
      %v8573 = vpow.pop %v8572
      %v8574 = vmul.f32 %v8531, 1.442695
      %v8575 = vpow.pop %v8574
      %v8576 = vmul.f32 %v8532, 1.442695
      %v8577 = vpow.pop %v8576
      %v8578 = vmul.f32 %v8533, 1.442695
      %v8579 = vpow.pop %v8578
      %v8580 = vmul.f32 %v8534, 1.442695
      %v8581 = vpow.pop %v8580
      %v8582 = vmul.f32 %v8535, 1.442695
      %v8583 = vpow.pop %v8582
      %v8584 = vmul.f32 %v8536, 1.442695
      %v8585 = vpow.pop %v8584
      %v8586 = vmul.f32 %v8537, 1.442695
      %v8587 = vpow.pop %v8586
      %v8588 = vadd.f32 %v8539, 1.0
      %v8589 = vadd.f32 %v8541, 1.0
      %v8590 = vadd.f32 %v8543, 1.0
      %v8591 = vadd.f32 %v8545, 1.0
      %v8592 = vadd.f32 %v8547, 1.0
      %v8593 = vadd.f32 %v8549, 1.0
      %v8594 = vadd.f32 %v8551, 1.0
      %v8595 = vadd.f32 %v8553, 1.0
      %v8596 = vadd.f32 %v8555, 1.0
      %v8597 = vadd.f32 %v8557, 1.0
      %v8598 = vadd.f32 %v8559, 1.0
      %v8599 = vadd.f32 %v8561, 1.0
      %v8600 = vadd.f32 %v8563, 1.0
      %v8601 = vadd.f32 %v8565, 1.0
      %v8602 = vadd.f32 %v8567, 1.0
      %v8603 = vadd.f32 %v8569, 1.0
      %v8604 = vadd.f32 %v8571, 1.0
      %v8605 = vadd.f32 %v8573, 1.0
      %v8606 = vadd.f32 %v8575, 1.0
      %v8607 = vadd.f32 %v8577, 1.0
      %v8608 = vadd.f32 %v8579, 1.0
      %v8609 = vadd.f32 %v8581, 1.0
      %v8610 = vadd.f32 %v8583, 1.0
      %v8611 = vadd.f32 %v8585, 1.0
      %v8612 = vadd.f32 %v8587, 1.0
      %v8613 = vrcp.pop %v8588
      %v8614 = vrcp.pop %v8589
      %v8615 = vrcp.pop %v8590
      %v8616 = vrcp.pop %v8591
      %v8617 = vrcp.pop %v8592
      %v8618 = vrcp.pop %v8593
      %v8619 = vrcp.pop %v8594
      %v8620 = vrcp.pop %v8595
      %v8621 = vrcp.pop %v8596
      %v8622 = vrcp.pop %v8597
      %v8623 = vrcp.pop %v8598
      %v8624 = vrcp.pop %v8599
      %v8625 = vrcp.pop %v8600
      %v8626 = vrcp.pop %v8601
      %v8627 = vrcp.pop %v8602
      %v8628 = vrcp.pop %v8603
      %v8629 = vrcp.pop %v8604
      %v8630 = vrcp.pop %v8605
      %v8631 = vrcp.pop %v8606
      %v8632 = vrcp.pop %v8607
      %v8633 = vrcp.pop %v8608
      %v8634 = vrcp.pop %v8609
      %v8635 = vrcp.pop %v8610
      %v8636 = vrcp.pop %v8611
      %v8637 = vrcp.pop %v8612
      %v8638 = vmul.f32 %v8403, %v8613
      %v8639 = vmul.f32 %v8404, %v8614
      %v8640 = vmul.f32 %v8405, %v8615
      %v8641 = vmul.f32 %v8406, %v8616
      %v8642 = vmul.f32 %v8407, %v8617
      %v8643 = vmul.f32 %v8408, %v8618
      %v8644 = vmul.f32 %v8409, %v8619
      %v8645 = vmul.f32 %v8410, %v8620
      %v8646 = vmul.f32 %v8411, %v8621
      %v8647 = vmul.f32 %v8412, %v8622
      %v8648 = vmul.f32 %v8413, %v8623
      %v8649 = vmul.f32 %v8414, %v8624
      %v8650 = vmul.f32 %v8415, %v8625
      %v8651 = vmul.f32 %v8416, %v8626
      %v8652 = vmul.f32 %v8417, %v8627
      %v8653 = vmul.f32 %v8418, %v8628
      %v8654 = vmul.f32 %v8419, %v8629
      %v8655 = vmul.f32 %v8420, %v8630
      %v8656 = vmul.f32 %v8421, %v8631
      %v8657 = vmul.f32 %v8422, %v8632
      %v8658 = vmul.f32 %v8423, %v8633
      %v8659 = vmul.f32 %v8424, %v8634
      %v8660 = vmul.f32 %v8425, %v8635
      %v8661 = vmul.f32 %v8426, %v8636
      %v8662 = vmul.f32 %v8427, %v8637
      %v8663 = vpack.c.bf16 %v8639, %v8638
      %v8664 = vpack.c.bf16 %v8641, %v8640
      %v8665 = vpack.c.bf16 %v8643, %v8642
      %v8666 = vpack.c.bf16 %v8645, %v8644
      %v8667 = vpack.c.bf16 %v8647, %v8646
      %v8668 = vpack.c.bf16 %v8649, %v8648
      %v8669 = vpack.c.bf16 %v8651, %v8650
      %v8670 = vpack.c.bf16 %v8653, %v8652
      %v8671 = vpack.c.bf16 %v8655, %v8654
      %v8672 = vpack.c.bf16 %v8657, %v8656
      %v8673 = vpack.c.bf16 %v8659, %v8658
      %v8674 = vpack.c.bf16 %v8661, %v8660
      %v8675 = vpack.c.bf16 %v8662, %v8662
      %v8676 = vld [vmem:[%s4] sm:$0xff]
      %v8677 = vld [vmem:[%s4 + $0x8] sm:$0xff]
      %v8678 = vld [vmem:[%s4 + $0x10] sm:$0xff]
      %v8679 = vld [vmem:[%s4 + $0x18] sm:$0xff]
      %v8680 = vld [vmem:[%s4 + $0x20] sm:$0xff]
      %v8681 = vld [vmem:[%s4 + $0x28] sm:$0xff]
      %v8682 = vld [vmem:[%s4 + $0x30] sm:$0xff]
      %v8683 = vld [vmem:[%s4 + $0x38] sm:$0xff]
      %v8684 = vld [vmem:[%s4 + $0x40] sm:$0xff]
      %v8685 = vld [vmem:[%s4 + $0x48] sm:$0xff]
      %v8686 = vld [vmem:[%s4 + $0x50] sm:$0xff]
      %v8687 = vld [vmem:[%s4 + $0x58] sm:$0xff]
      %v8688 = vld [vmem:[%s4 + $0x60] sm:$0xff]
      %v8689 = vld [vmem:[%s4 + $0x68] sm:$0xff]
      %v8690 = vld [vmem:[%s4 + $0x70] sm:$0xff]
      %v8691 = vld [vmem:[%s4 + $0x78] sm:$0xff]
      %v8692 = vld [vmem:[%s4 + $0x80] sm:$0xff]
      %v8693 = vld [vmem:[%s4 + $0x88] sm:$0xff]
      %v8694 = vld [vmem:[%s4 + $0x90] sm:$0xff]
      %v8695 = vld [vmem:[%s4 + $0x98] sm:$0xff]
      %v8696 = vld [vmem:[%s4 + $0xa0] sm:$0xff]
      %v8697 = vld [vmem:[%s4 + $0xa8] sm:$0xff]
      %v8698 = vld [vmem:[%s4 + $0xb0] sm:$0xff]
      %v8699 = vld [vmem:[%s4 + $0xb8] sm:$0xff]
      %v8700 = vld [vmem:[%s5] sm:$0x3f]
      %v8702 = vlaneseq
      %v8703 = vshrl.u32 %v8702, 7
      %v8704 = vsub.s32 0, %v8703
      %v8705 = vrot.slane %v8700, %v8704
      %v8706 = vlaneseq
      %v8707 = vshrl.u32 %v8706, 7
      %v8708 = vsub.s32 1, %v8707
      %v8709 = vrot.slane %v8700, %v8708
      %v8710 = vlaneseq
      %v8711 = vshrl.u32 %v8710, 7
      %v8712 = vsub.s32 2, %v8711
      %v8713 = vrot.slane %v8700, %v8712
      %v8714 = vlaneseq
      %v8715 = vshrl.u32 %v8714, 7
      %v8716 = vsub.s32 3, %v8715
      %v8717 = vrot.slane %v8700, %v8716
      %v8718 = vlaneseq
      %v8719 = vshrl.u32 %v8718, 7
      %v8720 = vsub.s32 4, %v8719
      %v8721 = vrot.slane %v8700, %v8720
      %v8722 = vlaneseq
      %v8723 = vshrl.u32 %v8722, 7
      %v8724 = vsub.s32 5, %v8723
      %v8725 = vrot.slane %v8700, %v8724
      %v8756 = vunpack.c.l.b16 %v8676
      %v8757 = vunpack.c.h.b16 %v8676
      %v8758 = vunpack.c.l.b16 %v8677
      %v8759 = vunpack.c.h.b16 %v8677
      %v8760 = vunpack.c.l.b16 %v8678
      %v8761 = vunpack.c.h.b16 %v8678
      %v8762 = vunpack.c.l.b16 %v8679
      %v8763 = vunpack.c.h.b16 %v8679
      %v8764 = vunpack.c.l.b16 %v8680
      %v8765 = vunpack.c.h.b16 %v8680
      %v8766 = vunpack.c.l.b16 %v8681
      %v8767 = vunpack.c.h.b16 %v8681
      %v8768 = vunpack.c.l.b16 %v8682
      %v8769 = vunpack.c.h.b16 %v8682
      %v8770 = vunpack.c.l.b16 %v8683
      %v8771 = vunpack.c.h.b16 %v8683
      %v8772 = vunpack.c.l.b16 %v8684
      %v8773 = vunpack.c.h.b16 %v8684
      %v8774 = vunpack.c.l.b16 %v8685
      %v8775 = vunpack.c.h.b16 %v8685
      %v8776 = vunpack.c.l.b16 %v8686
      %v8777 = vunpack.c.h.b16 %v8686
      %v8778 = vunpack.c.l.b16 %v8687
      %v8779 = vunpack.c.h.b16 %v8687
      %v8780 = vunpack.c.l.b16 %v8688
      %v8781 = vunpack.c.h.b16 %v8688
      %v8782 = vunpack.c.l.b16 %v8689
      %v8783 = vunpack.c.h.b16 %v8689
      %v8784 = vunpack.c.l.b16 %v8690
      %v8785 = vunpack.c.h.b16 %v8690
      %v8786 = vunpack.c.l.b16 %v8691
      %v8787 = vunpack.c.h.b16 %v8691
      %v8788 = vunpack.c.l.b16 %v8692
      %v8789 = vunpack.c.h.b16 %v8692
      %v8790 = vunpack.c.l.b16 %v8693
      %v8791 = vunpack.c.h.b16 %v8693
      %v8792 = vunpack.c.l.b16 %v8694
      %v8793 = vunpack.c.h.b16 %v8694
      %v8794 = vunpack.c.l.b16 %v8695
      %v8795 = vunpack.c.h.b16 %v8695
      %v8796 = vunpack.c.l.b16 %v8696
      %v8797 = vunpack.c.h.b16 %v8696
      %v8798 = vunpack.c.l.b16 %v8697
      %v8799 = vunpack.c.h.b16 %v8697
      %v8800 = vunpack.c.l.b16 %v8698
      %v8801 = vunpack.c.h.b16 %v8698
      %v8802 = vunpack.c.l.b16 %v8699
      %v8803 = vunpack.c.h.b16 %v8699
      %v8804 = vpack.c.b16 %v8762, %v8756
      %v8805 = vpack.c.b16 %v8763, %v8757
      %v8806 = vpack.c.b16 %v8764, %v8758
      %v8807 = vpack.c.b16 %v8765, %v8759
      %v8808 = vpack.c.b16 %v8766, %v8760
      %v8809 = vpack.c.b16 %v8767, %v8761
      %v8810 = vpack.c.b16 %v8774, %v8768
      %v8811 = vpack.c.b16 %v8775, %v8769
      %v8812 = vpack.c.b16 %v8776, %v8770
      %v8813 = vpack.c.b16 %v8777, %v8771
      %v8814 = vpack.c.b16 %v8778, %v8772
      %v8815 = vpack.c.b16 %v8779, %v8773
      %v8816 = vpack.c.b16 %v8786, %v8780
      %v8817 = vpack.c.b16 %v8787, %v8781
      %v8818 = vpack.c.b16 %v8788, %v8782
      %v8819 = vpack.c.b16 %v8789, %v8783
      %v8820 = vpack.c.b16 %v8790, %v8784
      %v8821 = vpack.c.b16 %v8791, %v8785
      %v8822 = vpack.c.b16 %v8798, %v8792
      %v8823 = vpack.c.b16 %v8799, %v8793
      %v8824 = vpack.c.b16 %v8800, %v8794
      %v8825 = vpack.c.b16 %v8801, %v8795
      %v8826 = vpack.c.b16 %v8802, %v8796
      %v8827 = vpack.c.b16 %v8803, %v8797
      %v8853 = vsel %vm8429, %v8663, 0
      %v8856 = vsel %vm8429, %v8664, 0
      %v8859 = vsel %vm8429, %v8665, 0
      %v8862 = vsel %vm8429, %v8666, 0
      %v8865 = vsel %vm8429, %v8667, 0
      %v8868 = vsel %vm8429, %v8668, 0
      %v8871 = vsel %vm8429, %v8669, 0
      %v8874 = vsel %vm8429, %v8670, 0
      %v8877 = vsel %vm8429, %v8671, 0
      %v8880 = vsel %vm8429, %v8672, 0
      %v8883 = vsel %vm8429, %v8673, 0
      %v8886 = vsel %vm8429, %v8674, 0
      %v8889 = vsel %vm8429, %v8675, 0
      %8891 = vmatprep.subr.bf16.mxu0 0
      %8892 = vmatpush1.bf16.msra.mxu0 0
      %8893 = vmatprep.subr.bf16.mxu0 0
      %8894 = vmatpush1.bf16.msra.mxu0 0
      %8895 = vmatprep.subr.bf16.mxu0 0
      %8896 = vmatpush1.bf16.msra.mxu0 0
      %8897 = vmatprep.subr.bf16.mxu0 0
      %8898 = vmatpush1.bf16.msra.mxu0 0
      %8899 = vmatprep.subr.bf16.mxu0 %v8823
      %8900 = vmatpush1.bf16.msra.mxu0 %v8822
      %8901 = vmatprep.subr.bf16.mxu0 %v8817
      %8902 = vmatpush1.bf16.msra.mxu0 %v8816
      %8903 = vmatprep.subr.bf16.mxu0 %v8811
      %8904 = vmatpush1.bf16.msra.mxu0 %v8810
      %8905 = vmatprep.subr.bf16.mxu0 %v8805
      %8906 = vmatpush1.bf16.msra.mxu0 %v8804
      %8907 = vmatprep.subr.bf16.mxu0 0
      %8908 = vmatpush2.bf16.msra.mxu0 0
      %8909 = vmatprep.subr.bf16.mxu0 0
      %8910 = vmatpush2.bf16.msra.mxu0 0
      %8911 = vmatprep.subr.bf16.mxu0 0
      %8912 = vmatpush2.bf16.msra.mxu0 0
      %8913 = vmatprep.subr.bf16.mxu0 0
      %8914 = vmatpush2.bf16.msra.mxu0 0
      %8915 = vmatprep.subr.bf16.mxu0 0
      %8916 = vmatpush2.bf16.msra.mxu0 0
      %8917 = vmatprep.subr.bf16.mxu0 0
      %8918 = vmatpush2.bf16.msra.mxu0 0
      %8919 = vmatprep.subr.bf16.mxu0 0
      %8920 = vmatpush2.bf16.msra.mxu0 0
      %8921 = vmatprep.subr.bf16.mxu0 0
      %8922 = vmatpush2.bf16.msra.mxu0 0
      %8923 = vmatprep.mubr.bf16.mxu0 0
      %8924 = vmatmul.mubr.bf16.gmra.mxu0 %v8853
      %v8925 = vpop.f32.mrf.mxu0
      %v8926 = vadd.f32 %v8705, %v8925
      %v8927 = vpop.f32.mrf.mxu0
      %v8928 = vadd.f32 %v8709, %v8927
      %v8929 = vpop.f32.mrf.mxu0
      %v8930 = vadd.f32 %v8705, %v8929
      %v8931 = vpop.f32.mrf.mxu0
      %v8932 = vadd.f32 %v8709, %v8931
      %8933 = vmatprep.mubr.bf16.mxu0 0
      %8934 = vmatmul.mubr.bf16.gmra.mxu0 %v8856
      %v8935 = vpop.f32.mrf.mxu0
      %v8936 = vadd.f32 %v8705, %v8935
      %v8937 = vpop.f32.mrf.mxu0
      %v8938 = vadd.f32 %v8709, %v8937
      %v8939 = vpop.f32.mrf.mxu0
      %v8940 = vadd.f32 %v8705, %v8939
      %v8941 = vpop.f32.mrf.mxu0
      %v8942 = vadd.f32 %v8709, %v8941
      %8943 = vmatprep.mubr.bf16.mxu0 0
      %8944 = vmatmul.mubr.bf16.gmra.mxu0 %v8859
      %v8945 = vpop.f32.mrf.mxu0
      %v8946 = vadd.f32 %v8705, %v8945
      %v8947 = vpop.f32.mrf.mxu0
      %v8948 = vadd.f32 %v8709, %v8947
      %v8949 = vpop.f32.mrf.mxu0
      %v8950 = vadd.f32 %v8705, %v8949
      %v8951 = vpop.f32.mrf.mxu0
      %v8952 = vadd.f32 %v8709, %v8951
      %8953 = vmatprep.mubr.bf16.mxu0 0
      %8954 = vmatmul.mubr.bf16.gmra.mxu0 %v8862
      %v8955 = vpop.f32.mrf.mxu0
      %v8956 = vadd.f32 %v8705, %v8955
      %v8957 = vpop.f32.mrf.mxu0
      %v8958 = vadd.f32 %v8709, %v8957
      %v8959 = vpop.f32.mrf.mxu0
      %v8960 = vadd.f32 %v8705, %v8959
      %v8961 = vpop.f32.mrf.mxu0
      %v8962 = vadd.f32 %v8709, %v8961
      %8963 = vmatprep.mubr.bf16.mxu0 0
      %8964 = vmatmul.mubr.bf16.gmra.mxu0 %v8865
      %v8965 = vpop.f32.mrf.mxu0
      %v8966 = vadd.f32 %v8705, %v8965
      %v8967 = vpop.f32.mrf.mxu0
      %v8968 = vadd.f32 %v8709, %v8967
      %v8969 = vpop.f32.mrf.mxu0
      %v8970 = vadd.f32 %v8705, %v8969
      %v8971 = vpop.f32.mrf.mxu0
      %v8972 = vadd.f32 %v8709, %v8971
      %8973 = vmatprep.mubr.bf16.mxu0 0
      %8974 = vmatmul.mubr.bf16.gmra.mxu0 %v8868
      %v8975 = vpop.f32.mrf.mxu0
      %v8976 = vadd.f32 %v8705, %v8975
      %v8977 = vpop.f32.mrf.mxu0
      %v8978 = vadd.f32 %v8709, %v8977
      %v8979 = vpop.f32.mrf.mxu0
      %v8980 = vadd.f32 %v8705, %v8979
      %v8981 = vpop.f32.mrf.mxu0
      %v8982 = vadd.f32 %v8709, %v8981
      %8983 = vmatprep.mubr.bf16.mxu0 0
      %8984 = vmatmul.mubr.bf16.gmra.mxu0 %v8871
      %v8985 = vpop.f32.mrf.mxu0
      %v8986 = vadd.f32 %v8705, %v8985
      %v8987 = vpop.f32.mrf.mxu0
      %v8988 = vadd.f32 %v8709, %v8987
      %v8989 = vpop.f32.mrf.mxu0
      %v8990 = vadd.f32 %v8705, %v8989
      %v8991 = vpop.f32.mrf.mxu0
      %v8992 = vadd.f32 %v8709, %v8991
      %8993 = vmatprep.mubr.bf16.mxu0 0
      %8994 = vmatmul.mubr.bf16.gmra.mxu0 %v8874
      %v8995 = vpop.f32.mrf.mxu0
      %v8996 = vadd.f32 %v8705, %v8995
      %v8997 = vpop.f32.mrf.mxu0
      %v8998 = vadd.f32 %v8709, %v8997
      %v8999 = vpop.f32.mrf.mxu0
      %v9000 = vadd.f32 %v8705, %v8999
      %v9001 = vpop.f32.mrf.mxu0
      %v9002 = vadd.f32 %v8709, %v9001
      %9003 = vmatprep.mubr.bf16.mxu0 0
      %9004 = vmatmul.mubr.bf16.gmra.mxu0 %v8877
      %v9005 = vpop.f32.mrf.mxu0
      %v9006 = vadd.f32 %v8705, %v9005
      %v9007 = vpop.f32.mrf.mxu0
      %v9008 = vadd.f32 %v8709, %v9007
      %v9009 = vpop.f32.mrf.mxu0
      %v9010 = vadd.f32 %v8705, %v9009
      %v9011 = vpop.f32.mrf.mxu0
      %v9012 = vadd.f32 %v8709, %v9011
      %9013 = vmatprep.mubr.bf16.mxu0 0
      %9014 = vmatmul.mubr.bf16.gmra.mxu0 %v8880
      %v9015 = vpop.f32.mrf.mxu0
      %v9016 = vadd.f32 %v8705, %v9015
      %v9017 = vpop.f32.mrf.mxu0
      %v9018 = vadd.f32 %v8709, %v9017
      %v9019 = vpop.f32.mrf.mxu0
      %v9020 = vadd.f32 %v8705, %v9019
      %v9021 = vpop.f32.mrf.mxu0
      %v9022 = vadd.f32 %v8709, %v9021
      %9023 = vmatprep.mubr.bf16.mxu0 0
      %9024 = vmatmul.mubr.bf16.gmra.mxu0 %v8883
      %v9025 = vpop.f32.mrf.mxu0
      %v9026 = vadd.f32 %v8705, %v9025
      %v9027 = vpop.f32.mrf.mxu0
      %v9028 = vadd.f32 %v8709, %v9027
      %v9029 = vpop.f32.mrf.mxu0
      %v9030 = vadd.f32 %v8705, %v9029
      %v9031 = vpop.f32.mrf.mxu0
      %v9032 = vadd.f32 %v8709, %v9031
      %9033 = vmatprep.mubr.bf16.mxu0 0
      %9034 = vmatmul.mubr.bf16.gmra.mxu0 %v8886
      %v9035 = vpop.f32.mrf.mxu0
      %v9036 = vadd.f32 %v8705, %v9035
      %v9037 = vpop.f32.mrf.mxu0
      %v9038 = vadd.f32 %v8709, %v9037
      %v9039 = vpop.f32.mrf.mxu0
      %v9040 = vadd.f32 %v8705, %v9039
      %v9041 = vpop.f32.mrf.mxu0
      %v9042 = vadd.f32 %v8709, %v9041
      %9043 = vmatprep.mubr.bf16.mxu0 0
      %9044 = vmatmul.mubr.bf16.gmra.mxu0 %v8889
      %v9045 = vpop.f32.mrf.mxu0
      %v9046 = vadd.f32 %v8705, %v9045
      %v9047 = vpop.f32.mrf.mxu0
      %v9048 = vadd.f32 %v8709, %v9047
      %v9049 = vpop.f32.mrf.mxu0
      %v9050 = vpop.f32.mrf.mxu0
      %9051 = vdwg.mxu0
      %9052 = vmatprep.subr.bf16.mxu0 0
      %9053 = vmatpush1.bf16.msra.mxu0 0
      %9054 = vmatprep.subr.bf16.mxu0 0
      %9055 = vmatpush1.bf16.msra.mxu0 0
      %9056 = vmatprep.subr.bf16.mxu0 0
      %9057 = vmatpush1.bf16.msra.mxu0 0
      %9058 = vmatprep.subr.bf16.mxu0 0
      %9059 = vmatpush1.bf16.msra.mxu0 0
      %9060 = vmatprep.subr.bf16.mxu0 %v8825
      %9061 = vmatpush1.bf16.msra.mxu0 %v8824
      %9062 = vmatprep.subr.bf16.mxu0 %v8819
      %9063 = vmatpush1.bf16.msra.mxu0 %v8818
      %9064 = vmatprep.subr.bf16.mxu0 %v8813
      %9065 = vmatpush1.bf16.msra.mxu0 %v8812
      %9066 = vmatprep.subr.bf16.mxu0 %v8807
      %9067 = vmatpush1.bf16.msra.mxu0 %v8806
      %9068 = vmatprep.subr.bf16.mxu0 0
      %9069 = vmatpush2.bf16.msra.mxu0 0
      %9070 = vmatprep.subr.bf16.mxu0 0
      %9071 = vmatpush2.bf16.msra.mxu0 0
      %9072 = vmatprep.subr.bf16.mxu0 0
      %9073 = vmatpush2.bf16.msra.mxu0 0
      %9074 = vmatprep.subr.bf16.mxu0 0
      %9075 = vmatpush2.bf16.msra.mxu0 0
      %9076 = vmatprep.subr.bf16.mxu0 0
      %9077 = vmatpush2.bf16.msra.mxu0 0
      %9078 = vmatprep.subr.bf16.mxu0 0
      %9079 = vmatpush2.bf16.msra.mxu0 0
      %9080 = vmatprep.subr.bf16.mxu0 0
      %9081 = vmatpush2.bf16.msra.mxu0 0
      %9082 = vmatprep.subr.bf16.mxu0 0
      %9083 = vmatpush2.bf16.msra.mxu0 0
      %9084 = vmatprep.mubr.bf16.mxu0 0
      %9085 = vmatmul.mubr.bf16.gmra.mxu0 %v8853
      %v9086 = vpop.f32.mrf.mxu0
      %v9087 = vadd.f32 %v8713, %v9086
      %v9088 = vpop.f32.mrf.mxu0
      %v9089 = vadd.f32 %v8717, %v9088
      %v9090 = vpop.f32.mrf.mxu0
      %v9091 = vadd.f32 %v8713, %v9090
      %v9092 = vpop.f32.mrf.mxu0
      %v9093 = vadd.f32 %v8717, %v9092
      %9094 = vmatprep.mubr.bf16.mxu0 0
      %9095 = vmatmul.mubr.bf16.gmra.mxu0 %v8856
      %v9096 = vpop.f32.mrf.mxu0
      %v9097 = vadd.f32 %v8713, %v9096
      %v9098 = vpop.f32.mrf.mxu0
      %v9099 = vadd.f32 %v8717, %v9098
      %v9100 = vpop.f32.mrf.mxu0
      %v9101 = vadd.f32 %v8713, %v9100
      %v9102 = vpop.f32.mrf.mxu0
      %v9103 = vadd.f32 %v8717, %v9102
      %9104 = vmatprep.mubr.bf16.mxu0 0
      %9105 = vmatmul.mubr.bf16.gmra.mxu0 %v8859
      %v9106 = vpop.f32.mrf.mxu0
      %v9107 = vadd.f32 %v8713, %v9106
      %v9108 = vpop.f32.mrf.mxu0
      %v9109 = vadd.f32 %v8717, %v9108
      %v9110 = vpop.f32.mrf.mxu0
      %v9111 = vadd.f32 %v8713, %v9110
      %v9112 = vpop.f32.mrf.mxu0
      %v9113 = vadd.f32 %v8717, %v9112
      %9114 = vmatprep.mubr.bf16.mxu0 0
      %9115 = vmatmul.mubr.bf16.gmra.mxu0 %v8862
      %v9116 = vpop.f32.mrf.mxu0
      %v9117 = vadd.f32 %v8713, %v9116
      %v9118 = vpop.f32.mrf.mxu0
      %v9119 = vadd.f32 %v8717, %v9118
      %v9120 = vpop.f32.mrf.mxu0
      %v9121 = vadd.f32 %v8713, %v9120
      %v9122 = vpop.f32.mrf.mxu0
      %v9123 = vadd.f32 %v8717, %v9122
      %9124 = vmatprep.mubr.bf16.mxu0 0
      %9125 = vmatmul.mubr.bf16.gmra.mxu0 %v8865
      %v9126 = vpop.f32.mrf.mxu0
      %v9127 = vadd.f32 %v8713, %v9126
      %v9128 = vpop.f32.mrf.mxu0
      %v9129 = vadd.f32 %v8717, %v9128
      %v9130 = vpop.f32.mrf.mxu0
      %v9131 = vadd.f32 %v8713, %v9130
      %v9132 = vpop.f32.mrf.mxu0
      %v9133 = vadd.f32 %v8717, %v9132
      %9134 = vmatprep.mubr.bf16.mxu0 0
      %9135 = vmatmul.mubr.bf16.gmra.mxu0 %v8868
      %v9136 = vpop.f32.mrf.mxu0
      %v9137 = vadd.f32 %v8713, %v9136
      %v9138 = vpop.f32.mrf.mxu0
      %v9139 = vadd.f32 %v8717, %v9138
      %v9140 = vpop.f32.mrf.mxu0
      %v9141 = vadd.f32 %v8713, %v9140
      %v9142 = vpop.f32.mrf.mxu0
      %v9143 = vadd.f32 %v8717, %v9142
      %9144 = vmatprep.mubr.bf16.mxu0 0
      %9145 = vmatmul.mubr.bf16.gmra.mxu0 %v8871
      %v9146 = vpop.f32.mrf.mxu0
      %v9147 = vadd.f32 %v8713, %v9146
      %v9148 = vpop.f32.mrf.mxu0
      %v9149 = vadd.f32 %v8717, %v9148
      %v9150 = vpop.f32.mrf.mxu0
      %v9151 = vadd.f32 %v8713, %v9150
      %v9152 = vpop.f32.mrf.mxu0
      %v9153 = vadd.f32 %v8717, %v9152
      %9154 = vmatprep.mubr.bf16.mxu0 0
      %9155 = vmatmul.mubr.bf16.gmra.mxu0 %v8874
      %v9156 = vpop.f32.mrf.mxu0
      %v9157 = vadd.f32 %v8713, %v9156
      %v9158 = vpop.f32.mrf.mxu0
      %v9159 = vadd.f32 %v8717, %v9158
      %v9160 = vpop.f32.mrf.mxu0
      %v9161 = vadd.f32 %v8713, %v9160
      %v9162 = vpop.f32.mrf.mxu0
      %v9163 = vadd.f32 %v8717, %v9162
      %9164 = vmatprep.mubr.bf16.mxu0 0
      %9165 = vmatmul.mubr.bf16.gmra.mxu0 %v8877
      %v9166 = vpop.f32.mrf.mxu0
      %v9167 = vadd.f32 %v8713, %v9166
      %v9168 = vpop.f32.mrf.mxu0
      %v9169 = vadd.f32 %v8717, %v9168
      %v9170 = vpop.f32.mrf.mxu0
      %v9171 = vadd.f32 %v8713, %v9170
      %v9172 = vpop.f32.mrf.mxu0
      %v9173 = vadd.f32 %v8717, %v9172
      %9174 = vmatprep.mubr.bf16.mxu0 0
      %9175 = vmatmul.mubr.bf16.gmra.mxu0 %v8880
      %v9176 = vpop.f32.mrf.mxu0
      %v9177 = vadd.f32 %v8713, %v9176
      %v9178 = vpop.f32.mrf.mxu0
      %v9179 = vadd.f32 %v8717, %v9178
      %v9180 = vpop.f32.mrf.mxu0
      %v9181 = vadd.f32 %v8713, %v9180
      %v9182 = vpop.f32.mrf.mxu0
      %v9183 = vadd.f32 %v8717, %v9182
      %9184 = vmatprep.mubr.bf16.mxu0 0
      %9185 = vmatmul.mubr.bf16.gmra.mxu0 %v8883
      %v9186 = vpop.f32.mrf.mxu0
      %v9187 = vadd.f32 %v8713, %v9186
      %v9188 = vpop.f32.mrf.mxu0
      %v9189 = vadd.f32 %v8717, %v9188
      %v9190 = vpop.f32.mrf.mxu0
      %v9191 = vadd.f32 %v8713, %v9190
      %v9192 = vpop.f32.mrf.mxu0
      %v9193 = vadd.f32 %v8717, %v9192
      %9194 = vmatprep.mubr.bf16.mxu0 0
      %9195 = vmatmul.mubr.bf16.gmra.mxu0 %v8886
      %v9196 = vpop.f32.mrf.mxu0
      %v9197 = vadd.f32 %v8713, %v9196
      %v9198 = vpop.f32.mrf.mxu0
      %v9199 = vadd.f32 %v8717, %v9198
      %v9200 = vpop.f32.mrf.mxu0
      %v9201 = vadd.f32 %v8713, %v9200
      %v9202 = vpop.f32.mrf.mxu0
      %v9203 = vadd.f32 %v8717, %v9202
      %9204 = vmatprep.mubr.bf16.mxu0 0
      %9205 = vmatmul.mubr.bf16.gmra.mxu0 %v8889
      %v9206 = vpop.f32.mrf.mxu0
      %v9207 = vadd.f32 %v8713, %v9206
      %v9208 = vpop.f32.mrf.mxu0
      %v9209 = vadd.f32 %v8717, %v9208
      %v9210 = vpop.f32.mrf.mxu0
      %v9211 = vpop.f32.mrf.mxu0
      %9212 = vdwg.mxu0
      %9213 = vmatprep.subr.bf16.mxu0 0
      %9214 = vmatpush1.bf16.msra.mxu0 0
      %9215 = vmatprep.subr.bf16.mxu0 0
      %9216 = vmatpush1.bf16.msra.mxu0 0
      %9217 = vmatprep.subr.bf16.mxu0 0
      %9218 = vmatpush1.bf16.msra.mxu0 0
      %9219 = vmatprep.subr.bf16.mxu0 0
      %9220 = vmatpush1.bf16.msra.mxu0 0
      %9221 = vmatprep.subr.bf16.mxu0 %v8827
      %9222 = vmatpush1.bf16.msra.mxu0 %v8826
      %9223 = vmatprep.subr.bf16.mxu0 %v8821
      %9224 = vmatpush1.bf16.msra.mxu0 %v8820
      %9225 = vmatprep.subr.bf16.mxu0 %v8815
      %9226 = vmatpush1.bf16.msra.mxu0 %v8814
      %9227 = vmatprep.subr.bf16.mxu0 %v8809
      %9228 = vmatpush1.bf16.msra.mxu0 %v8808
      %9229 = vmatprep.subr.bf16.mxu0 0
      %9230 = vmatpush2.bf16.msra.mxu0 0
      %9231 = vmatprep.subr.bf16.mxu0 0
      %9232 = vmatpush2.bf16.msra.mxu0 0
      %9233 = vmatprep.subr.bf16.mxu0 0
      %9234 = vmatpush2.bf16.msra.mxu0 0
      %9235 = vmatprep.subr.bf16.mxu0 0
      %9236 = vmatpush2.bf16.msra.mxu0 0
      %9237 = vmatprep.subr.bf16.mxu0 0
      %9238 = vmatpush2.bf16.msra.mxu0 0
      %9239 = vmatprep.subr.bf16.mxu0 0
      %9240 = vmatpush2.bf16.msra.mxu0 0
      %9241 = vmatprep.subr.bf16.mxu0 0
      %9242 = vmatpush2.bf16.msra.mxu0 0
      %9243 = vmatprep.subr.bf16.mxu0 0
      %9244 = vmatpush2.bf16.msra.mxu0 0
      %9245 = vmatprep.mubr.bf16.mxu0 0
      %9246 = vmatmul.mubr.bf16.gmra.mxu0 %v8853
      %v9247 = vpop.f32.mrf.mxu0
      %v9248 = vadd.f32 %v8721, %v9247
      %v9249 = vpop.f32.mrf.mxu0
      %v9250 = vadd.f32 %v8725, %v9249
      %v9251 = vpop.f32.mrf.mxu0
      %v9252 = vadd.f32 %v8721, %v9251
      %v9253 = vpop.f32.mrf.mxu0
      %v9254 = vadd.f32 %v8725, %v9253
      %9255 = vmatprep.mubr.bf16.mxu0 0
      %9256 = vmatmul.mubr.bf16.gmra.mxu0 %v8856
      %v9257 = vpop.f32.mrf.mxu0
      %v9258 = vadd.f32 %v8721, %v9257
      %v9259 = vpop.f32.mrf.mxu0
      %v9260 = vadd.f32 %v8725, %v9259
      %v9261 = vpop.f32.mrf.mxu0
      %v9262 = vadd.f32 %v8721, %v9261
      %v9263 = vpop.f32.mrf.mxu0
      %v9264 = vadd.f32 %v8725, %v9263
      %9265 = vmatprep.mubr.bf16.mxu0 0
      %9266 = vmatmul.mubr.bf16.gmra.mxu0 %v8859
      %v9267 = vpop.f32.mrf.mxu0
      %v9268 = vadd.f32 %v8721, %v9267
      %v9269 = vpop.f32.mrf.mxu0
      %v9270 = vadd.f32 %v8725, %v9269
      %v9271 = vpop.f32.mrf.mxu0
      %v9272 = vadd.f32 %v8721, %v9271
      %v9273 = vpop.f32.mrf.mxu0
      %v9274 = vadd.f32 %v8725, %v9273
      %9275 = vmatprep.mubr.bf16.mxu0 0
      %9276 = vmatmul.mubr.bf16.gmra.mxu0 %v8862
      %v9277 = vpop.f32.mrf.mxu0
      %v9278 = vadd.f32 %v8721, %v9277
      %v9279 = vpop.f32.mrf.mxu0
      %v9280 = vadd.f32 %v8725, %v9279
      %v9281 = vpop.f32.mrf.mxu0
      %v9282 = vadd.f32 %v8721, %v9281
      %v9283 = vpop.f32.mrf.mxu0
      %v9284 = vadd.f32 %v8725, %v9283
      %9285 = vmatprep.mubr.bf16.mxu0 0
      %9286 = vmatmul.mubr.bf16.gmra.mxu0 %v8865
      %v9287 = vpop.f32.mrf.mxu0
      %v9288 = vadd.f32 %v8721, %v9287
      %v9289 = vpop.f32.mrf.mxu0
      %v9290 = vadd.f32 %v8725, %v9289
      %v9291 = vpop.f32.mrf.mxu0
      %v9292 = vadd.f32 %v8721, %v9291
      %v9293 = vpop.f32.mrf.mxu0
      %v9294 = vadd.f32 %v8725, %v9293
      %9295 = vmatprep.mubr.bf16.mxu0 0
      %9296 = vmatmul.mubr.bf16.gmra.mxu0 %v8868
      %v9297 = vpop.f32.mrf.mxu0
      %v9298 = vadd.f32 %v8721, %v9297
      %v9299 = vpop.f32.mrf.mxu0
      %v9300 = vadd.f32 %v8725, %v9299
      %v9301 = vpop.f32.mrf.mxu0
      %v9302 = vadd.f32 %v8721, %v9301
      %v9303 = vpop.f32.mrf.mxu0
      %v9304 = vadd.f32 %v8725, %v9303
      %9305 = vmatprep.mubr.bf16.mxu0 0
      %9306 = vmatmul.mubr.bf16.gmra.mxu0 %v8871
      %v9307 = vpop.f32.mrf.mxu0
      %v9308 = vadd.f32 %v8721, %v9307
      %v9309 = vpop.f32.mrf.mxu0
      %v9310 = vadd.f32 %v8725, %v9309
      %v9311 = vpop.f32.mrf.mxu0
      %v9312 = vadd.f32 %v8721, %v9311
      %v9313 = vpop.f32.mrf.mxu0
      %v9314 = vadd.f32 %v8725, %v9313
      %9315 = vmatprep.mubr.bf16.mxu0 0
      %9316 = vmatmul.mubr.bf16.gmra.mxu0 %v8874
      %v9317 = vpop.f32.mrf.mxu0
      %v9318 = vadd.f32 %v8721, %v9317
      %v9319 = vpop.f32.mrf.mxu0
      %v9320 = vadd.f32 %v8725, %v9319
      %v9321 = vpop.f32.mrf.mxu0
      %v9322 = vadd.f32 %v8721, %v9321
      %v9323 = vpop.f32.mrf.mxu0
      %v9324 = vadd.f32 %v8725, %v9323
      %9325 = vmatprep.mubr.bf16.mxu0 0
      %9326 = vmatmul.mubr.bf16.gmra.mxu0 %v8877
      %v9327 = vpop.f32.mrf.mxu0
      %v9328 = vadd.f32 %v8721, %v9327
      %v9329 = vpop.f32.mrf.mxu0
      %v9330 = vadd.f32 %v8725, %v9329
      %v9331 = vpop.f32.mrf.mxu0
      %v9332 = vadd.f32 %v8721, %v9331
      %v9333 = vpop.f32.mrf.mxu0
      %v9334 = vadd.f32 %v8725, %v9333
      %9335 = vmatprep.mubr.bf16.mxu0 0
      %9336 = vmatmul.mubr.bf16.gmra.mxu0 %v8880
      %v9337 = vpop.f32.mrf.mxu0
      %v9338 = vadd.f32 %v8721, %v9337
      %v9339 = vpop.f32.mrf.mxu0
      %v9340 = vadd.f32 %v8725, %v9339
      %v9341 = vpop.f32.mrf.mxu0
      %v9342 = vadd.f32 %v8721, %v9341
      %v9343 = vpop.f32.mrf.mxu0
      %v9344 = vadd.f32 %v8725, %v9343
      %9345 = vmatprep.mubr.bf16.mxu0 0
      %9346 = vmatmul.mubr.bf16.gmra.mxu0 %v8883
      %v9347 = vpop.f32.mrf.mxu0
      %v9348 = vadd.f32 %v8721, %v9347
      %v9349 = vpop.f32.mrf.mxu0
      %v9350 = vadd.f32 %v8725, %v9349
      %v9351 = vpop.f32.mrf.mxu0
      %v9352 = vadd.f32 %v8721, %v9351
      %v9353 = vpop.f32.mrf.mxu0
      %v9354 = vadd.f32 %v8725, %v9353
      %9355 = vmatprep.mubr.bf16.mxu0 0
      %9356 = vmatmul.mubr.bf16.gmra.mxu0 %v8886
      %v9357 = vpop.f32.mrf.mxu0
      %v9358 = vadd.f32 %v8721, %v9357
      %v9359 = vpop.f32.mrf.mxu0
      %v9360 = vadd.f32 %v8725, %v9359
      %v9361 = vpop.f32.mrf.mxu0
      %v9362 = vadd.f32 %v8721, %v9361
      %v9363 = vpop.f32.mrf.mxu0
      %v9364 = vadd.f32 %v8725, %v9363
      %9365 = vmatprep.mubr.bf16.mxu0 0
      %9366 = vmatmul.mubr.bf16.gmra.mxu0 %v8889
      %v9367 = vpop.f32.mrf.mxu0
      %v9368 = vadd.f32 %v8721, %v9367
      %v9369 = vpop.f32.mrf.mxu0
      %v9370 = vadd.f32 %v8725, %v9369
      %v9371 = vpop.f32.mrf.mxu0
      %v9372 = vpop.f32.mrf.mxu0
      %9373 = vdwg.mxu0
      %v9374 = vmul.f32 %v8508, -1.702
      %v9375 = vmul.f32 %v9374, 1.442695
      %v9376 = vpow.pop %v9375
      %v9377 = vadd.f32 %v9376, 1.0
      %v9378 = vrcp.pop %v9377
      %v9379 = vmul.f32 %v8508, %v9378
      %v9380 = vpack.c.bf16 %v9379, %v9379
      %v9382 = vsel %vm8429, %v9380, 0
      %9384 = vmatprep.subr.bf16.mxu0 0
      %9385 = vmatpush1.bf16.msra.mxu0 0
      %9386 = vmatprep.subr.bf16.mxu0 0
      %9387 = vmatpush1.bf16.msra.mxu0 0
      %9388 = vmatprep.subr.bf16.mxu0 0
      %9389 = vmatpush1.bf16.msra.mxu0 0
      %9390 = vmatprep.subr.bf16.mxu0 0
      %9391 = vmatpush1.bf16.msra.mxu0 0
      %9392 = vmatprep.subr.bf16.mxu0 %v8823
      %9393 = vmatpush1.bf16.msra.mxu0 %v8822
      %9394 = vmatprep.subr.bf16.mxu0 %v8817
      %9395 = vmatpush1.bf16.msra.mxu0 %v8816
      %9396 = vmatprep.subr.bf16.mxu0 %v8811
      %9397 = vmatpush1.bf16.msra.mxu0 %v8810
      %9398 = vmatprep.subr.bf16.mxu0 %v8805
      %9399 = vmatpush1.bf16.msra.mxu0 %v8804
      %9400 = vmatprep.subr.bf16.mxu0 0
      %9401 = vmatpush2.bf16.msra.mxu0 0
      %9402 = vmatprep.subr.bf16.mxu0 0
      %9403 = vmatpush2.bf16.msra.mxu0 0
      %9404 = vmatprep.subr.bf16.mxu0 0
      %9405 = vmatpush2.bf16.msra.mxu0 0
      %9406 = vmatprep.subr.bf16.mxu0 0
      %9407 = vmatpush2.bf16.msra.mxu0 0
      %9408 = vmatprep.subr.bf16.mxu0 0
      %9409 = vmatpush2.bf16.msra.mxu0 0
      %9410 = vmatprep.subr.bf16.mxu0 0
      %9411 = vmatpush2.bf16.msra.mxu0 0
      %9412 = vmatprep.subr.bf16.mxu0 0
      %9413 = vmatpush2.bf16.msra.mxu0 0
      %9414 = vmatprep.subr.bf16.mxu0 0
      %9415 = vmatpush2.bf16.msra.mxu0 0
      %9416 = vmatprep.mubr.bf16.mxu0 0
      %9417 = vmatmul.mubr.bf16.gmra.mxu0 %v9382
      %v9418 = vpop.f32.mrf.mxu0
      %v9419 = vadd.f32 %v8705, %v9418
      %v9420 = vpop.f32.mrf.mxu0
      %v9421 = vadd.f32 %v8709, %v9420
      %v9422 = vpop.f32.mrf.mxu0
      %v9423 = vpop.f32.mrf.mxu0
      %9424 = vdwg.mxu0
      %9425 = vmatprep.subr.bf16.mxu0 0
      %9426 = vmatpush1.bf16.msra.mxu0 0
      %9427 = vmatprep.subr.bf16.mxu0 0
      %9428 = vmatpush1.bf16.msra.mxu0 0
      %9429 = vmatprep.subr.bf16.mxu0 0
      %9430 = vmatpush1.bf16.msra.mxu0 0
      %9431 = vmatprep.subr.bf16.mxu0 0
      %9432 = vmatpush1.bf16.msra.mxu0 0
      %9433 = vmatprep.subr.bf16.mxu0 %v8825
      %9434 = vmatpush1.bf16.msra.mxu0 %v8824
      %9435 = vmatprep.subr.bf16.mxu0 %v8819
      %9436 = vmatpush1.bf16.msra.mxu0 %v8818
      %9437 = vmatprep.subr.bf16.mxu0 %v8813
      %9438 = vmatpush1.bf16.msra.mxu0 %v8812
      %9439 = vmatprep.subr.bf16.mxu0 %v8807
      %9440 = vmatpush1.bf16.msra.mxu0 %v8806
      %9441 = vmatprep.subr.bf16.mxu0 0
      %9442 = vmatpush2.bf16.msra.mxu0 0
      %9443 = vmatprep.subr.bf16.mxu0 0
      %9444 = vmatpush2.bf16.msra.mxu0 0
      %9445 = vmatprep.subr.bf16.mxu0 0
      %9446 = vmatpush2.bf16.msra.mxu0 0
      %9447 = vmatprep.subr.bf16.mxu0 0
      %9448 = vmatpush2.bf16.msra.mxu0 0
      %9449 = vmatprep.subr.bf16.mxu0 0
      %9450 = vmatpush2.bf16.msra.mxu0 0
      %9451 = vmatprep.subr.bf16.mxu0 0
      %9452 = vmatpush2.bf16.msra.mxu0 0
      %9453 = vmatprep.subr.bf16.mxu0 0
      %9454 = vmatpush2.bf16.msra.mxu0 0
      %9455 = vmatprep.subr.bf16.mxu0 0
      %9456 = vmatpush2.bf16.msra.mxu0 0
      %9457 = vmatprep.mubr.bf16.mxu0 0
      %9458 = vmatmul.mubr.bf16.gmra.mxu0 %v9382
      %v9459 = vpop.f32.mrf.mxu0
      %v9460 = vadd.f32 %v8713, %v9459
      %v9461 = vpop.f32.mrf.mxu0
      %v9462 = vadd.f32 %v8717, %v9461
      %v9463 = vpop.f32.mrf.mxu0
      %v9464 = vpop.f32.mrf.mxu0
      %9465 = vdwg.mxu0
      %9466 = vmatprep.subr.bf16.mxu0 0
      %9467 = vmatpush1.bf16.msra.mxu0 0
      %9468 = vmatprep.subr.bf16.mxu0 0
      %9469 = vmatpush1.bf16.msra.mxu0 0
      %9470 = vmatprep.subr.bf16.mxu0 0
      %9471 = vmatpush1.bf16.msra.mxu0 0
      %9472 = vmatprep.subr.bf16.mxu0 0
      %9473 = vmatpush1.bf16.msra.mxu0 0
      %9474 = vmatprep.subr.bf16.mxu0 %v8827
      %9475 = vmatpush1.bf16.msra.mxu0 %v8826
      %9476 = vmatprep.subr.bf16.mxu0 %v8821
      %9477 = vmatpush1.bf16.msra.mxu0 %v8820
      %9478 = vmatprep.subr.bf16.mxu0 %v8815
      %9479 = vmatpush1.bf16.msra.mxu0 %v8814
      %9480 = vmatprep.subr.bf16.mxu0 %v8809
      %9481 = vmatpush1.bf16.msra.mxu0 %v8808
      %9482 = vmatprep.subr.bf16.mxu0 0
      %9483 = vmatpush2.bf16.msra.mxu0 0
      %9484 = vmatprep.subr.bf16.mxu0 0
      %9485 = vmatpush2.bf16.msra.mxu0 0
      %9486 = vmatprep.subr.bf16.mxu0 0
      %9487 = vmatpush2.bf16.msra.mxu0 0
      %9488 = vmatprep.subr.bf16.mxu0 0
      %9489 = vmatpush2.bf16.msra.mxu0 0
      %9490 = vmatprep.subr.bf16.mxu0 0
      %9491 = vmatpush2.bf16.msra.mxu0 0
      %9492 = vmatprep.subr.bf16.mxu0 0
      %9493 = vmatpush2.bf16.msra.mxu0 0
      %9494 = vmatprep.subr.bf16.mxu0 0
      %9495 = vmatpush2.bf16.msra.mxu0 0
      %9496 = vmatprep.subr.bf16.mxu0 0
      %9497 = vmatpush2.bf16.msra.mxu0 0
      %9498 = vmatprep.mubr.bf16.mxu0 0
      %9499 = vmatmul.mubr.bf16.gmra.mxu0 %v9382
      %v9500 = vpop.f32.mrf.mxu0
      %v9501 = vadd.f32 %v8721, %v9500
      %v9502 = vpop.f32.mrf.mxu0
      %v9503 = vadd.f32 %v8725, %v9502
      %v9504 = vpop.f32.mrf.mxu0
      %v9505 = vpop.f32.mrf.mxu0
      %9506 = vdwg.mxu0
      %v9513 = vcombine.low %v9419, %v9421
      %v9514 = vcombine.low %v9460, %v9462
      %v9515 = vcombine.low %v9501, %v9503
      %v9517 = vunpack.c.l.s4 1966171168
      %v9518 = vunpack.c.0.s8 %v9517
      %v9519 = vlaneseq
      %v9520 = vshrl.u32 %v9519, 7
      %v9521 = vsub.s32 %v9518, %v9520
      %v9522 = vrot.slane %v9513, %v9521
      %v9524 = vunpack.c.l.s4 1966171168
      %v9525 = vunpack.c.0.s8 %v9524
      %v9526 = vlaneseq
      %v9527 = vshrl.u32 %v9526, 7
      %v9528 = vsub.s32 %v9525, %v9527
      %v9529 = vrot.slane %v9514, %v9528
      %v9531 = vunpack.c.l.s4 1966171168
      %v9532 = vunpack.c.0.s8 %v9531
      %v9533 = vlaneseq
      %v9534 = vshrl.u32 %v9533, 7
      %v9535 = vsub.s32 %v9532, %v9534
      %v9536 = vrot.slane %v9515, %v9535
      %v9537 = vcombine.low %v9522, %v9529
      %v9539 = vunpack.c.l.s4 1966171168
      %v9540 = vunpack.c.0.s8 %v9539
      %v9541 = vlaneseq
      %v9542 = vshrl.u32 %v9541, 7
      %v9543 = vsub.s32 %v9540, %v9542
      %v9544 = vrot.slane %v9537, %v9543
      %v9546 = vunpack.c.l.s4 1966171168
      %v9547 = vunpack.c.0.s8 %v9546
      %v9548 = vlaneseq
      %v9549 = vshrl.u32 %v9548, 7
      %v9550 = vsub.s32 %v9547, %v9549
      %v9551 = vrot.slane %v9536, %v9550
      %v9552 = vcombine.low %v9544, %v9551
      %v9554 = vlaneseq
      %vm9555 = vcmp.ge.s32.totalorder %v9554, 0
      %vm9556 = vcmp.lt.s32.totalorder %v9554, 768
      %vm9557 = vmand %vm9555, %vm9556
      %9558 = vst.msk [vmem:[%s251] ss:$8 sm:$0xf] %vm9557, %v9552
      %9559 = vst.msk [vmem:[%s251] ss:$8 sm:$0x30] %vm9557, %v9552
      %vm9710 = vcmask 1040384
      %v9711 = vrot.slane %v8926, 7
      %v9712 = vrot.slane %v8928, 7
      %v9713 = vrot.slane %v9087, 7
      %v9714 = vrot.slane %v9089, 7
      %v9715 = vrot.slane %v9248, 7
      %v9716 = vrot.slane %v9250, 7
      %v9717 = vrot.slane %v8930, 7
      %v9718 = vsel %vm9710, %v9711, %v9717
      %v9719 = vrot.slane %v8932, 7
      %v9720 = vsel %vm9710, %v9712, %v9719
      %v9721 = vrot.slane %v9091, 7
      %v9722 = vsel %vm9710, %v9713, %v9721
      %v9723 = vrot.slane %v9093, 7
      %v9724 = vsel %vm9710, %v9714, %v9723
      %v9725 = vrot.slane %v9252, 7
      %v9726 = vsel %vm9710, %v9715, %v9725
      %v9727 = vrot.slane %v9254, 7
      %v9728 = vsel %vm9710, %v9716, %v9727
      %v9729 = vrot.slane %v8936, 7
      %v9730 = vsel %vm9710, %v9717, %v9729
      %v9731 = vrot.slane %v8938, 7
      %v9732 = vsel %vm9710, %v9719, %v9731
      %v9733 = vrot.slane %v9097, 7
      %v9734 = vsel %vm9710, %v9721, %v9733
      %v9735 = vrot.slane %v9099, 7
      %v9736 = vsel %vm9710, %v9723, %v9735
      %v9737 = vrot.slane %v9258, 7
      %v9738 = vsel %vm9710, %v9725, %v9737
      %v9739 = vrot.slane %v9260, 7
      %v9740 = vsel %vm9710, %v9727, %v9739
      %v9741 = vrot.slane %v8940, 7
      %v9742 = vsel %vm9710, %v9729, %v9741
      %v9743 = vrot.slane %v8942, 7
      %v9744 = vsel %vm9710, %v9731, %v9743
      %v9745 = vrot.slane %v9101, 7
      %v9746 = vsel %vm9710, %v9733, %v9745
      %v9747 = vrot.slane %v9103, 7
      %v9748 = vsel %vm9710, %v9735, %v9747
      %v9749 = vrot.slane %v9262, 7
      %v9750 = vsel %vm9710, %v9737, %v9749
      %v9751 = vrot.slane %v9264, 7
      %v9752 = vsel %vm9710, %v9739, %v9751
      %v9753 = vrot.slane %v8946, 7
      %v9754 = vsel %vm9710, %v9741, %v9753
      %v9755 = vrot.slane %v8948, 7
      %v9756 = vsel %vm9710, %v9743, %v9755
      %v9757 = vrot.slane %v9107, 7
      %v9758 = vsel %vm9710, %v9745, %v9757
      %v9759 = vrot.slane %v9109, 7
      %v9760 = vsel %vm9710, %v9747, %v9759
      %v9761 = vrot.slane %v9268, 7
      %v9762 = vsel %vm9710, %v9749, %v9761
      %v9763 = vrot.slane %v9270, 7
      %v9764 = vsel %vm9710, %v9751, %v9763
      %v9765 = vrot.slane %v8950, 7
      %v9766 = vsel %vm9710, %v9753, %v9765
      %v9767 = vrot.slane %v8952, 7
      %v9768 = vsel %vm9710, %v9755, %v9767
      %v9769 = vrot.slane %v9111, 7
      %v9770 = vsel %vm9710, %v9757, %v9769
      %v9771 = vrot.slane %v9113, 7
      %v9772 = vsel %vm9710, %v9759, %v9771
      %v9773 = vrot.slane %v9272, 7
      %v9774 = vsel %vm9710, %v9761, %v9773
      %v9775 = vrot.slane %v9274, 7
      %v9776 = vsel %vm9710, %v9763, %v9775
      %v9777 = vrot.slane %v8956, 7
      %v9778 = vsel %vm9710, %v9765, %v9777
      %v9779 = vrot.slane %v8958, 7
      %v9780 = vsel %vm9710, %v9767, %v9779
      %v9781 = vrot.slane %v9117, 7
      %v9782 = vsel %vm9710, %v9769, %v9781
      %v9783 = vrot.slane %v9119, 7
      %v9784 = vsel %vm9710, %v9771, %v9783
      %v9785 = vrot.slane %v9278, 7
      %v9786 = vsel %vm9710, %v9773, %v9785
      %v9787 = vrot.slane %v9280, 7
      %v9788 = vsel %vm9710, %v9775, %v9787
      %v9789 = vrot.slane %v8960, 7
      %v9790 = vsel %vm9710, %v9777, %v9789
      %v9791 = vrot.slane %v8962, 7
      %v9792 = vsel %vm9710, %v9779, %v9791
      %v9793 = vrot.slane %v9121, 7
      %v9794 = vsel %vm9710, %v9781, %v9793
      %v9795 = vrot.slane %v9123, 7
      %v9796 = vsel %vm9710, %v9783, %v9795
      %v9797 = vrot.slane %v9282, 7
      %v9798 = vsel %vm9710, %v9785, %v9797
      %v9799 = vrot.slane %v9284, 7
      %v9800 = vsel %vm9710, %v9787, %v9799
      %v9801 = vrot.slane %v8966, 7
      %v9802 = vsel %vm9710, %v9789, %v9801
      %v9803 = vrot.slane %v8968, 7
      %v9804 = vsel %vm9710, %v9791, %v9803
      %v9805 = vrot.slane %v9127, 7
      %v9806 = vsel %vm9710, %v9793, %v9805
      %v9807 = vrot.slane %v9129, 7
      %v9808 = vsel %vm9710, %v9795, %v9807
      %v9809 = vrot.slane %v9288, 7
      %v9810 = vsel %vm9710, %v9797, %v9809
      %v9811 = vrot.slane %v9290, 7
      %v9812 = vsel %vm9710, %v9799, %v9811
      %v9813 = vrot.slane %v8970, 7
      %v9814 = vsel %vm9710, %v9801, %v9813
      %v9815 = vrot.slane %v8972, 7
      %v9816 = vsel %vm9710, %v9803, %v9815
      %v9817 = vrot.slane %v9131, 7
      %v9818 = vsel %vm9710, %v9805, %v9817
      %v9819 = vrot.slane %v9133, 7
      %v9820 = vsel %vm9710, %v9807, %v9819
      %v9821 = vrot.slane %v9292, 7
      %v9822 = vsel %vm9710, %v9809, %v9821
      %v9823 = vrot.slane %v9294, 7
      %v9824 = vsel %vm9710, %v9811, %v9823
      %v9825 = vrot.slane %v8976, 7
      %v9826 = vsel %vm9710, %v9813, %v9825
      %v9827 = vrot.slane %v8978, 7
      %v9828 = vsel %vm9710, %v9815, %v9827
      %v9829 = vrot.slane %v9137, 7
      %v9830 = vsel %vm9710, %v9817, %v9829
      %v9831 = vrot.slane %v9139, 7
      %v9832 = vsel %vm9710, %v9819, %v9831
      %v9833 = vrot.slane %v9298, 7
      %v9834 = vsel %vm9710, %v9821, %v9833
      %v9835 = vrot.slane %v9300, 7
      %v9836 = vsel %vm9710, %v9823, %v9835
      %v9837 = vrot.slane %v8980, 7
      %v9838 = vsel %vm9710, %v9825, %v9837
      %v9839 = vrot.slane %v8982, 7
      %v9840 = vsel %vm9710, %v9827, %v9839
      %v9841 = vrot.slane %v9141, 7
      %v9842 = vsel %vm9710, %v9829, %v9841
      %v9843 = vrot.slane %v9143, 7
      %v9844 = vsel %vm9710, %v9831, %v9843
      %v9845 = vrot.slane %v9302, 7
      %v9846 = vsel %vm9710, %v9833, %v9845
      %v9847 = vrot.slane %v9304, 7
      %v9848 = vsel %vm9710, %v9835, %v9847
      %v9849 = vrot.slane %v8986, 7
      %v9850 = vsel %vm9710, %v9837, %v9849
      %v9851 = vrot.slane %v8988, 7
      %v9852 = vsel %vm9710, %v9839, %v9851
      %v9853 = vrot.slane %v9147, 7
      %v9854 = vsel %vm9710, %v9841, %v9853
      %v9855 = vrot.slane %v9149, 7
      %v9856 = vsel %vm9710, %v9843, %v9855
      %v9857 = vrot.slane %v9308, 7
      %v9858 = vsel %vm9710, %v9845, %v9857
      %v9859 = vrot.slane %v9310, 7
      %v9860 = vsel %vm9710, %v9847, %v9859
      %v9861 = vrot.slane %v8990, 7
      %v9862 = vsel %vm9710, %v9849, %v9861
      %v9863 = vrot.slane %v8992, 7
      %v9864 = vsel %vm9710, %v9851, %v9863
      %v9865 = vrot.slane %v9151, 7
      %v9866 = vsel %vm9710, %v9853, %v9865
      %v9867 = vrot.slane %v9153, 7
      %v9868 = vsel %vm9710, %v9855, %v9867
      %v9869 = vrot.slane %v9312, 7
      %v9870 = vsel %vm9710, %v9857, %v9869
      %v9871 = vrot.slane %v9314, 7
      %v9872 = vsel %vm9710, %v9859, %v9871
      %v9873 = vrot.slane %v8996, 7
      %v9874 = vsel %vm9710, %v9861, %v9873
      %v9875 = vrot.slane %v8998, 7
      %v9876 = vsel %vm9710, %v9863, %v9875
      %v9877 = vrot.slane %v9157, 7
      %v9878 = vsel %vm9710, %v9865, %v9877
      %v9879 = vrot.slane %v9159, 7
      %v9880 = vsel %vm9710, %v9867, %v9879
      %v9881 = vrot.slane %v9318, 7
      %v9882 = vsel %vm9710, %v9869, %v9881
      %v9883 = vrot.slane %v9320, 7
      %v9884 = vsel %vm9710, %v9871, %v9883
      %v9885 = vrot.slane %v9000, 7
      %v9886 = vsel %vm9710, %v9873, %v9885
      %v9887 = vrot.slane %v9002, 7
      %v9888 = vsel %vm9710, %v9875, %v9887
      %v9889 = vrot.slane %v9161, 7
      %v9890 = vsel %vm9710, %v9877, %v9889
      %v9891 = vrot.slane %v9163, 7
      %v9892 = vsel %vm9710, %v9879, %v9891
      %v9893 = vrot.slane %v9322, 7
      %v9894 = vsel %vm9710, %v9881, %v9893
      %v9895 = vrot.slane %v9324, 7
      %v9896 = vsel %vm9710, %v9883, %v9895
      %v9897 = vrot.slane %v9006, 7
      %v9898 = vsel %vm9710, %v9885, %v9897
      %v9899 = vrot.slane %v9008, 7
      %v9900 = vsel %vm9710, %v9887, %v9899
      %v9901 = vrot.slane %v9167, 7
      %v9902 = vsel %vm9710, %v9889, %v9901
      %v9903 = vrot.slane %v9169, 7
      %v9904 = vsel %vm9710, %v9891, %v9903
      %v9905 = vrot.slane %v9328, 7
      %v9906 = vsel %vm9710, %v9893, %v9905
      %v9907 = vrot.slane %v9330, 7
      %v9908 = vsel %vm9710, %v9895, %v9907
      %v9909 = vrot.slane %v9010, 7
      %v9910 = vsel %vm9710, %v9897, %v9909
      %v9911 = vrot.slane %v9012, 7
      %v9912 = vsel %vm9710, %v9899, %v9911
      %v9913 = vrot.slane %v9171, 7
      %v9914 = vsel %vm9710, %v9901, %v9913
      %v9915 = vrot.slane %v9173, 7
      %v9916 = vsel %vm9710, %v9903, %v9915
      %v9917 = vrot.slane %v9332, 7
      %v9918 = vsel %vm9710, %v9905, %v9917
      %v9919 = vrot.slane %v9334, 7
      %v9920 = vsel %vm9710, %v9907, %v9919
      %v9921 = vrot.slane %v9016, 7
      %v9922 = vsel %vm9710, %v9909, %v9921
      %v9923 = vrot.slane %v9018, 7
      %v9924 = vsel %vm9710, %v9911, %v9923
      %v9925 = vrot.slane %v9177, 7
      %v9926 = vsel %vm9710, %v9913, %v9925
      %v9927 = vrot.slane %v9179, 7
      %v9928 = vsel %vm9710, %v9915, %v9927
      %v9929 = vrot.slane %v9338, 7
      %v9930 = vsel %vm9710, %v9917, %v9929
      %v9931 = vrot.slane %v9340, 7
      %v9932 = vsel %vm9710, %v9919, %v9931
      %v9933 = vrot.slane %v9020, 7
      %v9934 = vsel %vm9710, %v9921, %v9933
      %v9935 = vrot.slane %v9022, 7
      %v9936 = vsel %vm9710, %v9923, %v9935
      %v9937 = vrot.slane %v9181, 7
      %v9938 = vsel %vm9710, %v9925, %v9937
      %v9939 = vrot.slane %v9183, 7
      %v9940 = vsel %vm9710, %v9927, %v9939
      %v9941 = vrot.slane %v9342, 7
      %v9942 = vsel %vm9710, %v9929, %v9941
      %v9943 = vrot.slane %v9344, 7
      %v9944 = vsel %vm9710, %v9931, %v9943
      %v9945 = vrot.slane %v9026, 7
      %v9946 = vsel %vm9710, %v9933, %v9945
      %v9947 = vrot.slane %v9028, 7
      %v9948 = vsel %vm9710, %v9935, %v9947
      %v9949 = vrot.slane %v9187, 7
      %v9950 = vsel %vm9710, %v9937, %v9949
      %v9951 = vrot.slane %v9189, 7
      %v9952 = vsel %vm9710, %v9939, %v9951
      %v9953 = vrot.slane %v9348, 7
      %v9954 = vsel %vm9710, %v9941, %v9953
      %v9955 = vrot.slane %v9350, 7
      %v9956 = vsel %vm9710, %v9943, %v9955
      %v9957 = vrot.slane %v9030, 7
      %v9958 = vsel %vm9710, %v9945, %v9957
      %v9959 = vrot.slane %v9032, 7
      %v9960 = vsel %vm9710, %v9947, %v9959
      %v9961 = vrot.slane %v9191, 7
      %v9962 = vsel %vm9710, %v9949, %v9961
      %v9963 = vrot.slane %v9193, 7
      %v9964 = vsel %vm9710, %v9951, %v9963
      %v9965 = vrot.slane %v9352, 7
      %v9966 = vsel %vm9710, %v9953, %v9965
      %v9967 = vrot.slane %v9354, 7
      %v9968 = vsel %vm9710, %v9955, %v9967
      %v9969 = vrot.slane %v9036, 7
      %v9970 = vsel %vm9710, %v9957, %v9969
      %v9971 = vrot.slane %v9038, 7
      %v9972 = vsel %vm9710, %v9959, %v9971
      %v9973 = vrot.slane %v9197, 7
      %v9974 = vsel %vm9710, %v9961, %v9973
      %v9975 = vrot.slane %v9199, 7
      %v9976 = vsel %vm9710, %v9963, %v9975
      %v9977 = vrot.slane %v9358, 7
      %v9978 = vsel %vm9710, %v9965, %v9977
      %v9979 = vrot.slane %v9360, 7
      %v9980 = vsel %vm9710, %v9967, %v9979
      %v9981 = vrot.slane %v9040, 7
      %v9982 = vsel %vm9710, %v9969, %v9981
      %v9983 = vrot.slane %v9042, 7
      %v9984 = vsel %vm9710, %v9971, %v9983
      %v9985 = vrot.slane %v9201, 7
      %v9986 = vsel %vm9710, %v9973, %v9985
      %v9987 = vrot.slane %v9203, 7
      %v9988 = vsel %vm9710, %v9975, %v9987
      %v9989 = vrot.slane %v9362, 7
      %v9990 = vsel %vm9710, %v9977, %v9989
      %v9991 = vrot.slane %v9364, 7
      %v9992 = vsel %vm9710, %v9979, %v9991
      %v9993 = vrot.slane %v9046, 7
      %v9994 = vsel %vm9710, %v9981, %v9993
      %v9995 = vrot.slane %v9048, 7
      %v9996 = vsel %vm9710, %v9983, %v9995
      %v9997 = vrot.slane %v9207, 7
      %v9998 = vsel %vm9710, %v9985, %v9997
      %v9999 = vrot.slane %v9209, 7
      %v10000 = vsel %vm9710, %v9987, %v9999
      %v10001 = vrot.slane %v9368, 7
      %v10002 = vsel %vm9710, %v9989, %v10001
      %v10003 = vrot.slane %v9370, 7
      %v10004 = vsel %vm9710, %v9991, %v10003
      %10155 = vst [vmem:[%s251] sm:$0xfe] %v9711
      %10156 = vst [vmem:[%s251 + $0x8] sm:$0xfe] %v9712
      %10157 = vst [vmem:[%s251 + $0x10] sm:$0xfe] %v9713
      %10158 = vst [vmem:[%s251 + $0x18] sm:$0xfe] %v9714
      %10159 = vst [vmem:[%s251 + $0x20] sm:$0xfe] %v9715
      %10160 = vst [vmem:[%s251 + $0x28] sm:$0xfe] %v9716
      %10161 = vst [vmem:[%s251 + $0x30] sm:$0xff] %v9718
      %10162 = vst [vmem:[%s251 + $0x38] sm:$0xff] %v9720
      %10163 = vst [vmem:[%s251 + $0x40] sm:$0xff] %v9722
      %10164 = vst [vmem:[%s251 + $0x48] sm:$0xff] %v9724
      %10165 = vst [vmem:[%s251 + $0x50] sm:$0xff] %v9726
      %10166 = vst [vmem:[%s251 + $0x58] sm:$0xff] %v9728
      %10167 = vst [vmem:[%s251 + $0x60] sm:$0xff] %v9730
      %10168 = vst [vmem:[%s251 + $0x68] sm:$0xff] %v9732
      %10169 = vst [vmem:[%s251 + $0x70] sm:$0xff] %v9734
      %10170 = vst [vmem:[%s251 + $0x78] sm:$0xff] %v9736
      %10171 = vst [vmem:[%s251 + $0x80] sm:$0xff] %v9738
      %10172 = vst [vmem:[%s251 + $0x88] sm:$0xff] %v9740
      %10173 = vst [vmem:[%s251 + $0x90] sm:$0xff] %v9742
      %10174 = vst [vmem:[%s251 + $0x98] sm:$0xff] %v9744
      %10175 = vst [vmem:[%s251 + $0xa0] sm:$0xff] %v9746
      %10176 = vst [vmem:[%s251 + $0xa8] sm:$0xff] %v9748
      %10177 = vst [vmem:[%s251 + $0xb0] sm:$0xff] %v9750
      %10178 = vst [vmem:[%s251 + $0xb8] sm:$0xff] %v9752
      %10179 = vst [vmem:[%s251 + $0xc0] sm:$0xff] %v9754
      %10180 = vst [vmem:[%s251 + $0xc8] sm:$0xff] %v9756
      %10181 = vst [vmem:[%s251 + $0xd0] sm:$0xff] %v9758
      %10182 = vst [vmem:[%s251 + $0xd8] sm:$0xff] %v9760
      %10183 = vst [vmem:[%s251 + $0xe0] sm:$0xff] %v9762
      %10184 = vst [vmem:[%s251 + $0xe8] sm:$0xff] %v9764
      %10185 = vst [vmem:[%s251 + $0xf0] sm:$0xff] %v9766
      %10186 = vst [vmem:[%s251 + $0xf8] sm:$0xff] %v9768
      %10187 = vst [vmem:[%s251 + $0x100] sm:$0xff] %v9770
      %10188 = vst [vmem:[%s251 + $0x108] sm:$0xff] %v9772
      %10189 = vst [vmem:[%s251 + $0x110] sm:$0xff] %v9774
      %10190 = vst [vmem:[%s251 + $0x118] sm:$0xff] %v9776
      %10191 = vst [vmem:[%s251 + $0x120] sm:$0xff] %v9778
      %10192 = vst [vmem:[%s251 + $0x128] sm:$0xff] %v9780
      %10193 = vst [vmem:[%s251 + $0x130] sm:$0xff] %v9782
      %10194 = vst [vmem:[%s251 + $0x138] sm:$0xff] %v9784
      %10195 = vst [vmem:[%s251 + $0x140] sm:$0xff] %v9786
      %10196 = vst [vmem:[%s251 + $0x148] sm:$0xff] %v9788
      %10197 = vst [vmem:[%s251 + $0x150] sm:$0xff] %v9790
      %10198 = vst [vmem:[%s251 + $0x158] sm:$0xff] %v9792
      %10199 = vst [vmem:[%s251 + $0x160] sm:$0xff] %v9794
      %10200 = vst [vmem:[%s251 + $0x168] sm:$0xff] %v9796
      %10201 = vst [vmem:[%s251 + $0x170] sm:$0xff] %v9798
      %10202 = vst [vmem:[%s251 + $0x178] sm:$0xff] %v9800
      %10203 = vst [vmem:[%s251 + $0x180] sm:$0xff] %v9802
      %10204 = vst [vmem:[%s251 + $0x188] sm:$0xff] %v9804
      %10205 = vst [vmem:[%s251 + $0x190] sm:$0xff] %v9806
      %10206 = vst [vmem:[%s251 + $0x198] sm:$0xff] %v9808
      %10207 = vst [vmem:[%s251 + $0x1a0] sm:$0xff] %v9810
      %10208 = vst [vmem:[%s251 + $0x1a8] sm:$0xff] %v9812
      %10209 = vst [vmem:[%s251 + $0x1b0] sm:$0xff] %v9814
      %10210 = vst [vmem:[%s251 + $0x1b8] sm:$0xff] %v9816
      %10211 = vst [vmem:[%s251 + $0x1c0] sm:$0xff] %v9818
      %10212 = vst [vmem:[%s251 + $0x1c8] sm:$0xff] %v9820
      %10213 = vst [vmem:[%s251 + $0x1d0] sm:$0xff] %v9822
      %10214 = vst [vmem:[%s251 + $0x1d8] sm:$0xff] %v9824
      %10215 = vst [vmem:[%s251 + $0x1e0] sm:$0xff] %v9826
      %10216 = vst [vmem:[%s251 + $0x1e8] sm:$0xff] %v9828
      %10217 = vst [vmem:[%s251 + $0x1f0] sm:$0xff] %v9830
      %10218 = vst [vmem:[%s251 + $0x1f8] sm:$0xff] %v9832
      %10219 = vst [vmem:[%s251 + $0x200] sm:$0xff] %v9834
      %10220 = vst [vmem:[%s251 + $0x208] sm:$0xff] %v9836
      %10221 = vst [vmem:[%s251 + $0x210] sm:$0xff] %v9838
      %10222 = vst [vmem:[%s251 + $0x218] sm:$0xff] %v9840
      %10223 = vst [vmem:[%s251 + $0x220] sm:$0xff] %v9842
      %10224 = vst [vmem:[%s251 + $0x228] sm:$0xff] %v9844
      %10225 = vst [vmem:[%s251 + $0x230] sm:$0xff] %v9846
      %10226 = vst [vmem:[%s251 + $0x238] sm:$0xff] %v9848
      %10227 = vst [vmem:[%s251 + $0x240] sm:$0xff] %v9850
      %10228 = vst [vmem:[%s251 + $0x248] sm:$0xff] %v9852
      %10229 = vst [vmem:[%s251 + $0x250] sm:$0xff] %v9854
      %10230 = vst [vmem:[%s251 + $0x258] sm:$0xff] %v9856
      %10231 = vst [vmem:[%s251 + $0x260] sm:$0xff] %v9858
      %10232 = vst [vmem:[%s251 + $0x268] sm:$0xff] %v9860
      %10233 = vst [vmem:[%s251 + $0x270] sm:$0xff] %v9862
      %10234 = vst [vmem:[%s251 + $0x278] sm:$0xff] %v9864
      %10235 = vst [vmem:[%s251 + $0x280] sm:$0xff] %v9866
      %10236 = vst [vmem:[%s251 + $0x288] sm:$0xff] %v9868
      %10237 = vst [vmem:[%s251 + $0x290] sm:$0xff] %v9870
      %10238 = vst [vmem:[%s251 + $0x298] sm:$0xff] %v9872
      %10239 = vst [vmem:[%s251 + $0x2a0] sm:$0xff] %v9874
      %10240 = vst [vmem:[%s251 + $0x2a8] sm:$0xff] %v9876
      %10241 = vst [vmem:[%s251 + $0x2b0] sm:$0xff] %v9878
      %10242 = vst [vmem:[%s251 + $0x2b8] sm:$0xff] %v9880
      %10243 = vst [vmem:[%s251 + $0x2c0] sm:$0xff] %v9882
      %10244 = vst [vmem:[%s251 + $0x2c8] sm:$0xff] %v9884
      %10245 = vst [vmem:[%s251 + $0x2d0] sm:$0xff] %v9886
      %10246 = vst [vmem:[%s251 + $0x2d8] sm:$0xff] %v9888
      %10247 = vst [vmem:[%s251 + $0x2e0] sm:$0xff] %v9890
      %10248 = vst [vmem:[%s251 + $0x2e8] sm:$0xff] %v9892
      %10249 = vst [vmem:[%s251 + $0x2f0] sm:$0xff] %v9894
      %10250 = vst [vmem:[%s251 + $0x2f8] sm:$0xff] %v9896
      %10251 = vst [vmem:[%s251 + $0x300] sm:$0xff] %v9898
      %10252 = vst [vmem:[%s251 + $0x308] sm:$0xff] %v9900
      %10253 = vst [vmem:[%s251 + $0x310] sm:$0xff] %v9902
      %10254 = vst [vmem:[%s251 + $0x318] sm:$0xff] %v9904
      %10255 = vst [vmem:[%s251 + $0x320] sm:$0xff] %v9906
      %10256 = vst [vmem:[%s251 + $0x328] sm:$0xff] %v9908
      %10257 = vst [vmem:[%s251 + $0x330] sm:$0xff] %v9910
      %10258 = vst [vmem:[%s251 + $0x338] sm:$0xff] %v9912
      %10259 = vst [vmem:[%s251 + $0x340] sm:$0xff] %v9914
      %10260 = vst [vmem:[%s251 + $0x348] sm:$0xff] %v9916
      %10261 = vst [vmem:[%s251 + $0x350] sm:$0xff] %v9918
      %10262 = vst [vmem:[%s251 + $0x358] sm:$0xff] %v9920
      %10263 = vst [vmem:[%s251 + $0x360] sm:$0xff] %v9922
      %10264 = vst [vmem:[%s251 + $0x368] sm:$0xff] %v9924
      %10265 = vst [vmem:[%s251 + $0x370] sm:$0xff] %v9926
      %10266 = vst [vmem:[%s251 + $0x378] sm:$0xff] %v9928
      %10267 = vst [vmem:[%s251 + $0x380] sm:$0xff] %v9930
      %10268 = vst [vmem:[%s251 + $0x388] sm:$0xff] %v9932
      %10269 = vst [vmem:[%s251 + $0x390] sm:$0xff] %v9934
      %10270 = vst [vmem:[%s251 + $0x398] sm:$0xff] %v9936
      %10271 = vst [vmem:[%s251 + $0x3a0] sm:$0xff] %v9938
      %10272 = vst [vmem:[%s251 + $0x3a8] sm:$0xff] %v9940
      %10273 = vst [vmem:[%s251 + $0x3b0] sm:$0xff] %v9942
      %10274 = vst [vmem:[%s251 + $0x3b8] sm:$0xff] %v9944
      %10275 = vst [vmem:[%s251 + $0x3c0] sm:$0xff] %v9946
      %10276 = vst [vmem:[%s251 + $0x3c8] sm:$0xff] %v9948
      %10277 = vst [vmem:[%s251 + $0x3d0] sm:$0xff] %v9950
      %10278 = vst [vmem:[%s251 + $0x3d8] sm:$0xff] %v9952
      %10279 = vst [vmem:[%s251 + $0x3e0] sm:$0xff] %v9954
      %10280 = vst [vmem:[%s251 + $0x3e8] sm:$0xff] %v9956
      %10281 = vst [vmem:[%s251 + $0x3f0] sm:$0xff] %v9958
      %10282 = vst [vmem:[%s251 + $0x3f8] sm:$0xff] %v9960
      %10283 = vst [vmem:[%s251 + $0x400] sm:$0xff] %v9962
      %10284 = vst [vmem:[%s251 + $0x408] sm:$0xff] %v9964
      %10285 = vst [vmem:[%s251 + $0x410] sm:$0xff] %v9966
      %10286 = vst [vmem:[%s251 + $0x418] sm:$0xff] %v9968
      %10287 = vst [vmem:[%s251 + $0x420] sm:$0xff] %v9970
      %10288 = vst [vmem:[%s251 + $0x428] sm:$0xff] %v9972
      %10289 = vst [vmem:[%s251 + $0x430] sm:$0xff] %v9974
      %10290 = vst [vmem:[%s251 + $0x438] sm:$0xff] %v9976
      %10291 = vst [vmem:[%s251 + $0x440] sm:$0xff] %v9978
      %10292 = vst [vmem:[%s251 + $0x448] sm:$0xff] %v9980
      %10293 = vst [vmem:[%s251 + $0x450] sm:$0xff] %v9982
      %10294 = vst [vmem:[%s251 + $0x458] sm:$0xff] %v9984
      %10295 = vst [vmem:[%s251 + $0x460] sm:$0xff] %v9986
      %10296 = vst [vmem:[%s251 + $0x468] sm:$0xff] %v9988
      %10297 = vst [vmem:[%s251 + $0x470] sm:$0xff] %v9990
      %10298 = vst [vmem:[%s251 + $0x478] sm:$0xff] %v9992
      %10299 = vst [vmem:[%s251 + $0x480] sm:$0x1f] %v9994
      %10300 = vst [vmem:[%s251 + $0x488] sm:$0x1f] %v9996
      %10301 = vst [vmem:[%s251 + $0x490] sm:$0x1f] %v9998
      %10302 = vst [vmem:[%s251 + $0x498] sm:$0x1f] %v10000
      %10303 = vst [vmem:[%s251 + $0x4a0] sm:$0x1f] %v10002
      %10304 = vst [vmem:[%s251 + $0x4a8] sm:$0x1f] %v10004
      %vm10305 = vcmask 1044480
      %v10306 = vrot.slane %v8926, 3
      %v10307 = vrot.slane %v8928, 3
      %v10308 = vrot.slane %v9087, 3
      %v10309 = vrot.slane %v9089, 3
      %v10310 = vrot.slane %v9248, 3
      %v10311 = vrot.slane %v9250, 3
      %v10312 = vrot.slane %v8930, 3
      %v10313 = vsel %vm10305, %v10306, %v10312
      %v10314 = vrot.slane %v8932, 3
      %v10315 = vsel %vm10305, %v10307, %v10314
      %v10316 = vrot.slane %v9091, 3
      %v10317 = vsel %vm10305, %v10308, %v10316
      %v10318 = vrot.slane %v9093, 3
      %v10319 = vsel %vm10305, %v10309, %v10318
      %v10320 = vrot.slane %v9252, 3
      %v10321 = vsel %vm10305, %v10310, %v10320
      %v10322 = vrot.slane %v9254, 3
      %v10323 = vsel %vm10305, %v10311, %v10322
      %v10324 = vrot.slane %v8936, 3
      %v10325 = vsel %vm10305, %v10312, %v10324
      %v10326 = vrot.slane %v8938, 3
      %v10327 = vsel %vm10305, %v10314, %v10326
      %v10328 = vrot.slane %v9097, 3
      %v10329 = vsel %vm10305, %v10316, %v10328
      %v10330 = vrot.slane %v9099, 3
      %v10331 = vsel %vm10305, %v10318, %v10330
      %v10332 = vrot.slane %v9258, 3
      %v10333 = vsel %vm10305, %v10320, %v10332
      %v10334 = vrot.slane %v9260, 3
      %v10335 = vsel %vm10305, %v10322, %v10334
      %v10336 = vrot.slane %v8940, 3
      %v10337 = vsel %vm10305, %v10324, %v10336
      %v10338 = vrot.slane %v8942, 3
      %v10339 = vsel %vm10305, %v10326, %v10338
      %v10340 = vrot.slane %v9101, 3
      %v10341 = vsel %vm10305, %v10328, %v10340
      %v10342 = vrot.slane %v9103, 3
      %v10343 = vsel %vm10305, %v10330, %v10342
      %v10344 = vrot.slane %v9262, 3
      %v10345 = vsel %vm10305, %v10332, %v10344
      %v10346 = vrot.slane %v9264, 3
      %v10347 = vsel %vm10305, %v10334, %v10346
      %v10348 = vrot.slane %v8946, 3
      %v10349 = vsel %vm10305, %v10336, %v10348
      %v10350 = vrot.slane %v8948, 3
      %v10351 = vsel %vm10305, %v10338, %v10350
      %v10352 = vrot.slane %v9107, 3
      %v10353 = vsel %vm10305, %v10340, %v10352
      %v10354 = vrot.slane %v9109, 3
      %v10355 = vsel %vm10305, %v10342, %v10354
      %v10356 = vrot.slane %v9268, 3
      %v10357 = vsel %vm10305, %v10344, %v10356
      %v10358 = vrot.slane %v9270, 3
      %v10359 = vsel %vm10305, %v10346, %v10358
      %v10360 = vrot.slane %v8950, 3
      %v10361 = vsel %vm10305, %v10348, %v10360
      %v10362 = vrot.slane %v8952, 3
      %v10363 = vsel %vm10305, %v10350, %v10362
      %v10364 = vrot.slane %v9111, 3
      %v10365 = vsel %vm10305, %v10352, %v10364
      %v10366 = vrot.slane %v9113, 3
      %v10367 = vsel %vm10305, %v10354, %v10366
      %v10368 = vrot.slane %v9272, 3
      %v10369 = vsel %vm10305, %v10356, %v10368
      %v10370 = vrot.slane %v9274, 3
      %v10371 = vsel %vm10305, %v10358, %v10370
      %v10372 = vrot.slane %v8956, 3
      %v10373 = vsel %vm10305, %v10360, %v10372
      %v10374 = vrot.slane %v8958, 3
      %v10375 = vsel %vm10305, %v10362, %v10374
      %v10376 = vrot.slane %v9117, 3
      %v10377 = vsel %vm10305, %v10364, %v10376
      %v10378 = vrot.slane %v9119, 3
      %v10379 = vsel %vm10305, %v10366, %v10378
      %v10380 = vrot.slane %v9278, 3
      %v10381 = vsel %vm10305, %v10368, %v10380
      %v10382 = vrot.slane %v9280, 3
      %v10383 = vsel %vm10305, %v10370, %v10382
      %v10384 = vrot.slane %v8960, 3
      %v10385 = vsel %vm10305, %v10372, %v10384
      %v10386 = vrot.slane %v8962, 3
      %v10387 = vsel %vm10305, %v10374, %v10386
      %v10388 = vrot.slane %v9121, 3
      %v10389 = vsel %vm10305, %v10376, %v10388
      %v10390 = vrot.slane %v9123, 3
      %v10391 = vsel %vm10305, %v10378, %v10390
      %v10392 = vrot.slane %v9282, 3
      %v10393 = vsel %vm10305, %v10380, %v10392
      %v10394 = vrot.slane %v9284, 3
      %v10395 = vsel %vm10305, %v10382, %v10394
      %v10396 = vrot.slane %v8966, 3
      %v10397 = vsel %vm10305, %v10384, %v10396
      %v10398 = vrot.slane %v8968, 3
      %v10399 = vsel %vm10305, %v10386, %v10398
      %v10400 = vrot.slane %v9127, 3
      %v10401 = vsel %vm10305, %v10388, %v10400
      %v10402 = vrot.slane %v9129, 3
      %v10403 = vsel %vm10305, %v10390, %v10402
      %v10404 = vrot.slane %v9288, 3
      %v10405 = vsel %vm10305, %v10392, %v10404
      %v10406 = vrot.slane %v9290, 3
      %v10407 = vsel %vm10305, %v10394, %v10406
      %v10408 = vrot.slane %v8970, 3
      %v10409 = vsel %vm10305, %v10396, %v10408
      %v10410 = vrot.slane %v8972, 3
      %v10411 = vsel %vm10305, %v10398, %v10410
      %v10412 = vrot.slane %v9131, 3
      %v10413 = vsel %vm10305, %v10400, %v10412
      %v10414 = vrot.slane %v9133, 3
      %v10415 = vsel %vm10305, %v10402, %v10414
      %v10416 = vrot.slane %v9292, 3
      %v10417 = vsel %vm10305, %v10404, %v10416
      %v10418 = vrot.slane %v9294, 3
      %v10419 = vsel %vm10305, %v10406, %v10418
      %v10420 = vrot.slane %v8976, 3
      %v10421 = vsel %vm10305, %v10408, %v10420
      %v10422 = vrot.slane %v8978, 3
      %v10423 = vsel %vm10305, %v10410, %v10422
      %v10424 = vrot.slane %v9137, 3
      %v10425 = vsel %vm10305, %v10412, %v10424
      %v10426 = vrot.slane %v9139, 3
      %v10427 = vsel %vm10305, %v10414, %v10426
      %v10428 = vrot.slane %v9298, 3
      %v10429 = vsel %vm10305, %v10416, %v10428
      %v10430 = vrot.slane %v9300, 3
      %v10431 = vsel %vm10305, %v10418, %v10430
      %v10432 = vrot.slane %v8980, 3
      %v10433 = vsel %vm10305, %v10420, %v10432
      %v10434 = vrot.slane %v8982, 3
      %v10435 = vsel %vm10305, %v10422, %v10434
      %v10436 = vrot.slane %v9141, 3
      %v10437 = vsel %vm10305, %v10424, %v10436
      %v10438 = vrot.slane %v9143, 3
      %v10439 = vsel %vm10305, %v10426, %v10438
      %v10440 = vrot.slane %v9302, 3
      %v10441 = vsel %vm10305, %v10428, %v10440
      %v10442 = vrot.slane %v9304, 3
      %v10443 = vsel %vm10305, %v10430, %v10442
      %v10444 = vrot.slane %v8986, 3
      %v10445 = vsel %vm10305, %v10432, %v10444
      %v10446 = vrot.slane %v8988, 3
      %v10447 = vsel %vm10305, %v10434, %v10446
      %v10448 = vrot.slane %v9147, 3
      %v10449 = vsel %vm10305, %v10436, %v10448
      %v10450 = vrot.slane %v9149, 3
      %v10451 = vsel %vm10305, %v10438, %v10450
      %v10452 = vrot.slane %v9308, 3
      %v10453 = vsel %vm10305, %v10440, %v10452
      %v10454 = vrot.slane %v9310, 3
      %v10455 = vsel %vm10305, %v10442, %v10454
      %v10456 = vrot.slane %v8990, 3
      %v10457 = vsel %vm10305, %v10444, %v10456
      %v10458 = vrot.slane %v8992, 3
      %v10459 = vsel %vm10305, %v10446, %v10458
      %v10460 = vrot.slane %v9151, 3
      %v10461 = vsel %vm10305, %v10448, %v10460
      %v10462 = vrot.slane %v9153, 3
      %v10463 = vsel %vm10305, %v10450, %v10462
      %v10464 = vrot.slane %v9312, 3
      %v10465 = vsel %vm10305, %v10452, %v10464
      %v10466 = vrot.slane %v9314, 3
      %v10467 = vsel %vm10305, %v10454, %v10466
      %v10468 = vrot.slane %v8996, 3
      %v10469 = vsel %vm10305, %v10456, %v10468
      %v10470 = vrot.slane %v8998, 3
      %v10471 = vsel %vm10305, %v10458, %v10470
      %v10472 = vrot.slane %v9157, 3
      %v10473 = vsel %vm10305, %v10460, %v10472
      %v10474 = vrot.slane %v9159, 3
      %v10475 = vsel %vm10305, %v10462, %v10474
      %v10476 = vrot.slane %v9318, 3
      %v10477 = vsel %vm10305, %v10464, %v10476
      %v10478 = vrot.slane %v9320, 3
      %v10479 = vsel %vm10305, %v10466, %v10478
      %v10480 = vrot.slane %v9000, 3
      %v10481 = vsel %vm10305, %v10468, %v10480
      %v10482 = vrot.slane %v9002, 3
      %v10483 = vsel %vm10305, %v10470, %v10482
      %v10484 = vrot.slane %v9161, 3
      %v10485 = vsel %vm10305, %v10472, %v10484
      %v10486 = vrot.slane %v9163, 3
      %v10487 = vsel %vm10305, %v10474, %v10486
      %v10488 = vrot.slane %v9322, 3
      %v10489 = vsel %vm10305, %v10476, %v10488
      %v10490 = vrot.slane %v9324, 3
      %v10491 = vsel %vm10305, %v10478, %v10490
      %v10492 = vrot.slane %v9006, 3
      %v10493 = vsel %vm10305, %v10480, %v10492
      %v10494 = vrot.slane %v9008, 3
      %v10495 = vsel %vm10305, %v10482, %v10494
      %v10496 = vrot.slane %v9167, 3
      %v10497 = vsel %vm10305, %v10484, %v10496
      %v10498 = vrot.slane %v9169, 3
      %v10499 = vsel %vm10305, %v10486, %v10498
      %v10500 = vrot.slane %v9328, 3
      %v10501 = vsel %vm10305, %v10488, %v10500
      %v10502 = vrot.slane %v9330, 3
      %v10503 = vsel %vm10305, %v10490, %v10502
      %v10504 = vrot.slane %v9010, 3
      %v10505 = vsel %vm10305, %v10492, %v10504
      %v10506 = vrot.slane %v9012, 3
      %v10507 = vsel %vm10305, %v10494, %v10506
      %v10508 = vrot.slane %v9171, 3
      %v10509 = vsel %vm10305, %v10496, %v10508
      %v10510 = vrot.slane %v9173, 3
      %v10511 = vsel %vm10305, %v10498, %v10510
      %v10512 = vrot.slane %v9332, 3
      %v10513 = vsel %vm10305, %v10500, %v10512
      %v10514 = vrot.slane %v9334, 3
      %v10515 = vsel %vm10305, %v10502, %v10514
      %v10516 = vrot.slane %v9016, 3
      %v10517 = vsel %vm10305, %v10504, %v10516
      %v10518 = vrot.slane %v9018, 3
      %v10519 = vsel %vm10305, %v10506, %v10518
      %v10520 = vrot.slane %v9177, 3
      %v10521 = vsel %vm10305, %v10508, %v10520
      %v10522 = vrot.slane %v9179, 3
      %v10523 = vsel %vm10305, %v10510, %v10522
      %v10524 = vrot.slane %v9338, 3
      %v10525 = vsel %vm10305, %v10512, %v10524
      %v10526 = vrot.slane %v9340, 3
      %v10527 = vsel %vm10305, %v10514, %v10526
      %v10528 = vrot.slane %v9020, 3
      %v10529 = vsel %vm10305, %v10516, %v10528
      %v10530 = vrot.slane %v9022, 3
      %v10531 = vsel %vm10305, %v10518, %v10530
      %v10532 = vrot.slane %v9181, 3
      %v10533 = vsel %vm10305, %v10520, %v10532
      %v10534 = vrot.slane %v9183, 3
      %v10535 = vsel %vm10305, %v10522, %v10534
      %v10536 = vrot.slane %v9342, 3
      %v10537 = vsel %vm10305, %v10524, %v10536
      %v10538 = vrot.slane %v9344, 3
      %v10539 = vsel %vm10305, %v10526, %v10538
      %v10540 = vrot.slane %v9026, 3
      %v10541 = vsel %vm10305, %v10528, %v10540
      %v10542 = vrot.slane %v9028, 3
      %v10543 = vsel %vm10305, %v10530, %v10542
      %v10544 = vrot.slane %v9187, 3
      %v10545 = vsel %vm10305, %v10532, %v10544
      %v10546 = vrot.slane %v9189, 3
      %v10547 = vsel %vm10305, %v10534, %v10546
      %v10548 = vrot.slane %v9348, 3
      %v10549 = vsel %vm10305, %v10536, %v10548
      %v10550 = vrot.slane %v9350, 3
      %v10551 = vsel %vm10305, %v10538, %v10550
      %v10552 = vrot.slane %v9030, 3
      %v10553 = vsel %vm10305, %v10540, %v10552
      %v10554 = vrot.slane %v9032, 3
      %v10555 = vsel %vm10305, %v10542, %v10554
      %v10556 = vrot.slane %v9191, 3
      %v10557 = vsel %vm10305, %v10544, %v10556
      %v10558 = vrot.slane %v9193, 3
      %v10559 = vsel %vm10305, %v10546, %v10558
      %v10560 = vrot.slane %v9352, 3
      %v10561 = vsel %vm10305, %v10548, %v10560
      %v10562 = vrot.slane %v9354, 3
      %v10563 = vsel %vm10305, %v10550, %v10562
      %v10564 = vrot.slane %v9036, 3
      %v10565 = vsel %vm10305, %v10552, %v10564
      %v10566 = vrot.slane %v9038, 3
      %v10567 = vsel %vm10305, %v10554, %v10566
      %v10568 = vrot.slane %v9197, 3
      %v10569 = vsel %vm10305, %v10556, %v10568
      %v10570 = vrot.slane %v9199, 3
      %v10571 = vsel %vm10305, %v10558, %v10570
      %v10572 = vrot.slane %v9358, 3
      %v10573 = vsel %vm10305, %v10560, %v10572
      %v10574 = vrot.slane %v9360, 3
      %v10575 = vsel %vm10305, %v10562, %v10574
      %v10576 = vrot.slane %v9040, 3
      %v10577 = vsel %vm10305, %v10564, %v10576
      %v10578 = vrot.slane %v9042, 3
      %v10579 = vsel %vm10305, %v10566, %v10578
      %v10580 = vrot.slane %v9201, 3
      %v10581 = vsel %vm10305, %v10568, %v10580
      %v10582 = vrot.slane %v9203, 3
      %v10583 = vsel %vm10305, %v10570, %v10582
      %v10584 = vrot.slane %v9362, 3
      %v10585 = vsel %vm10305, %v10572, %v10584
      %v10586 = vrot.slane %v9364, 3
      %v10587 = vsel %vm10305, %v10574, %v10586
      %v10588 = vrot.slane %v9046, 3
      %v10589 = vsel %vm10305, %v10576, %v10588
      %v10590 = vrot.slane %v9048, 3
      %v10591 = vsel %vm10305, %v10578, %v10590
      %v10592 = vrot.slane %v9207, 3
      %v10593 = vsel %vm10305, %v10580, %v10592
      %v10594 = vrot.slane %v9209, 3
      %v10595 = vsel %vm10305, %v10582, %v10594
      %v10596 = vrot.slane %v9368, 3
      %v10597 = vsel %vm10305, %v10584, %v10596
      %v10598 = vrot.slane %v9370, 3
      %v10599 = vsel %vm10305, %v10586, %v10598
      %10756 = vst [vmem:[%s251 + $0x480] sm:$0xe0] %v10306
      %10757 = vst [vmem:[%s251 + $0x488] sm:$0xe0] %v10307
      %10758 = vst [vmem:[%s251 + $0x490] sm:$0xe0] %v10308
      %10759 = vst [vmem:[%s251 + $0x498] sm:$0xe0] %v10309
      %10760 = vst [vmem:[%s251 + $0x4a0] sm:$0xe0] %v10310
      %10761 = vst [vmem:[%s251 + $0x4a8] sm:$0xe0] %v10311
      %10762 = vst [vmem:[%s251 + $0x4b0] sm:$0xff] %v10313
      %10763 = vst [vmem:[%s251 + $0x4b8] sm:$0xff] %v10315
      %10764 = vst [vmem:[%s251 + $0x4c0] sm:$0xff] %v10317
      %10765 = vst [vmem:[%s251 + $0x4c8] sm:$0xff] %v10319
      %10766 = vst [vmem:[%s251 + $0x4d0] sm:$0xff] %v10321
      %10767 = vst [vmem:[%s251 + $0x4d8] sm:$0xff] %v10323
      %10768 = vst [vmem:[%s251 + $0x4e0] sm:$0xff] %v10325
      %10769 = vst [vmem:[%s251 + $0x4e8] sm:$0xff] %v10327
      %10770 = vst [vmem:[%s251 + $0x4f0] sm:$0xff] %v10329
      %10771 = vst [vmem:[%s251 + $0x4f8] sm:$0xff] %v10331
      %10772 = vst [vmem:[%s251 + $0x500] sm:$0xff] %v10333
      %10773 = vst [vmem:[%s251 + $0x508] sm:$0xff] %v10335
      %10774 = vst [vmem:[%s251 + $0x510] sm:$0xff] %v10337
      %10775 = vst [vmem:[%s251 + $0x518] sm:$0xff] %v10339
      %10776 = vst [vmem:[%s251 + $0x520] sm:$0xff] %v10341
      %10777 = vst [vmem:[%s251 + $0x528] sm:$0xff] %v10343
      %10778 = vst [vmem:[%s251 + $0x530] sm:$0xff] %v10345
      %10779 = vst [vmem:[%s251 + $0x538] sm:$0xff] %v10347
      %10780 = vst [vmem:[%s251 + $0x540] sm:$0xff] %v10349
      %10781 = vst [vmem:[%s251 + $0x548] sm:$0xff] %v10351
      %10782 = vst [vmem:[%s251 + $0x550] sm:$0xff] %v10353
      %10783 = vst [vmem:[%s251 + $0x558] sm:$0xff] %v10355
      %10784 = vst [vmem:[%s251 + $0x560] sm:$0xff] %v10357
      %10785 = vst [vmem:[%s251 + $0x568] sm:$0xff] %v10359
      %10786 = vst [vmem:[%s251 + $0x570] sm:$0xff] %v10361
      %10787 = vst [vmem:[%s251 + $0x578] sm:$0xff] %v10363
      %10788 = vst [vmem:[%s251 + $0x580] sm:$0xff] %v10365
      %10789 = vst [vmem:[%s251 + $0x588] sm:$0xff] %v10367
      %10790 = vst [vmem:[%s251 + $0x590] sm:$0xff] %v10369
      %10791 = vst [vmem:[%s251 + $0x598] sm:$0xff] %v10371
      %10792 = vst [vmem:[%s251 + $0x5a0] sm:$0xff] %v10373
      %10793 = vst [vmem:[%s251 + $0x5a8] sm:$0xff] %v10375
      %10794 = vst [vmem:[%s251 + $0x5b0] sm:$0xff] %v10377
      %10795 = vst [vmem:[%s251 + $0x5b8] sm:$0xff] %v10379
      %10796 = vst [vmem:[%s251 + $0x5c0] sm:$0xff] %v10381
      %10797 = vst [vmem:[%s251 + $0x5c8] sm:$0xff] %v10383
      %10798 = vst [vmem:[%s251 + $0x5d0] sm:$0xff] %v10385
      %10799 = vst [vmem:[%s251 + $0x5d8] sm:$0xff] %v10387
      %10800 = vst [vmem:[%s251 + $0x5e0] sm:$0xff] %v10389
      %10801 = vst [vmem:[%s251 + $0x5e8] sm:$0xff] %v10391
      %10802 = vst [vmem:[%s251 + $0x5f0] sm:$0xff] %v10393
      %10803 = vst [vmem:[%s251 + $0x5f8] sm:$0xff] %v10395
      %10804 = vst [vmem:[%s251 + $0x600] sm:$0xff] %v10397
      %10805 = vst [vmem:[%s251 + $0x608] sm:$0xff] %v10399
      %10806 = vst [vmem:[%s251 + $0x610] sm:$0xff] %v10401
      %10807 = vst [vmem:[%s251 + $0x618] sm:$0xff] %v10403
      %10808 = vst [vmem:[%s251 + $0x620] sm:$0xff] %v10405
      %10809 = vst [vmem:[%s251 + $0x628] sm:$0xff] %v10407
      %10810 = vst [vmem:[%s251 + $0x630] sm:$0xff] %v10409
      %10811 = vst [vmem:[%s251 + $0x638] sm:$0xff] %v10411
      %10812 = vst [vmem:[%s251 + $0x640] sm:$0xff] %v10413
      %10813 = vst [vmem:[%s251 + $0x648] sm:$0xff] %v10415
      %10814 = vst [vmem:[%s251 + $0x650] sm:$0xff] %v10417
      %10815 = vst [vmem:[%s251 + $0x658] sm:$0xff] %v10419
      %10816 = vst [vmem:[%s251 + $0x660] sm:$0xff] %v10421
      %10817 = vst [vmem:[%s251 + $0x668] sm:$0xff] %v10423
      %10818 = vst [vmem:[%s251 + $0x670] sm:$0xff] %v10425
      %10819 = vst [vmem:[%s251 + $0x678] sm:$0xff] %v10427
      %10820 = vst [vmem:[%s251 + $0x680] sm:$0xff] %v10429
      %10821 = vst [vmem:[%s251 + $0x688] sm:$0xff] %v10431
      %10822 = vst [vmem:[%s251 + $0x690] sm:$0xff] %v10433
      %10823 = vst [vmem:[%s251 + $0x698] sm:$0xff] %v10435
      %10824 = vst [vmem:[%s251 + $0x6a0] sm:$0xff] %v10437
      %10825 = vst [vmem:[%s251 + $0x6a8] sm:$0xff] %v10439
      %10826 = vst [vmem:[%s251 + $0x6b0] sm:$0xff] %v10441
      %10827 = vst [vmem:[%s251 + $0x6b8] sm:$0xff] %v10443
      %10828 = vst [vmem:[%s251 + $0x6c0] sm:$0xff] %v10445
      %10829 = vst [vmem:[%s251 + $0x6c8] sm:$0xff] %v10447
      %10830 = vst [vmem:[%s251 + $0x6d0] sm:$0xff] %v10449
      %10831 = vst [vmem:[%s251 + $0x6d8] sm:$0xff] %v10451
      %10832 = vst [vmem:[%s251 + $0x6e0] sm:$0xff] %v10453
      %10833 = vst [vmem:[%s251 + $0x6e8] sm:$0xff] %v10455
      %10834 = vst [vmem:[%s251 + $0x6f0] sm:$0xff] %v10457
      %10835 = vst [vmem:[%s251 + $0x6f8] sm:$0xff] %v10459
      %10836 = vst [vmem:[%s251 + $0x700] sm:$0xff] %v10461
      %10837 = vst [vmem:[%s251 + $0x708] sm:$0xff] %v10463
      %10838 = vst [vmem:[%s251 + $0x710] sm:$0xff] %v10465
      %10839 = vst [vmem:[%s251 + $0x718] sm:$0xff] %v10467
      %10840 = vst [vmem:[%s251 + $0x720] sm:$0xff] %v10469
      %10841 = vst [vmem:[%s251 + $0x728] sm:$0xff] %v10471
      %10842 = vst [vmem:[%s251 + $0x730] sm:$0xff] %v10473
      %10843 = vst [vmem:[%s251 + $0x738] sm:$0xff] %v10475
      %10844 = vst [vmem:[%s251 + $0x740] sm:$0xff] %v10477
      %10845 = vst [vmem:[%s251 + $0x748] sm:$0xff] %v10479
      %10846 = vst [vmem:[%s251 + $0x750] sm:$0xff] %v10481
      %10847 = vst [vmem:[%s251 + $0x758] sm:$0xff] %v10483
      %10848 = vst [vmem:[%s251 + $0x760] sm:$0xff] %v10485
      %10849 = vst [vmem:[%s251 + $0x768] sm:$0xff] %v10487
      %10850 = vst [vmem:[%s251 + $0x770] sm:$0xff] %v10489
      %10851 = vst [vmem:[%s251 + $0x778] sm:$0xff] %v10491
      %10852 = vst [vmem:[%s251 + $0x780] sm:$0xff] %v10493
      %10853 = vst [vmem:[%s251 + $0x788] sm:$0xff] %v10495
      %10854 = vst [vmem:[%s251 + $0x790] sm:$0xff] %v10497
      %10855 = vst [vmem:[%s251 + $0x798] sm:$0xff] %v10499
      %10856 = vst [vmem:[%s251 + $0x7a0] sm:$0xff] %v10501
      %10857 = vst [vmem:[%s251 + $0x7a8] sm:$0xff] %v10503
      %10858 = vst [vmem:[%s251 + $0x7b0] sm:$0xff] %v10505
      %10859 = vst [vmem:[%s251 + $0x7b8] sm:$0xff] %v10507
      %10860 = vst [vmem:[%s251 + $0x7c0] sm:$0xff] %v10509
      %10861 = vst [vmem:[%s251 + $0x7c8] sm:$0xff] %v10511
      %10862 = vst [vmem:[%s251 + $0x7d0] sm:$0xff] %v10513
      %10863 = vst [vmem:[%s251 + $0x7d8] sm:$0xff] %v10515
      %10864 = vst [vmem:[%s251 + $0x7e0] sm:$0xff] %v10517
      %10865 = vst [vmem:[%s251 + $0x7e8] sm:$0xff] %v10519
      %10866 = vst [vmem:[%s251 + $0x7f0] sm:$0xff] %v10521
      %10867 = vst [vmem:[%s251 + $0x7f8] sm:$0xff] %v10523
      %10868 = vst [vmem:[%s251 + $0x800] sm:$0xff] %v10525
      %10869 = vst [vmem:[%s251 + $0x808] sm:$0xff] %v10527
      %10870 = vst [vmem:[%s251 + $0x810] sm:$0xff] %v10529
      %10871 = vst [vmem:[%s251 + $0x818] sm:$0xff] %v10531
      %10872 = vst [vmem:[%s251 + $0x820] sm:$0xff] %v10533
      %10873 = vst [vmem:[%s251 + $0x828] sm:$0xff] %v10535
      %10874 = vst [vmem:[%s251 + $0x830] sm:$0xff] %v10537
      %10875 = vst [vmem:[%s251 + $0x838] sm:$0xff] %v10539
      %10876 = vst [vmem:[%s251 + $0x840] sm:$0xff] %v10541
      %10877 = vst [vmem:[%s251 + $0x848] sm:$0xff] %v10543
      %10878 = vst [vmem:[%s251 + $0x850] sm:$0xff] %v10545
      %10879 = vst [vmem:[%s251 + $0x858] sm:$0xff] %v10547
      %10880 = vst [vmem:[%s251 + $0x860] sm:$0xff] %v10549
      %10881 = vst [vmem:[%s251 + $0x868] sm:$0xff] %v10551
      %10882 = vst [vmem:[%s251 + $0x870] sm:$0xff] %v10553
      %10883 = vst [vmem:[%s251 + $0x878] sm:$0xff] %v10555
      %10884 = vst [vmem:[%s251 + $0x880] sm:$0xff] %v10557
      %10885 = vst [vmem:[%s251 + $0x888] sm:$0xff] %v10559
      %10886 = vst [vmem:[%s251 + $0x890] sm:$0xff] %v10561
      %10887 = vst [vmem:[%s251 + $0x898] sm:$0xff] %v10563
      %10888 = vst [vmem:[%s251 + $0x8a0] sm:$0xff] %v10565
      %10889 = vst [vmem:[%s251 + $0x8a8] sm:$0xff] %v10567
      %10890 = vst [vmem:[%s251 + $0x8b0] sm:$0xff] %v10569
      %10891 = vst [vmem:[%s251 + $0x8b8] sm:$0xff] %v10571
      %10892 = vst [vmem:[%s251 + $0x8c0] sm:$0xff] %v10573
      %10893 = vst [vmem:[%s251 + $0x8c8] sm:$0xff] %v10575
      %10894 = vst [vmem:[%s251 + $0x8d0] sm:$0xff] %v10577
      %10895 = vst [vmem:[%s251 + $0x8d8] sm:$0xff] %v10579
      %10896 = vst [vmem:[%s251 + $0x8e0] sm:$0xff] %v10581
      %10897 = vst [vmem:[%s251 + $0x8e8] sm:$0xff] %v10583
      %10898 = vst [vmem:[%s251 + $0x8f0] sm:$0xff] %v10585
      %10899 = vst [vmem:[%s251 + $0x8f8] sm:$0xff] %v10587
      %10900 = vst [vmem:[%s251 + $0x900] sm:$0xff] %v10589
      %10901 = vst [vmem:[%s251 + $0x908] sm:$0xff] %v10591
      %10902 = vst [vmem:[%s251 + $0x910] sm:$0xff] %v10593
      %10903 = vst [vmem:[%s251 + $0x918] sm:$0xff] %v10595
      %10904 = vst [vmem:[%s251 + $0x920] sm:$0xff] %v10597
      %10905 = vst [vmem:[%s251 + $0x928] sm:$0xff] %v10599
      %10906 = vst [vmem:[%s251 + $0x930] sm:$0x1] %v10588
      %10907 = vst [vmem:[%s251 + $0x938] sm:$0x1] %v10590
      %10908 = vst [vmem:[%s251 + $0x940] sm:$0x1] %v10592
      %10909 = vst [vmem:[%s251 + $0x948] sm:$0x1] %v10594
      %10910 = vst [vmem:[%s251 + $0x950] sm:$0x1] %v10596
      %10911 = vst [vmem:[%s251 + $0x958] sm:$0x1] %v10598
      %p10912 = scmp.lt.s32.totalorder %s17, 1
      %s10913 = scalar_select %p10912, %s17, 1
      %s10914 = smul.addr %s10913, 300
      %s10915 = smul.addr %s10914, 8
      %s10916 = scalar_lea.vmem %s6, %s10915
      // Predicated region
      $region45: #{convpass_2modal_forward.1} parent=43 // pred_check
        %p10917 = pneg %p166
      $region46: #{convpass_2modal_forward.1} parent=43 // pred_check_branch
        %10919 = sbr.rel (%p10917) target = $region48
      $region47: #{convpass_2modal_forward.1} parent=43 // pred_region
        _
      $region48: #{convpass_2modal_forward.1} parent=43 // pred_fallthru
        _
    $region44: #{convpass_2modal_forward.1} parent=5 // pred_fallthru
      _
    %p10920 = scmp.le.s32.totalorder 2, %s12
    // Predicated region
    $region49: #{convpass_2modal_forward.1} parent=5 // pred_check
      %p10921 = pneg %p10920
    $region50: #{convpass_2modal_forward.1} parent=5 // pred_check_branch
      %10923 = sbr.rel (%p10921) target = $region52
    $region51: #{convpass_2modal_forward.1} parent=5 // pred_region
      %s10924 = ssub.s32 %s12, 2
      // Predicated region
      $region53: #{convpass_2modal_forward.1} parent=51 // pred_check
        %p10925 = pneg %p172
      $region54: #{convpass_2modal_forward.1} parent=51 // pred_check_branch
        %10927 = sbr.rel (%p10925) target = $region56
      $region55: #{convpass_2modal_forward.1} parent=51 // pred_region
        %p10928 = scmp.lt.s32.totalorder %s18, 1
        %s10929 = scalar_select %p10928, %s18, 1
        %s10930 = smul.addr %s10929, 300
        %s10931 = smul.addr %s10930, 8
        %s10932 = scalar_lea.vmem %s6, %s10931
      $region56: #{convpass_2modal_forward.1} parent=51 // pred_fallthru
        _
    $region52: #{convpass_2modal_forward.1} parent=5 // pred_fallthru
      _
  $region6: #{convpass_2modal_forward.1} parent=0 // loop_footer
    %s16 = sadd.s32 1, %s12
  $region7: #{convpass_2modal_forward.1} parent=0 // loop_footer_branch
    %11 = sbr.rel target = $region3
  $region8: #{convpass_2modal_forward.1} parent=0 // loop_exit
    _

</llo_original>
